<compile_context>
chip_gen: v7x
topology: tpu7x:2x2x1
jax: 0.10.0
libtpu: 0.0.40
codegen_flags: <defaults>
</compile_context>

<pallas_src>
import numpy as np
import jax
import jax.numpy as jnp
from jax import lax
from jax.experimental import pallas as pl
from jax.experimental.pallas import tpu as pltpu


# ---------------------------------------------------------------------------
# Fused Pallas kernel (one image per grid step)
# ---------------------------------------------------------------------------
# Activation layout per image: 2-D (H, W*C), column index = w*C + c.
# The input is pre-split on the host into even rows (16, 96) and odd rows
# (16, 96) so that the stride-2 fused conv2 only ever needs *contiguous*
# row slices in-kernel.

def _cnn_fused_kernel(xe_ref, xo_ref, t1_ref, t2_ref, t3_ref, t4_ref, w5_ref,
                      b1_ref, b2_ref, b3_ref, b4_ref, b5_ref,
                      out_ref, a1e_ref, a1o_ref, a2_ref, a3_ref):
    f32, bf16 = jnp.float32, jnp.bfloat16

    # ---- layer 1: conv1 5x5 + ReLU, computed as even / odd output rows ----
    # even output row u=2t uses input rows 2t+di; odd row u=2t+1 uses 2t+1+di.
    def conv1_rows(srcs):
        acc = jnp.zeros((14, 448), f32)
        for di, (src, m) in enumerate(srcs):
            acc = acc + jnp.dot(src[m:m + 14, :], t1_ref[di],
                                preferred_element_type=f32)
        return acc

    b1 = b1_ref[...]
    acc_e = conv1_rows([(xe_ref, 0), (xo_ref, 0), (xe_ref, 1),
                        (xo_ref, 1), (xe_ref, 2)])
    acc_o = conv1_rows([(xo_ref, 0), (xe_ref, 1), (xo_ref, 1),
                        (xe_ref, 2), (xo_ref, 2)])
    a1e_ref[...] = jnp.maximum(acc_e + b1, 0.0)   # conv1 output rows 0,2,...,26
    a1o_ref[...] = jnp.maximum(acc_o + b1, 0.0)   # conv1 output rows 1,3,...,27

    # ---- layer 2: pool1 folded into conv2 (stride-2, 6x6 effective) + ReLU --
    # output row u uses conv1-output rows 2u+di, di = 0..5.
    acc2 = jnp.zeros((12, 384), f32)
    for di, (src, m) in enumerate([(a1e_ref, 0), (a1o_ref, 0), (a1e_ref, 1),
                                   (a1o_ref, 1), (a1e_ref, 2), (a1o_ref, 2)]):
        acc2 = acc2 + jnp.dot(src[m:m + 12, :].astype(bf16), t2_ref[di],
                              preferred_element_type=f32)
    a2_ref[...] = jnp.maximum(acc2 + b2_ref[...], 0.0)          # (12, 12*32)

    # ---- layer 3: conv3 3x3 + ReLU -----------------------------------------
    acc3 = jnp.zeros((10, 80), f32)
    for di in range(3):
        acc3 = acc3 + jnp.dot(a2_ref[di:di + 10, :].astype(bf16), t3_ref[di],
                              preferred_element_type=f32)
    a3_ref[...] = jnp.maximum(acc3 + b3_ref[...], 0.0)          # (10, 10*8)

    # ---- layer 4: pool2 + flatten folded into fc1, + ReLU -------------------
    acc4 = jnp.zeros((1, 30), f32)
    for h in range(10):
        acc4 = acc4 + jnp.dot(a3_ref[h:h + 1, :].astype(bf16), t4_ref[h],
                              preferred_element_type=f32)
    z = jnp.maximum(acc4 + b4_ref[...], 0.0)                    # (1, 30)

    # ---- layer 5: fc2 --------------------------------------------------------
    out = jnp.dot(z.astype(bf16), w5_ref[...], preferred_element_type=f32)
    out_ref[...] = out + b5_ref[...]                            # (1, 10)


# ---------------------------------------------------------------------------
# Host-side weight preprocessing (numpy, done once)
# ---------------------------------------------------------------------------

def _toeplitz(w_khkwio, w_in, stride=1):
    """Banded matrices T[di] of shape (w_in*cin, w_out*cout) such that
    conv(x)[u] = sum_di x_row(stride*u_row + di) @ T[di] with the (W*C) layout."""
    kh, kw, cin, cout = w_khkwio.shape
    w_out = (w_in - kw) // stride + 1
    t = np.zeros((kh, w_in * cin, w_out * cout), np.float32)
    for di in range(kh):
        for v in range(w_out):
            for dj in range(kw):
                wi = stride * v + dj
                t[di, wi * cin:(wi + 1) * cin, v * cout:(v + 1) * cout] = \
                    w_khkwio[di, dj]
    return t


def prepare_params(params):
    (w1, b1, w2, b2, w3, b3, wf1, bf1, wf2, bf2) = \
        [np.asarray(p, np.float32) for p in params]

    # conv1: (16,3,5,5) -> (5,5,3,16) -> T1 (5, 32*3, 28*16)
    t1 = _toeplitz(np.transpose(w1, (2, 3, 1, 0)), 32, 1)

    # pool1 folded into conv2: stride-2 conv with 6x6 effective kernel.
    w2_t = np.transpose(w2, (2, 3, 1, 0))                        # (3,3,16,32)
    w2_eff = 0.25 * np.repeat(np.repeat(w2_t, 2, axis=0), 2, axis=1)  # (6,6,16,32)
    t2 = _toeplitz(w2_eff, 28, 2)                                # (6, 28*16, 12*32)

    # conv3: (8,32,3,3) -> T3 (3, 12*32, 10*8)
    t3 = _toeplitz(np.transpose(w3, (2, 3, 1, 0)), 12, 1)

    # pool2 + torch.flatten (C,H,W order) folded into fc1: T4 (10, 10*8, 30)
    t4 = np.zeros((10, 80, 30), np.float32)
    for h in range(10):
        for xw in range(10):
            for c in range(8):
                t4[h, xw * 8 + c, :] = \
                    0.25 * wf1[:, c * 25 + (h // 2) * 5 + (xw // 2)]

    w5 = wf2.T                                                   # (30, 10)

    b1r = np.tile(b1, 28).reshape(1, 448)
    b2r = np.tile(b2, 12).reshape(1, 384)
    b3r = np.tile(b3, 10).reshape(1, 80)
    b4r = bf1.reshape(1, 30)
    b5r = bf2.reshape(1, 10)

    bf = jnp.bfloat16
    return (jnp.asarray(t1, bf), jnp.asarray(t2, bf), jnp.asarray(t3, bf),
            jnp.asarray(t4, bf), jnp.asarray(w5, bf),
            jnp.asarray(b1r), jnp.asarray(b2r), jnp.asarray(b3r),
            jnp.asarray(b4r), jnp.asarray(b5r))


# ---------------------------------------------------------------------------
# Forward (jit-compiled wrapper around the single fused pallas_call)
# ---------------------------------------------------------------------------

@jax.jit
def forward(x_nchw, prep):
    (t1, t2, t3, t4, w5, b1, b2, b3, b4, b5) = prep
    n = x_nchw.shape[0]

    # NCHW -> (N, H, W*C) with column index = w*C + c, then even/odd row split.
    x = jnp.transpose(x_nchw, (0, 2, 3, 1)).reshape(n, 32, 96)
    xe = x[:, 0::2, :].astype(jnp.bfloat16)                      # (N, 16, 96)
    xo = x[:, 1::2, :].astype(jnp.bfloat16)                      # (N, 16, 96)

    out = pl.pallas_call(
        _cnn_fused_kernel,
        out_shape=jax.ShapeDtypeStruct((n, 1, 10), jnp.float32),
        grid=(n,),
        in_specs=[
            pl.BlockSpec((None, 16, 96), lambda i: (i, 0, 0)),    # x even rows
            pl.BlockSpec((None, 16, 96), lambda i: (i, 0, 0)),    # x odd rows
            pl.BlockSpec((5, 96, 448), lambda i: (0, 0, 0)),      # T1
            pl.BlockSpec((6, 448, 384), lambda i: (0, 0, 0)),     # T2
            pl.BlockSpec((3, 384, 80), lambda i: (0, 0, 0)),      # T3
            pl.BlockSpec((10, 80, 30), lambda i: (0, 0, 0)),      # T4
            pl.BlockSpec((30, 10), lambda i: (0, 0)),             # W5
            pl.BlockSpec((1, 448), lambda i: (0, 0)),             # b1 (tiled)
            pl.BlockSpec((1, 384), lambda i: (0, 0)),             # b2 (tiled)
            pl.BlockSpec((1, 80), lambda i: (0, 0)),              # b3 (tiled)
            pl.BlockSpec((1, 30), lambda i: (0, 0)),              # b4
            pl.BlockSpec((1, 10), lambda i: (0, 0)),              # b5
        ],
        out_specs=pl.BlockSpec((None, 1, 10), lambda i: (i, 0, 0)),
        scratch_shapes=[
            pltpu.VMEM((14, 448), jnp.float32),   # conv1 out, even rows
            pltpu.VMEM((14, 448), jnp.float32),   # conv1 out, odd rows
            pltpu.VMEM((12, 384), jnp.float32),   # conv2 out
            pltpu.VMEM((10, 80), jnp.float32),    # conv3 out
        ],
        compiler_params=pltpu.CompilerParams(
            dimension_semantics=("parallel",)),
    )(xe, xo, t1, t2, t3, t4, w5, b1, b2, b3, b4, b5)

    return out.reshape(n, 10)


# ---------------------------------------------------------------------------
# Pure-JAX reference (mirrors the PyTorch module semantics)
# ---------------------------------------------------------------------------

def reference(x_nchw, params):
    (w1, b1, w2, b2, w3, b3, wf1, bf1, wf2, bf2) = params
    hi = lax.Precision.HIGHEST

    def conv(x, w, b):
        y = lax.conv_general_dilated(
            x, w, (1, 1), "VALID",
            dimension_numbers=("NCHW", "OIHW", "NCHW"), precision=hi)
        return y + b.reshape(1, -1, 1, 1)

    def pool(x):
        return lax.reduce_window(
            x, 0.0, lax.add, (1, 1, 2, 2), (1, 1, 2, 2), "VALID") * 0.25

    x = pool(jax.nn.relu(conv(x_nchw, w1, b1)))
    x = jax.nn.relu(conv(x, w2, b2))
    x = pool(jax.nn.relu(conv(x, w3, b3)))
    x = x.reshape(x.shape[0], -1)
    x = jax.nn.relu(jnp.dot(x, wf1.T, precision=hi) + bf1)
    x = jnp.dot(x, wf2.T, precision=hi) + bf2
    return x


# ---------------------------------------------------------------------------
# Main
# ---------------------------------------------------------------------------

if __name__ == "__main__":
    key = jax.random.PRNGKey(0)
    ks = jax.random.split(key, 11)
    N = 2

    # Input: NCHW, 3x32x32 (so flatten yields 8*5*5 = 200 features)
    x = jax.random.normal(ks[0], (N, 3, 32, 32), jnp.float32)

    # Deterministic synthetic parameters, PyTorch-shaped.
    w1 = 0.1 * jax.random.normal(ks[1], (16, 3, 5, 5), jnp.float32)
    b1 = 0.1 * jax.random.normal(ks[2], (16,), jnp.float32)
    w2 = 0.1 * jax.random.normal(ks[3], (32, 16, 3, 3), jnp.float32)
    b2 = 0.1 * jax.random.normal(ks[4], (32,), jnp.float32)
    w3 = 0.1 * jax.random.normal(ks[5], (8, 32, 3, 3), jnp.float32)
    b3 = 0.1 * jax.random.normal(ks[6], (8,), jnp.float32)
    wf1 = 0.1 * jax.random.normal(ks[7], (30, 200), jnp.float32)
    bf1 = 0.1 * jax.random.normal(ks[8], (30,), jnp.float32)
    wf2 = 0.1 * jax.random.normal(ks[9], (10, 30), jnp.float32)
    bf2 = 0.1 * jax.random.normal(ks[10], (10,), jnp.float32)

    params = (w1, b1, w2, b2, w3, b3, wf1, bf1, wf2, bf2)
    prep = prepare_params(params)        # one-time host-side weight packing

    out = forward(x, prep)
    out = jax.block_until_ready(out)

    ref = reference(x, params)
    assert out.shape == (N, 10)
    assert bool(jnp.all(jnp.isfinite(out)))
    assert bool(jnp.allclose(out, ref, atol=2e-2, rtol=2e-2))

    print("KERNEL_OK")
</pallas_src>

<mosaic_0001>
module attributes {stable_mosaic.version = 11 : i64} {
  func.func @_cnn_fused_kernel(%arg0: i32, %arg1: memref<1x16x96xbf16, #tpu.memory_space<vmem>>, %arg2: memref<1x16x96xbf16, #tpu.memory_space<vmem>>, %arg3: memref<5x96x448xbf16, #tpu.memory_space<vmem>>, %arg4: memref<6x448x384xbf16, #tpu.memory_space<vmem>>, %arg5: memref<3x384x80xbf16, #tpu.memory_space<vmem>>, %arg6: memref<10x80x30xbf16, #tpu.memory_space<vmem>>, %arg7: memref<30x10xbf16, #tpu.memory_space<vmem>>, %arg8: memref<1x448xf32, #tpu.memory_space<vmem>>, %arg9: memref<1x384xf32, #tpu.memory_space<vmem>>, %arg10: memref<1x80xf32, #tpu.memory_space<vmem>>, %arg11: memref<1x30xf32, #tpu.memory_space<vmem>>, %arg12: memref<1x10xf32, #tpu.memory_space<vmem>>, %arg13: memref<1x1x10xf32, #tpu.memory_space<vmem>>, %arg14: memref<14x448xf32, #tpu.memory_space<vmem>>, %arg15: memref<14x448xf32, #tpu.memory_space<vmem>>, %arg16: memref<12x384xf32, #tpu.memory_space<vmem>>, %arg17: memref<10x80xf32, #tpu.memory_space<vmem>>) attributes {dimension_semantics = [#tpu.dimension_semantics<parallel>], iteration_bounds = array<i64: 2>, scalar_prefetch = 0 : i64, scratch_operands = 4 : i64, tpu.core_type = #tpu.core_type<tc>, window_params = [{transform_indices = @transform_0, window_bounds = array<i64: 1, 16, 96>}, {transform_indices = @transform_1, window_bounds = array<i64: 1, 16, 96>}, {pipeline_mode = #tpu.pipeline_mode<synchronous>, transform_indices = @transform_2, window_bounds = array<i64: 5, 96, 448>}, {pipeline_mode = #tpu.pipeline_mode<synchronous>, transform_indices = @transform_3, window_bounds = array<i64: 6, 448, 384>}, {pipeline_mode = #tpu.pipeline_mode<synchronous>, transform_indices = @transform_4, window_bounds = array<i64: 3, 384, 80>}, {pipeline_mode = #tpu.pipeline_mode<synchronous>, transform_indices = @transform_5, window_bounds = array<i64: 10, 80, 30>}, {pipeline_mode = #tpu.pipeline_mode<synchronous>, transform_indices = @transform_6, window_bounds = array<i64: 30, 10>}, {pipeline_mode = #tpu.pipeline_mode<synchronous>, transform_indices = @transform_7, window_bounds = array<i64: 1, 448>}, {pipeline_mode = #tpu.pipeline_mode<synchronous>, transform_indices = @transform_8, window_bounds = array<i64: 1, 384>}, {pipeline_mode = #tpu.pipeline_mode<synchronous>, transform_indices = @transform_9, window_bounds = array<i64: 1, 80>}, {pipeline_mode = #tpu.pipeline_mode<synchronous>, transform_indices = @transform_10, window_bounds = array<i64: 1, 30>}, {pipeline_mode = #tpu.pipeline_mode<synchronous>, transform_indices = @transform_11, window_bounds = array<i64: 1, 10>}, {transform_indices = @transform_12, window_bounds = array<i64: 1, 1, 10>}]} {
    %c0 = arith.constant 0 : index
    %c0_0 = arith.constant 0 : index
    %0 = vector.load %arg8[%c0, %c0_0] : memref<1x448xf32, #tpu.memory_space<vmem>>, vector<1x448xf32>
    %cst = arith.constant 0.000000e+00 : f32
    %1 = vector.broadcast %cst : f32 to vector<14x448xf32>
    %c0_1 = arith.constant 0 : index
    %c0_2 = arith.constant 0 : index
    %c0_3 = arith.constant 0 : index
    %2 = vector.load %arg1[%c0_1, %c0_2, %c0_3] : memref<1x16x96xbf16, #tpu.memory_space<vmem>>, vector<1x14x96xbf16>
    %3 = vector.shape_cast %2 : vector<1x14x96xbf16> to vector<14x96xbf16>
    %c0_4 = arith.constant 0 : index
    %c0_5 = arith.constant 0 : index
    %c0_6 = arith.constant 0 : index
    %4 = vector.load %arg3[%c0_4, %c0_5, %c0_6] : memref<5x96x448xbf16, #tpu.memory_space<vmem>>, vector<1x96x448xbf16>
    %5 = vector.shape_cast %4 : vector<1x96x448xbf16> to vector<96x448xbf16>
    %cst_7 = arith.constant dense<0.000000e+00> : vector<14x448xf32>
    %6 = tpu.matmul %3, %5, %cst_7 {dimension_numbers = #tpu.dot_dimension_numbers<[1], [0], [0], [1], [0, 0, 1, 1], [], []>} : vector<14x96xbf16>, vector<96x448xbf16>, vector<14x448xf32> -> vector<14x448xf32>
    %7 = arith.addf %1, %6 : vector<14x448xf32>
    %c0_8 = arith.constant 0 : index
    %c0_9 = arith.constant 0 : index
    %c0_10 = arith.constant 0 : index
    %8 = vector.load %arg2[%c0_8, %c0_9, %c0_10] : memref<1x16x96xbf16, #tpu.memory_space<vmem>>, vector<1x14x96xbf16>
    %9 = vector.shape_cast %8 : vector<1x14x96xbf16> to vector<14x96xbf16>
    %c1 = arith.constant 1 : index
    %c0_11 = arith.constant 0 : index
    %c0_12 = arith.constant 0 : index
    %10 = vector.load %arg3[%c1, %c0_11, %c0_12] : memref<5x96x448xbf16, #tpu.memory_space<vmem>>, vector<1x96x448xbf16>
    %11 = vector.shape_cast %10 : vector<1x96x448xbf16> to vector<96x448xbf16>
    %cst_13 = arith.constant dense<0.000000e+00> : vector<14x448xf32>
    %12 = tpu.matmul %9, %11, %cst_13 {dimension_numbers = #tpu.dot_dimension_numbers<[1], [0], [0], [1], [0, 0, 1, 1], [], []>} : vector<14x96xbf16>, vector<96x448xbf16>, vector<14x448xf32> -> vector<14x448xf32>
    %13 = arith.addf %7, %12 : vector<14x448xf32>
    %c0_14 = arith.constant 0 : index
    %c1_15 = arith.constant 1 : index
    %c0_16 = arith.constant 0 : index
    %14 = vector.load %arg1[%c0_14, %c1_15, %c0_16] : memref<1x16x96xbf16, #tpu.memory_space<vmem>>, vector<1x14x96xbf16>
    %15 = vector.shape_cast %14 : vector<1x14x96xbf16> to vector<14x96xbf16>
    %c2 = arith.constant 2 : index
    %c0_17 = arith.constant 0 : index
    %c0_18 = arith.constant 0 : index
    %16 = vector.load %arg3[%c2, %c0_17, %c0_18] : memref<5x96x448xbf16, #tpu.memory_space<vmem>>, vector<1x96x448xbf16>
    %17 = vector.shape_cast %16 : vector<1x96x448xbf16> to vector<96x448xbf16>
    %cst_19 = arith.constant dense<0.000000e+00> : vector<14x448xf32>
    %18 = tpu.matmul %15, %17, %cst_19 {dimension_numbers = #tpu.dot_dimension_numbers<[1], [0], [0], [1], [0, 0, 1, 1], [], []>} : vector<14x96xbf16>, vector<96x448xbf16>, vector<14x448xf32> -> vector<14x448xf32>
    %19 = arith.addf %13, %18 : vector<14x448xf32>
    %c0_20 = arith.constant 0 : index
    %c1_21 = arith.constant 1 : index
    %c0_22 = arith.constant 0 : index
    %20 = vector.load %arg2[%c0_20, %c1_21, %c0_22] : memref<1x16x96xbf16, #tpu.memory_space<vmem>>, vector<1x14x96xbf16>
    %21 = vector.shape_cast %20 : vector<1x14x96xbf16> to vector<14x96xbf16>
    %c3 = arith.constant 3 : index
    %c0_23 = arith.constant 0 : index
    %c0_24 = arith.constant 0 : index
    %22 = vector.load %arg3[%c3, %c0_23, %c0_24] : memref<5x96x448xbf16, #tpu.memory_space<vmem>>, vector<1x96x448xbf16>
    %23 = vector.shape_cast %22 : vector<1x96x448xbf16> to vector<96x448xbf16>
    %cst_25 = arith.constant dense<0.000000e+00> : vector<14x448xf32>
    %24 = tpu.matmul %21, %23, %cst_25 {dimension_numbers = #tpu.dot_dimension_numbers<[1], [0], [0], [1], [0, 0, 1, 1], [], []>} : vector<14x96xbf16>, vector<96x448xbf16>, vector<14x448xf32> -> vector<14x448xf32>
    %25 = arith.addf %19, %24 : vector<14x448xf32>
    %c0_26 = arith.constant 0 : index
    %c2_27 = arith.constant 2 : index
    %c0_28 = arith.constant 0 : index
    %26 = vector.load %arg1[%c0_26, %c2_27, %c0_28] : memref<1x16x96xbf16, #tpu.memory_space<vmem>>, vector<1x14x96xbf16>
    %27 = vector.shape_cast %26 : vector<1x14x96xbf16> to vector<14x96xbf16>
    %c4 = arith.constant 4 : index
    %c0_29 = arith.constant 0 : index
    %c0_30 = arith.constant 0 : index
    %28 = vector.load %arg3[%c4, %c0_29, %c0_30] : memref<5x96x448xbf16, #tpu.memory_space<vmem>>, vector<1x96x448xbf16>
    %29 = vector.shape_cast %28 : vector<1x96x448xbf16> to vector<96x448xbf16>
    %cst_31 = arith.constant dense<0.000000e+00> : vector<14x448xf32>
    %30 = tpu.matmul %27, %29, %cst_31 {dimension_numbers = #tpu.dot_dimension_numbers<[1], [0], [0], [1], [0, 0, 1, 1], [], []>} : vector<14x96xbf16>, vector<96x448xbf16>, vector<14x448xf32> -> vector<14x448xf32>
    %31 = arith.addf %25, %30 : vector<14x448xf32>
    %cst_32 = arith.constant 0.000000e+00 : f32
    %32 = vector.broadcast %cst_32 : f32 to vector<14x448xf32>
    %c0_33 = arith.constant 0 : index
    %c0_34 = arith.constant 0 : index
    %c0_35 = arith.constant 0 : index
    %33 = vector.load %arg2[%c0_33, %c0_34, %c0_35] : memref<1x16x96xbf16, #tpu.memory_space<vmem>>, vector<1x14x96xbf16>
    %34 = vector.shape_cast %33 : vector<1x14x96xbf16> to vector<14x96xbf16>
    %c0_36 = arith.constant 0 : index
    %c0_37 = arith.constant 0 : index
    %c0_38 = arith.constant 0 : index
    %35 = vector.load %arg3[%c0_36, %c0_37, %c0_38] : memref<5x96x448xbf16, #tpu.memory_space<vmem>>, vector<1x96x448xbf16>
    %36 = vector.shape_cast %35 : vector<1x96x448xbf16> to vector<96x448xbf16>
    %cst_39 = arith.constant dense<0.000000e+00> : vector<14x448xf32>
    %37 = tpu.matmul %34, %36, %cst_39 {dimension_numbers = #tpu.dot_dimension_numbers<[1], [0], [0], [1], [0, 0, 1, 1], [], []>} : vector<14x96xbf16>, vector<96x448xbf16>, vector<14x448xf32> -> vector<14x448xf32>
    %38 = arith.addf %32, %37 : vector<14x448xf32>
    %c0_40 = arith.constant 0 : index
    %c1_41 = arith.constant 1 : index
    %c0_42 = arith.constant 0 : index
    %39 = vector.load %arg1[%c0_40, %c1_41, %c0_42] : memref<1x16x96xbf16, #tpu.memory_space<vmem>>, vector<1x14x96xbf16>
    %40 = vector.shape_cast %39 : vector<1x14x96xbf16> to vector<14x96xbf16>
    %c1_43 = arith.constant 1 : index
    %c0_44 = arith.constant 0 : index
    %c0_45 = arith.constant 0 : index
    %41 = vector.load %arg3[%c1_43, %c0_44, %c0_45] : memref<5x96x448xbf16, #tpu.memory_space<vmem>>, vector<1x96x448xbf16>
    %42 = vector.shape_cast %41 : vector<1x96x448xbf16> to vector<96x448xbf16>
    %cst_46 = arith.constant dense<0.000000e+00> : vector<14x448xf32>
    %43 = tpu.matmul %40, %42, %cst_46 {dimension_numbers = #tpu.dot_dimension_numbers<[1], [0], [0], [1], [0, 0, 1, 1], [], []>} : vector<14x96xbf16>, vector<96x448xbf16>, vector<14x448xf32> -> vector<14x448xf32>
    %44 = arith.addf %38, %43 : vector<14x448xf32>
    %c0_47 = arith.constant 0 : index
    %c1_48 = arith.constant 1 : index
    %c0_49 = arith.constant 0 : index
    %45 = vector.load %arg2[%c0_47, %c1_48, %c0_49] : memref<1x16x96xbf16, #tpu.memory_space<vmem>>, vector<1x14x96xbf16>
    %46 = vector.shape_cast %45 : vector<1x14x96xbf16> to vector<14x96xbf16>
    %c2_50 = arith.constant 2 : index
    %c0_51 = arith.constant 0 : index
    %c0_52 = arith.constant 0 : index
    %47 = vector.load %arg3[%c2_50, %c0_51, %c0_52] : memref<5x96x448xbf16, #tpu.memory_space<vmem>>, vector<1x96x448xbf16>
    %48 = vector.shape_cast %47 : vector<1x96x448xbf16> to vector<96x448xbf16>
    %cst_53 = arith.constant dense<0.000000e+00> : vector<14x448xf32>
    %49 = tpu.matmul %46, %48, %cst_53 {dimension_numbers = #tpu.dot_dimension_numbers<[1], [0], [0], [1], [0, 0, 1, 1], [], []>} : vector<14x96xbf16>, vector<96x448xbf16>, vector<14x448xf32> -> vector<14x448xf32>
    %50 = arith.addf %44, %49 : vector<14x448xf32>
    %c0_54 = arith.constant 0 : index
    %c2_55 = arith.constant 2 : index
    %c0_56 = arith.constant 0 : index
    %51 = vector.load %arg1[%c0_54, %c2_55, %c0_56] : memref<1x16x96xbf16, #tpu.memory_space<vmem>>, vector<1x14x96xbf16>
    %52 = vector.shape_cast %51 : vector<1x14x96xbf16> to vector<14x96xbf16>
    %c3_57 = arith.constant 3 : index
    %c0_58 = arith.constant 0 : index
    %c0_59 = arith.constant 0 : index
    %53 = vector.load %arg3[%c3_57, %c0_58, %c0_59] : memref<5x96x448xbf16, #tpu.memory_space<vmem>>, vector<1x96x448xbf16>
    %54 = vector.shape_cast %53 : vector<1x96x448xbf16> to vector<96x448xbf16>
    %cst_60 = arith.constant dense<0.000000e+00> : vector<14x448xf32>
    %55 = tpu.matmul %52, %54, %cst_60 {dimension_numbers = #tpu.dot_dimension_numbers<[1], [0], [0], [1], [0, 0, 1, 1], [], []>} : vector<14x96xbf16>, vector<96x448xbf16>, vector<14x448xf32> -> vector<14x448xf32>
    %56 = arith.addf %50, %55 : vector<14x448xf32>
    %c0_61 = arith.constant 0 : index
    %c2_62 = arith.constant 2 : index
    %c0_63 = arith.constant 0 : index
    %57 = vector.load %arg2[%c0_61, %c2_62, %c0_63] : memref<1x16x96xbf16, #tpu.memory_space<vmem>>, vector<1x14x96xbf16>
    %58 = vector.shape_cast %57 : vector<1x14x96xbf16> to vector<14x96xbf16>
    %c4_64 = arith.constant 4 : index
    %c0_65 = arith.constant 0 : index
    %c0_66 = arith.constant 0 : index
    %59 = vector.load %arg3[%c4_64, %c0_65, %c0_66] : memref<5x96x448xbf16, #tpu.memory_space<vmem>>, vector<1x96x448xbf16>
    %60 = vector.shape_cast %59 : vector<1x96x448xbf16> to vector<96x448xbf16>
    %cst_67 = arith.constant dense<0.000000e+00> : vector<14x448xf32>
    %61 = tpu.matmul %58, %60, %cst_67 {dimension_numbers = #tpu.dot_dimension_numbers<[1], [0], [0], [1], [0, 0, 1, 1], [], []>} : vector<14x96xbf16>, vector<96x448xbf16>, vector<14x448xf32> -> vector<14x448xf32>
    %62 = arith.addf %56, %61 : vector<14x448xf32>
    %63 = vector.broadcast %0 : vector<1x448xf32> to vector<14x448xf32>
    %64 = arith.addf %31, %63 : vector<14x448xf32>
    %cst_68 = arith.constant 0.000000e+00 : f32
    %65 = vector.broadcast %cst_68 : f32 to vector<14x448xf32>
    %66 = arith.maximumf %64, %65 : vector<14x448xf32>
    %c0_69 = arith.constant 0 : index
    %c0_70 = arith.constant 0 : index
    %67 = vector.load %arg14[%c0_69, %c0_70] : memref<14x448xf32, #tpu.memory_space<vmem>>, vector<14x448xf32>
    tpu.vector_store %arg14[%c0_69, %c0_70], %66 {strides = array<i32>} : memref<14x448xf32, #tpu.memory_space<vmem>>, vector<14x448xf32>,
    %68 = vector.broadcast %0 : vector<1x448xf32> to vector<14x448xf32>
    %69 = arith.addf %62, %68 : vector<14x448xf32>
    %cst_71 = arith.constant 0.000000e+00 : f32
    %70 = vector.broadcast %cst_71 : f32 to vector<14x448xf32>
    %71 = arith.maximumf %69, %70 : vector<14x448xf32>
    %c0_72 = arith.constant 0 : index
    %c0_73 = arith.constant 0 : index
    %72 = vector.load %arg15[%c0_72, %c0_73] : memref<14x448xf32, #tpu.memory_space<vmem>>, vector<14x448xf32>
    tpu.vector_store %arg15[%c0_72, %c0_73], %71 {strides = array<i32>} : memref<14x448xf32, #tpu.memory_space<vmem>>, vector<14x448xf32>,
    %cst_74 = arith.constant 0.000000e+00 : f32
    %73 = vector.broadcast %cst_74 : f32 to vector<12x384xf32>
    %c0_75 = arith.constant 0 : index
    %c0_76 = arith.constant 0 : index
    %74 = vector.load %arg14[%c0_75, %c0_76] : memref<14x448xf32, #tpu.memory_space<vmem>>, vector<12x448xf32>
    %75 = arith.truncf %74 : vector<12x448xf32> to vector<12x448xbf16>
    %c0_77 = arith.constant 0 : index
    %c0_78 = arith.constant 0 : index
    %c0_79 = arith.constant 0 : index
    %76 = vector.load %arg4[%c0_77, %c0_78, %c0_79] : memref<6x448x384xbf16, #tpu.memory_space<vmem>>, vector<1x448x384xbf16>
    %77 = vector.shape_cast %76 : vector<1x448x384xbf16> to vector<448x384xbf16>
    %cst_80 = arith.constant dense<0.000000e+00> : vector<12x384xf32>
    %78 = tpu.matmul %75, %77, %cst_80 {dimension_numbers = #tpu.dot_dimension_numbers<[1], [0], [0], [1], [0, 0, 1, 1], [], []>} : vector<12x448xbf16>, vector<448x384xbf16>, vector<12x384xf32> -> vector<12x384xf32>
    %79 = arith.addf %73, %78 : vector<12x384xf32>
    %c0_81 = arith.constant 0 : index
    %c0_82 = arith.constant 0 : index
    %80 = vector.load %arg15[%c0_81, %c0_82] : memref<14x448xf32, #tpu.memory_space<vmem>>, vector<12x448xf32>
    %81 = arith.truncf %80 : vector<12x448xf32> to vector<12x448xbf16>
    %c1_83 = arith.constant 1 : index
    %c0_84 = arith.constant 0 : index
    %c0_85 = arith.constant 0 : index
    %82 = vector.load %arg4[%c1_83, %c0_84, %c0_85] : memref<6x448x384xbf16, #tpu.memory_space<vmem>>, vector<1x448x384xbf16>
    %83 = vector.shape_cast %82 : vector<1x448x384xbf16> to vector<448x384xbf16>
    %cst_86 = arith.constant dense<0.000000e+00> : vector<12x384xf32>
    %84 = tpu.matmul %81, %83, %cst_86 {dimension_numbers = #tpu.dot_dimension_numbers<[1], [0], [0], [1], [0, 0, 1, 1], [], []>} : vector<12x448xbf16>, vector<448x384xbf16>, vector<12x384xf32> -> vector<12x384xf32>
    %85 = arith.addf %79, %84 : vector<12x384xf32>
    %c1_87 = arith.constant 1 : index
    %c0_88 = arith.constant 0 : index
    %86 = vector.load %arg14[%c1_87, %c0_88] : memref<14x448xf32, #tpu.memory_space<vmem>>, vector<12x448xf32>
    %87 = arith.truncf %86 : vector<12x448xf32> to vector<12x448xbf16>
    %c2_89 = arith.constant 2 : index
    %c0_90 = arith.constant 0 : index
    %c0_91 = arith.constant 0 : index
    %88 = vector.load %arg4[%c2_89, %c0_90, %c0_91] : memref<6x448x384xbf16, #tpu.memory_space<vmem>>, vector<1x448x384xbf16>
    %89 = vector.shape_cast %88 : vector<1x448x384xbf16> to vector<448x384xbf16>
    %cst_92 = arith.constant dense<0.000000e+00> : vector<12x384xf32>
    %90 = tpu.matmul %87, %89, %cst_92 {dimension_numbers = #tpu.dot_dimension_numbers<[1], [0], [0], [1], [0, 0, 1, 1], [], []>} : vector<12x448xbf16>, vector<448x384xbf16>, vector<12x384xf32> -> vector<12x384xf32>
    %91 = arith.addf %85, %90 : vector<12x384xf32>
    %c1_93 = arith.constant 1 : index
    %c0_94 = arith.constant 0 : index
    %92 = vector.load %arg15[%c1_93, %c0_94] : memref<14x448xf32, #tpu.memory_space<vmem>>, vector<12x448xf32>
    %93 = arith.truncf %92 : vector<12x448xf32> to vector<12x448xbf16>
    %c3_95 = arith.constant 3 : index
    %c0_96 = arith.constant 0 : index
    %c0_97 = arith.constant 0 : index
    %94 = vector.load %arg4[%c3_95, %c0_96, %c0_97] : memref<6x448x384xbf16, #tpu.memory_space<vmem>>, vector<1x448x384xbf16>
    %95 = vector.shape_cast %94 : vector<1x448x384xbf16> to vector<448x384xbf16>
    %cst_98 = arith.constant dense<0.000000e+00> : vector<12x384xf32>
    %96 = tpu.matmul %93, %95, %cst_98 {dimension_numbers = #tpu.dot_dimension_numbers<[1], [0], [0], [1], [0, 0, 1, 1], [], []>} : vector<12x448xbf16>, vector<448x384xbf16>, vector<12x384xf32> -> vector<12x384xf32>
    %97 = arith.addf %91, %96 : vector<12x384xf32>
    %c2_99 = arith.constant 2 : index
    %c0_100 = arith.constant 0 : index
    %98 = vector.load %arg14[%c2_99, %c0_100] : memref<14x448xf32, #tpu.memory_space<vmem>>, vector<12x448xf32>
    %99 = arith.truncf %98 : vector<12x448xf32> to vector<12x448xbf16>
    %c4_101 = arith.constant 4 : index
    %c0_102 = arith.constant 0 : index
    %c0_103 = arith.constant 0 : index
    %100 = vector.load %arg4[%c4_101, %c0_102, %c0_103] : memref<6x448x384xbf16, #tpu.memory_space<vmem>>, vector<1x448x384xbf16>
    %101 = vector.shape_cast %100 : vector<1x448x384xbf16> to vector<448x384xbf16>
    %cst_104 = arith.constant dense<0.000000e+00> : vector<12x384xf32>
    %102 = tpu.matmul %99, %101, %cst_104 {dimension_numbers = #tpu.dot_dimension_numbers<[1], [0], [0], [1], [0, 0, 1, 1], [], []>} : vector<12x448xbf16>, vector<448x384xbf16>, vector<12x384xf32> -> vector<12x384xf32>
    %103 = arith.addf %97, %102 : vector<12x384xf32>
    %c2_105 = arith.constant 2 : index
    %c0_106 = arith.constant 0 : index
    %104 = vector.load %arg15[%c2_105, %c0_106] : memref<14x448xf32, #tpu.memory_space<vmem>>, vector<12x448xf32>
    %105 = arith.truncf %104 : vector<12x448xf32> to vector<12x448xbf16>
    %c5 = arith.constant 5 : index
    %c0_107 = arith.constant 0 : index
    %c0_108 = arith.constant 0 : index
    %106 = vector.load %arg4[%c5, %c0_107, %c0_108] : memref<6x448x384xbf16, #tpu.memory_space<vmem>>, vector<1x448x384xbf16>
    %107 = vector.shape_cast %106 : vector<1x448x384xbf16> to vector<448x384xbf16>
    %cst_109 = arith.constant dense<0.000000e+00> : vector<12x384xf32>
    %108 = tpu.matmul %105, %107, %cst_109 {dimension_numbers = #tpu.dot_dimension_numbers<[1], [0], [0], [1], [0, 0, 1, 1], [], []>} : vector<12x448xbf16>, vector<448x384xbf16>, vector<12x384xf32> -> vector<12x384xf32>
    %109 = arith.addf %103, %108 : vector<12x384xf32>
    %c0_110 = arith.constant 0 : index
    %c0_111 = arith.constant 0 : index
    %110 = vector.load %arg9[%c0_110, %c0_111] : memref<1x384xf32, #tpu.memory_space<vmem>>, vector<1x384xf32>
    %111 = vector.broadcast %110 : vector<1x384xf32> to vector<12x384xf32>
    %112 = arith.addf %109, %111 : vector<12x384xf32>
    %cst_112 = arith.constant 0.000000e+00 : f32
    %113 = vector.broadcast %cst_112 : f32 to vector<12x384xf32>
    %114 = arith.maximumf %112, %113 : vector<12x384xf32>
    %c0_113 = arith.constant 0 : index
    %c0_114 = arith.constant 0 : index
    %115 = vector.load %arg16[%c0_113, %c0_114] : memref<12x384xf32, #tpu.memory_space<vmem>>, vector<12x384xf32>
    tpu.vector_store %arg16[%c0_113, %c0_114], %114 {strides = array<i32>} : memref<12x384xf32, #tpu.memory_space<vmem>>, vector<12x384xf32>,
    %cst_115 = arith.constant 0.000000e+00 : f32
    %116 = vector.broadcast %cst_115 : f32 to vector<10x80xf32>
    %c0_116 = arith.constant 0 : index
    %c0_117 = arith.constant 0 : index
    %117 = vector.load %arg16[%c0_116, %c0_117] : memref<12x384xf32, #tpu.memory_space<vmem>>, vector<10x384xf32>
    %118 = arith.truncf %117 : vector<10x384xf32> to vector<10x384xbf16>
    %c0_118 = arith.constant 0 : index
    %c0_119 = arith.constant 0 : index
    %c0_120 = arith.constant 0 : index
    %119 = vector.load %arg5[%c0_118, %c0_119, %c0_120] : memref<3x384x80xbf16, #tpu.memory_space<vmem>>, vector<1x384x80xbf16>
    %120 = vector.shape_cast %119 : vector<1x384x80xbf16> to vector<384x80xbf16>
    %cst_121 = arith.constant dense<0.000000e+00> : vector<10x80xf32>
    %121 = tpu.matmul %118, %120, %cst_121 {dimension_numbers = #tpu.dot_dimension_numbers<[1], [0], [0], [1], [0, 0, 1, 1], [], []>} : vector<10x384xbf16>, vector<384x80xbf16>, vector<10x80xf32> -> vector<10x80xf32>
    %122 = arith.addf %116, %121 : vector<10x80xf32>
    %c1_122 = arith.constant 1 : index
    %c0_123 = arith.constant 0 : index
    %123 = vector.load %arg16[%c1_122, %c0_123] : memref<12x384xf32, #tpu.memory_space<vmem>>, vector<10x384xf32>
    %124 = arith.truncf %123 : vector<10x384xf32> to vector<10x384xbf16>
    %c1_124 = arith.constant 1 : index
    %c0_125 = arith.constant 0 : index
    %c0_126 = arith.constant 0 : index
    %125 = vector.load %arg5[%c1_124, %c0_125, %c0_126] : memref<3x384x80xbf16, #tpu.memory_space<vmem>>, vector<1x384x80xbf16>
    %126 = vector.shape_cast %125 : vector<1x384x80xbf16> to vector<384x80xbf16>
    %cst_127 = arith.constant dense<0.000000e+00> : vector<10x80xf32>
    %127 = tpu.matmul %124, %126, %cst_127 {dimension_numbers = #tpu.dot_dimension_numbers<[1], [0], [0], [1], [0, 0, 1, 1], [], []>} : vector<10x384xbf16>, vector<384x80xbf16>, vector<10x80xf32> -> vector<10x80xf32>
    %128 = arith.addf %122, %127 : vector<10x80xf32>
    %c2_128 = arith.constant 2 : index
    %c0_129 = arith.constant 0 : index
    %129 = vector.load %arg16[%c2_128, %c0_129] : memref<12x384xf32, #tpu.memory_space<vmem>>, vector<10x384xf32>
    %130 = arith.truncf %129 : vector<10x384xf32> to vector<10x384xbf16>
    %c2_130 = arith.constant 2 : index
    %c0_131 = arith.constant 0 : index
    %c0_132 = arith.constant 0 : index
    %131 = vector.load %arg5[%c2_130, %c0_131, %c0_132] : memref<3x384x80xbf16, #tpu.memory_space<vmem>>, vector<1x384x80xbf16>
    %132 = vector.shape_cast %131 : vector<1x384x80xbf16> to vector<384x80xbf16>
    %cst_133 = arith.constant dense<0.000000e+00> : vector<10x80xf32>
    %133 = tpu.matmul %130, %132, %cst_133 {dimension_numbers = #tpu.dot_dimension_numbers<[1], [0], [0], [1], [0, 0, 1, 1], [], []>} : vector<10x384xbf16>, vector<384x80xbf16>, vector<10x80xf32> -> vector<10x80xf32>
    %134 = arith.addf %128, %133 : vector<10x80xf32>
    %c0_134 = arith.constant 0 : index
    %c0_135 = arith.constant 0 : index
    %135 = vector.load %arg10[%c0_134, %c0_135] : memref<1x80xf32, #tpu.memory_space<vmem>>, vector<1x80xf32>
    %136 = vector.broadcast %135 : vector<1x80xf32> to vector<10x80xf32>
    %137 = arith.addf %134, %136 : vector<10x80xf32>
    %cst_136 = arith.constant 0.000000e+00 : f32
    %138 = vector.broadcast %cst_136 : f32 to vector<10x80xf32>
    %139 = arith.maximumf %137, %138 : vector<10x80xf32>
    %c0_137 = arith.constant 0 : index
    %c0_138 = arith.constant 0 : index
    %140 = vector.load %arg17[%c0_137, %c0_138] : memref<10x80xf32, #tpu.memory_space<vmem>>, vector<10x80xf32>
    tpu.vector_store %arg17[%c0_137, %c0_138], %139 {strides = array<i32>} : memref<10x80xf32, #tpu.memory_space<vmem>>, vector<10x80xf32>,
    %cst_139 = arith.constant 0.000000e+00 : f32
    %141 = vector.broadcast %cst_139 : f32 to vector<1x30xf32>
    %c0_140 = arith.constant 0 : index
    %c0_141 = arith.constant 0 : index
    %142 = vector.load %arg17[%c0_140, %c0_141] : memref<10x80xf32, #tpu.memory_space<vmem>>, vector<1x80xf32>
    %143 = arith.truncf %142 : vector<1x80xf32> to vector<1x80xbf16>
    %c0_142 = arith.constant 0 : index
    %c0_143 = arith.constant 0 : index
    %c0_144 = arith.constant 0 : index
    %144 = vector.load %arg6[%c0_142, %c0_143, %c0_144] : memref<10x80x30xbf16, #tpu.memory_space<vmem>>, vector<1x80x30xbf16>
    %145 = vector.shape_cast %144 : vector<1x80x30xbf16> to vector<80x30xbf16>
    %cst_145 = arith.constant dense<0.000000e+00> : vector<1x30xf32>
    %146 = tpu.matmul %143, %145, %cst_145 {dimension_numbers = #tpu.dot_dimension_numbers<[1], [0], [0], [1], [0, 0, 1, 1], [], []>} : vector<1x80xbf16>, vector<80x30xbf16>, vector<1x30xf32> -> vector<1x30xf32>
    %147 = arith.addf %141, %146 : vector<1x30xf32>
    %c1_146 = arith.constant 1 : index
    %c0_147 = arith.constant 0 : index
    %148 = vector.load %arg17[%c1_146, %c0_147] : memref<10x80xf32, #tpu.memory_space<vmem>>, vector<1x80xf32>
    %149 = arith.truncf %148 : vector<1x80xf32> to vector<1x80xbf16>
    %c1_148 = arith.constant 1 : index
    %c0_149 = arith.constant 0 : index
    %c0_150 = arith.constant 0 : index
    %150 = vector.load %arg6[%c1_148, %c0_149, %c0_150] : memref<10x80x30xbf16, #tpu.memory_space<vmem>>, vector<1x80x30xbf16>
    %151 = vector.shape_cast %150 : vector<1x80x30xbf16> to vector<80x30xbf16>
    %cst_151 = arith.constant dense<0.000000e+00> : vector<1x30xf32>
    %152 = tpu.matmul %149, %151, %cst_151 {dimension_numbers = #tpu.dot_dimension_numbers<[1], [0], [0], [1], [0, 0, 1, 1], [], []>} : vector<1x80xbf16>, vector<80x30xbf16>, vector<1x30xf32> -> vector<1x30xf32>
    %153 = arith.addf %147, %152 : vector<1x30xf32>
    %c2_152 = arith.constant 2 : index
    %c0_153 = arith.constant 0 : index
    %154 = vector.load %arg17[%c2_152, %c0_153] : memref<10x80xf32, #tpu.memory_space<vmem>>, vector<1x80xf32>
    %155 = arith.truncf %154 : vector<1x80xf32> to vector<1x80xbf16>
    %c2_154 = arith.constant 2 : index
    %c0_155 = arith.constant 0 : index
    %c0_156 = arith.constant 0 : index
    %156 = vector.load %arg6[%c2_154, %c0_155, %c0_156] : memref<10x80x30xbf16, #tpu.memory_space<vmem>>, vector<1x80x30xbf16>
    %157 = vector.shape_cast %156 : vector<1x80x30xbf16> to vector<80x30xbf16>
    %cst_157 = arith.constant dense<0.000000e+00> : vector<1x30xf32>
    %158 = tpu.matmul %155, %157, %cst_157 {dimension_numbers = #tpu.dot_dimension_numbers<[1], [0], [0], [1], [0, 0, 1, 1], [], []>} : vector<1x80xbf16>, vector<80x30xbf16>, vector<1x30xf32> -> vector<1x30xf32>
    %159 = arith.addf %153, %158 : vector<1x30xf32>
    %c3_158 = arith.constant 3 : index
    %c0_159 = arith.constant 0 : index
    %160 = vector.load %arg17[%c3_158, %c0_159] : memref<10x80xf32, #tpu.memory_space<vmem>>, vector<1x80xf32>
    %161 = arith.truncf %160 : vector<1x80xf32> to vector<1x80xbf16>
    %c3_160 = arith.constant 3 : index
    %c0_161 = arith.constant 0 : index
    %c0_162 = arith.constant 0 : index
    %162 = vector.load %arg6[%c3_160, %c0_161, %c0_162] : memref<10x80x30xbf16, #tpu.memory_space<vmem>>, vector<1x80x30xbf16>
    %163 = vector.shape_cast %162 : vector<1x80x30xbf16> to vector<80x30xbf16>
    %cst_163 = arith.constant dense<0.000000e+00> : vector<1x30xf32>
    %164 = tpu.matmul %161, %163, %cst_163 {dimension_numbers = #tpu.dot_dimension_numbers<[1], [0], [0], [1], [0, 0, 1, 1], [], []>} : vector<1x80xbf16>, vector<80x30xbf16>, vector<1x30xf32> -> vector<1x30xf32>
    %165 = arith.addf %159, %164 : vector<1x30xf32>
    %c4_164 = arith.constant 4 : index
    %c0_165 = arith.constant 0 : index
    %166 = vector.load %arg17[%c4_164, %c0_165] : memref<10x80xf32, #tpu.memory_space<vmem>>, vector<1x80xf32>
    %167 = arith.truncf %166 : vector<1x80xf32> to vector<1x80xbf16>
    %c4_166 = arith.constant 4 : index
    %c0_167 = arith.constant 0 : index
    %c0_168 = arith.constant 0 : index
    %168 = vector.load %arg6[%c4_166, %c0_167, %c0_168] : memref<10x80x30xbf16, #tpu.memory_space<vmem>>, vector<1x80x30xbf16>
    %169 = vector.shape_cast %168 : vector<1x80x30xbf16> to vector<80x30xbf16>
    %cst_169 = arith.constant dense<0.000000e+00> : vector<1x30xf32>
    %170 = tpu.matmul %167, %169, %cst_169 {dimension_numbers = #tpu.dot_dimension_numbers<[1], [0], [0], [1], [0, 0, 1, 1], [], []>} : vector<1x80xbf16>, vector<80x30xbf16>, vector<1x30xf32> -> vector<1x30xf32>
    %171 = arith.addf %165, %170 : vector<1x30xf32>
    %c5_170 = arith.constant 5 : index
    %c0_171 = arith.constant 0 : index
    %172 = vector.load %arg17[%c5_170, %c0_171] : memref<10x80xf32, #tpu.memory_space<vmem>>, vector<1x80xf32>
    %173 = arith.truncf %172 : vector<1x80xf32> to vector<1x80xbf16>
    %c5_172 = arith.constant 5 : index
    %c0_173 = arith.constant 0 : index
    %c0_174 = arith.constant 0 : index
    %174 = vector.load %arg6[%c5_172, %c0_173, %c0_174] : memref<10x80x30xbf16, #tpu.memory_space<vmem>>, vector<1x80x30xbf16>
    %175 = vector.shape_cast %174 : vector<1x80x30xbf16> to vector<80x30xbf16>
    %cst_175 = arith.constant dense<0.000000e+00> : vector<1x30xf32>
    %176 = tpu.matmul %173, %175, %cst_175 {dimension_numbers = #tpu.dot_dimension_numbers<[1], [0], [0], [1], [0, 0, 1, 1], [], []>} : vector<1x80xbf16>, vector<80x30xbf16>, vector<1x30xf32> -> vector<1x30xf32>
    %177 = arith.addf %171, %176 : vector<1x30xf32>
    %c6 = arith.constant 6 : index
    %c0_176 = arith.constant 0 : index
    %178 = vector.load %arg17[%c6, %c0_176] : memref<10x80xf32, #tpu.memory_space<vmem>>, vector<1x80xf32>
    %179 = arith.truncf %178 : vector<1x80xf32> to vector<1x80xbf16>
    %c6_177 = arith.constant 6 : index
    %c0_178 = arith.constant 0 : index
    %c0_179 = arith.constant 0 : index
    %180 = vector.load %arg6[%c6_177, %c0_178, %c0_179] : memref<10x80x30xbf16, #tpu.memory_space<vmem>>, vector<1x80x30xbf16>
    %181 = vector.shape_cast %180 : vector<1x80x30xbf16> to vector<80x30xbf16>
    %cst_180 = arith.constant dense<0.000000e+00> : vector<1x30xf32>
    %182 = tpu.matmul %179, %181, %cst_180 {dimension_numbers = #tpu.dot_dimension_numbers<[1], [0], [0], [1], [0, 0, 1, 1], [], []>} : vector<1x80xbf16>, vector<80x30xbf16>, vector<1x30xf32> -> vector<1x30xf32>
    %183 = arith.addf %177, %182 : vector<1x30xf32>
    %c7 = arith.constant 7 : index
    %c0_181 = arith.constant 0 : index
    %184 = vector.load %arg17[%c7, %c0_181] : memref<10x80xf32, #tpu.memory_space<vmem>>, vector<1x80xf32>
    %185 = arith.truncf %184 : vector<1x80xf32> to vector<1x80xbf16>
    %c7_182 = arith.constant 7 : index
    %c0_183 = arith.constant 0 : index
    %c0_184 = arith.constant 0 : index
    %186 = vector.load %arg6[%c7_182, %c0_183, %c0_184] : memref<10x80x30xbf16, #tpu.memory_space<vmem>>, vector<1x80x30xbf16>
    %187 = vector.shape_cast %186 : vector<1x80x30xbf16> to vector<80x30xbf16>
    %cst_185 = arith.constant dense<0.000000e+00> : vector<1x30xf32>
    %188 = tpu.matmul %185, %187, %cst_185 {dimension_numbers = #tpu.dot_dimension_numbers<[1], [0], [0], [1], [0, 0, 1, 1], [], []>} : vector<1x80xbf16>, vector<80x30xbf16>, vector<1x30xf32> -> vector<1x30xf32>
    %189 = arith.addf %183, %188 : vector<1x30xf32>
    %c8 = arith.constant 8 : index
    %c0_186 = arith.constant 0 : index
    %190 = vector.load %arg17[%c8, %c0_186] : memref<10x80xf32, #tpu.memory_space<vmem>>, vector<1x80xf32>
    %191 = arith.truncf %190 : vector<1x80xf32> to vector<1x80xbf16>
    %c8_187 = arith.constant 8 : index
    %c0_188 = arith.constant 0 : index
    %c0_189 = arith.constant 0 : index
    %192 = vector.load %arg6[%c8_187, %c0_188, %c0_189] : memref<10x80x30xbf16, #tpu.memory_space<vmem>>, vector<1x80x30xbf16>
    %193 = vector.shape_cast %192 : vector<1x80x30xbf16> to vector<80x30xbf16>
    %cst_190 = arith.constant dense<0.000000e+00> : vector<1x30xf32>
    %194 = tpu.matmul %191, %193, %cst_190 {dimension_numbers = #tpu.dot_dimension_numbers<[1], [0], [0], [1], [0, 0, 1, 1], [], []>} : vector<1x80xbf16>, vector<80x30xbf16>, vector<1x30xf32> -> vector<1x30xf32>
    %195 = arith.addf %189, %194 : vector<1x30xf32>
    %c9 = arith.constant 9 : index
    %c0_191 = arith.constant 0 : index
    %196 = vector.load %arg17[%c9, %c0_191] : memref<10x80xf32, #tpu.memory_space<vmem>>, vector<1x80xf32>
    %197 = arith.truncf %196 : vector<1x80xf32> to vector<1x80xbf16>
    %c9_192 = arith.constant 9 : index
    %c0_193 = arith.constant 0 : index
    %c0_194 = arith.constant 0 : index
    %198 = vector.load %arg6[%c9_192, %c0_193, %c0_194] : memref<10x80x30xbf16, #tpu.memory_space<vmem>>, vector<1x80x30xbf16>
    %199 = vector.shape_cast %198 : vector<1x80x30xbf16> to vector<80x30xbf16>
    %cst_195 = arith.constant dense<0.000000e+00> : vector<1x30xf32>
    %200 = tpu.matmul %197, %199, %cst_195 {dimension_numbers = #tpu.dot_dimension_numbers<[1], [0], [0], [1], [0, 0, 1, 1], [], []>} : vector<1x80xbf16>, vector<80x30xbf16>, vector<1x30xf32> -> vector<1x30xf32>
    %201 = arith.addf %195, %200 : vector<1x30xf32>
    %c0_196 = arith.constant 0 : index
    %c0_197 = arith.constant 0 : index
    %202 = vector.load %arg11[%c0_196, %c0_197] : memref<1x30xf32, #tpu.memory_space<vmem>>, vector<1x30xf32>
    %203 = arith.addf %201, %202 : vector<1x30xf32>
    %cst_198 = arith.constant 0.000000e+00 : f32
    %204 = vector.broadcast %cst_198 : f32 to vector<1x30xf32>
    %205 = arith.maximumf %203, %204 : vector<1x30xf32>
    %206 = arith.truncf %205 : vector<1x30xf32> to vector<1x30xbf16>
    %c0_199 = arith.constant 0 : index
    %c0_200 = arith.constant 0 : index
    %207 = vector.load %arg7[%c0_199, %c0_200] : memref<30x10xbf16, #tpu.memory_space<vmem>>, vector<30x10xbf16>
    %cst_201 = arith.constant dense<0.000000e+00> : vector<1x10xf32>
    %208 = tpu.matmul %206, %207, %cst_201 {dimension_numbers = #tpu.dot_dimension_numbers<[1], [0], [0], [1], [0, 0, 1, 1], [], []>} : vector<1x30xbf16>, vector<30x10xbf16>, vector<1x10xf32> -> vector<1x10xf32>
    %c0_202 = arith.constant 0 : index
    %c0_203 = arith.constant 0 : index
    %209 = vector.load %arg12[%c0_202, %c0_203] : memref<1x10xf32, #tpu.memory_space<vmem>>, vector<1x10xf32>
    %210 = arith.addf %208, %209 : vector<1x10xf32>
    %c0_204 = arith.constant 0 : index
    %c0_205 = arith.constant 0 : index
    %c0_206 = arith.constant 0 : index
    %211 = vector.load %arg13[%c0_204, %c0_205, %c0_206] : memref<1x1x10xf32, #tpu.memory_space<vmem>>, vector<1x1x10xf32>
    %212 = vector.shape_cast %211 : vector<1x1x10xf32> to vector<1x10xf32>
    %213 = vector.shape_cast %210 : vector<1x10xf32> to vector<1x1x10xf32>
    tpu.vector_store %arg13[%c0_204, %c0_205, %c0_206], %213 {strides = array<i32>} : memref<1x1x10xf32, #tpu.memory_space<vmem>>, vector<1x1x10xf32>,
    return
  }
  func.func @transform_0(%arg0: i32) -> (i32, i32, i32) {
    %c0_i32 = arith.constant 0 : i32
    %c0_i32_0 = arith.constant 0 : i32
    %c0_i32_1 = arith.constant 0 : i32
    return %arg0, %c0_i32, %c0_i32_0 : i32, i32, i32
  }
  func.func @transform_1(%arg0: i32) -> (i32, i32, i32) {
    %c0_i32 = arith.constant 0 : i32
    %c0_i32_0 = arith.constant 0 : i32
    %c0_i32_1 = arith.constant 0 : i32
    return %arg0, %c0_i32, %c0_i32_0 : i32, i32, i32
  }
  func.func @transform_2(%arg0: i32) -> (i32, i32, i32) {
    %c0_i32 = arith.constant 0 : i32
    %c0_i32_0 = arith.constant 0 : i32
    %c0_i32_1 = arith.constant 0 : i32
    %c0_i32_2 = arith.constant 0 : i32
    return %c0_i32, %c0_i32_0, %c0_i32_1 : i32, i32, i32
  }
  func.func @transform_3(%arg0: i32) -> (i32, i32, i32) {
    %c0_i32 = arith.constant 0 : i32
    %c0_i32_0 = arith.constant 0 : i32
    %c0_i32_1 = arith.constant 0 : i32
    %c0_i32_2 = arith.constant 0 : i32
    return %c0_i32, %c0_i32_0, %c0_i32_1 : i32, i32, i32
  }
  func.func @transform_4(%arg0: i32) -> (i32, i32, i32) {
    %c0_i32 = arith.constant 0 : i32
    %c0_i32_0 = arith.constant 0 : i32
    %c0_i32_1 = arith.constant 0 : i32
    %c0_i32_2 = arith.constant 0 : i32
    return %c0_i32, %c0_i32_0, %c0_i32_1 : i32, i32, i32
  }
  func.func @transform_5(%arg0: i32) -> (i32, i32, i32) {
    %c0_i32 = arith.constant 0 : i32
    %c0_i32_0 = arith.constant 0 : i32
    %c0_i32_1 = arith.constant 0 : i32
    %c0_i32_2 = arith.constant 0 : i32
    return %c0_i32, %c0_i32_0, %c0_i32_1 : i32, i32, i32
  }
  func.func @transform_6(%arg0: i32) -> (i32, i32) {
    %c0_i32 = arith.constant 0 : i32
    %c0_i32_0 = arith.constant 0 : i32
    %c0_i32_1 = arith.constant 0 : i32
    return %c0_i32, %c0_i32_0 : i32, i32
  }
  func.func @transform_7(%arg0: i32) -> (i32, i32) {
    %c0_i32 = arith.constant 0 : i32
    %c0_i32_0 = arith.constant 0 : i32
    %c0_i32_1 = arith.constant 0 : i32
    return %c0_i32, %c0_i32_0 : i32, i32
  }
  func.func @transform_8(%arg0: i32) -> (i32, i32) {
    %c0_i32 = arith.constant 0 : i32
    %c0_i32_0 = arith.constant 0 : i32
    %c0_i32_1 = arith.constant 0 : i32
    return %c0_i32, %c0_i32_0 : i32, i32
  }
  func.func @transform_9(%arg0: i32) -> (i32, i32) {
    %c0_i32 = arith.constant 0 : i32
    %c0_i32_0 = arith.constant 0 : i32
    %c0_i32_1 = arith.constant 0 : i32
    return %c0_i32, %c0_i32_0 : i32, i32
  }
  func.func @transform_10(%arg0: i32) -> (i32, i32) {
    %c0_i32 = arith.constant 0 : i32
    %c0_i32_0 = arith.constant 0 : i32
    %c0_i32_1 = arith.constant 0 : i32
    return %c0_i32, %c0_i32_0 : i32, i32
  }
  func.func @transform_11(%arg0: i32) -> (i32, i32) {
    %c0_i32 = arith.constant 0 : i32
    %c0_i32_0 = arith.constant 0 : i32
    %c0_i32_1 = arith.constant 0 : i32
    return %c0_i32, %c0_i32_0 : i32, i32
  }
  func.func @transform_12(%arg0: i32) -> (i32, i32, i32) {
    %c0_i32 = arith.constant 0 : i32
    %c0_i32_0 = arith.constant 0 : i32
    %c0_i32_1 = arith.constant 0 : i32
    return %arg0, %c0_i32, %c0_i32_0 : i32, i32, i32
  }
}

</mosaic_0001>

<llo_original>
// kernel: forward.1
$region0: #{forward.1}
  #allocation0 [shape = 'u32[]', space=smem, size = 0x4, offset = 0x4, fixed_abs, tag = 'smem constant byte address 0x4 - core index']
  #allocation1 [shape = 'u32[144,128]{1,0:T(1,128)}', space=vmem, size = 0x12000, scoped, tag = 'internal scratch']
  #allocation2 [shape = 'f32[14,448]{1,0:T(8,128)}', space=vmem, size = 0x8000, scoped, tag = 'scratch operand']
  #allocation3 [shape = 'f32[14,448]{1,0:T(8,128)}', space=vmem, size = 0x8000, scoped, tag = 'scratch operand']
  #allocation4 [shape = 'f32[12,384]{1,0:T(8,128)}', space=vmem, size = 0x6000, scoped, tag = 'scratch operand']
  #allocation5 [shape = 'f32[10,80]{1,0:T(8,128)}', space=vmem, size = 0x2000, scoped, tag = 'scratch operand']
  %s0 = inlined_call_operand.vmem [shape: bf16[2,16,96], index: 0, kind: input, shape index: {}]
  %s1 = inlined_call_operand.vmem [shape: bf16[2,16,96], index: 1, kind: input, shape index: {}]
  %s2 = inlined_call_operand.hbm [shape: bf16[5,96,448], index: 2, kind: input, shape index: {}]
  %s3 = inlined_call_operand.hbm [shape: bf16[6,448,384], index: 3, kind: input, shape index: {}]
  %s4 = inlined_call_operand.vmem [shape: bf16[3,384,80], index: 4, kind: input, shape index: {}]
  %s5 = inlined_call_operand.vmem [shape: bf16[10,80,30], index: 5, kind: input, shape index: {}]
  %s6 = inlined_call_operand.vmem [shape: bf16[30,10], index: 6, kind: input, shape index: {}]
  %s7 = inlined_call_operand.hbm [shape: f32[1,448], index: 7, kind: input, shape index: {}]
  %s8 = inlined_call_operand.hbm [shape: f32[1,384], index: 8, kind: input, shape index: {}]
  %s9 = inlined_call_operand.hbm [shape: f32[1,80], index: 9, kind: input, shape index: {}]
  %s10 = inlined_call_operand.hbm [shape: f32[1,30], index: 10, kind: input, shape index: {}]
  %s11 = inlined_call_operand.hbm [shape: f32[1,10], index: 11, kind: input, shape index: {}]
  %s12 = inlined_call_operand.hbm [shape: f32[2,1,10], index: 12, kind: output, shape index: {}]
  %s13 = sld [smem:[#allocation0]]
  $region109: #{forward.1} parent=0
    _
  %s15 = ssub.s32 1, %s13
  %s16 = scalar_select 0, %s15, %s13
  $region1: #{forward.1} parent=0
    #allocation6 [shape = 'u8[491520]{0}', space=vmem, size = 0x78000, scoped, tag = 'input window, operand 2, single buffered']
    #allocation7 [shape = 's32[2]{0}', space=sflag, size = 0x8, scoped, tag = 'scoped memory for forward.1']
    #allocation8 [shape = 's32[2]{0}', space=sflag, size = 0x8, scoped, tag = 'scoped memory for forward.1']
    #allocation9 [shape = 'u8[2064384]{0}', space=vmem, size = 0x1f8000, scoped, tag = 'input window, operand 3, single buffered']
    #allocation10 [shape = 's32[1]{0}', space=sflag, size = 0x4, scoped, tag = 'scoped memory for forward.1']
    #allocation11 [shape = 'u8[2048]{0}', space=vmem, size = 0x800, scoped, tag = 'input window, operand 7, single buffered']
    #allocation12 [shape = 'u8[1536]{0}', space=vmem, size = 0x800, scoped, tag = 'input window, operand 8, single buffered']
    #allocation13 [shape = 's32[1]{0}', space=sflag, size = 0x4, scoped, tag = 'scoped memory for forward.1']
    #allocation14 [shape = 'u8[512]{0}', space=vmem, size = 0x400, scoped, tag = 'input window, operand 9, single buffered']
    #allocation15 [shape = 'u8[512]{0}', space=vmem, size = 0x400, scoped, tag = 'input window, operand 10, single buffered']
    #allocation16 [shape = 's32[1]{0}', space=sflag, size = 0x4, scoped, tag = 'scoped memory for forward.1']
    #allocation17 [shape = 'u8[512]{0}', space=vmem, size = 0x400, scoped, tag = 'input window, operand 11, single buffered']
    #allocation18 [shape = 'u8[1024]{0}', space=vmem, size = 0x400, scoped, tag = 'output window, operand 0']
    %17 = vsyncpa [#allocation7], 0
    %18 = vsyncpa [#allocation10], 0
    %19 = vsyncpa [#allocation13], 0
    %20 = vsyncpa [#allocation16], 0
    %21 = vsyncpa [#allocation8], 0
    %s22 = scalar_lea.sflag [#allocation8], 1
    %23 = vsyncpa %s22, 0
    loop: start=0, step=1, limit=4
    $region2: #{forward.1} parent=1 // loop_pre_header
      _
    $region3: #{forward.1} parent=1 // loop_header
      %s25 = sphi 0, %s29
      %p26 = scmp.ge.s32.totalorder %s25, 4
      %s35 = sphi 0, %s37
      %s38 = sphi 0, %s35
      %s39 = sphi 0, %s38
      %s55 = sphi 0, %s39
      %s61 = sphi 0, %s63
      %s64 = sphi 0, %s61
      %s65 = sphi 0, %s64
      %s81 = sphi 0, %s65
      %s85 = sphi 0, %s85
      %s87 = sphi 0, %s85
      %s88 = sphi 0, %s87
      %s102 = sphi 0, %s88
      %s106 = sphi 0, %s106
      %s108 = sphi 0, %s106
      %s109 = sphi 0, %s108
      %s123 = sphi 0, %s109
      %s127 = sphi 0, %s127
      %s129 = sphi 0, %s127
      %s130 = sphi 0, %s129
      %s144 = sphi 0, %s130
      %s148 = sphi 0, %s148
      %s150 = sphi 0, %s148
      %s151 = sphi 0, %s150
      %s165 = sphi 0, %s151
      %s169 = sphi 0, %s169
      %s171 = sphi 0, %s169
      %s172 = sphi 0, %s171
      %s186 = sphi 0, %s172
      %s190 = sphi 0, %s190
      %s192 = sphi 0, %s190
      %s193 = sphi 0, %s192
      %s207 = sphi 0, %s193
      %s211 = sphi 0, %s211
      %s213 = sphi 0, %s211
      %s214 = sphi 0, %s213
      %s228 = sphi 0, %s214
      %s232 = sphi 0, %s232
      %s234 = sphi 0, %s232
      %s235 = sphi 0, %s234
      %s249 = sphi 0, %s235
      %s253 = sphi 0, %s253
      %s255 = sphi 0, %s253
      %s256 = sphi 0, %s255
      %s270 = sphi 0, %s256
      %s274 = sphi 0, %s274
      %s276 = sphi 0, %s274
      %s277 = sphi 0, %s276
      %s291 = sphi 0, %s277
      %s297 = sphi 0, %s299
      %s300 = sphi 0, %s297
      %s301 = sphi 0, %s300
      %s317 = sphi 0, %s301
    $region4: #{forward.1} parent=1 // loop_header_branch
      %28 = sbr.rel (%p26) target = $region8
    $region5: #{forward.1} parent=1 // loop_body
      %s30 = ssub.s32 %s25, 1
      %s31 = ssub.s32 %s25, 2
      %s32 = sadd.s32 %s25, 1
      %s33 = ssub.s32 %s25, %s32
      %p34 = scmp.eq.s32.totalorder %s33, 0
      %s36 = sadd.s32 %s35, 1
      %s37 = scalar_select %p34, %s35, %s36
      %p40 = pneg %p34
      %p41 = scmp.eq.s32.totalorder %s25, 1
      %p42 = por %p40, %p41
      %p43 = scmp.ne.s32.totalorder %s35, %s38
      %p44 = scmp.eq.s32.totalorder %s25, 0
      %p45 = por %p43, %p44
      %p46 = scmp.ne.s32.totalorder %s35, %s38
      %p47 = scmp.eq.s32.totalorder %s30, 1
      %p48 = por %p46, %p47
      %p49 = scmp.ne.s32.totalorder %s38, %s39
      %p50 = scmp.eq.s32.totalorder %s30, 0
      %p51 = por %p49, %p50
      %p52 = scmp.ne.s32.totalorder %s38, %s39
      %p53 = scmp.eq.s32.totalorder %s31, 1
      %p54 = por %p52, %p53
      %p56 = scmp.ne.s32.totalorder %s39, %s55
      %p57 = scmp.eq.s32.totalorder %s31, 0
      %p58 = por %p56, %p57
      %s59 = ssub.s32 %s25, %s32
      %p60 = scmp.eq.s32.totalorder %s59, 0
      %s62 = sadd.s32 %s61, 1
      %s63 = scalar_select %p60, %s61, %s62
      %p66 = pneg %p60
      %p67 = scmp.eq.s32.totalorder %s25, 1
      %p68 = por %p66, %p67
      %p69 = scmp.ne.s32.totalorder %s61, %s64
      %p70 = scmp.eq.s32.totalorder %s25, 0
      %p71 = por %p69, %p70
      %p72 = scmp.ne.s32.totalorder %s61, %s64
      %p73 = scmp.eq.s32.totalorder %s30, 1
      %p74 = por %p72, %p73
      %p75 = scmp.ne.s32.totalorder %s64, %s65
      %p76 = scmp.eq.s32.totalorder %s30, 0
      %p77 = por %p75, %p76
      %p78 = scmp.ne.s32.totalorder %s64, %s65
      %p79 = scmp.eq.s32.totalorder %s31, 1
      %p80 = por %p78, %p79
      %p82 = scmp.ne.s32.totalorder %s65, %s81
      %p83 = scmp.eq.s32.totalorder %s31, 0
      %p84 = por %p82, %p83
      %s86 = sadd.s32 %s85, 1
      %p89 = scmp.eq.s32.totalorder %s25, 1
      %p90 = scmp.ne.s32.totalorder %s85, %s87
      %p91 = scmp.eq.s32.totalorder %s25, 0
      %p92 = por %p90, %p91
      %p93 = scmp.ne.s32.totalorder %s85, %s87
      %p94 = scmp.eq.s32.totalorder %s30, 1
      %p95 = por %p93, %p94
      %p96 = scmp.ne.s32.totalorder %s87, %s88
      %p97 = scmp.eq.s32.totalorder %s30, 0
      %p98 = por %p96, %p97
      %p99 = scmp.ne.s32.totalorder %s87, %s88
      %p100 = scmp.eq.s32.totalorder %s31, 1
      %p101 = por %p99, %p100
      %p103 = scmp.ne.s32.totalorder %s88, %s102
      %p104 = scmp.eq.s32.totalorder %s31, 0
      %p105 = por %p103, %p104
      %s107 = sadd.s32 %s106, 1
      %p110 = scmp.eq.s32.totalorder %s25, 1
      %p111 = scmp.ne.s32.totalorder %s106, %s108
      %p112 = scmp.eq.s32.totalorder %s25, 0
      %p113 = por %p111, %p112
      %p114 = scmp.ne.s32.totalorder %s106, %s108
      %p115 = scmp.eq.s32.totalorder %s30, 1
      %p116 = por %p114, %p115
      %p117 = scmp.ne.s32.totalorder %s108, %s109
      %p118 = scmp.eq.s32.totalorder %s30, 0
      %p119 = por %p117, %p118
      %p120 = scmp.ne.s32.totalorder %s108, %s109
      %p121 = scmp.eq.s32.totalorder %s31, 1
      %p122 = por %p120, %p121
      %p124 = scmp.ne.s32.totalorder %s109, %s123
      %p125 = scmp.eq.s32.totalorder %s31, 0
      %p126 = por %p124, %p125
      %s128 = sadd.s32 %s127, 1
      %p131 = scmp.eq.s32.totalorder %s25, 1
      %p132 = scmp.ne.s32.totalorder %s127, %s129
      %p133 = scmp.eq.s32.totalorder %s25, 0
      %p134 = por %p132, %p133
      %p135 = scmp.ne.s32.totalorder %s127, %s129
      %p136 = scmp.eq.s32.totalorder %s30, 1
      %p137 = por %p135, %p136
      %p138 = scmp.ne.s32.totalorder %s129, %s130
      %p139 = scmp.eq.s32.totalorder %s30, 0
      %p140 = por %p138, %p139
      %p141 = scmp.ne.s32.totalorder %s129, %s130
      %p142 = scmp.eq.s32.totalorder %s31, 1
      %p143 = por %p141, %p142
      %p145 = scmp.ne.s32.totalorder %s130, %s144
      %p146 = scmp.eq.s32.totalorder %s31, 0
      %p147 = por %p145, %p146
      %s149 = sadd.s32 %s148, 1
      %p152 = scmp.eq.s32.totalorder %s25, 1
      %p153 = scmp.ne.s32.totalorder %s148, %s150
      %p154 = scmp.eq.s32.totalorder %s25, 0
      %p155 = por %p153, %p154
      %p156 = scmp.ne.s32.totalorder %s148, %s150
      %p157 = scmp.eq.s32.totalorder %s30, 1
      %p158 = por %p156, %p157
      %p159 = scmp.ne.s32.totalorder %s150, %s151
      %p160 = scmp.eq.s32.totalorder %s30, 0
      %p161 = por %p159, %p160
      %p162 = scmp.ne.s32.totalorder %s150, %s151
      %p163 = scmp.eq.s32.totalorder %s31, 1
      %p164 = por %p162, %p163
      %p166 = scmp.ne.s32.totalorder %s151, %s165
      %p167 = scmp.eq.s32.totalorder %s31, 0
      %p168 = por %p166, %p167
      %s170 = sadd.s32 %s169, 1
      %p173 = scmp.eq.s32.totalorder %s25, 1
      %p174 = scmp.ne.s32.totalorder %s169, %s171
      %p175 = scmp.eq.s32.totalorder %s25, 0
      %p176 = por %p174, %p175
      %p177 = scmp.ne.s32.totalorder %s169, %s171
      %p178 = scmp.eq.s32.totalorder %s30, 1
      %p179 = por %p177, %p178
      %p180 = scmp.ne.s32.totalorder %s171, %s172
      %p181 = scmp.eq.s32.totalorder %s30, 0
      %p182 = por %p180, %p181
      %p183 = scmp.ne.s32.totalorder %s171, %s172
      %p184 = scmp.eq.s32.totalorder %s31, 1
      %p185 = por %p183, %p184
      %p187 = scmp.ne.s32.totalorder %s172, %s186
      %p188 = scmp.eq.s32.totalorder %s31, 0
      %p189 = por %p187, %p188
      %s191 = sadd.s32 %s190, 1
      %p194 = scmp.eq.s32.totalorder %s25, 1
      %p195 = scmp.ne.s32.totalorder %s190, %s192
      %p196 = scmp.eq.s32.totalorder %s25, 0
      %p197 = por %p195, %p196
      %p198 = scmp.ne.s32.totalorder %s190, %s192
      %p199 = scmp.eq.s32.totalorder %s30, 1
      %p200 = por %p198, %p199
      %p201 = scmp.ne.s32.totalorder %s192, %s193
      %p202 = scmp.eq.s32.totalorder %s30, 0
      %p203 = por %p201, %p202
      %p204 = scmp.ne.s32.totalorder %s192, %s193
      %p205 = scmp.eq.s32.totalorder %s31, 1
      %p206 = por %p204, %p205
      %p208 = scmp.ne.s32.totalorder %s193, %s207
      %p209 = scmp.eq.s32.totalorder %s31, 0
      %p210 = por %p208, %p209
      %s212 = sadd.s32 %s211, 1
      %p215 = scmp.eq.s32.totalorder %s25, 1
      %p216 = scmp.ne.s32.totalorder %s211, %s213
      %p217 = scmp.eq.s32.totalorder %s25, 0
      %p218 = por %p216, %p217
      %p219 = scmp.ne.s32.totalorder %s211, %s213
      %p220 = scmp.eq.s32.totalorder %s30, 1
      %p221 = por %p219, %p220
      %p222 = scmp.ne.s32.totalorder %s213, %s214
      %p223 = scmp.eq.s32.totalorder %s30, 0
      %p224 = por %p222, %p223
      %p225 = scmp.ne.s32.totalorder %s213, %s214
      %p226 = scmp.eq.s32.totalorder %s31, 1
      %p227 = por %p225, %p226
      %p229 = scmp.ne.s32.totalorder %s214, %s228
      %p230 = scmp.eq.s32.totalorder %s31, 0
      %p231 = por %p229, %p230
      %s233 = sadd.s32 %s232, 1
      %p236 = scmp.eq.s32.totalorder %s25, 1
      %p237 = scmp.ne.s32.totalorder %s232, %s234
      %p238 = scmp.eq.s32.totalorder %s25, 0
      %p239 = por %p237, %p238
      %p240 = scmp.ne.s32.totalorder %s232, %s234
      %p241 = scmp.eq.s32.totalorder %s30, 1
      %p242 = por %p240, %p241
      %p243 = scmp.ne.s32.totalorder %s234, %s235
      %p244 = scmp.eq.s32.totalorder %s30, 0
      %p245 = por %p243, %p244
      %p246 = scmp.ne.s32.totalorder %s234, %s235
      %p247 = scmp.eq.s32.totalorder %s31, 1
      %p248 = por %p246, %p247
      %p250 = scmp.ne.s32.totalorder %s235, %s249
      %p251 = scmp.eq.s32.totalorder %s31, 0
      %p252 = por %p250, %p251
      %s254 = sadd.s32 %s253, 1
      %p257 = scmp.eq.s32.totalorder %s25, 1
      %p258 = scmp.ne.s32.totalorder %s253, %s255
      %p259 = scmp.eq.s32.totalorder %s25, 0
      %p260 = por %p258, %p259
      %p261 = scmp.ne.s32.totalorder %s253, %s255
      %p262 = scmp.eq.s32.totalorder %s30, 1
      %p263 = por %p261, %p262
      %p264 = scmp.ne.s32.totalorder %s255, %s256
      %p265 = scmp.eq.s32.totalorder %s30, 0
      %p266 = por %p264, %p265
      %p267 = scmp.ne.s32.totalorder %s255, %s256
      %p268 = scmp.eq.s32.totalorder %s31, 1
      %p269 = por %p267, %p268
      %p271 = scmp.ne.s32.totalorder %s256, %s270
      %p272 = scmp.eq.s32.totalorder %s31, 0
      %p273 = por %p271, %p272
      %s275 = sadd.s32 %s274, 1
      %p278 = scmp.eq.s32.totalorder %s25, 1
      %p279 = scmp.ne.s32.totalorder %s274, %s276
      %p280 = scmp.eq.s32.totalorder %s25, 0
      %p281 = por %p279, %p280
      %p282 = scmp.ne.s32.totalorder %s274, %s276
      %p283 = scmp.eq.s32.totalorder %s30, 1
      %p284 = por %p282, %p283
      %p285 = scmp.ne.s32.totalorder %s276, %s277
      %p286 = scmp.eq.s32.totalorder %s30, 0
      %p287 = por %p285, %p286
      %p288 = scmp.ne.s32.totalorder %s276, %s277
      %p289 = scmp.eq.s32.totalorder %s31, 1
      %p290 = por %p288, %p289
      %p292 = scmp.ne.s32.totalorder %s277, %s291
      %p293 = scmp.eq.s32.totalorder %s31, 0
      %p294 = por %p292, %p293
      %s295 = ssub.s32 %s25, %s32
      %p296 = scmp.eq.s32.totalorder %s295, 0
      %s298 = sadd.s32 %s297, 1
      %s299 = scalar_select %p296, %s297, %s298
      %p302 = pneg %p296
      %p303 = scmp.eq.s32.totalorder %s25, 1
      %p304 = por %p302, %p303
      %p305 = scmp.ne.s32.totalorder %s297, %s300
      %p306 = scmp.eq.s32.totalorder %s25, 0
      %p307 = por %p305, %p306
      %p308 = scmp.ne.s32.totalorder %s297, %s300
      %p309 = scmp.eq.s32.totalorder %s30, 1
      %p310 = por %p308, %p309
      %p311 = scmp.ne.s32.totalorder %s300, %s301
      %p312 = scmp.eq.s32.totalorder %s30, 0
      %p313 = por %p311, %p312
      %p314 = scmp.ne.s32.totalorder %s300, %s301
      %p315 = scmp.eq.s32.totalorder %s31, 1
      %p316 = por %p314, %p315
      %p318 = scmp.ne.s32.totalorder %s301, %s317
      %p319 = scmp.eq.s32.totalorder %s31, 0
      %p320 = por %p318, %p319
      %p321 = scmp.le.s32.totalorder 1, %s25
      %p322 = scmp.lt.s32.totalorder %s25, 3
      %p323 = pnand %p321, %p322
      %p324 = pneg %p323
      // Predicated region
      $region9: #{forward.1} parent=5 // pred_check
        _
      $region10: #{forward.1} parent=5 // pred_check_branch
        %326 = sbr.rel (%p323) target = $region12
      $region11: #{forward.1} parent=5 // pred_region
        %s327 = ssub.s32 %s25, 1
        // Predicated region
        $region13: #{forward.1} parent=11 // pred_check
          %p328 = pneg %p98
        $region14: #{forward.1} parent=11 // pred_check_branch
          %330 = sbr.rel (%p328) target = $region16
        $region15: #{forward.1} parent=11 // pred_region
          %s332 = ssub.s32 15360, 15360
          %333 = vsyncadd [#allocation7], %s332
          %s334 = sshll.u32 [#allocation6], 4
          %s335 = int_to_ptr.vmem [resolvable:$true] %s334
          %340 = dma.hbm_to_vmem [thread:$0]  %s2, 15360, %s335, [#allocation7], 256, 256, 16
        $region16: #{forward.1} parent=11 // pred_fallthru
          _
        // Predicated region
        $region17: #{forward.1} parent=11 // pred_check
          %p341 = pneg %p119
        $region18: #{forward.1} parent=11 // pred_check_branch
          %343 = sbr.rel (%p341) target = $region20
        $region19: #{forward.1} parent=11 // pred_region
          %s345 = ssub.s32 64512, 64512
          %346 = vsyncadd [#allocation10], %s345
          %s347 = sshll.u32 [#allocation9], 4
          %s348 = int_to_ptr.vmem [resolvable:$true] %s347
          %353 = dma.hbm_to_vmem [thread:$0]  %s3, 64512, %s348, [#allocation10], 192, 192, 12
        $region20: #{forward.1} parent=11 // pred_fallthru
          _
        // Predicated region
        $region21: #{forward.1} parent=11 // pred_check
          %p354 = pneg %p140
        $region22: #{forward.1} parent=11 // pred_check_branch
          %356 = sbr.rel (%p354) target = $region24
        $region23: #{forward.1} parent=11 // pred_region
          _
        $region24: #{forward.1} parent=11 // pred_fallthru
          _
        // Predicated region
        $region25: #{forward.1} parent=11 // pred_check
          %p357 = pneg %p161
        $region26: #{forward.1} parent=11 // pred_check_branch
          %359 = sbr.rel (%p357) target = $region28
        $region27: #{forward.1} parent=11 // pred_region
          _
        $region28: #{forward.1} parent=11 // pred_fallthru
          _
        // Predicated region
        $region29: #{forward.1} parent=11 // pred_check
          %p360 = pneg %p182
        $region30: #{forward.1} parent=11 // pred_check_branch
          %362 = sbr.rel (%p360) target = $region32
        $region31: #{forward.1} parent=11 // pred_region
          _
        $region32: #{forward.1} parent=11 // pred_fallthru
          _
        // Predicated region
        $region33: #{forward.1} parent=11 // pred_check
          %p363 = pneg %p203
        $region34: #{forward.1} parent=11 // pred_check_branch
          %365 = sbr.rel (%p363) target = $region36
        $region35: #{forward.1} parent=11 // pred_region
          %s367 = ssub.s32 64, 64
          %368 = vsyncadd [#allocation10], %s367
          %s370 = sshll.u32 [#allocation11], 4
          %s371 = int_to_ptr.vmem [resolvable:$true] %s370
          %373 = dma.hbm_to_vmem [thread:$0]  %s7, 64, %s371, [#allocation10]
        $region36: #{forward.1} parent=11 // pred_fallthru
          _
        // Predicated region
        $region37: #{forward.1} parent=11 // pred_check
          %p374 = pneg %p224
        $region38: #{forward.1} parent=11 // pred_check_branch
          %376 = sbr.rel (%p374) target = $region40
        $region39: #{forward.1} parent=11 // pred_region
          %s378 = ssub.s32 48, 48
          %379 = vsyncadd [#allocation13], %s378
          %s381 = sshll.u32 [#allocation12], 4
          %s382 = int_to_ptr.vmem [resolvable:$true] %s381
          %384 = dma.hbm_to_vmem [thread:$0]  %s8, 48, %s382, [#allocation13]
        $region40: #{forward.1} parent=11 // pred_fallthru
          _
        // Predicated region
        $region41: #{forward.1} parent=11 // pred_check
          %p385 = pneg %p245
        $region42: #{forward.1} parent=11 // pred_check_branch
          %387 = sbr.rel (%p385) target = $region44
        $region43: #{forward.1} parent=11 // pred_region
          %s389 = ssub.s32 16, 16
          %390 = vsyncadd [#allocation13], %s389
          %s392 = sshll.u32 [#allocation14], 4
          %s393 = int_to_ptr.vmem [resolvable:$true] %s392
          %395 = dma.hbm_to_vmem [thread:$0]  %s9, 16, %s393, [#allocation13]
        $region44: #{forward.1} parent=11 // pred_fallthru
          _
        // Predicated region
        $region45: #{forward.1} parent=11 // pred_check
          %p396 = pneg %p266
        $region46: #{forward.1} parent=11 // pred_check_branch
          %398 = sbr.rel (%p396) target = $region48
        $region47: #{forward.1} parent=11 // pred_region
          %s400 = ssub.s32 16, 16
          %401 = vsyncadd [#allocation16], %s400
          %s403 = sshll.u32 [#allocation15], 4
          %s404 = int_to_ptr.vmem [resolvable:$true] %s403
          %406 = dma.hbm_to_vmem [thread:$0]  %s10, 16, %s404, [#allocation16]
        $region48: #{forward.1} parent=11 // pred_fallthru
          _
        // Predicated region
        $region49: #{forward.1} parent=11 // pred_check
          %p407 = pneg %p287
        $region50: #{forward.1} parent=11 // pred_check_branch
          %409 = sbr.rel (%p407) target = $region52
        $region51: #{forward.1} parent=11 // pred_region
          %s411 = ssub.s32 16, 16
          %412 = vsyncadd [#allocation16], %s411
          %s414 = sshll.u32 [#allocation17], 4
          %s415 = int_to_ptr.vmem [resolvable:$true] %s414
          %417 = dma.hbm_to_vmem [thread:$0]  %s11, 16, %s415, [#allocation16]
        $region52: #{forward.1} parent=11 // pred_fallthru
          _
      $region12: #{forward.1} parent=5 // pred_fallthru
        _
      %p418 = scmp.lt.s32.totalorder %s25, 2
      // Predicated region
      $region53: #{forward.1} parent=5 // pred_check
        %p419 = pneg %p418
      $region54: #{forward.1} parent=5 // pred_check_branch
        %421 = sbr.rel (%p419) target = $region56
      $region55: #{forward.1} parent=5 // pred_region
        // Predicated region
        $region57: #{forward.1} parent=55 // pred_check
          %p422 = pneg %p45
        $region58: #{forward.1} parent=55 // pred_check_branch
          %424 = sbr.rel (%p422) target = $region60
        $region59: #{forward.1} parent=55 // pred_region
          %p425 = scmp.lt.s32.totalorder %s25, 1
          %s426 = scalar_select %p425, %s25, 1
          %s427 = smul.addr %s426, 2
          %s428 = smul.addr %s427, 4
          %s429 = scalar_lea.vmem %s0, %s428
        $region60: #{forward.1} parent=55 // pred_fallthru
          _
        // Predicated region
        $region61: #{forward.1} parent=55 // pred_check
          %p430 = pneg %p71
        $region62: #{forward.1} parent=55 // pred_check_branch
          %432 = sbr.rel (%p430) target = $region64
        $region63: #{forward.1} parent=55 // pred_region
          %p433 = scmp.lt.s32.totalorder %s25, 1
          %s434 = scalar_select %p433, %s25, 1
          %s435 = smul.addr %s434, 2
          %s436 = smul.addr %s435, 4
          %s437 = scalar_lea.vmem %s1, %s436
        $region64: #{forward.1} parent=55 // pred_fallthru
          _
      $region56: #{forward.1} parent=5 // pred_fallthru
        _
      %p438 = scmp.le.s32.totalorder 1, %s25
      %p439 = scmp.lt.s32.totalorder %s25, 3
      %p440 = pnand %p438, %p439
      %p441 = pneg %p440
      // Predicated region
      $region65: #{forward.1} parent=5 // pred_check
        _
      $region66: #{forward.1} parent=5 // pred_check_branch
        %443 = sbr.rel (%p440) target = $region68
      $region67: #{forward.1} parent=5 // pred_region
        %s444 = ssub.s32 %s25, 1
        // Predicated region
        $region69: #{forward.1} parent=67 // pred_check
          %p445 = pneg %p98
        $region70: #{forward.1} parent=67 // pred_check_branch
          %447 = sbr.rel (%p445) target = $region72
        $region71: #{forward.1} parent=67 // pred_region
          %448 = dma.done [#allocation7], 15360
        $region72: #{forward.1} parent=67 // pred_fallthru
          _
        // Predicated region
        $region73: #{forward.1} parent=67 // pred_check
          %p449 = pneg %p119
        $region74: #{forward.1} parent=67 // pred_check_branch
          %451 = sbr.rel (%p449) target = $region76
        $region75: #{forward.1} parent=67 // pred_region
          %452 = dma.done [#allocation10], 64512
        $region76: #{forward.1} parent=67 // pred_fallthru
          _
        // Predicated region
        $region77: #{forward.1} parent=67 // pred_check
          %p453 = pneg %p203
        $region78: #{forward.1} parent=67 // pred_check_branch
          %455 = sbr.rel (%p453) target = $region80
        $region79: #{forward.1} parent=67 // pred_region
          %456 = dma.done [#allocation10], 64
        $region80: #{forward.1} parent=67 // pred_fallthru
          _
        // Predicated region
        $region81: #{forward.1} parent=67 // pred_check
          %p457 = pneg %p224
        $region82: #{forward.1} parent=67 // pred_check_branch
          %459 = sbr.rel (%p457) target = $region84
        $region83: #{forward.1} parent=67 // pred_region
          %460 = dma.done [#allocation13], 48
        $region84: #{forward.1} parent=67 // pred_fallthru
          _
        // Predicated region
        $region85: #{forward.1} parent=67 // pred_check
          %p461 = pneg %p245
        $region86: #{forward.1} parent=67 // pred_check_branch
          %463 = sbr.rel (%p461) target = $region88
        $region87: #{forward.1} parent=67 // pred_region
          %464 = dma.done [#allocation13], 16
        $region88: #{forward.1} parent=67 // pred_fallthru
          _
        // Predicated region
        $region89: #{forward.1} parent=67 // pred_check
          %p465 = pneg %p266
        $region90: #{forward.1} parent=67 // pred_check_branch
          %467 = sbr.rel (%p465) target = $region92
        $region91: #{forward.1} parent=67 // pred_region
          %468 = dma.done [#allocation16], 16
        $region92: #{forward.1} parent=67 // pred_fallthru
          _
        // Predicated region
        $region93: #{forward.1} parent=67 // pred_check
          %p469 = pneg %p287
        $region94: #{forward.1} parent=67 // pred_check_branch
          %471 = sbr.rel (%p469) target = $region96
        $region95: #{forward.1} parent=67 // pred_region
          %472 = dma.done [#allocation16], 16
        $region96: #{forward.1} parent=67 // pred_fallthru
          _
        %p473 = scmp.lt.s32.totalorder %s30, 1
        %s474 = scalar_select %p473, %s30, 1
        %s475 = smul.addr %s474, 2
        %s476 = smul.addr %s475, 4
        %s477 = scalar_lea.vmem %s0, %s476
        %p478 = pneg %p51
        %p479 = pneg %p48
        %p480 = scmp.lt.s32.totalorder %s30, 1
        %s481 = scalar_select %p480, %s30, 1
        %s482 = smul.addr %s481, 2
        %s483 = smul.addr %s482, 4
        %s484 = scalar_lea.vmem %s1, %s483
        %p485 = pneg %p77
        %p486 = pneg %p74
        %p487 = pneg %p98
        %p488 = pneg %p95
        %p489 = pneg %p119
        %p490 = pneg %p116
        %p491 = pneg %p140
        %p492 = pneg %p137
        %p493 = pneg %p161
        %p494 = pneg %p158
        %p495 = pneg %p182
        %p496 = pneg %p179
        %p497 = pneg %p203
        %p498 = pneg %p200
        %p499 = pneg %p224
        %p500 = pneg %p221
        %p501 = pneg %p245
        %p502 = pneg %p242
        %p503 = pneg %p266
        %p504 = pneg %p263
        %p505 = pneg %p287
        %p506 = pneg %p284
        %p507 = pneg %p313
        %p508 = pneg %p310
        %s509 = sand.u32 %s300, 1
        %s510 = scalar_lea.sflag [#allocation8], %s509
        %s511 = sand.u32 %s300, 1
        %s512 = scalar_lea.vmem [#allocation18], %s511
        %p513 = scmp.lt.s32.totalorder %s30, 1
        %s514 = scalar_select %p513, %s30, 1
        %s515 = smul.addr %s514, 2
        %s516 = smul.addr %s515, 4
        %s517 = scalar_lea.vmem %s0, %s516
        %p518 = scmp.lt.s32.totalorder %s30, 1
        %s519 = scalar_select %p518, %s30, 1
        %s520 = smul.addr %s519, 2
        %s521 = smul.addr %s520, 4
        %s522 = scalar_lea.vmem %s1, %s521
        %v524 = vld [vmem:[#allocation11] sm:$0xf]
        %v525 = vld [vmem:[%s517] sm:$0xf]
        %v526 = vld [vmem:[%s517 + $0x4] sm:$0x7]
        %v527 = vld [vmem:[#allocation6] sm:$0xff]
        %v528 = vld [vmem:[#allocation6 + $0x8] sm:$0xff]
        %v529 = vld [vmem:[#allocation6 + $0x10] sm:$0xff]
        %v530 = vld [vmem:[#allocation6 + $0x18] sm:$0xff]
        %v531 = vld [vmem:[#allocation6 + $0x20] sm:$0xff]
        %v532 = vld [vmem:[#allocation6 + $0x28] sm:$0xff]
        %v533 = vld [vmem:[#allocation6 + $0x30] sm:$0xff]
        %v534 = vld [vmem:[#allocation6 + $0x38] sm:$0xff]
        %v535 = vld [vmem:[#allocation6 + $0x40] sm:$0xff]
        %v536 = vld [vmem:[#allocation6 + $0x48] sm:$0xff]
        %v537 = vld [vmem:[#allocation6 + $0x50] sm:$0xff]
        %v538 = vld [vmem:[#allocation6 + $0x58] sm:$0xff]
        %v539 = vld [vmem:[#allocation6 + $0x60] sm:$0xff]
        %v540 = vld [vmem:[#allocation6 + $0x68] sm:$0xff]
        %v541 = vld [vmem:[#allocation6 + $0x70] sm:$0xff]
        %v542 = vld [vmem:[#allocation6 + $0x78] sm:$0xff]
        %v543 = vld [vmem:[#allocation6 + $0x80] sm:$0xff]
        %v544 = vld [vmem:[#allocation6 + $0x88] sm:$0xff]
        %v545 = vld [vmem:[#allocation6 + $0x90] sm:$0xff]
        %v546 = vld [vmem:[#allocation6 + $0x98] sm:$0xff]
        %v547 = vld [vmem:[#allocation6 + $0xa0] sm:$0xff]
        %v548 = vld [vmem:[#allocation6 + $0xa8] sm:$0xff]
        %v549 = vld [vmem:[#allocation6 + $0xb0] sm:$0xff]
        %v550 = vld [vmem:[#allocation6 + $0xb8] sm:$0xff]
        %v551 = vld [vmem:[%s522] sm:$0xf]
        %v552 = vld [vmem:[%s522 + $0x4] sm:$0x7]
        %s553 = scalar_lea.vmem [#allocation6], 192
        %v554 = vld [vmem:[%s553] sm:$0xff]
        %v555 = vld [vmem:[%s553 + $0x8] sm:$0xff]
        %v556 = vld [vmem:[%s553 + $0x10] sm:$0xff]
        %v557 = vld [vmem:[%s553 + $0x18] sm:$0xff]
        %v558 = vld [vmem:[%s553 + $0x20] sm:$0xff]
        %v559 = vld [vmem:[%s553 + $0x28] sm:$0xff]
        %v560 = vld [vmem:[%s553 + $0x30] sm:$0xff]
        %v561 = vld [vmem:[%s553 + $0x38] sm:$0xff]
        %v562 = vld [vmem:[%s553 + $0x40] sm:$0xff]
        %v563 = vld [vmem:[%s553 + $0x48] sm:$0xff]
        %v564 = vld [vmem:[%s553 + $0x50] sm:$0xff]
        %v565 = vld [vmem:[%s553 + $0x58] sm:$0xff]
        %v566 = vld [vmem:[%s553 + $0x60] sm:$0xff]
        %v567 = vld [vmem:[%s553 + $0x68] sm:$0xff]
        %v568 = vld [vmem:[%s553 + $0x70] sm:$0xff]
        %v569 = vld [vmem:[%s553 + $0x78] sm:$0xff]
        %v570 = vld [vmem:[%s553 + $0x80] sm:$0xff]
        %v571 = vld [vmem:[%s553 + $0x88] sm:$0xff]
        %v572 = vld [vmem:[%s553 + $0x90] sm:$0xff]
        %v573 = vld [vmem:[%s553 + $0x98] sm:$0xff]
        %v574 = vld [vmem:[%s553 + $0xa0] sm:$0xff]
        %v575 = vld [vmem:[%s553 + $0xa8] sm:$0xff]
        %v576 = vld [vmem:[%s553 + $0xb0] sm:$0xff]
        %v577 = vld [vmem:[%s553 + $0xb8] sm:$0xff]
        %v580 = vunpack.c.l.b16 %v551
        %v581 = vunpack.c.l.b16 %v552
        %v582 = vpack.c.b16 %v581, %v580
        %v607 = vunpack.c.l.b16 %v554
        %v608 = vunpack.c.h.b16 %v554
        %v609 = vunpack.c.l.b16 %v555
        %v610 = vunpack.c.h.b16 %v555
        %v611 = vunpack.c.l.b16 %v556
        %v612 = vunpack.c.h.b16 %v556
        %v613 = vunpack.c.l.b16 %v557
        %v614 = vunpack.c.h.b16 %v557
        %v615 = vunpack.c.l.b16 %v558
        %v616 = vunpack.c.h.b16 %v558
        %v617 = vunpack.c.l.b16 %v559
        %v618 = vunpack.c.h.b16 %v559
        %v619 = vunpack.c.l.b16 %v560
        %v620 = vunpack.c.h.b16 %v560
        %v621 = vunpack.c.l.b16 %v561
        %v622 = vunpack.c.h.b16 %v561
        %v623 = vunpack.c.l.b16 %v562
        %v624 = vunpack.c.h.b16 %v562
        %v625 = vunpack.c.l.b16 %v563
        %v626 = vunpack.c.h.b16 %v563
        %v627 = vunpack.c.l.b16 %v564
        %v628 = vunpack.c.h.b16 %v564
        %v629 = vunpack.c.l.b16 %v565
        %v630 = vunpack.c.h.b16 %v565
        %v631 = vunpack.c.l.b16 %v566
        %v632 = vunpack.c.h.b16 %v566
        %v633 = vunpack.c.l.b16 %v567
        %v634 = vunpack.c.h.b16 %v567
        %v635 = vunpack.c.l.b16 %v568
        %v636 = vunpack.c.h.b16 %v568
        %v637 = vunpack.c.l.b16 %v569
        %v638 = vunpack.c.h.b16 %v569
        %v639 = vunpack.c.l.b16 %v570
        %v640 = vunpack.c.h.b16 %v570
        %v641 = vunpack.c.l.b16 %v571
        %v642 = vunpack.c.h.b16 %v571
        %v643 = vunpack.c.l.b16 %v572
        %v644 = vunpack.c.h.b16 %v572
        %v645 = vunpack.c.l.b16 %v573
        %v646 = vunpack.c.h.b16 %v573
        %v647 = vunpack.c.l.b16 %v574
        %v648 = vunpack.c.h.b16 %v574
        %v649 = vunpack.c.l.b16 %v575
        %v650 = vunpack.c.h.b16 %v575
        %v651 = vunpack.c.l.b16 %v576
        %v652 = vunpack.c.h.b16 %v576
        %v653 = vunpack.c.l.b16 %v577
        %v654 = vunpack.c.h.b16 %v577
        %v655 = vpack.c.b16 %v611, %v607
        %v656 = vpack.c.b16 %v612, %v608
        %v657 = vpack.c.b16 %v613, %v609
        %v658 = vpack.c.b16 %v614, %v610
        %v659 = vpack.c.b16 %v619, %v615
        %v660 = vpack.c.b16 %v620, %v616
        %v661 = vpack.c.b16 %v621, %v617
        %v662 = vpack.c.b16 %v622, %v618
        %v663 = vpack.c.b16 %v627, %v623
        %v664 = vpack.c.b16 %v628, %v624
        %v665 = vpack.c.b16 %v629, %v625
        %v666 = vpack.c.b16 %v630, %v626
        %v667 = vpack.c.b16 %v635, %v631
        %v668 = vpack.c.b16 %v636, %v632
        %v669 = vpack.c.b16 %v637, %v633
        %v670 = vpack.c.b16 %v638, %v634
        %v671 = vpack.c.b16 %v643, %v639
        %v672 = vpack.c.b16 %v644, %v640
        %v673 = vpack.c.b16 %v645, %v641
        %v674 = vpack.c.b16 %v646, %v642
        %v675 = vpack.c.b16 %v651, %v647
        %v676 = vpack.c.b16 %v652, %v648
        %v677 = vpack.c.b16 %v653, %v649
        %v678 = vpack.c.b16 %v654, %v650
        %vm703 = vcmask 785408
        %v705 = vsel %vm703, %v582, 0
        %707 = vmatprep.subr.bf16.mxu0 %v656
        %708 = vmatpush1.bf16.msra.mxu0 %v655
        %709 = vmatprep.subr.bf16.mxu0 %v660
        %710 = vmatpush1.bf16.msra.mxu0 %v659
        %711 = vmatprep.subr.bf16.mxu0 %v664
        %712 = vmatpush1.bf16.msra.mxu0 %v663
        %713 = vmatprep.subr.bf16.mxu0 %v668
        %714 = vmatpush1.bf16.msra.mxu0 %v667
        %715 = vmatprep.subr.bf16.mxu0 %v672
        %716 = vmatpush1.bf16.msra.mxu0 %v671
        %717 = vmatprep.subr.bf16.mxu0 %v676
        %718 = vmatpush1.bf16.msra.mxu0 %v675
        %719 = vmatprep.subr.bf16.mxu0 0
        %720 = vmatpush1.bf16.msra.mxu0 0
        %721 = vmatprep.subr.bf16.mxu0 0
        %722 = vmatpush1.bf16.msra.mxu0 0
        %723 = vmatprep.subr.bf16.mxu0 0
        %724 = vmatpush1.bf16.msra.mxu0 0
        %725 = vmatprep.subr.bf16.mxu0 0
        %726 = vmatpush1.bf16.msra.mxu0 0
        %727 = vmatprep.subr.bf16.mxu0 0
        %728 = vmatpush1.bf16.msra.mxu0 0
        %729 = vmatprep.subr.bf16.mxu0 0
        %730 = vmatpush1.bf16.msra.mxu0 0
        %731 = vmatprep.subr.bf16.mxu0 0
        %732 = vmatpush1.bf16.msra.mxu0 0
        %733 = vmatprep.subr.bf16.mxu0 0
        %734 = vmatpush1.bf16.msra.mxu0 0
        %735 = vmatprep.subr.bf16.mxu0 0
        %736 = vmatpush1.bf16.msra.mxu0 0
        %737 = vmatprep.subr.bf16.mxu0 0
        %738 = vmatpush1.bf16.msra.mxu0 0
        %739 = vmatprep.mubr.bf16.mxu0 0
        %740 = vmatmul.mubr.bf16.gmra.mrb[0].mxu0 %v705
        %v741 = vpop.f32.mrb[0].mxu0
        %v742 = vadd.f32 0.0, %v741
        %v743 = vpop.f32.mrb[0].mxu0
        %v744 = vadd.f32 0.0, %v743
        %v745 = vpop.f32.mrb[0].mxu0
        %v746 = vadd.f32 0.0, %v745
        %v747 = vpop.f32.mrb[0].mxu0
        %v748 = vadd.f32 0.0, %v747
        %749 = vdwg.mxu0
        %750 = vmatprep.subr.bf16.mxu0 %v658
        %751 = vmatpush1.bf16.msra.mxu0 %v657
        %752 = vmatprep.subr.bf16.mxu0 %v662
        %753 = vmatpush1.bf16.msra.mxu0 %v661
        %754 = vmatprep.subr.bf16.mxu0 %v666
        %755 = vmatpush1.bf16.msra.mxu0 %v665
        %756 = vmatprep.subr.bf16.mxu0 %v670
        %757 = vmatpush1.bf16.msra.mxu0 %v669
        %758 = vmatprep.subr.bf16.mxu0 %v674
        %759 = vmatpush1.bf16.msra.mxu0 %v673
        %760 = vmatprep.subr.bf16.mxu0 %v678
        %761 = vmatpush1.bf16.msra.mxu0 %v677
        %762 = vmatprep.subr.bf16.mxu0 0
        %763 = vmatpush1.bf16.msra.mxu0 0
        %764 = vmatprep.subr.bf16.mxu0 0
        %765 = vmatpush1.bf16.msra.mxu0 0
        %766 = vmatprep.subr.bf16.mxu0 0
        %767 = vmatpush1.bf16.msra.mxu0 0
        %768 = vmatprep.subr.bf16.mxu0 0
        %769 = vmatpush1.bf16.msra.mxu0 0
        %770 = vmatprep.subr.bf16.mxu0 0
        %771 = vmatpush1.bf16.msra.mxu0 0
        %772 = vmatprep.subr.bf16.mxu0 0
        %773 = vmatpush1.bf16.msra.mxu0 0
        %774 = vmatprep.subr.bf16.mxu0 0
        %775 = vmatpush1.bf16.msra.mxu0 0
        %776 = vmatprep.subr.bf16.mxu0 0
        %777 = vmatpush1.bf16.msra.mxu0 0
        %778 = vmatprep.subr.bf16.mxu0 0
        %779 = vmatpush1.bf16.msra.mxu0 0
        %780 = vmatprep.subr.bf16.mxu0 0
        %781 = vmatpush1.bf16.msra.mxu0 0
        %782 = vmatprep.mubr.bf16.mxu0 0
        %783 = vmatmul.mubr.bf16.gmra.mrb[0].mxu0 %v705
        %v784 = vpop.f32.mrb[0].mxu0
        %v785 = vadd.f32 0.0, %v784
        %v786 = vpop.f32.mrb[0].mxu0
        %v787 = vadd.f32 0.0, %v786
        %v788 = vpop.f32.mrb[0].mxu0
        %v789 = vadd.f32 0.0, %v788
        %v790 = vpop.f32.mrb[0].mxu0
        %v791 = vadd.f32 0.0, %v790
        %792 = vdwg.mxu0
        %v795 = vunpack.c.l.b16 %v525
        %v796 = vunpack.c.l.b16 %v526
        %v797 = vpack.c.b16 %v796, %v795
        %v822 = vunpack.c.l.b16 %v527
        %v823 = vunpack.c.h.b16 %v527
        %v824 = vunpack.c.l.b16 %v528
        %v825 = vunpack.c.h.b16 %v528
        %v826 = vunpack.c.l.b16 %v529
        %v827 = vunpack.c.h.b16 %v529
        %v828 = vunpack.c.l.b16 %v530
        %v829 = vunpack.c.h.b16 %v530
        %v830 = vunpack.c.l.b16 %v531
        %v831 = vunpack.c.h.b16 %v531
        %v832 = vunpack.c.l.b16 %v532
        %v833 = vunpack.c.h.b16 %v532
        %v834 = vunpack.c.l.b16 %v533
        %v835 = vunpack.c.h.b16 %v533
        %v836 = vunpack.c.l.b16 %v534
        %v837 = vunpack.c.h.b16 %v534
        %v838 = vunpack.c.l.b16 %v535
        %v839 = vunpack.c.h.b16 %v535
        %v840 = vunpack.c.l.b16 %v536
        %v841 = vunpack.c.h.b16 %v536
        %v842 = vunpack.c.l.b16 %v537
        %v843 = vunpack.c.h.b16 %v537
        %v844 = vunpack.c.l.b16 %v538
        %v845 = vunpack.c.h.b16 %v538
        %v846 = vunpack.c.l.b16 %v539
        %v847 = vunpack.c.h.b16 %v539
        %v848 = vunpack.c.l.b16 %v540
        %v849 = vunpack.c.h.b16 %v540
        %v850 = vunpack.c.l.b16 %v541
        %v851 = vunpack.c.h.b16 %v541
        %v852 = vunpack.c.l.b16 %v542
        %v853 = vunpack.c.h.b16 %v542
        %v854 = vunpack.c.l.b16 %v543
        %v855 = vunpack.c.h.b16 %v543
        %v856 = vunpack.c.l.b16 %v544
        %v857 = vunpack.c.h.b16 %v544
        %v858 = vunpack.c.l.b16 %v545
        %v859 = vunpack.c.h.b16 %v545
        %v860 = vunpack.c.l.b16 %v546
        %v861 = vunpack.c.h.b16 %v546
        %v862 = vunpack.c.l.b16 %v547
        %v863 = vunpack.c.h.b16 %v547
        %v864 = vunpack.c.l.b16 %v548
        %v865 = vunpack.c.h.b16 %v548
        %v866 = vunpack.c.l.b16 %v549
        %v867 = vunpack.c.h.b16 %v549
        %v868 = vunpack.c.l.b16 %v550
        %v869 = vunpack.c.h.b16 %v550
        %v870 = vpack.c.b16 %v826, %v822
        %v871 = vpack.c.b16 %v827, %v823
        %v872 = vpack.c.b16 %v828, %v824
        %v873 = vpack.c.b16 %v829, %v825
        %v874 = vpack.c.b16 %v834, %v830
        %v875 = vpack.c.b16 %v835, %v831
        %v876 = vpack.c.b16 %v836, %v832
        %v877 = vpack.c.b16 %v837, %v833
        %v878 = vpack.c.b16 %v842, %v838
        %v879 = vpack.c.b16 %v843, %v839
        %v880 = vpack.c.b16 %v844, %v840
        %v881 = vpack.c.b16 %v845, %v841
        %v882 = vpack.c.b16 %v850, %v846
        %v883 = vpack.c.b16 %v851, %v847
        %v884 = vpack.c.b16 %v852, %v848
        %v885 = vpack.c.b16 %v853, %v849
        %v886 = vpack.c.b16 %v858, %v854
        %v887 = vpack.c.b16 %v859, %v855
        %v888 = vpack.c.b16 %v860, %v856
        %v889 = vpack.c.b16 %v861, %v857
        %v890 = vpack.c.b16 %v866, %v862
        %v891 = vpack.c.b16 %v867, %v863
        %v892 = vpack.c.b16 %v868, %v864
        %v893 = vpack.c.b16 %v869, %v865
        %v919 = vsel %vm703, %v797, 0
        %921 = vmatprep.subr.bf16.mxu0 %v871
        %922 = vmatpush1.bf16.msra.mxu0 %v870
        %923 = vmatprep.subr.bf16.mxu0 %v875
        %924 = vmatpush1.bf16.msra.mxu0 %v874
        %925 = vmatprep.subr.bf16.mxu0 %v879
        %926 = vmatpush1.bf16.msra.mxu0 %v878
        %927 = vmatprep.subr.bf16.mxu0 %v883
        %928 = vmatpush1.bf16.msra.mxu0 %v882
        %929 = vmatprep.subr.bf16.mxu0 %v887
        %930 = vmatpush1.bf16.msra.mxu0 %v886
        %931 = vmatprep.subr.bf16.mxu0 %v891
        %932 = vmatpush1.bf16.msra.mxu0 %v890
        %933 = vmatprep.subr.bf16.mxu0 0
        %934 = vmatpush1.bf16.msra.mxu0 0
        %935 = vmatprep.subr.bf16.mxu0 0
        %936 = vmatpush1.bf16.msra.mxu0 0
        %937 = vmatprep.subr.bf16.mxu0 0
        %938 = vmatpush1.bf16.msra.mxu0 0
        %939 = vmatprep.subr.bf16.mxu0 0
        %940 = vmatpush1.bf16.msra.mxu0 0
        %941 = vmatprep.subr.bf16.mxu0 0
        %942 = vmatpush1.bf16.msra.mxu0 0
        %943 = vmatprep.subr.bf16.mxu0 0
        %944 = vmatpush1.bf16.msra.mxu0 0
        %945 = vmatprep.subr.bf16.mxu0 0
        %946 = vmatpush1.bf16.msra.mxu0 0
        %947 = vmatprep.subr.bf16.mxu0 0
        %948 = vmatpush1.bf16.msra.mxu0 0
        %949 = vmatprep.subr.bf16.mxu0 0
        %950 = vmatpush1.bf16.msra.mxu0 0
        %951 = vmatprep.subr.bf16.mxu0 0
        %952 = vmatpush1.bf16.msra.mxu0 0
        %953 = vmatprep.mubr.bf16.mxu0 0
        %954 = vmatmul.mubr.bf16.gmra.mrb[0].mxu0 %v919
        %v955 = vpop.f32.mrb[0].mxu0
        %v956 = vadd.f32 %v742, %v955
        %v957 = vpop.f32.mrb[0].mxu0
        %v958 = vadd.f32 %v744, %v957
        %v959 = vpop.f32.mrb[0].mxu0
        %v960 = vadd.f32 %v746, %v959
        %v961 = vpop.f32.mrb[0].mxu0
        %v962 = vadd.f32 %v748, %v961
        %963 = vdwg.mxu0
        %964 = vmatprep.subr.bf16.mxu0 %v873
        %965 = vmatpush1.bf16.msra.mxu0 %v872
        %966 = vmatprep.subr.bf16.mxu0 %v877
        %967 = vmatpush1.bf16.msra.mxu0 %v876
        %968 = vmatprep.subr.bf16.mxu0 %v881
        %969 = vmatpush1.bf16.msra.mxu0 %v880
        %970 = vmatprep.subr.bf16.mxu0 %v885
        %971 = vmatpush1.bf16.msra.mxu0 %v884
        %972 = vmatprep.subr.bf16.mxu0 %v889
        %973 = vmatpush1.bf16.msra.mxu0 %v888
        %974 = vmatprep.subr.bf16.mxu0 %v893
        %975 = vmatpush1.bf16.msra.mxu0 %v892
        %976 = vmatprep.subr.bf16.mxu0 0
        %977 = vmatpush1.bf16.msra.mxu0 0
        %978 = vmatprep.subr.bf16.mxu0 0
        %979 = vmatpush1.bf16.msra.mxu0 0
        %980 = vmatprep.subr.bf16.mxu0 0
        %981 = vmatpush1.bf16.msra.mxu0 0
        %982 = vmatprep.subr.bf16.mxu0 0
        %983 = vmatpush1.bf16.msra.mxu0 0
        %984 = vmatprep.subr.bf16.mxu0 0
        %985 = vmatpush1.bf16.msra.mxu0 0
        %986 = vmatprep.subr.bf16.mxu0 0
        %987 = vmatpush1.bf16.msra.mxu0 0
        %988 = vmatprep.subr.bf16.mxu0 0
        %989 = vmatpush1.bf16.msra.mxu0 0
        %990 = vmatprep.subr.bf16.mxu0 0
        %991 = vmatpush1.bf16.msra.mxu0 0
        %992 = vmatprep.subr.bf16.mxu0 0
        %993 = vmatpush1.bf16.msra.mxu0 0
        %994 = vmatprep.subr.bf16.mxu0 0
        %995 = vmatpush1.bf16.msra.mxu0 0
        %996 = vmatprep.mubr.bf16.mxu0 0
        %997 = vmatmul.mubr.bf16.gmra.mrb[0].mxu0 %v919
        %v998 = vpop.f32.mrb[0].mxu0
        %v999 = vadd.f32 %v785, %v998
        %v1000 = vpop.f32.mrb[0].mxu0
        %v1001 = vadd.f32 %v787, %v1000
        %v1002 = vpop.f32.mrb[0].mxu0
        %v1003 = vadd.f32 %v789, %v1002
        %v1004 = vpop.f32.mrb[0].mxu0
        %v1005 = vadd.f32 %v791, %v1004
        %1006 = vdwg.mxu0
        %v1007 = vld [vmem:[%s517 + $0x4] sm:$0xf]
        %s1008 = scalar_lea.vmem [#allocation6], 384
        %v1009 = vld [vmem:[%s1008] sm:$0xff]
        %v1010 = vld [vmem:[%s1008 + $0x8] sm:$0xff]
        %v1011 = vld [vmem:[%s1008 + $0x10] sm:$0xff]
        %v1012 = vld [vmem:[%s1008 + $0x18] sm:$0xff]
        %v1013 = vld [vmem:[%s1008 + $0x20] sm:$0xff]
        %v1014 = vld [vmem:[%s1008 + $0x28] sm:$0xff]
        %v1015 = vld [vmem:[%s1008 + $0x30] sm:$0xff]
        %v1016 = vld [vmem:[%s1008 + $0x38] sm:$0xff]
        %v1017 = vld [vmem:[%s1008 + $0x40] sm:$0xff]
        %v1018 = vld [vmem:[%s1008 + $0x48] sm:$0xff]
        %v1019 = vld [vmem:[%s1008 + $0x50] sm:$0xff]
        %v1020 = vld [vmem:[%s1008 + $0x58] sm:$0xff]
        %v1021 = vld [vmem:[%s1008 + $0x60] sm:$0xff]
        %v1022 = vld [vmem:[%s1008 + $0x68] sm:$0xff]
        %v1023 = vld [vmem:[%s1008 + $0x70] sm:$0xff]
        %v1024 = vld [vmem:[%s1008 + $0x78] sm:$0xff]
        %v1025 = vld [vmem:[%s1008 + $0x80] sm:$0xff]
        %v1026 = vld [vmem:[%s1008 + $0x88] sm:$0xff]
        %v1027 = vld [vmem:[%s1008 + $0x90] sm:$0xff]
        %v1028 = vld [vmem:[%s1008 + $0x98] sm:$0xff]
        %v1029 = vld [vmem:[%s1008 + $0xa0] sm:$0xff]
        %v1030 = vld [vmem:[%s1008 + $0xa8] sm:$0xff]
        %v1031 = vld [vmem:[%s1008 + $0xb0] sm:$0xff]
        %v1032 = vld [vmem:[%s1008 + $0xb8] sm:$0xff]
        %v1034 = vunpack.c.l.b16 %v1007
        %v1035 = vpack.c.b16 %v1034, %v795
        %v1037 = vshrl.u32 %v1035, 16
        %v1039 = vshll.u32 %v1035, 16
        %v1041 = vrot.slane %v1039, 1
        %v1042 = vor.u32 %v1037, %v1041
        %v1067 = vunpack.c.l.b16 %v1009
        %v1068 = vunpack.c.h.b16 %v1009
        %v1069 = vunpack.c.l.b16 %v1010
        %v1070 = vunpack.c.h.b16 %v1010
        %v1071 = vunpack.c.l.b16 %v1011
        %v1072 = vunpack.c.h.b16 %v1011
        %v1073 = vunpack.c.l.b16 %v1012
        %v1074 = vunpack.c.h.b16 %v1012
        %v1075 = vunpack.c.l.b16 %v1013
        %v1076 = vunpack.c.h.b16 %v1013
        %v1077 = vunpack.c.l.b16 %v1014
        %v1078 = vunpack.c.h.b16 %v1014
        %v1079 = vunpack.c.l.b16 %v1015
        %v1080 = vunpack.c.h.b16 %v1015
        %v1081 = vunpack.c.l.b16 %v1016
        %v1082 = vunpack.c.h.b16 %v1016
        %v1083 = vunpack.c.l.b16 %v1017
        %v1084 = vunpack.c.h.b16 %v1017
        %v1085 = vunpack.c.l.b16 %v1018
        %v1086 = vunpack.c.h.b16 %v1018
        %v1087 = vunpack.c.l.b16 %v1019
        %v1088 = vunpack.c.h.b16 %v1019
        %v1089 = vunpack.c.l.b16 %v1020
        %v1090 = vunpack.c.h.b16 %v1020
        %v1091 = vunpack.c.l.b16 %v1021
        %v1092 = vunpack.c.h.b16 %v1021
        %v1093 = vunpack.c.l.b16 %v1022
        %v1094 = vunpack.c.h.b16 %v1022
        %v1095 = vunpack.c.l.b16 %v1023
        %v1096 = vunpack.c.h.b16 %v1023
        %v1097 = vunpack.c.l.b16 %v1024
        %v1098 = vunpack.c.h.b16 %v1024
        %v1099 = vunpack.c.l.b16 %v1025
        %v1100 = vunpack.c.h.b16 %v1025
        %v1101 = vunpack.c.l.b16 %v1026
        %v1102 = vunpack.c.h.b16 %v1026
        %v1103 = vunpack.c.l.b16 %v1027
        %v1104 = vunpack.c.h.b16 %v1027
        %v1105 = vunpack.c.l.b16 %v1028
        %v1106 = vunpack.c.h.b16 %v1028
        %v1107 = vunpack.c.l.b16 %v1029
        %v1108 = vunpack.c.h.b16 %v1029
        %v1109 = vunpack.c.l.b16 %v1030
        %v1110 = vunpack.c.h.b16 %v1030
        %v1111 = vunpack.c.l.b16 %v1031
        %v1112 = vunpack.c.h.b16 %v1031
        %v1113 = vunpack.c.l.b16 %v1032
        %v1114 = vunpack.c.h.b16 %v1032
        %v1115 = vpack.c.b16 %v1071, %v1067
        %v1116 = vpack.c.b16 %v1072, %v1068
        %v1117 = vpack.c.b16 %v1073, %v1069
        %v1118 = vpack.c.b16 %v1074, %v1070
        %v1119 = vpack.c.b16 %v1079, %v1075
        %v1120 = vpack.c.b16 %v1080, %v1076
        %v1121 = vpack.c.b16 %v1081, %v1077
        %v1122 = vpack.c.b16 %v1082, %v1078
        %v1123 = vpack.c.b16 %v1087, %v1083
        %v1124 = vpack.c.b16 %v1088, %v1084
        %v1125 = vpack.c.b16 %v1089, %v1085
        %v1126 = vpack.c.b16 %v1090, %v1086
        %v1127 = vpack.c.b16 %v1095, %v1091
        %v1128 = vpack.c.b16 %v1096, %v1092
        %v1129 = vpack.c.b16 %v1097, %v1093
        %v1130 = vpack.c.b16 %v1098, %v1094
        %v1131 = vpack.c.b16 %v1103, %v1099
        %v1132 = vpack.c.b16 %v1104, %v1100
        %v1133 = vpack.c.b16 %v1105, %v1101
        %v1134 = vpack.c.b16 %v1106, %v1102
        %v1135 = vpack.c.b16 %v1111, %v1107
        %v1136 = vpack.c.b16 %v1112, %v1108
        %v1137 = vpack.c.b16 %v1113, %v1109
        %v1138 = vpack.c.b16 %v1114, %v1110
        %v1164 = vsel %vm703, %v1042, 0
        %1166 = vmatprep.subr.bf16.mxu0 %v1116
        %1167 = vmatpush1.bf16.msra.mxu0 %v1115
        %1168 = vmatprep.subr.bf16.mxu0 %v1120
        %1169 = vmatpush1.bf16.msra.mxu0 %v1119
        %1170 = vmatprep.subr.bf16.mxu0 %v1124
        %1171 = vmatpush1.bf16.msra.mxu0 %v1123
        %1172 = vmatprep.subr.bf16.mxu0 %v1128
        %1173 = vmatpush1.bf16.msra.mxu0 %v1127
        %1174 = vmatprep.subr.bf16.mxu0 %v1132
        %1175 = vmatpush1.bf16.msra.mxu0 %v1131
        %1176 = vmatprep.subr.bf16.mxu0 %v1136
        %1177 = vmatpush1.bf16.msra.mxu0 %v1135
        %1178 = vmatprep.subr.bf16.mxu0 0
        %1179 = vmatpush1.bf16.msra.mxu0 0
        %1180 = vmatprep.subr.bf16.mxu0 0
        %1181 = vmatpush1.bf16.msra.mxu0 0
        %1182 = vmatprep.subr.bf16.mxu0 0
        %1183 = vmatpush1.bf16.msra.mxu0 0
        %1184 = vmatprep.subr.bf16.mxu0 0
        %1185 = vmatpush1.bf16.msra.mxu0 0
        %1186 = vmatprep.subr.bf16.mxu0 0
        %1187 = vmatpush1.bf16.msra.mxu0 0
        %1188 = vmatprep.subr.bf16.mxu0 0
        %1189 = vmatpush1.bf16.msra.mxu0 0
        %1190 = vmatprep.subr.bf16.mxu0 0
        %1191 = vmatpush1.bf16.msra.mxu0 0
        %1192 = vmatprep.subr.bf16.mxu0 0
        %1193 = vmatpush1.bf16.msra.mxu0 0
        %1194 = vmatprep.subr.bf16.mxu0 0
        %1195 = vmatpush1.bf16.msra.mxu0 0
        %1196 = vmatprep.subr.bf16.mxu0 0
        %1197 = vmatpush1.bf16.msra.mxu0 0
        %1198 = vmatprep.mubr.bf16.mxu0 0
        %1199 = vmatmul.mubr.bf16.gmra.mrb[0].mxu0 %v1164
        %v1200 = vpop.f32.mrb[0].mxu0
        %v1201 = vadd.f32 0.0, %v1200
        %v1202 = vpop.f32.mrb[0].mxu0
        %v1203 = vadd.f32 0.0, %v1202
        %v1204 = vpop.f32.mrb[0].mxu0
        %v1205 = vadd.f32 0.0, %v1204
        %v1206 = vpop.f32.mrb[0].mxu0
        %v1207 = vadd.f32 0.0, %v1206
        %1208 = vdwg.mxu0
        %1209 = vmatprep.subr.bf16.mxu0 %v1118
        %1210 = vmatpush1.bf16.msra.mxu0 %v1117
        %1211 = vmatprep.subr.bf16.mxu0 %v1122
        %1212 = vmatpush1.bf16.msra.mxu0 %v1121
        %1213 = vmatprep.subr.bf16.mxu0 %v1126
        %1214 = vmatpush1.bf16.msra.mxu0 %v1125
        %1215 = vmatprep.subr.bf16.mxu0 %v1130
        %1216 = vmatpush1.bf16.msra.mxu0 %v1129
        %1217 = vmatprep.subr.bf16.mxu0 %v1134
        %1218 = vmatpush1.bf16.msra.mxu0 %v1133
        %1219 = vmatprep.subr.bf16.mxu0 %v1138
        %1220 = vmatpush1.bf16.msra.mxu0 %v1137
        %1221 = vmatprep.subr.bf16.mxu0 0
        %1222 = vmatpush1.bf16.msra.mxu0 0
        %1223 = vmatprep.subr.bf16.mxu0 0
        %1224 = vmatpush1.bf16.msra.mxu0 0
        %1225 = vmatprep.subr.bf16.mxu0 0
        %1226 = vmatpush1.bf16.msra.mxu0 0
        %1227 = vmatprep.subr.bf16.mxu0 0
        %1228 = vmatpush1.bf16.msra.mxu0 0
        %1229 = vmatprep.subr.bf16.mxu0 0
        %1230 = vmatpush1.bf16.msra.mxu0 0
        %1231 = vmatprep.subr.bf16.mxu0 0
        %1232 = vmatpush1.bf16.msra.mxu0 0
        %1233 = vmatprep.subr.bf16.mxu0 0
        %1234 = vmatpush1.bf16.msra.mxu0 0
        %1235 = vmatprep.subr.bf16.mxu0 0
        %1236 = vmatpush1.bf16.msra.mxu0 0
        %1237 = vmatprep.subr.bf16.mxu0 0
        %1238 = vmatpush1.bf16.msra.mxu0 0
        %1239 = vmatprep.subr.bf16.mxu0 0
        %1240 = vmatpush1.bf16.msra.mxu0 0
        %1241 = vmatprep.mubr.bf16.mxu0 0
        %1242 = vmatmul.mubr.bf16.gmra.mrb[0].mxu0 %v1164
        %v1243 = vpop.f32.mrb[0].mxu0
        %v1244 = vadd.f32 0.0, %v1243
        %v1245 = vpop.f32.mrb[0].mxu0
        %v1246 = vadd.f32 0.0, %v1245
        %v1247 = vpop.f32.mrb[0].mxu0
        %v1248 = vadd.f32 0.0, %v1247
        %v1249 = vpop.f32.mrb[0].mxu0
        %v1250 = vadd.f32 0.0, %v1249
        %1251 = vdwg.mxu0
        %v1252 = vadd.f32 %v956, %v1201
        %v1253 = vadd.f32 %v958, %v1203
        %v1254 = vadd.f32 %v999, %v1244
        %v1255 = vadd.f32 %v1001, %v1246
        %v1256 = vadd.f32 %v960, %v1205
        %v1257 = vadd.f32 %v962, %v1207
        %v1258 = vadd.f32 %v1003, %v1248
        %v1259 = vadd.f32 %v1005, %v1250
        %v1260 = vld [vmem:[%s522 + $0x4] sm:$0xf]
        %s1261 = scalar_lea.vmem [#allocation6], 576
        %v1262 = vld [vmem:[%s1261] sm:$0xff]
        %v1263 = vld [vmem:[%s1261 + $0x8] sm:$0xff]
        %v1264 = vld [vmem:[%s1261 + $0x10] sm:$0xff]
        %v1265 = vld [vmem:[%s1261 + $0x18] sm:$0xff]
        %v1266 = vld [vmem:[%s1261 + $0x20] sm:$0xff]
        %v1267 = vld [vmem:[%s1261 + $0x28] sm:$0xff]
        %v1268 = vld [vmem:[%s1261 + $0x30] sm:$0xff]
        %v1269 = vld [vmem:[%s1261 + $0x38] sm:$0xff]
        %v1270 = vld [vmem:[%s1261 + $0x40] sm:$0xff]
        %v1271 = vld [vmem:[%s1261 + $0x48] sm:$0xff]
        %v1272 = vld [vmem:[%s1261 + $0x50] sm:$0xff]
        %v1273 = vld [vmem:[%s1261 + $0x58] sm:$0xff]
        %v1274 = vld [vmem:[%s1261 + $0x60] sm:$0xff]
        %v1275 = vld [vmem:[%s1261 + $0x68] sm:$0xff]
        %v1276 = vld [vmem:[%s1261 + $0x70] sm:$0xff]
        %v1277 = vld [vmem:[%s1261 + $0x78] sm:$0xff]
        %v1278 = vld [vmem:[%s1261 + $0x80] sm:$0xff]
        %v1279 = vld [vmem:[%s1261 + $0x88] sm:$0xff]
        %v1280 = vld [vmem:[%s1261 + $0x90] sm:$0xff]
        %v1281 = vld [vmem:[%s1261 + $0x98] sm:$0xff]
        %v1282 = vld [vmem:[%s1261 + $0xa0] sm:$0xff]
        %v1283 = vld [vmem:[%s1261 + $0xa8] sm:$0xff]
        %v1284 = vld [vmem:[%s1261 + $0xb0] sm:$0xff]
        %v1285 = vld [vmem:[%s1261 + $0xb8] sm:$0xff]
        %v1287 = vunpack.c.l.b16 %v1260
        %v1288 = vpack.c.b16 %v1287, %v580
        %v1290 = vshrl.u32 %v1288, 16
        %v1292 = vshll.u32 %v1288, 16
        %v1294 = vrot.slane %v1292, 1
        %v1295 = vor.u32 %v1290, %v1294
        %v1320 = vunpack.c.l.b16 %v1262
        %v1321 = vunpack.c.h.b16 %v1262
        %v1322 = vunpack.c.l.b16 %v1263
        %v1323 = vunpack.c.h.b16 %v1263
        %v1324 = vunpack.c.l.b16 %v1264
        %v1325 = vunpack.c.h.b16 %v1264
        %v1326 = vunpack.c.l.b16 %v1265
        %v1327 = vunpack.c.h.b16 %v1265
        %v1328 = vunpack.c.l.b16 %v1266
        %v1329 = vunpack.c.h.b16 %v1266
        %v1330 = vunpack.c.l.b16 %v1267
        %v1331 = vunpack.c.h.b16 %v1267
        %v1332 = vunpack.c.l.b16 %v1268
        %v1333 = vunpack.c.h.b16 %v1268
        %v1334 = vunpack.c.l.b16 %v1269
        %v1335 = vunpack.c.h.b16 %v1269
        %v1336 = vunpack.c.l.b16 %v1270
        %v1337 = vunpack.c.h.b16 %v1270
        %v1338 = vunpack.c.l.b16 %v1271
        %v1339 = vunpack.c.h.b16 %v1271
        %v1340 = vunpack.c.l.b16 %v1272
        %v1341 = vunpack.c.h.b16 %v1272
        %v1342 = vunpack.c.l.b16 %v1273
        %v1343 = vunpack.c.h.b16 %v1273
        %v1344 = vunpack.c.l.b16 %v1274
        %v1345 = vunpack.c.h.b16 %v1274
        %v1346 = vunpack.c.l.b16 %v1275
        %v1347 = vunpack.c.h.b16 %v1275
        %v1348 = vunpack.c.l.b16 %v1276
        %v1349 = vunpack.c.h.b16 %v1276
        %v1350 = vunpack.c.l.b16 %v1277
        %v1351 = vunpack.c.h.b16 %v1277
        %v1352 = vunpack.c.l.b16 %v1278
        %v1353 = vunpack.c.h.b16 %v1278
        %v1354 = vunpack.c.l.b16 %v1279
        %v1355 = vunpack.c.h.b16 %v1279
        %v1356 = vunpack.c.l.b16 %v1280
        %v1357 = vunpack.c.h.b16 %v1280
        %v1358 = vunpack.c.l.b16 %v1281
        %v1359 = vunpack.c.h.b16 %v1281
        %v1360 = vunpack.c.l.b16 %v1282
        %v1361 = vunpack.c.h.b16 %v1282
        %v1362 = vunpack.c.l.b16 %v1283
        %v1363 = vunpack.c.h.b16 %v1283
        %v1364 = vunpack.c.l.b16 %v1284
        %v1365 = vunpack.c.h.b16 %v1284
        %v1366 = vunpack.c.l.b16 %v1285
        %v1367 = vunpack.c.h.b16 %v1285
        %v1368 = vpack.c.b16 %v1324, %v1320
        %v1369 = vpack.c.b16 %v1325, %v1321
        %v1370 = vpack.c.b16 %v1326, %v1322
        %v1371 = vpack.c.b16 %v1327, %v1323
        %v1372 = vpack.c.b16 %v1332, %v1328
        %v1373 = vpack.c.b16 %v1333, %v1329
        %v1374 = vpack.c.b16 %v1334, %v1330
        %v1375 = vpack.c.b16 %v1335, %v1331
        %v1376 = vpack.c.b16 %v1340, %v1336
        %v1377 = vpack.c.b16 %v1341, %v1337
        %v1378 = vpack.c.b16 %v1342, %v1338
        %v1379 = vpack.c.b16 %v1343, %v1339
        %v1380 = vpack.c.b16 %v1348, %v1344
        %v1381 = vpack.c.b16 %v1349, %v1345
        %v1382 = vpack.c.b16 %v1350, %v1346
        %v1383 = vpack.c.b16 %v1351, %v1347
        %v1384 = vpack.c.b16 %v1356, %v1352
        %v1385 = vpack.c.b16 %v1357, %v1353
        %v1386 = vpack.c.b16 %v1358, %v1354
        %v1387 = vpack.c.b16 %v1359, %v1355
        %v1388 = vpack.c.b16 %v1364, %v1360
        %v1389 = vpack.c.b16 %v1365, %v1361
        %v1390 = vpack.c.b16 %v1366, %v1362
        %v1391 = vpack.c.b16 %v1367, %v1363
        %v1417 = vsel %vm703, %v1295, 0
        %1419 = vmatprep.subr.bf16.mxu0 %v1369
        %1420 = vmatpush1.bf16.msra.mxu0 %v1368
        %1421 = vmatprep.subr.bf16.mxu0 %v1373
        %1422 = vmatpush1.bf16.msra.mxu0 %v1372
        %1423 = vmatprep.subr.bf16.mxu0 %v1377
        %1424 = vmatpush1.bf16.msra.mxu0 %v1376
        %1425 = vmatprep.subr.bf16.mxu0 %v1381
        %1426 = vmatpush1.bf16.msra.mxu0 %v1380
        %1427 = vmatprep.subr.bf16.mxu0 %v1385
        %1428 = vmatpush1.bf16.msra.mxu0 %v1384
        %1429 = vmatprep.subr.bf16.mxu0 %v1389
        %1430 = vmatpush1.bf16.msra.mxu0 %v1388
        %1431 = vmatprep.subr.bf16.mxu0 0
        %1432 = vmatpush1.bf16.msra.mxu0 0
        %1433 = vmatprep.subr.bf16.mxu0 0
        %1434 = vmatpush1.bf16.msra.mxu0 0
        %1435 = vmatprep.subr.bf16.mxu0 0
        %1436 = vmatpush1.bf16.msra.mxu0 0
        %1437 = vmatprep.subr.bf16.mxu0 0
        %1438 = vmatpush1.bf16.msra.mxu0 0
        %1439 = vmatprep.subr.bf16.mxu0 0
        %1440 = vmatpush1.bf16.msra.mxu0 0
        %1441 = vmatprep.subr.bf16.mxu0 0
        %1442 = vmatpush1.bf16.msra.mxu0 0
        %1443 = vmatprep.subr.bf16.mxu0 0
        %1444 = vmatpush1.bf16.msra.mxu0 0
        %1445 = vmatprep.subr.bf16.mxu0 0
        %1446 = vmatpush1.bf16.msra.mxu0 0
        %1447 = vmatprep.subr.bf16.mxu0 0
        %1448 = vmatpush1.bf16.msra.mxu0 0
        %1449 = vmatprep.subr.bf16.mxu0 0
        %1450 = vmatpush1.bf16.msra.mxu0 0
        %1451 = vmatprep.mubr.bf16.mxu0 0
        %1452 = vmatmul.mubr.bf16.gmra.mrb[0].mxu0 %v1417
        %v1453 = vpop.f32.mrb[0].mxu0
        %v1454 = vadd.f32 0.0, %v1453
        %v1455 = vpop.f32.mrb[0].mxu0
        %v1456 = vadd.f32 0.0, %v1455
        %v1457 = vpop.f32.mrb[0].mxu0
        %v1458 = vadd.f32 0.0, %v1457
        %v1459 = vpop.f32.mrb[0].mxu0
        %v1460 = vadd.f32 0.0, %v1459
        %1461 = vdwg.mxu0
        %1462 = vmatprep.subr.bf16.mxu0 %v1371
        %1463 = vmatpush1.bf16.msra.mxu0 %v1370
        %1464 = vmatprep.subr.bf16.mxu0 %v1375
        %1465 = vmatpush1.bf16.msra.mxu0 %v1374
        %1466 = vmatprep.subr.bf16.mxu0 %v1379
        %1467 = vmatpush1.bf16.msra.mxu0 %v1378
        %1468 = vmatprep.subr.bf16.mxu0 %v1383
        %1469 = vmatpush1.bf16.msra.mxu0 %v1382
        %1470 = vmatprep.subr.bf16.mxu0 %v1387
        %1471 = vmatpush1.bf16.msra.mxu0 %v1386
        %1472 = vmatprep.subr.bf16.mxu0 %v1391
        %1473 = vmatpush1.bf16.msra.mxu0 %v1390
        %1474 = vmatprep.subr.bf16.mxu0 0
        %1475 = vmatpush1.bf16.msra.mxu0 0
        %1476 = vmatprep.subr.bf16.mxu0 0
        %1477 = vmatpush1.bf16.msra.mxu0 0
        %1478 = vmatprep.subr.bf16.mxu0 0
        %1479 = vmatpush1.bf16.msra.mxu0 0
        %1480 = vmatprep.subr.bf16.mxu0 0
        %1481 = vmatpush1.bf16.msra.mxu0 0
        %1482 = vmatprep.subr.bf16.mxu0 0
        %1483 = vmatpush1.bf16.msra.mxu0 0
        %1484 = vmatprep.subr.bf16.mxu0 0
        %1485 = vmatpush1.bf16.msra.mxu0 0
        %1486 = vmatprep.subr.bf16.mxu0 0
        %1487 = vmatpush1.bf16.msra.mxu0 0
        %1488 = vmatprep.subr.bf16.mxu0 0
        %1489 = vmatpush1.bf16.msra.mxu0 0
        %1490 = vmatprep.subr.bf16.mxu0 0
        %1491 = vmatpush1.bf16.msra.mxu0 0
        %1492 = vmatprep.subr.bf16.mxu0 0
        %1493 = vmatpush1.bf16.msra.mxu0 0
        %1494 = vmatprep.mubr.bf16.mxu0 0
        %1495 = vmatmul.mubr.bf16.gmra.mrb[0].mxu0 %v1417
        %v1496 = vpop.f32.mrb[0].mxu0
        %v1497 = vadd.f32 0.0, %v1496
        %v1498 = vpop.f32.mrb[0].mxu0
        %v1499 = vadd.f32 0.0, %v1498
        %v1500 = vpop.f32.mrb[0].mxu0
        %v1501 = vadd.f32 0.0, %v1500
        %v1502 = vpop.f32.mrb[0].mxu0
        %v1503 = vadd.f32 0.0, %v1502
        %1504 = vdwg.mxu0
        %v1505 = vadd.f32 %v1252, %v1454
        %v1506 = vadd.f32 %v1253, %v1456
        %v1507 = vadd.f32 %v1254, %v1497
        %v1508 = vadd.f32 %v1255, %v1499
        %v1509 = vadd.f32 %v1256, %v1458
        %v1510 = vadd.f32 %v1257, %v1460
        %v1511 = vadd.f32 %v1258, %v1501
        %v1512 = vadd.f32 %v1259, %v1503
        %v1513 = vld [vmem:[%s517] sm:$0xe]
        %s1514 = scalar_lea.vmem [#allocation6], 768
        %v1515 = vld [vmem:[%s1514] sm:$0xff]
        %v1516 = vld [vmem:[%s1514 + $0x8] sm:$0xff]
        %v1517 = vld [vmem:[%s1514 + $0x10] sm:$0xff]
        %v1518 = vld [vmem:[%s1514 + $0x18] sm:$0xff]
        %v1519 = vld [vmem:[%s1514 + $0x20] sm:$0xff]
        %v1520 = vld [vmem:[%s1514 + $0x28] sm:$0xff]
        %v1521 = vld [vmem:[%s1514 + $0x30] sm:$0xff]
        %v1522 = vld [vmem:[%s1514 + $0x38] sm:$0xff]
        %v1523 = vld [vmem:[%s1514 + $0x40] sm:$0xff]
        %v1524 = vld [vmem:[%s1514 + $0x48] sm:$0xff]
        %v1525 = vld [vmem:[%s1514 + $0x50] sm:$0xff]
        %v1526 = vld [vmem:[%s1514 + $0x58] sm:$0xff]
        %v1527 = vld [vmem:[%s1514 + $0x60] sm:$0xff]
        %v1528 = vld [vmem:[%s1514 + $0x68] sm:$0xff]
        %v1529 = vld [vmem:[%s1514 + $0x70] sm:$0xff]
        %v1530 = vld [vmem:[%s1514 + $0x78] sm:$0xff]
        %v1531 = vld [vmem:[%s1514 + $0x80] sm:$0xff]
        %v1532 = vld [vmem:[%s1514 + $0x88] sm:$0xff]
        %v1533 = vld [vmem:[%s1514 + $0x90] sm:$0xff]
        %v1534 = vld [vmem:[%s1514 + $0x98] sm:$0xff]
        %v1535 = vld [vmem:[%s1514 + $0xa0] sm:$0xff]
        %v1536 = vld [vmem:[%s1514 + $0xa8] sm:$0xff]
        %v1537 = vld [vmem:[%s1514 + $0xb0] sm:$0xff]
        %v1538 = vld [vmem:[%s1514 + $0xb8] sm:$0xff]
        %v1540 = vunpack.c.l.b16 %v1513
        %v1541 = vpack.c.b16 %v1034, %v1540
        %v1542 = vrot.slane %v1541, 1
        %v1567 = vunpack.c.l.b16 %v1515
        %v1568 = vunpack.c.h.b16 %v1515
        %v1569 = vunpack.c.l.b16 %v1516
        %v1570 = vunpack.c.h.b16 %v1516
        %v1571 = vunpack.c.l.b16 %v1517
        %v1572 = vunpack.c.h.b16 %v1517
        %v1573 = vunpack.c.l.b16 %v1518
        %v1574 = vunpack.c.h.b16 %v1518
        %v1575 = vunpack.c.l.b16 %v1519
        %v1576 = vunpack.c.h.b16 %v1519
        %v1577 = vunpack.c.l.b16 %v1520
        %v1578 = vunpack.c.h.b16 %v1520
        %v1579 = vunpack.c.l.b16 %v1521
        %v1580 = vunpack.c.h.b16 %v1521
        %v1581 = vunpack.c.l.b16 %v1522
        %v1582 = vunpack.c.h.b16 %v1522
        %v1583 = vunpack.c.l.b16 %v1523
        %v1584 = vunpack.c.h.b16 %v1523
        %v1585 = vunpack.c.l.b16 %v1524
        %v1586 = vunpack.c.h.b16 %v1524
        %v1587 = vunpack.c.l.b16 %v1525
        %v1588 = vunpack.c.h.b16 %v1525
        %v1589 = vunpack.c.l.b16 %v1526
        %v1590 = vunpack.c.h.b16 %v1526
        %v1591 = vunpack.c.l.b16 %v1527
        %v1592 = vunpack.c.h.b16 %v1527
        %v1593 = vunpack.c.l.b16 %v1528
        %v1594 = vunpack.c.h.b16 %v1528
        %v1595 = vunpack.c.l.b16 %v1529
        %v1596 = vunpack.c.h.b16 %v1529
        %v1597 = vunpack.c.l.b16 %v1530
        %v1598 = vunpack.c.h.b16 %v1530
        %v1599 = vunpack.c.l.b16 %v1531
        %v1600 = vunpack.c.h.b16 %v1531
        %v1601 = vunpack.c.l.b16 %v1532
        %v1602 = vunpack.c.h.b16 %v1532
        %v1603 = vunpack.c.l.b16 %v1533
        %v1604 = vunpack.c.h.b16 %v1533
        %v1605 = vunpack.c.l.b16 %v1534
        %v1606 = vunpack.c.h.b16 %v1534
        %v1607 = vunpack.c.l.b16 %v1535
        %v1608 = vunpack.c.h.b16 %v1535
        %v1609 = vunpack.c.l.b16 %v1536
        %v1610 = vunpack.c.h.b16 %v1536
        %v1611 = vunpack.c.l.b16 %v1537
        %v1612 = vunpack.c.h.b16 %v1537
        %v1613 = vunpack.c.l.b16 %v1538
        %v1614 = vunpack.c.h.b16 %v1538
        %v1615 = vpack.c.b16 %v1571, %v1567
        %v1616 = vpack.c.b16 %v1572, %v1568
        %v1617 = vpack.c.b16 %v1573, %v1569
        %v1618 = vpack.c.b16 %v1574, %v1570
        %v1619 = vpack.c.b16 %v1579, %v1575
        %v1620 = vpack.c.b16 %v1580, %v1576
        %v1621 = vpack.c.b16 %v1581, %v1577
        %v1622 = vpack.c.b16 %v1582, %v1578
        %v1623 = vpack.c.b16 %v1587, %v1583
        %v1624 = vpack.c.b16 %v1588, %v1584
        %v1625 = vpack.c.b16 %v1589, %v1585
        %v1626 = vpack.c.b16 %v1590, %v1586
        %v1627 = vpack.c.b16 %v1595, %v1591
        %v1628 = vpack.c.b16 %v1596, %v1592
        %v1629 = vpack.c.b16 %v1597, %v1593
        %v1630 = vpack.c.b16 %v1598, %v1594
        %v1631 = vpack.c.b16 %v1603, %v1599
        %v1632 = vpack.c.b16 %v1604, %v1600
        %v1633 = vpack.c.b16 %v1605, %v1601
        %v1634 = vpack.c.b16 %v1606, %v1602
        %v1635 = vpack.c.b16 %v1611, %v1607
        %v1636 = vpack.c.b16 %v1612, %v1608
        %v1637 = vpack.c.b16 %v1613, %v1609
        %v1638 = vpack.c.b16 %v1614, %v1610
        %v1664 = vsel %vm703, %v1542, 0
        %1666 = vmatprep.subr.bf16.mxu0 %v1616
        %1667 = vmatpush1.bf16.msra.mxu0 %v1615
        %1668 = vmatprep.subr.bf16.mxu0 %v1620
        %1669 = vmatpush1.bf16.msra.mxu0 %v1619
        %1670 = vmatprep.subr.bf16.mxu0 %v1624
        %1671 = vmatpush1.bf16.msra.mxu0 %v1623
        %1672 = vmatprep.subr.bf16.mxu0 %v1628
        %1673 = vmatpush1.bf16.msra.mxu0 %v1627
        %1674 = vmatprep.subr.bf16.mxu0 %v1632
        %1675 = vmatpush1.bf16.msra.mxu0 %v1631
        %1676 = vmatprep.subr.bf16.mxu0 %v1636
        %1677 = vmatpush1.bf16.msra.mxu0 %v1635
        %1678 = vmatprep.subr.bf16.mxu0 0
        %1679 = vmatpush1.bf16.msra.mxu0 0
        %1680 = vmatprep.subr.bf16.mxu0 0
        %1681 = vmatpush1.bf16.msra.mxu0 0
        %1682 = vmatprep.subr.bf16.mxu0 0
        %1683 = vmatpush1.bf16.msra.mxu0 0
        %1684 = vmatprep.subr.bf16.mxu0 0
        %1685 = vmatpush1.bf16.msra.mxu0 0
        %1686 = vmatprep.subr.bf16.mxu0 0
        %1687 = vmatpush1.bf16.msra.mxu0 0
        %1688 = vmatprep.subr.bf16.mxu0 0
        %1689 = vmatpush1.bf16.msra.mxu0 0
        %1690 = vmatprep.subr.bf16.mxu0 0
        %1691 = vmatpush1.bf16.msra.mxu0 0
        %1692 = vmatprep.subr.bf16.mxu0 0
        %1693 = vmatpush1.bf16.msra.mxu0 0
        %1694 = vmatprep.subr.bf16.mxu0 0
        %1695 = vmatpush1.bf16.msra.mxu0 0
        %1696 = vmatprep.subr.bf16.mxu0 0
        %1697 = vmatpush1.bf16.msra.mxu0 0
        %1698 = vmatprep.mubr.bf16.mxu0 0
        %1699 = vmatmul.mubr.bf16.gmra.mrb[0].mxu0 %v1664
        %v1700 = vpop.f32.mrb[0].mxu0
        %v1701 = vadd.f32 0.0, %v1700
        %v1702 = vpop.f32.mrb[0].mxu0
        %v1703 = vadd.f32 0.0, %v1702
        %v1704 = vpop.f32.mrb[0].mxu0
        %v1705 = vadd.f32 0.0, %v1704
        %v1706 = vpop.f32.mrb[0].mxu0
        %v1707 = vadd.f32 0.0, %v1706
        %1708 = vdwg.mxu0
        %1709 = vmatprep.subr.bf16.mxu0 %v1618
        %1710 = vmatpush1.bf16.msra.mxu0 %v1617
        %1711 = vmatprep.subr.bf16.mxu0 %v1622
        %1712 = vmatpush1.bf16.msra.mxu0 %v1621
        %1713 = vmatprep.subr.bf16.mxu0 %v1626
        %1714 = vmatpush1.bf16.msra.mxu0 %v1625
        %1715 = vmatprep.subr.bf16.mxu0 %v1630
        %1716 = vmatpush1.bf16.msra.mxu0 %v1629
        %1717 = vmatprep.subr.bf16.mxu0 %v1634
        %1718 = vmatpush1.bf16.msra.mxu0 %v1633
        %1719 = vmatprep.subr.bf16.mxu0 %v1638
        %1720 = vmatpush1.bf16.msra.mxu0 %v1637
        %1721 = vmatprep.subr.bf16.mxu0 0
        %1722 = vmatpush1.bf16.msra.mxu0 0
        %1723 = vmatprep.subr.bf16.mxu0 0
        %1724 = vmatpush1.bf16.msra.mxu0 0
        %1725 = vmatprep.subr.bf16.mxu0 0
        %1726 = vmatpush1.bf16.msra.mxu0 0
        %1727 = vmatprep.subr.bf16.mxu0 0
        %1728 = vmatpush1.bf16.msra.mxu0 0
        %1729 = vmatprep.subr.bf16.mxu0 0
        %1730 = vmatpush1.bf16.msra.mxu0 0
        %1731 = vmatprep.subr.bf16.mxu0 0
        %1732 = vmatpush1.bf16.msra.mxu0 0
        %1733 = vmatprep.subr.bf16.mxu0 0
        %1734 = vmatpush1.bf16.msra.mxu0 0
        %1735 = vmatprep.subr.bf16.mxu0 0
        %1736 = vmatpush1.bf16.msra.mxu0 0
        %1737 = vmatprep.subr.bf16.mxu0 0
        %1738 = vmatpush1.bf16.msra.mxu0 0
        %1739 = vmatprep.subr.bf16.mxu0 0
        %1740 = vmatpush1.bf16.msra.mxu0 0
        %1741 = vmatprep.mubr.bf16.mxu0 0
        %1742 = vmatmul.mubr.bf16.gmra.mrb[0].mxu0 %v1664
        %v1743 = vpop.f32.mrb[0].mxu0
        %v1744 = vadd.f32 0.0, %v1743
        %v1745 = vpop.f32.mrb[0].mxu0
        %v1746 = vadd.f32 0.0, %v1745
        %v1747 = vpop.f32.mrb[0].mxu0
        %v1748 = vadd.f32 0.0, %v1747
        %v1749 = vpop.f32.mrb[0].mxu0
        %v1750 = vadd.f32 0.0, %v1749
        %1751 = vdwg.mxu0
        %v1752 = vadd.f32 %v1505, %v1701
        %v1753 = vadd.f32 %v1506, %v1703
        %v1754 = vadd.f32 %v1507, %v1744
        %v1755 = vadd.f32 %v1508, %v1746
        %v1756 = vadd.f32 %v1509, %v1705
        %v1757 = vadd.f32 %v1510, %v1707
        %v1758 = vadd.f32 %v1511, %v1748
        %v1759 = vadd.f32 %v1512, %v1750
        %1760 = vmatprep.subr.bf16.mxu0 %v656
        %1761 = vmatpush1.bf16.msra.mxu0 %v655
        %1762 = vmatprep.subr.bf16.mxu0 %v660
        %1763 = vmatpush1.bf16.msra.mxu0 %v659
        %1764 = vmatprep.subr.bf16.mxu0 %v664
        %1765 = vmatpush1.bf16.msra.mxu0 %v663
        %1766 = vmatprep.subr.bf16.mxu0 %v668
        %1767 = vmatpush1.bf16.msra.mxu0 %v667
        %1768 = vmatprep.subr.bf16.mxu0 %v672
        %1769 = vmatpush1.bf16.msra.mxu0 %v671
        %1770 = vmatprep.subr.bf16.mxu0 %v676
        %1771 = vmatpush1.bf16.msra.mxu0 %v675
        %1772 = vmatprep.subr.bf16.mxu0 0
        %1773 = vmatpush1.bf16.msra.mxu0 0
        %1774 = vmatprep.subr.bf16.mxu0 0
        %1775 = vmatpush1.bf16.msra.mxu0 0
        %1776 = vmatprep.subr.bf16.mxu0 0
        %1777 = vmatpush1.bf16.msra.mxu0 0
        %1778 = vmatprep.subr.bf16.mxu0 0
        %1779 = vmatpush1.bf16.msra.mxu0 0
        %1780 = vmatprep.subr.bf16.mxu0 0
        %1781 = vmatpush1.bf16.msra.mxu0 0
        %1782 = vmatprep.subr.bf16.mxu0 0
        %1783 = vmatpush1.bf16.msra.mxu0 0
        %1784 = vmatprep.subr.bf16.mxu0 0
        %1785 = vmatpush1.bf16.msra.mxu0 0
        %1786 = vmatprep.subr.bf16.mxu0 0
        %1787 = vmatpush1.bf16.msra.mxu0 0
        %1788 = vmatprep.subr.bf16.mxu0 0
        %1789 = vmatpush1.bf16.msra.mxu0 0
        %1790 = vmatprep.subr.bf16.mxu0 0
        %1791 = vmatpush1.bf16.msra.mxu0 0
        %1792 = vmatprep.mubr.bf16.mxu0 0
        %1793 = vmatmul.mubr.bf16.gmra.mrb[0].mxu0 %v1164
        %v1794 = vpop.f32.mrb[0].mxu0
        %v1795 = vadd.f32 0.0, %v1794
        %v1796 = vpop.f32.mrb[0].mxu0
        %v1797 = vadd.f32 0.0, %v1796
        %v1798 = vpop.f32.mrb[0].mxu0
        %v1799 = vadd.f32 0.0, %v1798
        %v1800 = vpop.f32.mrb[0].mxu0
        %v1801 = vadd.f32 0.0, %v1800
        %1802 = vdwg.mxu0
        %1803 = vmatprep.subr.bf16.mxu0 %v658
        %1804 = vmatpush1.bf16.msra.mxu0 %v657
        %1805 = vmatprep.subr.bf16.mxu0 %v662
        %1806 = vmatpush1.bf16.msra.mxu0 %v661
        %1807 = vmatprep.subr.bf16.mxu0 %v666
        %1808 = vmatpush1.bf16.msra.mxu0 %v665
        %1809 = vmatprep.subr.bf16.mxu0 %v670
        %1810 = vmatpush1.bf16.msra.mxu0 %v669
        %1811 = vmatprep.subr.bf16.mxu0 %v674
        %1812 = vmatpush1.bf16.msra.mxu0 %v673
        %1813 = vmatprep.subr.bf16.mxu0 %v678
        %1814 = vmatpush1.bf16.msra.mxu0 %v677
        %1815 = vmatprep.subr.bf16.mxu0 0
        %1816 = vmatpush1.bf16.msra.mxu0 0
        %1817 = vmatprep.subr.bf16.mxu0 0
        %1818 = vmatpush1.bf16.msra.mxu0 0
        %1819 = vmatprep.subr.bf16.mxu0 0
        %1820 = vmatpush1.bf16.msra.mxu0 0
        %1821 = vmatprep.subr.bf16.mxu0 0
        %1822 = vmatpush1.bf16.msra.mxu0 0
        %1823 = vmatprep.subr.bf16.mxu0 0
        %1824 = vmatpush1.bf16.msra.mxu0 0
        %1825 = vmatprep.subr.bf16.mxu0 0
        %1826 = vmatpush1.bf16.msra.mxu0 0
        %1827 = vmatprep.subr.bf16.mxu0 0
        %1828 = vmatpush1.bf16.msra.mxu0 0
        %1829 = vmatprep.subr.bf16.mxu0 0
        %1830 = vmatpush1.bf16.msra.mxu0 0
        %1831 = vmatprep.subr.bf16.mxu0 0
        %1832 = vmatpush1.bf16.msra.mxu0 0
        %1833 = vmatprep.subr.bf16.mxu0 0
        %1834 = vmatpush1.bf16.msra.mxu0 0
        %1835 = vmatprep.mubr.bf16.mxu0 0
        %1836 = vmatmul.mubr.bf16.gmra.mrb[0].mxu0 %v1164
        %v1837 = vpop.f32.mrb[0].mxu0
        %v1838 = vadd.f32 0.0, %v1837
        %v1839 = vpop.f32.mrb[0].mxu0
        %v1840 = vadd.f32 0.0, %v1839
        %v1841 = vpop.f32.mrb[0].mxu0
        %v1842 = vadd.f32 0.0, %v1841
        %v1843 = vpop.f32.mrb[0].mxu0
        %v1844 = vadd.f32 0.0, %v1843
        %1845 = vdwg.mxu0
        %1846 = vmatprep.subr.bf16.mxu0 %v871
        %1847 = vmatpush1.bf16.msra.mxu0 %v870
        %1848 = vmatprep.subr.bf16.mxu0 %v875
        %1849 = vmatpush1.bf16.msra.mxu0 %v874
        %1850 = vmatprep.subr.bf16.mxu0 %v879
        %1851 = vmatpush1.bf16.msra.mxu0 %v878
        %1852 = vmatprep.subr.bf16.mxu0 %v883
        %1853 = vmatpush1.bf16.msra.mxu0 %v882
        %1854 = vmatprep.subr.bf16.mxu0 %v887
        %1855 = vmatpush1.bf16.msra.mxu0 %v886
        %1856 = vmatprep.subr.bf16.mxu0 %v891
        %1857 = vmatpush1.bf16.msra.mxu0 %v890
        %1858 = vmatprep.subr.bf16.mxu0 0
        %1859 = vmatpush1.bf16.msra.mxu0 0
        %1860 = vmatprep.subr.bf16.mxu0 0
        %1861 = vmatpush1.bf16.msra.mxu0 0
        %1862 = vmatprep.subr.bf16.mxu0 0
        %1863 = vmatpush1.bf16.msra.mxu0 0
        %1864 = vmatprep.subr.bf16.mxu0 0
        %1865 = vmatpush1.bf16.msra.mxu0 0
        %1866 = vmatprep.subr.bf16.mxu0 0
        %1867 = vmatpush1.bf16.msra.mxu0 0
        %1868 = vmatprep.subr.bf16.mxu0 0
        %1869 = vmatpush1.bf16.msra.mxu0 0
        %1870 = vmatprep.subr.bf16.mxu0 0
        %1871 = vmatpush1.bf16.msra.mxu0 0
        %1872 = vmatprep.subr.bf16.mxu0 0
        %1873 = vmatpush1.bf16.msra.mxu0 0
        %1874 = vmatprep.subr.bf16.mxu0 0
        %1875 = vmatpush1.bf16.msra.mxu0 0
        %1876 = vmatprep.subr.bf16.mxu0 0
        %1877 = vmatpush1.bf16.msra.mxu0 0
        %1878 = vmatprep.mubr.bf16.mxu0 0
        %1879 = vmatmul.mubr.bf16.gmra.mrb[0].mxu0 %v705
        %v1880 = vpop.f32.mrb[0].mxu0
        %v1881 = vadd.f32 %v1795, %v1880
        %v1882 = vpop.f32.mrb[0].mxu0
        %v1883 = vadd.f32 %v1797, %v1882
        %v1884 = vpop.f32.mrb[0].mxu0
        %v1885 = vadd.f32 %v1799, %v1884
        %v1886 = vpop.f32.mrb[0].mxu0
        %v1887 = vadd.f32 %v1801, %v1886
        %1888 = vdwg.mxu0
        %1889 = vmatprep.subr.bf16.mxu0 %v873
        %1890 = vmatpush1.bf16.msra.mxu0 %v872
        %1891 = vmatprep.subr.bf16.mxu0 %v877
        %1892 = vmatpush1.bf16.msra.mxu0 %v876
        %1893 = vmatprep.subr.bf16.mxu0 %v881
        %1894 = vmatpush1.bf16.msra.mxu0 %v880
        %1895 = vmatprep.subr.bf16.mxu0 %v885
        %1896 = vmatpush1.bf16.msra.mxu0 %v884
        %1897 = vmatprep.subr.bf16.mxu0 %v889
        %1898 = vmatpush1.bf16.msra.mxu0 %v888
        %1899 = vmatprep.subr.bf16.mxu0 %v893
        %1900 = vmatpush1.bf16.msra.mxu0 %v892
        %1901 = vmatprep.subr.bf16.mxu0 0
        %1902 = vmatpush1.bf16.msra.mxu0 0
        %1903 = vmatprep.subr.bf16.mxu0 0
        %1904 = vmatpush1.bf16.msra.mxu0 0
        %1905 = vmatprep.subr.bf16.mxu0 0
        %1906 = vmatpush1.bf16.msra.mxu0 0
        %1907 = vmatprep.subr.bf16.mxu0 0
        %1908 = vmatpush1.bf16.msra.mxu0 0
        %1909 = vmatprep.subr.bf16.mxu0 0
        %1910 = vmatpush1.bf16.msra.mxu0 0
        %1911 = vmatprep.subr.bf16.mxu0 0
        %1912 = vmatpush1.bf16.msra.mxu0 0
        %1913 = vmatprep.subr.bf16.mxu0 0
        %1914 = vmatpush1.bf16.msra.mxu0 0
        %1915 = vmatprep.subr.bf16.mxu0 0
        %1916 = vmatpush1.bf16.msra.mxu0 0
        %1917 = vmatprep.subr.bf16.mxu0 0
        %1918 = vmatpush1.bf16.msra.mxu0 0
        %1919 = vmatprep.subr.bf16.mxu0 0
        %1920 = vmatpush1.bf16.msra.mxu0 0
        %1921 = vmatprep.mubr.bf16.mxu0 0
        %1922 = vmatmul.mubr.bf16.gmra.mrb[0].mxu0 %v705
        %v1923 = vpop.f32.mrb[0].mxu0
        %v1924 = vadd.f32 %v1838, %v1923
        %v1925 = vpop.f32.mrb[0].mxu0
        %v1926 = vadd.f32 %v1840, %v1925
        %v1927 = vpop.f32.mrb[0].mxu0
        %v1928 = vadd.f32 %v1842, %v1927
        %v1929 = vpop.f32.mrb[0].mxu0
        %v1930 = vadd.f32 %v1844, %v1929
        %1931 = vdwg.mxu0
        %1932 = vmatprep.subr.bf16.mxu0 %v1116
        %1933 = vmatpush1.bf16.msra.mxu0 %v1115
        %1934 = vmatprep.subr.bf16.mxu0 %v1120
        %1935 = vmatpush1.bf16.msra.mxu0 %v1119
        %1936 = vmatprep.subr.bf16.mxu0 %v1124
        %1937 = vmatpush1.bf16.msra.mxu0 %v1123
        %1938 = vmatprep.subr.bf16.mxu0 %v1128
        %1939 = vmatpush1.bf16.msra.mxu0 %v1127
        %1940 = vmatprep.subr.bf16.mxu0 %v1132
        %1941 = vmatpush1.bf16.msra.mxu0 %v1131
        %1942 = vmatprep.subr.bf16.mxu0 %v1136
        %1943 = vmatpush1.bf16.msra.mxu0 %v1135
        %1944 = vmatprep.subr.bf16.mxu0 0
        %1945 = vmatpush1.bf16.msra.mxu0 0
        %1946 = vmatprep.subr.bf16.mxu0 0
        %1947 = vmatpush1.bf16.msra.mxu0 0
        %1948 = vmatprep.subr.bf16.mxu0 0
        %1949 = vmatpush1.bf16.msra.mxu0 0
        %1950 = vmatprep.subr.bf16.mxu0 0
        %1951 = vmatpush1.bf16.msra.mxu0 0
        %1952 = vmatprep.subr.bf16.mxu0 0
        %1953 = vmatpush1.bf16.msra.mxu0 0
        %1954 = vmatprep.subr.bf16.mxu0 0
        %1955 = vmatpush1.bf16.msra.mxu0 0
        %1956 = vmatprep.subr.bf16.mxu0 0
        %1957 = vmatpush1.bf16.msra.mxu0 0
        %1958 = vmatprep.subr.bf16.mxu0 0
        %1959 = vmatpush1.bf16.msra.mxu0 0
        %1960 = vmatprep.subr.bf16.mxu0 0
        %1961 = vmatpush1.bf16.msra.mxu0 0
        %1962 = vmatprep.subr.bf16.mxu0 0
        %1963 = vmatpush1.bf16.msra.mxu0 0
        %1964 = vmatprep.mubr.bf16.mxu0 0
        %1965 = vmatmul.mubr.bf16.gmra.mrb[0].mxu0 %v1417
        %v1966 = vpop.f32.mrb[0].mxu0
        %v1967 = vadd.f32 0.0, %v1966
        %v1968 = vpop.f32.mrb[0].mxu0
        %v1969 = vadd.f32 0.0, %v1968
        %v1970 = vpop.f32.mrb[0].mxu0
        %v1971 = vadd.f32 0.0, %v1970
        %v1972 = vpop.f32.mrb[0].mxu0
        %v1973 = vadd.f32 0.0, %v1972
        %1974 = vdwg.mxu0
        %1975 = vmatprep.subr.bf16.mxu0 %v1118
        %1976 = vmatpush1.bf16.msra.mxu0 %v1117
        %1977 = vmatprep.subr.bf16.mxu0 %v1122
        %1978 = vmatpush1.bf16.msra.mxu0 %v1121
        %1979 = vmatprep.subr.bf16.mxu0 %v1126
        %1980 = vmatpush1.bf16.msra.mxu0 %v1125
        %1981 = vmatprep.subr.bf16.mxu0 %v1130
        %1982 = vmatpush1.bf16.msra.mxu0 %v1129
        %1983 = vmatprep.subr.bf16.mxu0 %v1134
        %1984 = vmatpush1.bf16.msra.mxu0 %v1133
        %1985 = vmatprep.subr.bf16.mxu0 %v1138
        %1986 = vmatpush1.bf16.msra.mxu0 %v1137
        %1987 = vmatprep.subr.bf16.mxu0 0
        %1988 = vmatpush1.bf16.msra.mxu0 0
        %1989 = vmatprep.subr.bf16.mxu0 0
        %1990 = vmatpush1.bf16.msra.mxu0 0
        %1991 = vmatprep.subr.bf16.mxu0 0
        %1992 = vmatpush1.bf16.msra.mxu0 0
        %1993 = vmatprep.subr.bf16.mxu0 0
        %1994 = vmatpush1.bf16.msra.mxu0 0
        %1995 = vmatprep.subr.bf16.mxu0 0
        %1996 = vmatpush1.bf16.msra.mxu0 0
        %1997 = vmatprep.subr.bf16.mxu0 0
        %1998 = vmatpush1.bf16.msra.mxu0 0
        %1999 = vmatprep.subr.bf16.mxu0 0
        %2000 = vmatpush1.bf16.msra.mxu0 0
        %2001 = vmatprep.subr.bf16.mxu0 0
        %2002 = vmatpush1.bf16.msra.mxu0 0
        %2003 = vmatprep.subr.bf16.mxu0 0
        %2004 = vmatpush1.bf16.msra.mxu0 0
        %2005 = vmatprep.subr.bf16.mxu0 0
        %2006 = vmatpush1.bf16.msra.mxu0 0
        %2007 = vmatprep.mubr.bf16.mxu0 0
        %2008 = vmatmul.mubr.bf16.gmra.mrb[0].mxu0 %v1417
        %v2009 = vpop.f32.mrb[0].mxu0
        %v2010 = vadd.f32 0.0, %v2009
        %v2011 = vpop.f32.mrb[0].mxu0
        %v2012 = vadd.f32 0.0, %v2011
        %v2013 = vpop.f32.mrb[0].mxu0
        %v2014 = vadd.f32 0.0, %v2013
        %v2015 = vpop.f32.mrb[0].mxu0
        %v2016 = vadd.f32 0.0, %v2015
        %2017 = vdwg.mxu0
        %v2018 = vadd.f32 %v1881, %v1967
        %v2019 = vadd.f32 %v1883, %v1969
        %v2020 = vadd.f32 %v1924, %v2010
        %v2021 = vadd.f32 %v1926, %v2012
        %v2022 = vadd.f32 %v1885, %v1971
        %v2023 = vadd.f32 %v1887, %v1973
        %v2024 = vadd.f32 %v1928, %v2014
        %v2025 = vadd.f32 %v1930, %v2016
        %2026 = vmatprep.subr.bf16.mxu0 %v1369
        %2027 = vmatpush1.bf16.msra.mxu0 %v1368
        %2028 = vmatprep.subr.bf16.mxu0 %v1373
        %2029 = vmatpush1.bf16.msra.mxu0 %v1372
        %2030 = vmatprep.subr.bf16.mxu0 %v1377
        %2031 = vmatpush1.bf16.msra.mxu0 %v1376
        %2032 = vmatprep.subr.bf16.mxu0 %v1381
        %2033 = vmatpush1.bf16.msra.mxu0 %v1380
        %2034 = vmatprep.subr.bf16.mxu0 %v1385
        %2035 = vmatpush1.bf16.msra.mxu0 %v1384
        %2036 = vmatprep.subr.bf16.mxu0 %v1389
        %2037 = vmatpush1.bf16.msra.mxu0 %v1388
        %2038 = vmatprep.subr.bf16.mxu0 0
        %2039 = vmatpush1.bf16.msra.mxu0 0
        %2040 = vmatprep.subr.bf16.mxu0 0
        %2041 = vmatpush1.bf16.msra.mxu0 0
        %2042 = vmatprep.subr.bf16.mxu0 0
        %2043 = vmatpush1.bf16.msra.mxu0 0
        %2044 = vmatprep.subr.bf16.mxu0 0
        %2045 = vmatpush1.bf16.msra.mxu0 0
        %2046 = vmatprep.subr.bf16.mxu0 0
        %2047 = vmatpush1.bf16.msra.mxu0 0
        %2048 = vmatprep.subr.bf16.mxu0 0
        %2049 = vmatpush1.bf16.msra.mxu0 0
        %2050 = vmatprep.subr.bf16.mxu0 0
        %2051 = vmatpush1.bf16.msra.mxu0 0
        %2052 = vmatprep.subr.bf16.mxu0 0
        %2053 = vmatpush1.bf16.msra.mxu0 0
        %2054 = vmatprep.subr.bf16.mxu0 0
        %2055 = vmatpush1.bf16.msra.mxu0 0
        %2056 = vmatprep.subr.bf16.mxu0 0
        %2057 = vmatpush1.bf16.msra.mxu0 0
        %2058 = vmatprep.mubr.bf16.mxu0 0
        %2059 = vmatmul.mubr.bf16.gmra.mrb[0].mxu0 %v1664
        %v2060 = vpop.f32.mrb[0].mxu0
        %v2061 = vadd.f32 0.0, %v2060
        %v2062 = vpop.f32.mrb[0].mxu0
        %v2063 = vadd.f32 0.0, %v2062
        %v2064 = vpop.f32.mrb[0].mxu0
        %v2065 = vadd.f32 0.0, %v2064
        %v2066 = vpop.f32.mrb[0].mxu0
        %v2067 = vadd.f32 0.0, %v2066
        %2068 = vdwg.mxu0
        %2069 = vmatprep.subr.bf16.mxu0 %v1371
        %2070 = vmatpush1.bf16.msra.mxu0 %v1370
        %2071 = vmatprep.subr.bf16.mxu0 %v1375
        %2072 = vmatpush1.bf16.msra.mxu0 %v1374
        %2073 = vmatprep.subr.bf16.mxu0 %v1379
        %2074 = vmatpush1.bf16.msra.mxu0 %v1378
        %2075 = vmatprep.subr.bf16.mxu0 %v1383
        %2076 = vmatpush1.bf16.msra.mxu0 %v1382
        %2077 = vmatprep.subr.bf16.mxu0 %v1387
        %2078 = vmatpush1.bf16.msra.mxu0 %v1386
        %2079 = vmatprep.subr.bf16.mxu0 %v1391
        %2080 = vmatpush1.bf16.msra.mxu0 %v1390
        %2081 = vmatprep.subr.bf16.mxu0 0
        %2082 = vmatpush1.bf16.msra.mxu0 0
        %2083 = vmatprep.subr.bf16.mxu0 0
        %2084 = vmatpush1.bf16.msra.mxu0 0
        %2085 = vmatprep.subr.bf16.mxu0 0
        %2086 = vmatpush1.bf16.msra.mxu0 0
        %2087 = vmatprep.subr.bf16.mxu0 0
        %2088 = vmatpush1.bf16.msra.mxu0 0
        %2089 = vmatprep.subr.bf16.mxu0 0
        %2090 = vmatpush1.bf16.msra.mxu0 0
        %2091 = vmatprep.subr.bf16.mxu0 0
        %2092 = vmatpush1.bf16.msra.mxu0 0
        %2093 = vmatprep.subr.bf16.mxu0 0
        %2094 = vmatpush1.bf16.msra.mxu0 0
        %2095 = vmatprep.subr.bf16.mxu0 0
        %2096 = vmatpush1.bf16.msra.mxu0 0
        %2097 = vmatprep.subr.bf16.mxu0 0
        %2098 = vmatpush1.bf16.msra.mxu0 0
        %2099 = vmatprep.subr.bf16.mxu0 0
        %2100 = vmatpush1.bf16.msra.mxu0 0
        %2101 = vmatprep.mubr.bf16.mxu0 0
        %2102 = vmatmul.mubr.bf16.gmra.mrb[0].mxu0 %v1664
        %v2103 = vpop.f32.mrb[0].mxu0
        %v2104 = vadd.f32 0.0, %v2103
        %v2105 = vpop.f32.mrb[0].mxu0
        %v2106 = vadd.f32 0.0, %v2105
        %v2107 = vpop.f32.mrb[0].mxu0
        %v2108 = vadd.f32 0.0, %v2107
        %v2109 = vpop.f32.mrb[0].mxu0
        %v2110 = vadd.f32 0.0, %v2109
        %2111 = vdwg.mxu0
        %v2112 = vadd.f32 %v2018, %v2061
        %v2113 = vadd.f32 %v2019, %v2063
        %v2114 = vadd.f32 %v2020, %v2104
        %v2115 = vadd.f32 %v2021, %v2106
        %v2116 = vadd.f32 %v2022, %v2065
        %v2117 = vadd.f32 %v2023, %v2067
        %v2118 = vadd.f32 %v2024, %v2108
        %v2119 = vadd.f32 %v2025, %v2110
        %v2120 = vld [vmem:[%s522] sm:$0xe]
        %v2122 = vunpack.c.l.b16 %v2120
        %v2123 = vpack.c.b16 %v1287, %v2122
        %v2124 = vrot.slane %v2123, 1
        %v2126 = vsel %vm703, %v2124, 0
        %2128 = vmatprep.subr.bf16.mxu0 %v1616
        %2129 = vmatpush1.bf16.msra.mxu0 %v1615
        %2130 = vmatprep.subr.bf16.mxu0 %v1620
        %2131 = vmatpush1.bf16.msra.mxu0 %v1619
        %2132 = vmatprep.subr.bf16.mxu0 %v1624
        %2133 = vmatpush1.bf16.msra.mxu0 %v1623
        %2134 = vmatprep.subr.bf16.mxu0 %v1628
        %2135 = vmatpush1.bf16.msra.mxu0 %v1627
        %2136 = vmatprep.subr.bf16.mxu0 %v1632
        %2137 = vmatpush1.bf16.msra.mxu0 %v1631
        %2138 = vmatprep.subr.bf16.mxu0 %v1636
        %2139 = vmatpush1.bf16.msra.mxu0 %v1635
        %2140 = vmatprep.subr.bf16.mxu0 0
        %2141 = vmatpush1.bf16.msra.mxu0 0
        %2142 = vmatprep.subr.bf16.mxu0 0
        %2143 = vmatpush1.bf16.msra.mxu0 0
        %2144 = vmatprep.subr.bf16.mxu0 0
        %2145 = vmatpush1.bf16.msra.mxu0 0
        %2146 = vmatprep.subr.bf16.mxu0 0
        %2147 = vmatpush1.bf16.msra.mxu0 0
        %2148 = vmatprep.subr.bf16.mxu0 0
        %2149 = vmatpush1.bf16.msra.mxu0 0
        %2150 = vmatprep.subr.bf16.mxu0 0
        %2151 = vmatpush1.bf16.msra.mxu0 0
        %2152 = vmatprep.subr.bf16.mxu0 0
        %2153 = vmatpush1.bf16.msra.mxu0 0
        %2154 = vmatprep.subr.bf16.mxu0 0
        %2155 = vmatpush1.bf16.msra.mxu0 0
        %2156 = vmatprep.subr.bf16.mxu0 0
        %2157 = vmatpush1.bf16.msra.mxu0 0
        %2158 = vmatprep.subr.bf16.mxu0 0
        %2159 = vmatpush1.bf16.msra.mxu0 0
        %2160 = vmatprep.mubr.bf16.mxu0 0
        %2161 = vmatmul.mubr.bf16.gmra.mrb[0].mxu0 %v2126
        %v2162 = vpop.f32.mrb[0].mxu0
        %v2163 = vadd.f32 0.0, %v2162
        %v2164 = vpop.f32.mrb[0].mxu0
        %v2165 = vadd.f32 0.0, %v2164
        %v2166 = vpop.f32.mrb[0].mxu0
        %v2167 = vadd.f32 0.0, %v2166
        %v2168 = vpop.f32.mrb[0].mxu0
        %v2169 = vadd.f32 0.0, %v2168
        %2170 = vdwg.mxu0
        %2171 = vmatprep.subr.bf16.mxu0 %v1618
        %2172 = vmatpush1.bf16.msra.mxu0 %v1617
        %2173 = vmatprep.subr.bf16.mxu0 %v1622
        %2174 = vmatpush1.bf16.msra.mxu0 %v1621
        %2175 = vmatprep.subr.bf16.mxu0 %v1626
        %2176 = vmatpush1.bf16.msra.mxu0 %v1625
        %2177 = vmatprep.subr.bf16.mxu0 %v1630
        %2178 = vmatpush1.bf16.msra.mxu0 %v1629
        %2179 = vmatprep.subr.bf16.mxu0 %v1634
        %2180 = vmatpush1.bf16.msra.mxu0 %v1633
        %2181 = vmatprep.subr.bf16.mxu0 %v1638
        %2182 = vmatpush1.bf16.msra.mxu0 %v1637
        %2183 = vmatprep.subr.bf16.mxu0 0
        %2184 = vmatpush1.bf16.msra.mxu0 0
        %2185 = vmatprep.subr.bf16.mxu0 0
        %2186 = vmatpush1.bf16.msra.mxu0 0
        %2187 = vmatprep.subr.bf16.mxu0 0
        %2188 = vmatpush1.bf16.msra.mxu0 0
        %2189 = vmatprep.subr.bf16.mxu0 0
        %2190 = vmatpush1.bf16.msra.mxu0 0
        %2191 = vmatprep.subr.bf16.mxu0 0
        %2192 = vmatpush1.bf16.msra.mxu0 0
        %2193 = vmatprep.subr.bf16.mxu0 0
        %2194 = vmatpush1.bf16.msra.mxu0 0
        %2195 = vmatprep.subr.bf16.mxu0 0
        %2196 = vmatpush1.bf16.msra.mxu0 0
        %2197 = vmatprep.subr.bf16.mxu0 0
        %2198 = vmatpush1.bf16.msra.mxu0 0
        %2199 = vmatprep.subr.bf16.mxu0 0
        %2200 = vmatpush1.bf16.msra.mxu0 0
        %2201 = vmatprep.subr.bf16.mxu0 0
        %2202 = vmatpush1.bf16.msra.mxu0 0
        %2203 = vmatprep.mubr.bf16.mxu0 0
        %2204 = vmatmul.mubr.bf16.gmra.mrb[0].mxu0 %v2126
        %v2205 = vpop.f32.mrb[0].mxu0
        %v2206 = vadd.f32 0.0, %v2205
        %v2207 = vpop.f32.mrb[0].mxu0
        %v2208 = vadd.f32 0.0, %v2207
        %v2209 = vpop.f32.mrb[0].mxu0
        %v2210 = vadd.f32 0.0, %v2209
        %v2211 = vpop.f32.mrb[0].mxu0
        %v2212 = vadd.f32 0.0, %v2211
        %2213 = vdwg.mxu0
        %v2214 = vadd.f32 %v2112, %v2163
        %v2215 = vadd.f32 %v2113, %v2165
        %v2216 = vadd.f32 %v2114, %v2206
        %v2217 = vadd.f32 %v2115, %v2208
        %v2218 = vadd.f32 %v2116, %v2167
        %v2219 = vadd.f32 %v2117, %v2169
        %v2220 = vadd.f32 %v2118, %v2210
        %v2221 = vadd.f32 %v2119, %v2212
        %v2223 = vlaneseq
        %v2224 = vshrl.u32 %v2223, 7
        %v2225 = vsub.s32 0, %v2224
        %v2226 = vrot.slane %v524, %v2225
        %v2227 = vlaneseq
        %v2228 = vshrl.u32 %v2227, 7
        %v2229 = vsub.s32 1, %v2228
        %v2230 = vrot.slane %v524, %v2229
        %v2231 = vlaneseq
        %v2232 = vshrl.u32 %v2231, 7
        %v2233 = vsub.s32 2, %v2232
        %v2234 = vrot.slane %v524, %v2233
        %v2235 = vlaneseq
        %v2236 = vshrl.u32 %v2235, 7
        %v2237 = vsub.s32 3, %v2236
        %v2238 = vrot.slane %v524, %v2237
        %v2243 = vadd.f32 %v1752, %v2226
        %v2244 = vadd.f32 %v1753, %v2230
        %v2245 = vadd.f32 %v1754, %v2234
        %v2246 = vadd.f32 %v1755, %v2238
        %v2247 = vadd.f32 %v1756, %v2226
        %v2248 = vadd.f32 %v1757, %v2230
        %v2249 = vadd.f32 %v1758, %v2234
        %v2250 = vadd.f32 %v1759, %v2238
        %v2251 = vmax.f32 %v2243, 0.0
        %v2252 = vmax.f32 %v2244, 0.0
        %v2253 = vmax.f32 %v2245, 0.0
        %v2254 = vmax.f32 %v2246, 0.0
        %v2255 = vmax.f32 %v2247, 0.0
        %v2256 = vmax.f32 %v2248, 0.0
        %v2257 = vmax.f32 %v2249, 0.0
        %v2258 = vmax.f32 %v2250, 0.0
        %2259 = vst [vmem:[#allocation2] sm:$0xff] %v2251
        %2260 = vst [vmem:[#allocation2 + $0x8] sm:$0xff] %v2252
        %2261 = vst [vmem:[#allocation2 + $0x10] sm:$0xff] %v2253
        %vm2262 = vcmask 523264
        %2263 = vst.msk [vmem:[#allocation2 + $0x18] sm:$0xff] %vm2262, %v2254
        %2264 = vst [vmem:[#allocation2 + $0x20] sm:$0x3f] %v2255
        %2265 = vst [vmem:[#allocation2 + $0x28] sm:$0x3f] %v2256
        %2266 = vst [vmem:[#allocation2 + $0x30] sm:$0x3f] %v2257
        %vm2267 = vcmask 521216
        %2268 = vst.msk [vmem:[#allocation2 + $0x38] sm:$0x3f] %vm2267, %v2258
        %v2269 = vadd.f32 %v2214, %v2226
        %v2270 = vadd.f32 %v2215, %v2230
        %v2271 = vadd.f32 %v2216, %v2234
        %v2272 = vadd.f32 %v2217, %v2238
        %v2273 = vadd.f32 %v2218, %v2226
        %v2274 = vadd.f32 %v2219, %v2230
        %v2275 = vadd.f32 %v2220, %v2234
        %v2276 = vadd.f32 %v2221, %v2238
        %v2277 = vmax.f32 %v2269, 0.0
        %v2278 = vmax.f32 %v2270, 0.0
        %v2279 = vmax.f32 %v2271, 0.0
        %v2280 = vmax.f32 %v2272, 0.0
        %v2281 = vmax.f32 %v2273, 0.0
        %v2282 = vmax.f32 %v2274, 0.0
        %v2283 = vmax.f32 %v2275, 0.0
        %v2284 = vmax.f32 %v2276, 0.0
        %2285 = vst [vmem:[#allocation3] sm:$0xff] %v2277
        %2286 = vst [vmem:[#allocation3 + $0x8] sm:$0xff] %v2278
        %2287 = vst [vmem:[#allocation3 + $0x10] sm:$0xff] %v2279
        %2288 = vst.msk [vmem:[#allocation3 + $0x18] sm:$0xff] %vm2262, %v2280
        %2289 = vst [vmem:[#allocation3 + $0x20] sm:$0x3f] %v2281
        %2290 = vst [vmem:[#allocation3 + $0x28] sm:$0x3f] %v2282
        %2291 = vst [vmem:[#allocation3 + $0x30] sm:$0x3f] %v2283
        %2292 = vst.msk [vmem:[#allocation3 + $0x38] sm:$0x3f] %vm2267, %v2284
        %v2293 = vld [vmem:[#allocation2] sm:$0xff]
        %v2294 = vld [vmem:[#allocation2 + $0x8] sm:$0xff]
        %v2295 = vld [vmem:[#allocation2 + $0x10] sm:$0xff]
        %v2296 = vld [vmem:[#allocation2 + $0x18] sm:$0xff]
        %v2297 = vld [vmem:[#allocation2 + $0x20] sm:$0xf]
        %v2298 = vld [vmem:[#allocation2 + $0x28] sm:$0xf]
        %v2299 = vld [vmem:[#allocation2 + $0x30] sm:$0xf]
        %v2300 = vld [vmem:[#allocation2 + $0x38] sm:$0xf]
        %v2301 = vpack.c.bf16 %v2297, %v2293
        %v2302 = vpack.c.bf16 %v2298, %v2294
        %v2303 = vpack.c.bf16 %v2299, %v2295
        %v2304 = vpack.c.bf16 %v2300, %v2296
        %v2305 = vld [vmem:[#allocation9] sm:$0xff]
        %v2306 = vld [vmem:[#allocation9 + $0x8] sm:$0xf]
        %v2307 = vld [vmem:[#allocation9 + $0xc] sm:$0xff]
        %v2308 = vld [vmem:[#allocation9 + $0x14] sm:$0xf]
        %v2309 = vld [vmem:[#allocation9 + $0x18] sm:$0xff]
        %v2310 = vld [vmem:[#allocation9 + $0x20] sm:$0xf]
        %v2311 = vld [vmem:[#allocation9 + $0x24] sm:$0xff]
        %v2312 = vld [vmem:[#allocation9 + $0x2c] sm:$0xf]
        %v2313 = vld [vmem:[#allocation9 + $0x30] sm:$0xff]
        %v2314 = vld [vmem:[#allocation9 + $0x38] sm:$0xf]
        %v2315 = vld [vmem:[#allocation9 + $0x3c] sm:$0xff]
        %v2316 = vld [vmem:[#allocation9 + $0x44] sm:$0xf]
        %v2317 = vld [vmem:[#allocation9 + $0x48] sm:$0xff]
        %v2318 = vld [vmem:[#allocation9 + $0x50] sm:$0xf]
        %v2319 = vld [vmem:[#allocation9 + $0x54] sm:$0xff]
        %v2320 = vld [vmem:[#allocation9 + $0x5c] sm:$0xf]
        %v2321 = vld [vmem:[#allocation9 + $0x60] sm:$0xff]
        %v2322 = vld [vmem:[#allocation9 + $0x68] sm:$0xf]
        %v2323 = vld [vmem:[#allocation9 + $0x6c] sm:$0xff]
        %v2324 = vld [vmem:[#allocation9 + $0x74] sm:$0xf]
        %v2325 = vld [vmem:[#allocation9 + $0x78] sm:$0xff]
        %v2326 = vld [vmem:[#allocation9 + $0x80] sm:$0xf]
        %v2327 = vld [vmem:[#allocation9 + $0x84] sm:$0xff]
        %v2328 = vld [vmem:[#allocation9 + $0x8c] sm:$0xf]
        %v2329 = vld [vmem:[#allocation9 + $0x90] sm:$0xff]
        %v2330 = vld [vmem:[#allocation9 + $0x98] sm:$0xf]
        %v2331 = vld [vmem:[#allocation9 + $0x9c] sm:$0xff]
        %v2332 = vld [vmem:[#allocation9 + $0xa4] sm:$0xf]
        %v2333 = vld [vmem:[#allocation9 + $0xa8] sm:$0xff]
        %v2334 = vld [vmem:[#allocation9 + $0xb0] sm:$0xf]
        %v2335 = vld [vmem:[#allocation9 + $0xb4] sm:$0xff]
        %v2336 = vld [vmem:[#allocation9 + $0xbc] sm:$0xf]
        %v2337 = vld [vmem:[#allocation9 + $0xc0] sm:$0xff]
        %v2338 = vld [vmem:[#allocation9 + $0xc8] sm:$0xf]
        %v2339 = vld [vmem:[#allocation9 + $0xcc] sm:$0xff]
        %v2340 = vld [vmem:[#allocation9 + $0xd4] sm:$0xf]
        %v2341 = vld [vmem:[#allocation9 + $0xd8] sm:$0xff]
        %v2342 = vld [vmem:[#allocation9 + $0xe0] sm:$0xf]
        %v2343 = vld [vmem:[#allocation9 + $0xe4] sm:$0xff]
        %v2344 = vld [vmem:[#allocation9 + $0xec] sm:$0xf]
        %v2345 = vld [vmem:[#allocation9 + $0xf0] sm:$0xff]
        %v2346 = vld [vmem:[#allocation9 + $0xf8] sm:$0xf]
        %v2347 = vld [vmem:[#allocation9 + $0xfc] sm:$0xff]
        %v2348 = vld [vmem:[#allocation9 + $0x104] sm:$0xf]
        %v2349 = vld [vmem:[#allocation9 + $0x108] sm:$0xff]
        %v2350 = vld [vmem:[#allocation9 + $0x110] sm:$0xf]
        %v2351 = vld [vmem:[#allocation9 + $0x114] sm:$0xff]
        %v2352 = vld [vmem:[#allocation9 + $0x11c] sm:$0xf]
        %v2353 = vld [vmem:[#allocation9 + $0x120] sm:$0xff]
        %v2354 = vld [vmem:[#allocation9 + $0x128] sm:$0xf]
        %v2355 = vld [vmem:[#allocation9 + $0x12c] sm:$0xff]
        %v2356 = vld [vmem:[#allocation9 + $0x134] sm:$0xf]
        %v2357 = vld [vmem:[#allocation9 + $0x138] sm:$0xff]
        %v2358 = vld [vmem:[#allocation9 + $0x140] sm:$0xf]
        %v2359 = vld [vmem:[#allocation9 + $0x144] sm:$0xff]
        %v2360 = vld [vmem:[#allocation9 + $0x14c] sm:$0xf]
        %v2361 = vld [vmem:[#allocation9 + $0x150] sm:$0xff]
        %v2362 = vld [vmem:[#allocation9 + $0x158] sm:$0xf]
        %v2363 = vld [vmem:[#allocation9 + $0x15c] sm:$0xff]
        %v2364 = vld [vmem:[#allocation9 + $0x164] sm:$0xf]
        %v2365 = vld [vmem:[#allocation9 + $0x168] sm:$0xff]
        %v2366 = vld [vmem:[#allocation9 + $0x170] sm:$0xf]
        %v2367 = vld [vmem:[#allocation9 + $0x174] sm:$0xff]
        %v2368 = vld [vmem:[#allocation9 + $0x17c] sm:$0xf]
        %v2369 = vld [vmem:[#allocation9 + $0x180] sm:$0xff]
        %v2370 = vld [vmem:[#allocation9 + $0x188] sm:$0xf]
        %v2371 = vld [vmem:[#allocation9 + $0x18c] sm:$0xff]
        %v2372 = vld [vmem:[#allocation9 + $0x194] sm:$0xf]
        %v2373 = vld [vmem:[#allocation9 + $0x198] sm:$0xff]
        %v2374 = vld [vmem:[#allocation9 + $0x1a0] sm:$0xf]
        %v2375 = vld [vmem:[#allocation9 + $0x1a4] sm:$0xff]
        %v2376 = vld [vmem:[#allocation9 + $0x1ac] sm:$0xf]
        %v2377 = vld [vmem:[#allocation9 + $0x1b0] sm:$0xff]
        %v2378 = vld [vmem:[#allocation9 + $0x1b8] sm:$0xf]
        %v2379 = vld [vmem:[#allocation9 + $0x1bc] sm:$0xff]
        %v2380 = vld [vmem:[#allocation9 + $0x1c4] sm:$0xf]
        %v2381 = vld [vmem:[#allocation9 + $0x1c8] sm:$0xff]
        %v2382 = vld [vmem:[#allocation9 + $0x1d0] sm:$0xf]
        %v2383 = vld [vmem:[#allocation9 + $0x1d4] sm:$0xff]
        %v2384 = vld [vmem:[#allocation9 + $0x1dc] sm:$0xf]
        %v2385 = vld [vmem:[#allocation9 + $0x1e0] sm:$0xff]
        %v2386 = vld [vmem:[#allocation9 + $0x1e8] sm:$0xf]
        %v2387 = vld [vmem:[#allocation9 + $0x1ec] sm:$0xff]
        %v2388 = vld [vmem:[#allocation9 + $0x1f4] sm:$0xf]
        %v2389 = vld [vmem:[#allocation9 + $0x1f8] sm:$0xff]
        %v2390 = vld [vmem:[#allocation9 + $0x200] sm:$0xf]
        %v2391 = vld [vmem:[#allocation9 + $0x204] sm:$0xff]
        %v2392 = vld [vmem:[#allocation9 + $0x20c] sm:$0xf]
        %v2393 = vld [vmem:[#allocation9 + $0x210] sm:$0xff]
        %v2394 = vld [vmem:[#allocation9 + $0x218] sm:$0xf]
        %v2395 = vld [vmem:[#allocation9 + $0x21c] sm:$0xff]
        %v2396 = vld [vmem:[#allocation9 + $0x224] sm:$0xf]
        %v2397 = vld [vmem:[#allocation9 + $0x228] sm:$0xff]
        %v2398 = vld [vmem:[#allocation9 + $0x230] sm:$0xf]
        %v2399 = vld [vmem:[#allocation9 + $0x234] sm:$0xff]
        %v2400 = vld [vmem:[#allocation9 + $0x23c] sm:$0xf]
        %v2401 = vld [vmem:[#allocation9 + $0x240] sm:$0xff]
        %v2402 = vld [vmem:[#allocation9 + $0x248] sm:$0xf]
        %v2403 = vld [vmem:[#allocation9 + $0x24c] sm:$0xff]
        %v2404 = vld [vmem:[#allocation9 + $0x254] sm:$0xf]
        %v2405 = vld [vmem:[#allocation9 + $0x258] sm:$0xff]
        %v2406 = vld [vmem:[#allocation9 + $0x260] sm:$0xf]
        %v2407 = vld [vmem:[#allocation9 + $0x264] sm:$0xff]
        %v2408 = vld [vmem:[#allocation9 + $0x26c] sm:$0xf]
        %v2409 = vld [vmem:[#allocation9 + $0x270] sm:$0xff]
        %v2410 = vld [vmem:[#allocation9 + $0x278] sm:$0xf]
        %v2411 = vld [vmem:[#allocation9 + $0x27c] sm:$0xff]
        %v2412 = vld [vmem:[#allocation9 + $0x284] sm:$0xf]
        %v2413 = vld [vmem:[#allocation9 + $0x288] sm:$0xff]
        %v2414 = vld [vmem:[#allocation9 + $0x290] sm:$0xf]
        %v2415 = vld [vmem:[#allocation9 + $0x294] sm:$0xff]
        %v2416 = vld [vmem:[#allocation9 + $0x29c] sm:$0xf]
        %v2417 = vld [vmem:[#allocation3] sm:$0xff]
        %v2418 = vld [vmem:[#allocation3 + $0x8] sm:$0xff]
        %v2419 = vld [vmem:[#allocation3 + $0x10] sm:$0xff]
        %v2420 = vld [vmem:[#allocation3 + $0x18] sm:$0xff]
        %v2421 = vld [vmem:[#allocation3 + $0x20] sm:$0xf]
        %v2422 = vld [vmem:[#allocation3 + $0x28] sm:$0xf]
        %v2423 = vld [vmem:[#allocation3 + $0x30] sm:$0xf]
        %v2424 = vld [vmem:[#allocation3 + $0x38] sm:$0xf]
        %v2425 = vpack.c.bf16 %v2421, %v2417
        %v2426 = vpack.c.bf16 %v2422, %v2418
        %v2427 = vpack.c.bf16 %v2423, %v2419
        %v2428 = vpack.c.bf16 %v2424, %v2420
        %s2429 = scalar_lea.vmem [#allocation9], 672
        %v2430 = vld [vmem:[%s2429] sm:$0xff]
        %v2431 = vld [vmem:[%s2429 + $0x8] sm:$0xf]
        %v2432 = vld [vmem:[%s2429 + $0xc] sm:$0xff]
        %v2433 = vld [vmem:[%s2429 + $0x14] sm:$0xf]
        %v2434 = vld [vmem:[%s2429 + $0x18] sm:$0xff]
        %v2435 = vld [vmem:[%s2429 + $0x20] sm:$0xf]
        %v2436 = vld [vmem:[%s2429 + $0x24] sm:$0xff]
        %v2437 = vld [vmem:[%s2429 + $0x2c] sm:$0xf]
        %v2438 = vld [vmem:[%s2429 + $0x30] sm:$0xff]
        %v2439 = vld [vmem:[%s2429 + $0x38] sm:$0xf]
        %v2440 = vld [vmem:[%s2429 + $0x3c] sm:$0xff]
        %v2441 = vld [vmem:[%s2429 + $0x44] sm:$0xf]
        %v2442 = vld [vmem:[%s2429 + $0x48] sm:$0xff]
        %v2443 = vld [vmem:[%s2429 + $0x50] sm:$0xf]
        %v2444 = vld [vmem:[%s2429 + $0x54] sm:$0xff]
        %v2445 = vld [vmem:[%s2429 + $0x5c] sm:$0xf]
        %v2446 = vld [vmem:[%s2429 + $0x60] sm:$0xff]
        %v2447 = vld [vmem:[%s2429 + $0x68] sm:$0xf]
        %v2448 = vld [vmem:[%s2429 + $0x6c] sm:$0xff]
        %v2449 = vld [vmem:[%s2429 + $0x74] sm:$0xf]
        %v2450 = vld [vmem:[%s2429 + $0x78] sm:$0xff]
        %v2451 = vld [vmem:[%s2429 + $0x80] sm:$0xf]
        %v2452 = vld [vmem:[%s2429 + $0x84] sm:$0xff]
        %v2453 = vld [vmem:[%s2429 + $0x8c] sm:$0xf]
        %v2454 = vld [vmem:[%s2429 + $0x90] sm:$0xff]
        %v2455 = vld [vmem:[%s2429 + $0x98] sm:$0xf]
        %v2456 = vld [vmem:[%s2429 + $0x9c] sm:$0xff]
        %v2457 = vld [vmem:[%s2429 + $0xa4] sm:$0xf]
        %v2458 = vld [vmem:[%s2429 + $0xa8] sm:$0xff]
        %v2459 = vld [vmem:[%s2429 + $0xb0] sm:$0xf]
        %v2460 = vld [vmem:[%s2429 + $0xb4] sm:$0xff]
        %v2461 = vld [vmem:[%s2429 + $0xbc] sm:$0xf]
        %v2462 = vld [vmem:[%s2429 + $0xc0] sm:$0xff]
        %v2463 = vld [vmem:[%s2429 + $0xc8] sm:$0xf]
        %v2464 = vld [vmem:[%s2429 + $0xcc] sm:$0xff]
        %v2465 = vld [vmem:[%s2429 + $0xd4] sm:$0xf]
        %v2466 = vld [vmem:[%s2429 + $0xd8] sm:$0xff]
        %v2467 = vld [vmem:[%s2429 + $0xe0] sm:$0xf]
        %v2468 = vld [vmem:[%s2429 + $0xe4] sm:$0xff]
        %v2469 = vld [vmem:[%s2429 + $0xec] sm:$0xf]
        %v2470 = vld [vmem:[%s2429 + $0xf0] sm:$0xff]
        %v2471 = vld [vmem:[%s2429 + $0xf8] sm:$0xf]
        %v2472 = vld [vmem:[%s2429 + $0xfc] sm:$0xff]
        %v2473 = vld [vmem:[%s2429 + $0x104] sm:$0xf]
        %v2474 = vld [vmem:[%s2429 + $0x108] sm:$0xff]
        %v2475 = vld [vmem:[%s2429 + $0x110] sm:$0xf]
        %v2476 = vld [vmem:[%s2429 + $0x114] sm:$0xff]
        %v2477 = vld [vmem:[%s2429 + $0x11c] sm:$0xf]
        %v2478 = vld [vmem:[%s2429 + $0x120] sm:$0xff]
        %v2479 = vld [vmem:[%s2429 + $0x128] sm:$0xf]
        %v2480 = vld [vmem:[%s2429 + $0x12c] sm:$0xff]
        %v2481 = vld [vmem:[%s2429 + $0x134] sm:$0xf]
        %v2482 = vld [vmem:[%s2429 + $0x138] sm:$0xff]
        %v2483 = vld [vmem:[%s2429 + $0x140] sm:$0xf]
        %v2484 = vld [vmem:[%s2429 + $0x144] sm:$0xff]
        %v2485 = vld [vmem:[%s2429 + $0x14c] sm:$0xf]
        %v2486 = vld [vmem:[%s2429 + $0x150] sm:$0xff]
        %v2487 = vld [vmem:[%s2429 + $0x158] sm:$0xf]
        %v2488 = vld [vmem:[%s2429 + $0x15c] sm:$0xff]
        %v2489 = vld [vmem:[%s2429 + $0x164] sm:$0xf]
        %v2490 = vld [vmem:[%s2429 + $0x168] sm:$0xff]
        %v2491 = vld [vmem:[%s2429 + $0x170] sm:$0xf]
        %v2492 = vld [vmem:[%s2429 + $0x174] sm:$0xff]
        %v2493 = vld [vmem:[%s2429 + $0x17c] sm:$0xf]
        %v2494 = vld [vmem:[%s2429 + $0x180] sm:$0xff]
        %v2495 = vld [vmem:[%s2429 + $0x188] sm:$0xf]
        %v2496 = vld [vmem:[%s2429 + $0x18c] sm:$0xff]
        %v2497 = vld [vmem:[%s2429 + $0x194] sm:$0xf]
        %v2498 = vld [vmem:[%s2429 + $0x198] sm:$0xff]
        %v2499 = vld [vmem:[%s2429 + $0x1a0] sm:$0xf]
        %v2500 = vld [vmem:[%s2429 + $0x1a4] sm:$0xff]
        %v2501 = vld [vmem:[%s2429 + $0x1ac] sm:$0xf]
        %v2502 = vld [vmem:[%s2429 + $0x1b0] sm:$0xff]
        %v2503 = vld [vmem:[%s2429 + $0x1b8] sm:$0xf]
        %v2504 = vld [vmem:[%s2429 + $0x1bc] sm:$0xff]
        %v2505 = vld [vmem:[%s2429 + $0x1c4] sm:$0xf]
        %v2506 = vld [vmem:[%s2429 + $0x1c8] sm:$0xff]
        %v2507 = vld [vmem:[%s2429 + $0x1d0] sm:$0xf]
        %v2508 = vld [vmem:[%s2429 + $0x1d4] sm:$0xff]
        %v2509 = vld [vmem:[%s2429 + $0x1dc] sm:$0xf]
        %v2510 = vld [vmem:[%s2429 + $0x1e0] sm:$0xff]
        %v2511 = vld [vmem:[%s2429 + $0x1e8] sm:$0xf]
        %v2512 = vld [vmem:[%s2429 + $0x1ec] sm:$0xff]
        %v2513 = vld [vmem:[%s2429 + $0x1f4] sm:$0xf]
        %v2514 = vld [vmem:[%s2429 + $0x1f8] sm:$0xff]
        %v2515 = vld [vmem:[%s2429 + $0x200] sm:$0xf]
        %v2516 = vld [vmem:[%s2429 + $0x204] sm:$0xff]
        %v2517 = vld [vmem:[%s2429 + $0x20c] sm:$0xf]
        %v2518 = vld [vmem:[%s2429 + $0x210] sm:$0xff]
        %v2519 = vld [vmem:[%s2429 + $0x218] sm:$0xf]
        %v2520 = vld [vmem:[%s2429 + $0x21c] sm:$0xff]
        %v2521 = vld [vmem:[%s2429 + $0x224] sm:$0xf]
        %v2522 = vld [vmem:[%s2429 + $0x228] sm:$0xff]
        %v2523 = vld [vmem:[%s2429 + $0x230] sm:$0xf]
        %v2524 = vld [vmem:[%s2429 + $0x234] sm:$0xff]
        %v2525 = vld [vmem:[%s2429 + $0x23c] sm:$0xf]
        %v2526 = vld [vmem:[%s2429 + $0x240] sm:$0xff]
        %v2527 = vld [vmem:[%s2429 + $0x248] sm:$0xf]
        %v2528 = vld [vmem:[%s2429 + $0x24c] sm:$0xff]
        %v2529 = vld [vmem:[%s2429 + $0x254] sm:$0xf]
        %v2530 = vld [vmem:[%s2429 + $0x258] sm:$0xff]
        %v2531 = vld [vmem:[%s2429 + $0x260] sm:$0xf]
        %v2532 = vld [vmem:[%s2429 + $0x264] sm:$0xff]
        %v2533 = vld [vmem:[%s2429 + $0x26c] sm:$0xf]
        %v2534 = vld [vmem:[%s2429 + $0x270] sm:$0xff]
        %v2535 = vld [vmem:[%s2429 + $0x278] sm:$0xf]
        %v2536 = vld [vmem:[%s2429 + $0x27c] sm:$0xff]
        %v2537 = vld [vmem:[%s2429 + $0x284] sm:$0xf]
        %v2538 = vld [vmem:[%s2429 + $0x288] sm:$0xff]
        %v2539 = vld [vmem:[%s2429 + $0x290] sm:$0xf]
        %v2540 = vld [vmem:[%s2429 + $0x294] sm:$0xff]
        %v2541 = vld [vmem:[%s2429 + $0x29c] sm:$0xf]
        %v2654 = vunpack.c.l.b16 %v2430
        %v2655 = vunpack.c.h.b16 %v2430
        %v2656 = vunpack.c.l.b16 %v2431
        %v2657 = vunpack.c.l.b16 %v2432
        %v2658 = vunpack.c.h.b16 %v2432
        %v2659 = vunpack.c.l.b16 %v2433
        %v2660 = vunpack.c.l.b16 %v2434
        %v2661 = vunpack.c.h.b16 %v2434
        %v2662 = vunpack.c.l.b16 %v2435
        %v2663 = vunpack.c.l.b16 %v2436
        %v2664 = vunpack.c.h.b16 %v2436
        %v2665 = vunpack.c.l.b16 %v2437
        %v2666 = vunpack.c.l.b16 %v2438
        %v2667 = vunpack.c.h.b16 %v2438
        %v2668 = vunpack.c.l.b16 %v2439
        %v2669 = vunpack.c.l.b16 %v2440
        %v2670 = vunpack.c.h.b16 %v2440
        %v2671 = vunpack.c.l.b16 %v2441
        %v2672 = vunpack.c.l.b16 %v2442
        %v2673 = vunpack.c.h.b16 %v2442
        %v2674 = vunpack.c.l.b16 %v2443
        %v2675 = vunpack.c.l.b16 %v2444
        %v2676 = vunpack.c.h.b16 %v2444
        %v2677 = vunpack.c.l.b16 %v2445
        %v2678 = vunpack.c.l.b16 %v2446
        %v2679 = vunpack.c.h.b16 %v2446
        %v2680 = vunpack.c.l.b16 %v2447
        %v2681 = vunpack.c.l.b16 %v2448
        %v2682 = vunpack.c.h.b16 %v2448
        %v2683 = vunpack.c.l.b16 %v2449
        %v2684 = vunpack.c.l.b16 %v2450
        %v2685 = vunpack.c.h.b16 %v2450
        %v2686 = vunpack.c.l.b16 %v2451
        %v2687 = vunpack.c.l.b16 %v2452
        %v2688 = vunpack.c.h.b16 %v2452
        %v2689 = vunpack.c.l.b16 %v2453
        %v2690 = vunpack.c.l.b16 %v2454
        %v2691 = vunpack.c.h.b16 %v2454
        %v2692 = vunpack.c.l.b16 %v2455
        %v2693 = vunpack.c.l.b16 %v2456
        %v2694 = vunpack.c.h.b16 %v2456
        %v2695 = vunpack.c.l.b16 %v2457
        %v2696 = vunpack.c.l.b16 %v2458
        %v2697 = vunpack.c.h.b16 %v2458
        %v2698 = vunpack.c.l.b16 %v2459
        %v2699 = vunpack.c.l.b16 %v2460
        %v2700 = vunpack.c.h.b16 %v2460
        %v2701 = vunpack.c.l.b16 %v2461
        %v2702 = vunpack.c.l.b16 %v2462
        %v2703 = vunpack.c.h.b16 %v2462
        %v2704 = vunpack.c.l.b16 %v2463
        %v2705 = vunpack.c.l.b16 %v2464
        %v2706 = vunpack.c.h.b16 %v2464
        %v2707 = vunpack.c.l.b16 %v2465
        %v2708 = vunpack.c.l.b16 %v2466
        %v2709 = vunpack.c.h.b16 %v2466
        %v2710 = vunpack.c.l.b16 %v2467
        %v2711 = vunpack.c.l.b16 %v2468
        %v2712 = vunpack.c.h.b16 %v2468
        %v2713 = vunpack.c.l.b16 %v2469
        %v2714 = vunpack.c.l.b16 %v2470
        %v2715 = vunpack.c.h.b16 %v2470
        %v2716 = vunpack.c.l.b16 %v2471
        %v2717 = vunpack.c.l.b16 %v2472
        %v2718 = vunpack.c.h.b16 %v2472
        %v2719 = vunpack.c.l.b16 %v2473
        %v2720 = vunpack.c.l.b16 %v2474
        %v2721 = vunpack.c.h.b16 %v2474
        %v2722 = vunpack.c.l.b16 %v2475
        %v2723 = vunpack.c.l.b16 %v2476
        %v2724 = vunpack.c.h.b16 %v2476
        %v2725 = vunpack.c.l.b16 %v2477
        %v2726 = vunpack.c.l.b16 %v2478
        %v2727 = vunpack.c.h.b16 %v2478
        %v2728 = vunpack.c.l.b16 %v2479
        %v2729 = vunpack.c.l.b16 %v2480
        %v2730 = vunpack.c.h.b16 %v2480
        %v2731 = vunpack.c.l.b16 %v2481
        %v2732 = vunpack.c.l.b16 %v2482
        %v2733 = vunpack.c.h.b16 %v2482
        %v2734 = vunpack.c.l.b16 %v2483
        %v2735 = vunpack.c.l.b16 %v2484
        %v2736 = vunpack.c.h.b16 %v2484
        %v2737 = vunpack.c.l.b16 %v2485
        %v2738 = vunpack.c.l.b16 %v2486
        %v2739 = vunpack.c.h.b16 %v2486
        %v2740 = vunpack.c.l.b16 %v2487
        %v2741 = vunpack.c.l.b16 %v2488
        %v2742 = vunpack.c.h.b16 %v2488
        %v2743 = vunpack.c.l.b16 %v2489
        %v2744 = vunpack.c.l.b16 %v2490
        %v2745 = vunpack.c.h.b16 %v2490
        %v2746 = vunpack.c.l.b16 %v2491
        %v2747 = vunpack.c.l.b16 %v2492
        %v2748 = vunpack.c.h.b16 %v2492
        %v2749 = vunpack.c.l.b16 %v2493
        %v2750 = vunpack.c.l.b16 %v2494
        %v2751 = vunpack.c.h.b16 %v2494
        %v2752 = vunpack.c.l.b16 %v2495
        %v2753 = vunpack.c.l.b16 %v2496
        %v2754 = vunpack.c.h.b16 %v2496
        %v2755 = vunpack.c.l.b16 %v2497
        %v2756 = vunpack.c.l.b16 %v2498
        %v2757 = vunpack.c.h.b16 %v2498
        %v2758 = vunpack.c.l.b16 %v2499
        %v2759 = vunpack.c.l.b16 %v2500
        %v2760 = vunpack.c.h.b16 %v2500
        %v2761 = vunpack.c.l.b16 %v2501
        %v2762 = vunpack.c.l.b16 %v2502
        %v2763 = vunpack.c.h.b16 %v2502
        %v2764 = vunpack.c.l.b16 %v2503
        %v2765 = vunpack.c.l.b16 %v2504
        %v2766 = vunpack.c.h.b16 %v2504
        %v2767 = vunpack.c.l.b16 %v2505
        %v2768 = vunpack.c.l.b16 %v2506
        %v2769 = vunpack.c.h.b16 %v2506
        %v2770 = vunpack.c.l.b16 %v2507
        %v2771 = vunpack.c.l.b16 %v2508
        %v2772 = vunpack.c.h.b16 %v2508
        %v2773 = vunpack.c.l.b16 %v2509
        %v2774 = vunpack.c.l.b16 %v2510
        %v2775 = vunpack.c.h.b16 %v2510
        %v2776 = vunpack.c.l.b16 %v2511
        %v2777 = vunpack.c.l.b16 %v2512
        %v2778 = vunpack.c.h.b16 %v2512
        %v2779 = vunpack.c.l.b16 %v2513
        %v2780 = vunpack.c.l.b16 %v2514
        %v2781 = vunpack.c.h.b16 %v2514
        %v2782 = vunpack.c.l.b16 %v2515
        %v2783 = vunpack.c.l.b16 %v2516
        %v2784 = vunpack.c.h.b16 %v2516
        %v2785 = vunpack.c.l.b16 %v2517
        %v2786 = vunpack.c.l.b16 %v2518
        %v2787 = vunpack.c.h.b16 %v2518
        %v2788 = vunpack.c.l.b16 %v2519
        %v2789 = vunpack.c.l.b16 %v2520
        %v2790 = vunpack.c.h.b16 %v2520
        %v2791 = vunpack.c.l.b16 %v2521
        %v2792 = vunpack.c.l.b16 %v2522
        %v2793 = vunpack.c.h.b16 %v2522
        %v2794 = vunpack.c.l.b16 %v2523
        %v2795 = vunpack.c.l.b16 %v2524
        %v2796 = vunpack.c.h.b16 %v2524
        %v2797 = vunpack.c.l.b16 %v2525
        %v2798 = vunpack.c.l.b16 %v2526
        %v2799 = vunpack.c.h.b16 %v2526
        %v2800 = vunpack.c.l.b16 %v2527
        %v2801 = vunpack.c.l.b16 %v2528
        %v2802 = vunpack.c.h.b16 %v2528
        %v2803 = vunpack.c.l.b16 %v2529
        %v2804 = vunpack.c.l.b16 %v2530
        %v2805 = vunpack.c.h.b16 %v2530
        %v2806 = vunpack.c.l.b16 %v2531
        %v2807 = vunpack.c.l.b16 %v2532
        %v2808 = vunpack.c.h.b16 %v2532
        %v2809 = vunpack.c.l.b16 %v2533
        %v2810 = vunpack.c.l.b16 %v2534
        %v2811 = vunpack.c.h.b16 %v2534
        %v2812 = vunpack.c.l.b16 %v2535
        %v2813 = vunpack.c.l.b16 %v2536
        %v2814 = vunpack.c.h.b16 %v2536
        %v2815 = vunpack.c.l.b16 %v2537
        %v2816 = vunpack.c.l.b16 %v2538
        %v2817 = vunpack.c.h.b16 %v2538
        %v2818 = vunpack.c.l.b16 %v2539
        %v2819 = vunpack.c.l.b16 %v2540
        %v2820 = vunpack.c.h.b16 %v2540
        %v2821 = vunpack.c.l.b16 %v2541
        %v2822 = vpack.c.b16 %v2657, %v2654
        %v2823 = vpack.c.b16 %v2658, %v2655
        %v2824 = vpack.c.b16 %v2659, %v2656
        %v2825 = vpack.c.b16 %v2663, %v2660
        %v2826 = vpack.c.b16 %v2664, %v2661
        %v2827 = vpack.c.b16 %v2665, %v2662
        %v2828 = vpack.c.b16 %v2669, %v2666
        %v2829 = vpack.c.b16 %v2670, %v2667
        %v2830 = vpack.c.b16 %v2671, %v2668
        %v2831 = vpack.c.b16 %v2675, %v2672
        %v2832 = vpack.c.b16 %v2676, %v2673
        %v2833 = vpack.c.b16 %v2677, %v2674
        %v2834 = vpack.c.b16 %v2681, %v2678
        %v2835 = vpack.c.b16 %v2682, %v2679
        %v2836 = vpack.c.b16 %v2683, %v2680
        %v2837 = vpack.c.b16 %v2687, %v2684
        %v2838 = vpack.c.b16 %v2688, %v2685
        %v2839 = vpack.c.b16 %v2689, %v2686
        %v2840 = vpack.c.b16 %v2693, %v2690
        %v2841 = vpack.c.b16 %v2694, %v2691
        %v2842 = vpack.c.b16 %v2695, %v2692
        %v2843 = vpack.c.b16 %v2699, %v2696
        %v2844 = vpack.c.b16 %v2700, %v2697
        %v2845 = vpack.c.b16 %v2701, %v2698
        %v2846 = vpack.c.b16 %v2705, %v2702
        %v2847 = vpack.c.b16 %v2706, %v2703
        %v2848 = vpack.c.b16 %v2707, %v2704
        %v2849 = vpack.c.b16 %v2711, %v2708
        %v2850 = vpack.c.b16 %v2712, %v2709
        %v2851 = vpack.c.b16 %v2713, %v2710
        %v2852 = vpack.c.b16 %v2717, %v2714
        %v2853 = vpack.c.b16 %v2718, %v2715
        %v2854 = vpack.c.b16 %v2719, %v2716
        %v2855 = vpack.c.b16 %v2723, %v2720
        %v2856 = vpack.c.b16 %v2724, %v2721
        %v2857 = vpack.c.b16 %v2725, %v2722
        %v2858 = vpack.c.b16 %v2729, %v2726
        %v2859 = vpack.c.b16 %v2730, %v2727
        %v2860 = vpack.c.b16 %v2731, %v2728
        %v2861 = vpack.c.b16 %v2735, %v2732
        %v2862 = vpack.c.b16 %v2736, %v2733
        %v2863 = vpack.c.b16 %v2737, %v2734
        %v2864 = vpack.c.b16 %v2741, %v2738
        %v2865 = vpack.c.b16 %v2742, %v2739
        %v2866 = vpack.c.b16 %v2743, %v2740
        %v2867 = vpack.c.b16 %v2747, %v2744
        %v2868 = vpack.c.b16 %v2748, %v2745
        %v2869 = vpack.c.b16 %v2749, %v2746
        %v2870 = vpack.c.b16 %v2753, %v2750
        %v2871 = vpack.c.b16 %v2754, %v2751
        %v2872 = vpack.c.b16 %v2755, %v2752
        %v2873 = vpack.c.b16 %v2759, %v2756
        %v2874 = vpack.c.b16 %v2760, %v2757
        %v2875 = vpack.c.b16 %v2761, %v2758
        %v2876 = vpack.c.b16 %v2765, %v2762
        %v2877 = vpack.c.b16 %v2766, %v2763
        %v2878 = vpack.c.b16 %v2767, %v2764
        %v2879 = vpack.c.b16 %v2771, %v2768
        %v2880 = vpack.c.b16 %v2772, %v2769
        %v2881 = vpack.c.b16 %v2773, %v2770
        %v2882 = vpack.c.b16 %v2777, %v2774
        %v2883 = vpack.c.b16 %v2778, %v2775
        %v2884 = vpack.c.b16 %v2779, %v2776
        %v2885 = vpack.c.b16 %v2783, %v2780
        %v2886 = vpack.c.b16 %v2784, %v2781
        %v2887 = vpack.c.b16 %v2785, %v2782
        %v2888 = vpack.c.b16 %v2789, %v2786
        %v2889 = vpack.c.b16 %v2790, %v2787
        %v2890 = vpack.c.b16 %v2791, %v2788
        %v2891 = vpack.c.b16 %v2795, %v2792
        %v2892 = vpack.c.b16 %v2796, %v2793
        %v2893 = vpack.c.b16 %v2797, %v2794
        %v2894 = vpack.c.b16 %v2801, %v2798
        %v2895 = vpack.c.b16 %v2802, %v2799
        %v2896 = vpack.c.b16 %v2803, %v2800
        %v2897 = vpack.c.b16 %v2807, %v2804
        %v2898 = vpack.c.b16 %v2808, %v2805
        %v2899 = vpack.c.b16 %v2809, %v2806
        %v2900 = vpack.c.b16 %v2813, %v2810
        %v2901 = vpack.c.b16 %v2814, %v2811
        %v2902 = vpack.c.b16 %v2815, %v2812
        %v2903 = vpack.c.b16 %v2819, %v2816
        %v2904 = vpack.c.b16 %v2820, %v2817
        %v2905 = vpack.c.b16 %v2821, %v2818
        %v2991 = vsel %vm2262, %v2428, 0
        %2993 = vmatprep.subr.bf16.mxu0 %v2823
        %2994 = vmatpush1.bf16.msra.mxu0 %v2822
        %2995 = vmatprep.subr.bf16.mxu0 %v2826
        %2996 = vmatpush1.bf16.msra.mxu0 %v2825
        %2997 = vmatprep.subr.bf16.mxu0 %v2829
        %2998 = vmatpush1.bf16.msra.mxu0 %v2828
        %2999 = vmatprep.subr.bf16.mxu0 %v2832
        %3000 = vmatpush1.bf16.msra.mxu0 %v2831
        %3001 = vmatprep.subr.bf16.mxu0 %v2835
        %3002 = vmatpush1.bf16.msra.mxu0 %v2834
        %3003 = vmatprep.subr.bf16.mxu0 %v2838
        %3004 = vmatpush1.bf16.msra.mxu0 %v2837
        %3005 = vmatprep.subr.bf16.mxu0 %v2841
        %3006 = vmatpush1.bf16.msra.mxu0 %v2840
        %3007 = vmatprep.subr.bf16.mxu0 %v2844
        %3008 = vmatpush1.bf16.msra.mxu0 %v2843
        %3009 = vmatprep.subr.bf16.mxu0 %v2847
        %3010 = vmatpush1.bf16.msra.mxu0 %v2846
        %3011 = vmatprep.subr.bf16.mxu0 %v2850
        %3012 = vmatpush1.bf16.msra.mxu0 %v2849
        %3013 = vmatprep.subr.bf16.mxu0 %v2853
        %3014 = vmatpush1.bf16.msra.mxu0 %v2852
        %3015 = vmatprep.subr.bf16.mxu0 %v2856
        %3016 = vmatpush1.bf16.msra.mxu0 %v2855
        %3017 = vmatprep.subr.bf16.mxu0 %v2859
        %3018 = vmatpush1.bf16.msra.mxu0 %v2858
        %3019 = vmatprep.subr.bf16.mxu0 %v2862
        %3020 = vmatpush1.bf16.msra.mxu0 %v2861
        %3021 = vmatprep.subr.bf16.mxu0 %v2865
        %3022 = vmatpush1.bf16.msra.mxu0 %v2864
        %3023 = vmatprep.subr.bf16.mxu0 %v2868
        %3024 = vmatpush1.bf16.msra.mxu0 %v2867
        %3025 = vmatprep.mubr.bf16.mxu0 %v2426
        %3026 = vmatmul.mubr.bf16.gmra.mrb[0].mxu0 %v2425
        %v3027 = vpop.f32.mrb[0].mxu0
        %v3028 = vadd.f32 0.0, %v3027
        %v3029 = vpop.f32.mrb[0].mxu0
        %v3030 = vadd.f32 0.0, %v3029
        %v3031 = vpop.f32.mrb[0].mxu0
        %v3032 = vadd.f32 0.0, %v3031
        %v3033 = vpop.f32.mrb[0].mxu0
        %v3034 = vadd.f32 0.0, %v3033
        %3035 = vdwg.mxu0
        %3036 = vmatprep.subr.bf16.mxu0 %v2871
        %3037 = vmatpush1.bf16.msra.mxu0 %v2870
        %3038 = vmatprep.subr.bf16.mxu0 %v2874
        %3039 = vmatpush1.bf16.msra.mxu0 %v2873
        %3040 = vmatprep.subr.bf16.mxu0 %v2877
        %3041 = vmatpush1.bf16.msra.mxu0 %v2876
        %3042 = vmatprep.subr.bf16.mxu0 %v2880
        %3043 = vmatpush1.bf16.msra.mxu0 %v2879
        %3044 = vmatprep.subr.bf16.mxu0 %v2883
        %3045 = vmatpush1.bf16.msra.mxu0 %v2882
        %3046 = vmatprep.subr.bf16.mxu0 %v2886
        %3047 = vmatpush1.bf16.msra.mxu0 %v2885
        %3048 = vmatprep.subr.bf16.mxu0 %v2889
        %3049 = vmatpush1.bf16.msra.mxu0 %v2888
        %3050 = vmatprep.subr.bf16.mxu0 %v2892
        %3051 = vmatpush1.bf16.msra.mxu0 %v2891
        %3052 = vmatprep.subr.bf16.mxu0 %v2895
        %3053 = vmatpush1.bf16.msra.mxu0 %v2894
        %3054 = vmatprep.subr.bf16.mxu0 %v2898
        %3055 = vmatpush1.bf16.msra.mxu0 %v2897
        %3056 = vmatprep.subr.bf16.mxu0 %v2901
        %3057 = vmatpush1.bf16.msra.mxu0 %v2900
        %3058 = vmatprep.subr.bf16.mxu0 %v2904
        %3059 = vmatpush1.bf16.msra.mxu0 %v2903
        %3060 = vmatprep.subr.bf16.mxu0 0
        %3061 = vmatpush1.bf16.msra.mxu0 0
        %3062 = vmatprep.subr.bf16.mxu0 0
        %3063 = vmatpush1.bf16.msra.mxu0 0
        %3064 = vmatprep.subr.bf16.mxu0 0
        %3065 = vmatpush1.bf16.msra.mxu0 0
        %3066 = vmatprep.subr.bf16.mxu0 0
        %3067 = vmatpush1.bf16.msra.mxu0 0
        %3068 = vmatprep.mubr.bf16.mxu0 %v2991
        %3069 = vmatmul.mubr.bf16.gmra.mrb[0].mxu0 %v2427
        %v3070 = vpop.f32.mrb[0].mxu0
        %v3071 = vadd.f32 %v3028, %v3070
        %v3072 = vpop.f32.mrb[0].mxu0
        %v3073 = vadd.f32 %v3030, %v3072
        %v3074 = vpop.f32.mrb[0].mxu0
        %v3075 = vadd.f32 %v3032, %v3074
        %v3076 = vpop.f32.mrb[0].mxu0
        %v3077 = vadd.f32 %v3034, %v3076
        %3078 = vdwg.mxu0
        %3079 = vmatprep.subr.bf16.mxu0 0
        %3080 = vmatpush1.bf16.msra.mxu0 %v2824
        %3081 = vmatprep.subr.bf16.mxu0 0
        %3082 = vmatpush1.bf16.msra.mxu0 %v2827
        %3083 = vmatprep.subr.bf16.mxu0 0
        %3084 = vmatpush1.bf16.msra.mxu0 %v2830
        %3085 = vmatprep.subr.bf16.mxu0 0
        %3086 = vmatpush1.bf16.msra.mxu0 %v2833
        %3087 = vmatprep.subr.bf16.mxu0 0
        %3088 = vmatpush1.bf16.msra.mxu0 %v2836
        %3089 = vmatprep.subr.bf16.mxu0 0
        %3090 = vmatpush1.bf16.msra.mxu0 %v2839
        %3091 = vmatprep.subr.bf16.mxu0 0
        %3092 = vmatpush1.bf16.msra.mxu0 %v2842
        %3093 = vmatprep.subr.bf16.mxu0 0
        %3094 = vmatpush1.bf16.msra.mxu0 %v2845
        %3095 = vmatprep.subr.bf16.mxu0 0
        %3096 = vmatpush1.bf16.msra.mxu0 %v2848
        %3097 = vmatprep.subr.bf16.mxu0 0
        %3098 = vmatpush1.bf16.msra.mxu0 %v2851
        %3099 = vmatprep.subr.bf16.mxu0 0
        %3100 = vmatpush1.bf16.msra.mxu0 %v2854
        %3101 = vmatprep.subr.bf16.mxu0 0
        %3102 = vmatpush1.bf16.msra.mxu0 %v2857
        %3103 = vmatprep.subr.bf16.mxu0 0
        %3104 = vmatpush1.bf16.msra.mxu0 %v2860
        %3105 = vmatprep.subr.bf16.mxu0 0
        %3106 = vmatpush1.bf16.msra.mxu0 %v2863
        %3107 = vmatprep.subr.bf16.mxu0 0
        %3108 = vmatpush1.bf16.msra.mxu0 %v2866
        %3109 = vmatprep.subr.bf16.mxu0 0
        %3110 = vmatpush1.bf16.msra.mxu0 %v2869
        %3111 = vmatprep.mubr.bf16.mxu0 %v2426
        %3112 = vmatmul.mubr.bf16.gmra.mrb[0].mxu0 %v2425
        %v3113 = vpop.f32.mrb[0].mxu0
        %v3114 = vadd.f32 0.0, %v3113
        %v3115 = vpop.f32.mrb[0].mxu0
        %v3116 = vpop.f32.mrb[0].mxu0
        %v3117 = vadd.f32 0.0, %v3116
        %v3118 = vpop.f32.mrb[0].mxu0
        %3119 = vdwg.mxu0
        %3120 = vmatprep.subr.bf16.mxu0 0
        %3121 = vmatpush1.bf16.msra.mxu0 %v2872
        %3122 = vmatprep.subr.bf16.mxu0 0
        %3123 = vmatpush1.bf16.msra.mxu0 %v2875
        %3124 = vmatprep.subr.bf16.mxu0 0
        %3125 = vmatpush1.bf16.msra.mxu0 %v2878
        %3126 = vmatprep.subr.bf16.mxu0 0
        %3127 = vmatpush1.bf16.msra.mxu0 %v2881
        %3128 = vmatprep.subr.bf16.mxu0 0
        %3129 = vmatpush1.bf16.msra.mxu0 %v2884
        %3130 = vmatprep.subr.bf16.mxu0 0
        %3131 = vmatpush1.bf16.msra.mxu0 %v2887
        %3132 = vmatprep.subr.bf16.mxu0 0
        %3133 = vmatpush1.bf16.msra.mxu0 %v2890
        %3134 = vmatprep.subr.bf16.mxu0 0
        %3135 = vmatpush1.bf16.msra.mxu0 %v2893
        %3136 = vmatprep.subr.bf16.mxu0 0
        %3137 = vmatpush1.bf16.msra.mxu0 %v2896
        %3138 = vmatprep.subr.bf16.mxu0 0
        %3139 = vmatpush1.bf16.msra.mxu0 %v2899
        %3140 = vmatprep.subr.bf16.mxu0 0
        %3141 = vmatpush1.bf16.msra.mxu0 %v2902
        %3142 = vmatprep.subr.bf16.mxu0 0
        %3143 = vmatpush1.bf16.msra.mxu0 %v2905
        %3144 = vmatprep.subr.bf16.mxu0 0
        %3145 = vmatpush1.bf16.msra.mxu0 0
        %3146 = vmatprep.subr.bf16.mxu0 0
        %3147 = vmatpush1.bf16.msra.mxu0 0
        %3148 = vmatprep.subr.bf16.mxu0 0
        %3149 = vmatpush1.bf16.msra.mxu0 0
        %3150 = vmatprep.subr.bf16.mxu0 0
        %3151 = vmatpush1.bf16.msra.mxu0 0
        %3152 = vmatprep.mubr.bf16.mxu0 %v2991
        %3153 = vmatmul.mubr.bf16.gmra.mrb[0].mxu0 %v2427
        %v3154 = vpop.f32.mrb[0].mxu0
        %v3155 = vadd.f32 %v3114, %v3154
        %v3156 = vpop.f32.mrb[0].mxu0
        %v3157 = vpop.f32.mrb[0].mxu0
        %v3158 = vadd.f32 %v3117, %v3157
        %v3159 = vpop.f32.mrb[0].mxu0
        %3160 = vdwg.mxu0
        %v3273 = vunpack.c.l.b16 %v2305
        %v3274 = vunpack.c.h.b16 %v2305
        %v3275 = vunpack.c.l.b16 %v2306
        %v3276 = vunpack.c.l.b16 %v2307
        %v3277 = vunpack.c.h.b16 %v2307
        %v3278 = vunpack.c.l.b16 %v2308
        %v3279 = vunpack.c.l.b16 %v2309
        %v3280 = vunpack.c.h.b16 %v2309
        %v3281 = vunpack.c.l.b16 %v2310
        %v3282 = vunpack.c.l.b16 %v2311
        %v3283 = vunpack.c.h.b16 %v2311
        %v3284 = vunpack.c.l.b16 %v2312
        %v3285 = vunpack.c.l.b16 %v2313
        %v3286 = vunpack.c.h.b16 %v2313
        %v3287 = vunpack.c.l.b16 %v2314
        %v3288 = vunpack.c.l.b16 %v2315
        %v3289 = vunpack.c.h.b16 %v2315
        %v3290 = vunpack.c.l.b16 %v2316
        %v3291 = vunpack.c.l.b16 %v2317
        %v3292 = vunpack.c.h.b16 %v2317
        %v3293 = vunpack.c.l.b16 %v2318
        %v3294 = vunpack.c.l.b16 %v2319
        %v3295 = vunpack.c.h.b16 %v2319
        %v3296 = vunpack.c.l.b16 %v2320
        %v3297 = vunpack.c.l.b16 %v2321
        %v3298 = vunpack.c.h.b16 %v2321
        %v3299 = vunpack.c.l.b16 %v2322
        %v3300 = vunpack.c.l.b16 %v2323
        %v3301 = vunpack.c.h.b16 %v2323
        %v3302 = vunpack.c.l.b16 %v2324
        %v3303 = vunpack.c.l.b16 %v2325
        %v3304 = vunpack.c.h.b16 %v2325
        %v3305 = vunpack.c.l.b16 %v2326
        %v3306 = vunpack.c.l.b16 %v2327
        %v3307 = vunpack.c.h.b16 %v2327
        %v3308 = vunpack.c.l.b16 %v2328
        %v3309 = vunpack.c.l.b16 %v2329
        %v3310 = vunpack.c.h.b16 %v2329
        %v3311 = vunpack.c.l.b16 %v2330
        %v3312 = vunpack.c.l.b16 %v2331
        %v3313 = vunpack.c.h.b16 %v2331
        %v3314 = vunpack.c.l.b16 %v2332
        %v3315 = vunpack.c.l.b16 %v2333
        %v3316 = vunpack.c.h.b16 %v2333
        %v3317 = vunpack.c.l.b16 %v2334
        %v3318 = vunpack.c.l.b16 %v2335
        %v3319 = vunpack.c.h.b16 %v2335
        %v3320 = vunpack.c.l.b16 %v2336
        %v3321 = vunpack.c.l.b16 %v2337
        %v3322 = vunpack.c.h.b16 %v2337
        %v3323 = vunpack.c.l.b16 %v2338
        %v3324 = vunpack.c.l.b16 %v2339
        %v3325 = vunpack.c.h.b16 %v2339
        %v3326 = vunpack.c.l.b16 %v2340
        %v3327 = vunpack.c.l.b16 %v2341
        %v3328 = vunpack.c.h.b16 %v2341
        %v3329 = vunpack.c.l.b16 %v2342
        %v3330 = vunpack.c.l.b16 %v2343
        %v3331 = vunpack.c.h.b16 %v2343
        %v3332 = vunpack.c.l.b16 %v2344
        %v3333 = vunpack.c.l.b16 %v2345
        %v3334 = vunpack.c.h.b16 %v2345
        %v3335 = vunpack.c.l.b16 %v2346
        %v3336 = vunpack.c.l.b16 %v2347
        %v3337 = vunpack.c.h.b16 %v2347
        %v3338 = vunpack.c.l.b16 %v2348
        %v3339 = vunpack.c.l.b16 %v2349
        %v3340 = vunpack.c.h.b16 %v2349
        %v3341 = vunpack.c.l.b16 %v2350
        %v3342 = vunpack.c.l.b16 %v2351
        %v3343 = vunpack.c.h.b16 %v2351
        %v3344 = vunpack.c.l.b16 %v2352
        %v3345 = vunpack.c.l.b16 %v2353
        %v3346 = vunpack.c.h.b16 %v2353
        %v3347 = vunpack.c.l.b16 %v2354
        %v3348 = vunpack.c.l.b16 %v2355
        %v3349 = vunpack.c.h.b16 %v2355
        %v3350 = vunpack.c.l.b16 %v2356
        %v3351 = vunpack.c.l.b16 %v2357
        %v3352 = vunpack.c.h.b16 %v2357
        %v3353 = vunpack.c.l.b16 %v2358
        %v3354 = vunpack.c.l.b16 %v2359
        %v3355 = vunpack.c.h.b16 %v2359
        %v3356 = vunpack.c.l.b16 %v2360
        %v3357 = vunpack.c.l.b16 %v2361
        %v3358 = vunpack.c.h.b16 %v2361
        %v3359 = vunpack.c.l.b16 %v2362
        %v3360 = vunpack.c.l.b16 %v2363
        %v3361 = vunpack.c.h.b16 %v2363
        %v3362 = vunpack.c.l.b16 %v2364
        %v3363 = vunpack.c.l.b16 %v2365
        %v3364 = vunpack.c.h.b16 %v2365
        %v3365 = vunpack.c.l.b16 %v2366
        %v3366 = vunpack.c.l.b16 %v2367
        %v3367 = vunpack.c.h.b16 %v2367
        %v3368 = vunpack.c.l.b16 %v2368
        %v3369 = vunpack.c.l.b16 %v2369
        %v3370 = vunpack.c.h.b16 %v2369
        %v3371 = vunpack.c.l.b16 %v2370
        %v3372 = vunpack.c.l.b16 %v2371
        %v3373 = vunpack.c.h.b16 %v2371
        %v3374 = vunpack.c.l.b16 %v2372
        %v3375 = vunpack.c.l.b16 %v2373
        %v3376 = vunpack.c.h.b16 %v2373
        %v3377 = vunpack.c.l.b16 %v2374
        %v3378 = vunpack.c.l.b16 %v2375
        %v3379 = vunpack.c.h.b16 %v2375
        %v3380 = vunpack.c.l.b16 %v2376
        %v3381 = vunpack.c.l.b16 %v2377
        %v3382 = vunpack.c.h.b16 %v2377
        %v3383 = vunpack.c.l.b16 %v2378
        %v3384 = vunpack.c.l.b16 %v2379
        %v3385 = vunpack.c.h.b16 %v2379
        %v3386 = vunpack.c.l.b16 %v2380
        %v3387 = vunpack.c.l.b16 %v2381
        %v3388 = vunpack.c.h.b16 %v2381
        %v3389 = vunpack.c.l.b16 %v2382
        %v3390 = vunpack.c.l.b16 %v2383
        %v3391 = vunpack.c.h.b16 %v2383
        %v3392 = vunpack.c.l.b16 %v2384
        %v3393 = vunpack.c.l.b16 %v2385
        %v3394 = vunpack.c.h.b16 %v2385
        %v3395 = vunpack.c.l.b16 %v2386
        %v3396 = vunpack.c.l.b16 %v2387
        %v3397 = vunpack.c.h.b16 %v2387
        %v3398 = vunpack.c.l.b16 %v2388
        %v3399 = vunpack.c.l.b16 %v2389
        %v3400 = vunpack.c.h.b16 %v2389
        %v3401 = vunpack.c.l.b16 %v2390
        %v3402 = vunpack.c.l.b16 %v2391
        %v3403 = vunpack.c.h.b16 %v2391
        %v3404 = vunpack.c.l.b16 %v2392
        %v3405 = vunpack.c.l.b16 %v2393
        %v3406 = vunpack.c.h.b16 %v2393
        %v3407 = vunpack.c.l.b16 %v2394
        %v3408 = vunpack.c.l.b16 %v2395
        %v3409 = vunpack.c.h.b16 %v2395
        %v3410 = vunpack.c.l.b16 %v2396
        %v3411 = vunpack.c.l.b16 %v2397
        %v3412 = vunpack.c.h.b16 %v2397
        %v3413 = vunpack.c.l.b16 %v2398
        %v3414 = vunpack.c.l.b16 %v2399
        %v3415 = vunpack.c.h.b16 %v2399
        %v3416 = vunpack.c.l.b16 %v2400
        %v3417 = vunpack.c.l.b16 %v2401
        %v3418 = vunpack.c.h.b16 %v2401
        %v3419 = vunpack.c.l.b16 %v2402
        %v3420 = vunpack.c.l.b16 %v2403
        %v3421 = vunpack.c.h.b16 %v2403
        %v3422 = vunpack.c.l.b16 %v2404
        %v3423 = vunpack.c.l.b16 %v2405
        %v3424 = vunpack.c.h.b16 %v2405
        %v3425 = vunpack.c.l.b16 %v2406
        %v3426 = vunpack.c.l.b16 %v2407
        %v3427 = vunpack.c.h.b16 %v2407
        %v3428 = vunpack.c.l.b16 %v2408
        %v3429 = vunpack.c.l.b16 %v2409
        %v3430 = vunpack.c.h.b16 %v2409
        %v3431 = vunpack.c.l.b16 %v2410
        %v3432 = vunpack.c.l.b16 %v2411
        %v3433 = vunpack.c.h.b16 %v2411
        %v3434 = vunpack.c.l.b16 %v2412
        %v3435 = vunpack.c.l.b16 %v2413
        %v3436 = vunpack.c.h.b16 %v2413
        %v3437 = vunpack.c.l.b16 %v2414
        %v3438 = vunpack.c.l.b16 %v2415
        %v3439 = vunpack.c.h.b16 %v2415
        %v3440 = vunpack.c.l.b16 %v2416
        %v3441 = vpack.c.b16 %v3276, %v3273
        %v3442 = vpack.c.b16 %v3277, %v3274
        %v3443 = vpack.c.b16 %v3278, %v3275
        %v3444 = vpack.c.b16 %v3282, %v3279
        %v3445 = vpack.c.b16 %v3283, %v3280
        %v3446 = vpack.c.b16 %v3284, %v3281
        %v3447 = vpack.c.b16 %v3288, %v3285
        %v3448 = vpack.c.b16 %v3289, %v3286
        %v3449 = vpack.c.b16 %v3290, %v3287
        %v3450 = vpack.c.b16 %v3294, %v3291
        %v3451 = vpack.c.b16 %v3295, %v3292
        %v3452 = vpack.c.b16 %v3296, %v3293
        %v3453 = vpack.c.b16 %v3300, %v3297
        %v3454 = vpack.c.b16 %v3301, %v3298
        %v3455 = vpack.c.b16 %v3302, %v3299
        %v3456 = vpack.c.b16 %v3306, %v3303
        %v3457 = vpack.c.b16 %v3307, %v3304
        %v3458 = vpack.c.b16 %v3308, %v3305
        %v3459 = vpack.c.b16 %v3312, %v3309
        %v3460 = vpack.c.b16 %v3313, %v3310
        %v3461 = vpack.c.b16 %v3314, %v3311
        %v3462 = vpack.c.b16 %v3318, %v3315
        %v3463 = vpack.c.b16 %v3319, %v3316
        %v3464 = vpack.c.b16 %v3320, %v3317
        %v3465 = vpack.c.b16 %v3324, %v3321
        %v3466 = vpack.c.b16 %v3325, %v3322
        %v3467 = vpack.c.b16 %v3326, %v3323
        %v3468 = vpack.c.b16 %v3330, %v3327
        %v3469 = vpack.c.b16 %v3331, %v3328
        %v3470 = vpack.c.b16 %v3332, %v3329
        %v3471 = vpack.c.b16 %v3336, %v3333
        %v3472 = vpack.c.b16 %v3337, %v3334
        %v3473 = vpack.c.b16 %v3338, %v3335
        %v3474 = vpack.c.b16 %v3342, %v3339
        %v3475 = vpack.c.b16 %v3343, %v3340
        %v3476 = vpack.c.b16 %v3344, %v3341
        %v3477 = vpack.c.b16 %v3348, %v3345
        %v3478 = vpack.c.b16 %v3349, %v3346
        %v3479 = vpack.c.b16 %v3350, %v3347
        %v3480 = vpack.c.b16 %v3354, %v3351
        %v3481 = vpack.c.b16 %v3355, %v3352
        %v3482 = vpack.c.b16 %v3356, %v3353
        %v3483 = vpack.c.b16 %v3360, %v3357
        %v3484 = vpack.c.b16 %v3361, %v3358
        %v3485 = vpack.c.b16 %v3362, %v3359
        %v3486 = vpack.c.b16 %v3366, %v3363
        %v3487 = vpack.c.b16 %v3367, %v3364
        %v3488 = vpack.c.b16 %v3368, %v3365
        %v3489 = vpack.c.b16 %v3372, %v3369
        %v3490 = vpack.c.b16 %v3373, %v3370
        %v3491 = vpack.c.b16 %v3374, %v3371
        %v3492 = vpack.c.b16 %v3378, %v3375
        %v3493 = vpack.c.b16 %v3379, %v3376
        %v3494 = vpack.c.b16 %v3380, %v3377
        %v3495 = vpack.c.b16 %v3384, %v3381
        %v3496 = vpack.c.b16 %v3385, %v3382
        %v3497 = vpack.c.b16 %v3386, %v3383
        %v3498 = vpack.c.b16 %v3390, %v3387
        %v3499 = vpack.c.b16 %v3391, %v3388
        %v3500 = vpack.c.b16 %v3392, %v3389
        %v3501 = vpack.c.b16 %v3396, %v3393
        %v3502 = vpack.c.b16 %v3397, %v3394
        %v3503 = vpack.c.b16 %v3398, %v3395
        %v3504 = vpack.c.b16 %v3402, %v3399
        %v3505 = vpack.c.b16 %v3403, %v3400
        %v3506 = vpack.c.b16 %v3404, %v3401
        %v3507 = vpack.c.b16 %v3408, %v3405
        %v3508 = vpack.c.b16 %v3409, %v3406
        %v3509 = vpack.c.b16 %v3410, %v3407
        %v3510 = vpack.c.b16 %v3414, %v3411
        %v3511 = vpack.c.b16 %v3415, %v3412
        %v3512 = vpack.c.b16 %v3416, %v3413
        %v3513 = vpack.c.b16 %v3420, %v3417
        %v3514 = vpack.c.b16 %v3421, %v3418
        %v3515 = vpack.c.b16 %v3422, %v3419
        %v3516 = vpack.c.b16 %v3426, %v3423
        %v3517 = vpack.c.b16 %v3427, %v3424
        %v3518 = vpack.c.b16 %v3428, %v3425
        %v3519 = vpack.c.b16 %v3432, %v3429
        %v3520 = vpack.c.b16 %v3433, %v3430
        %v3521 = vpack.c.b16 %v3434, %v3431
        %v3522 = vpack.c.b16 %v3438, %v3435
        %v3523 = vpack.c.b16 %v3439, %v3436
        %v3524 = vpack.c.b16 %v3440, %v3437
        %v3610 = vsel %vm2262, %v2304, 0
        %3612 = vmatprep.subr.bf16.mxu0 %v3442
        %3613 = vmatpush1.bf16.msra.mxu0 %v3441
        %3614 = vmatprep.subr.bf16.mxu0 %v3445
        %3615 = vmatpush1.bf16.msra.mxu0 %v3444
        %3616 = vmatprep.subr.bf16.mxu0 %v3448
        %3617 = vmatpush1.bf16.msra.mxu0 %v3447
        %3618 = vmatprep.subr.bf16.mxu0 %v3451
        %3619 = vmatpush1.bf16.msra.mxu0 %v3450
        %3620 = vmatprep.subr.bf16.mxu0 %v3454
        %3621 = vmatpush1.bf16.msra.mxu0 %v3453
        %3622 = vmatprep.subr.bf16.mxu0 %v3457
        %3623 = vmatpush1.bf16.msra.mxu0 %v3456
        %3624 = vmatprep.subr.bf16.mxu0 %v3460
        %3625 = vmatpush1.bf16.msra.mxu0 %v3459
        %3626 = vmatprep.subr.bf16.mxu0 %v3463
        %3627 = vmatpush1.bf16.msra.mxu0 %v3462
        %3628 = vmatprep.subr.bf16.mxu0 %v3466
        %3629 = vmatpush1.bf16.msra.mxu0 %v3465
        %3630 = vmatprep.subr.bf16.mxu0 %v3469
        %3631 = vmatpush1.bf16.msra.mxu0 %v3468
        %3632 = vmatprep.subr.bf16.mxu0 %v3472
        %3633 = vmatpush1.bf16.msra.mxu0 %v3471
        %3634 = vmatprep.subr.bf16.mxu0 %v3475
        %3635 = vmatpush1.bf16.msra.mxu0 %v3474
        %3636 = vmatprep.subr.bf16.mxu0 %v3478
        %3637 = vmatpush1.bf16.msra.mxu0 %v3477
        %3638 = vmatprep.subr.bf16.mxu0 %v3481
        %3639 = vmatpush1.bf16.msra.mxu0 %v3480
        %3640 = vmatprep.subr.bf16.mxu0 %v3484
        %3641 = vmatpush1.bf16.msra.mxu0 %v3483
        %3642 = vmatprep.subr.bf16.mxu0 %v3487
        %3643 = vmatpush1.bf16.msra.mxu0 %v3486
        %3644 = vmatprep.mubr.bf16.mxu0 %v2302
        %3645 = vmatmul.mubr.bf16.gmra.mrb[0].mxu0 %v2301
        %v3646 = vpop.f32.mrb[0].mxu0
        %v3647 = vadd.f32 %v3071, %v3646
        %v3648 = vpop.f32.mrb[0].mxu0
        %v3649 = vadd.f32 %v3073, %v3648
        %v3650 = vpop.f32.mrb[0].mxu0
        %v3651 = vadd.f32 %v3075, %v3650
        %v3652 = vpop.f32.mrb[0].mxu0
        %v3653 = vadd.f32 %v3077, %v3652
        %3654 = vdwg.mxu0
        %3655 = vmatprep.subr.bf16.mxu0 %v3490
        %3656 = vmatpush1.bf16.msra.mxu0 %v3489
        %3657 = vmatprep.subr.bf16.mxu0 %v3493
        %3658 = vmatpush1.bf16.msra.mxu0 %v3492
        %3659 = vmatprep.subr.bf16.mxu0 %v3496
        %3660 = vmatpush1.bf16.msra.mxu0 %v3495
        %3661 = vmatprep.subr.bf16.mxu0 %v3499
        %3662 = vmatpush1.bf16.msra.mxu0 %v3498
        %3663 = vmatprep.subr.bf16.mxu0 %v3502
        %3664 = vmatpush1.bf16.msra.mxu0 %v3501
        %3665 = vmatprep.subr.bf16.mxu0 %v3505
        %3666 = vmatpush1.bf16.msra.mxu0 %v3504
        %3667 = vmatprep.subr.bf16.mxu0 %v3508
        %3668 = vmatpush1.bf16.msra.mxu0 %v3507
        %3669 = vmatprep.subr.bf16.mxu0 %v3511
        %3670 = vmatpush1.bf16.msra.mxu0 %v3510
        %3671 = vmatprep.subr.bf16.mxu0 %v3514
        %3672 = vmatpush1.bf16.msra.mxu0 %v3513
        %3673 = vmatprep.subr.bf16.mxu0 %v3517
        %3674 = vmatpush1.bf16.msra.mxu0 %v3516
        %3675 = vmatprep.subr.bf16.mxu0 %v3520
        %3676 = vmatpush1.bf16.msra.mxu0 %v3519
        %3677 = vmatprep.subr.bf16.mxu0 %v3523
        %3678 = vmatpush1.bf16.msra.mxu0 %v3522
        %3679 = vmatprep.subr.bf16.mxu0 0
        %3680 = vmatpush1.bf16.msra.mxu0 0
        %3681 = vmatprep.subr.bf16.mxu0 0
        %3682 = vmatpush1.bf16.msra.mxu0 0
        %3683 = vmatprep.subr.bf16.mxu0 0
        %3684 = vmatpush1.bf16.msra.mxu0 0
        %3685 = vmatprep.subr.bf16.mxu0 0
        %3686 = vmatpush1.bf16.msra.mxu0 0
        %3687 = vmatprep.mubr.bf16.mxu0 %v3610
        %3688 = vmatmul.mubr.bf16.gmra.mrb[0].mxu0 %v2303
        %v3689 = vpop.f32.mrb[0].mxu0
        %v3690 = vadd.f32 %v3647, %v3689
        %v3691 = vpop.f32.mrb[0].mxu0
        %v3692 = vadd.f32 %v3649, %v3691
        %v3693 = vpop.f32.mrb[0].mxu0
        %v3694 = vadd.f32 %v3651, %v3693
        %v3695 = vpop.f32.mrb[0].mxu0
        %v3696 = vadd.f32 %v3653, %v3695
        %3697 = vdwg.mxu0
        %3698 = vmatprep.subr.bf16.mxu0 0
        %3699 = vmatpush1.bf16.msra.mxu0 %v3443
        %3700 = vmatprep.subr.bf16.mxu0 0
        %3701 = vmatpush1.bf16.msra.mxu0 %v3446
        %3702 = vmatprep.subr.bf16.mxu0 0
        %3703 = vmatpush1.bf16.msra.mxu0 %v3449
        %3704 = vmatprep.subr.bf16.mxu0 0
        %3705 = vmatpush1.bf16.msra.mxu0 %v3452
        %3706 = vmatprep.subr.bf16.mxu0 0
        %3707 = vmatpush1.bf16.msra.mxu0 %v3455
        %3708 = vmatprep.subr.bf16.mxu0 0
        %3709 = vmatpush1.bf16.msra.mxu0 %v3458
        %3710 = vmatprep.subr.bf16.mxu0 0
        %3711 = vmatpush1.bf16.msra.mxu0 %v3461
        %3712 = vmatprep.subr.bf16.mxu0 0
        %3713 = vmatpush1.bf16.msra.mxu0 %v3464
        %3714 = vmatprep.subr.bf16.mxu0 0
        %3715 = vmatpush1.bf16.msra.mxu0 %v3467
        %3716 = vmatprep.subr.bf16.mxu0 0
        %3717 = vmatpush1.bf16.msra.mxu0 %v3470
        %3718 = vmatprep.subr.bf16.mxu0 0
        %3719 = vmatpush1.bf16.msra.mxu0 %v3473
        %3720 = vmatprep.subr.bf16.mxu0 0
        %3721 = vmatpush1.bf16.msra.mxu0 %v3476
        %3722 = vmatprep.subr.bf16.mxu0 0
        %3723 = vmatpush1.bf16.msra.mxu0 %v3479
        %3724 = vmatprep.subr.bf16.mxu0 0
        %3725 = vmatpush1.bf16.msra.mxu0 %v3482
        %3726 = vmatprep.subr.bf16.mxu0 0
        %3727 = vmatpush1.bf16.msra.mxu0 %v3485
        %3728 = vmatprep.subr.bf16.mxu0 0
        %3729 = vmatpush1.bf16.msra.mxu0 %v3488
        %3730 = vmatprep.mubr.bf16.mxu0 %v2302
        %3731 = vmatmul.mubr.bf16.gmra.mrb[0].mxu0 %v2301
        %v3732 = vpop.f32.mrb[0].mxu0
        %v3733 = vadd.f32 %v3155, %v3732
        %v3734 = vpop.f32.mrb[0].mxu0
        %v3735 = vpop.f32.mrb[0].mxu0
        %v3736 = vadd.f32 %v3158, %v3735
        %v3737 = vpop.f32.mrb[0].mxu0
        %3738 = vdwg.mxu0
        %3739 = vmatprep.subr.bf16.mxu0 0
        %3740 = vmatpush1.bf16.msra.mxu0 %v3491
        %3741 = vmatprep.subr.bf16.mxu0 0
        %3742 = vmatpush1.bf16.msra.mxu0 %v3494
        %3743 = vmatprep.subr.bf16.mxu0 0
        %3744 = vmatpush1.bf16.msra.mxu0 %v3497
        %3745 = vmatprep.subr.bf16.mxu0 0
        %3746 = vmatpush1.bf16.msra.mxu0 %v3500
        %3747 = vmatprep.subr.bf16.mxu0 0
        %3748 = vmatpush1.bf16.msra.mxu0 %v3503
        %3749 = vmatprep.subr.bf16.mxu0 0
        %3750 = vmatpush1.bf16.msra.mxu0 %v3506
        %3751 = vmatprep.subr.bf16.mxu0 0
        %3752 = vmatpush1.bf16.msra.mxu0 %v3509
        %3753 = vmatprep.subr.bf16.mxu0 0
        %3754 = vmatpush1.bf16.msra.mxu0 %v3512
        %3755 = vmatprep.subr.bf16.mxu0 0
        %3756 = vmatpush1.bf16.msra.mxu0 %v3515
        %3757 = vmatprep.subr.bf16.mxu0 0
        %3758 = vmatpush1.bf16.msra.mxu0 %v3518
        %3759 = vmatprep.subr.bf16.mxu0 0
        %3760 = vmatpush1.bf16.msra.mxu0 %v3521
        %3761 = vmatprep.subr.bf16.mxu0 0
        %3762 = vmatpush1.bf16.msra.mxu0 %v3524
        %3763 = vmatprep.subr.bf16.mxu0 0
        %3764 = vmatpush1.bf16.msra.mxu0 0
        %3765 = vmatprep.subr.bf16.mxu0 0
        %3766 = vmatpush1.bf16.msra.mxu0 0
        %3767 = vmatprep.subr.bf16.mxu0 0
        %3768 = vmatpush1.bf16.msra.mxu0 0
        %3769 = vmatprep.subr.bf16.mxu0 0
        %3770 = vmatpush1.bf16.msra.mxu0 0
        %3771 = vmatprep.mubr.bf16.mxu0 %v3610
        %3772 = vmatmul.mubr.bf16.gmra.mrb[0].mxu0 %v2303
        %v3773 = vpop.f32.mrb[0].mxu0
        %v3774 = vadd.f32 %v3733, %v3773
        %v3775 = vpop.f32.mrb[0].mxu0
        %v3776 = vpop.f32.mrb[0].mxu0
        %v3777 = vadd.f32 %v3736, %v3776
        %v3778 = vpop.f32.mrb[0].mxu0
        %3779 = vdwg.mxu0
        %v3780 = vld [vmem:[#allocation2] sm:$0xfe]
        %v3781 = vld [vmem:[#allocation2 + $0x8] sm:$0xfe]
        %v3782 = vld [vmem:[#allocation2 + $0x10] sm:$0xfe]
        %v3783 = vld [vmem:[#allocation2 + $0x18] sm:$0xfe]
        %v3784 = vld [vmem:[#allocation2 + $0x20] sm:$0x1f]
        %v3785 = vld [vmem:[#allocation2 + $0x28] sm:$0x1f]
        %v3786 = vld [vmem:[#allocation2 + $0x30] sm:$0x1f]
        %v3787 = vld [vmem:[#allocation2 + $0x38] sm:$0x1f]
        %v3788 = vpack.c.bf16 %v3784, %v3780
        %v3789 = vpack.c.bf16 %v3785, %v3781
        %v3790 = vpack.c.bf16 %v3786, %v3782
        %v3791 = vpack.c.bf16 %v3787, %v3783
        %s3792 = scalar_lea.vmem [#allocation9], 1344
        %v3793 = vld [vmem:[%s3792] sm:$0xff]
        %v3794 = vld [vmem:[%s3792 + $0x8] sm:$0xf]
        %v3795 = vld [vmem:[%s3792 + $0xc] sm:$0xff]
        %v3796 = vld [vmem:[%s3792 + $0x14] sm:$0xf]
        %v3797 = vld [vmem:[%s3792 + $0x18] sm:$0xff]
        %v3798 = vld [vmem:[%s3792 + $0x20] sm:$0xf]
        %v3799 = vld [vmem:[%s3792 + $0x24] sm:$0xff]
        %v3800 = vld [vmem:[%s3792 + $0x2c] sm:$0xf]
        %v3801 = vld [vmem:[%s3792 + $0x30] sm:$0xff]
        %v3802 = vld [vmem:[%s3792 + $0x38] sm:$0xf]
        %v3803 = vld [vmem:[%s3792 + $0x3c] sm:$0xff]
        %v3804 = vld [vmem:[%s3792 + $0x44] sm:$0xf]
        %v3805 = vld [vmem:[%s3792 + $0x48] sm:$0xff]
        %v3806 = vld [vmem:[%s3792 + $0x50] sm:$0xf]
        %v3807 = vld [vmem:[%s3792 + $0x54] sm:$0xff]
        %v3808 = vld [vmem:[%s3792 + $0x5c] sm:$0xf]
        %v3809 = vld [vmem:[%s3792 + $0x60] sm:$0xff]
        %v3810 = vld [vmem:[%s3792 + $0x68] sm:$0xf]
        %v3811 = vld [vmem:[%s3792 + $0x6c] sm:$0xff]
        %v3812 = vld [vmem:[%s3792 + $0x74] sm:$0xf]
        %v3813 = vld [vmem:[%s3792 + $0x78] sm:$0xff]
        %v3814 = vld [vmem:[%s3792 + $0x80] sm:$0xf]
        %v3815 = vld [vmem:[%s3792 + $0x84] sm:$0xff]
        %v3816 = vld [vmem:[%s3792 + $0x8c] sm:$0xf]
        %v3817 = vld [vmem:[%s3792 + $0x90] sm:$0xff]
        %v3818 = vld [vmem:[%s3792 + $0x98] sm:$0xf]
        %v3819 = vld [vmem:[%s3792 + $0x9c] sm:$0xff]
        %v3820 = vld [vmem:[%s3792 + $0xa4] sm:$0xf]
        %v3821 = vld [vmem:[%s3792 + $0xa8] sm:$0xff]
        %v3822 = vld [vmem:[%s3792 + $0xb0] sm:$0xf]
        %v3823 = vld [vmem:[%s3792 + $0xb4] sm:$0xff]
        %v3824 = vld [vmem:[%s3792 + $0xbc] sm:$0xf]
        %v3825 = vld [vmem:[%s3792 + $0xc0] sm:$0xff]
        %v3826 = vld [vmem:[%s3792 + $0xc8] sm:$0xf]
        %v3827 = vld [vmem:[%s3792 + $0xcc] sm:$0xff]
        %v3828 = vld [vmem:[%s3792 + $0xd4] sm:$0xf]
        %v3829 = vld [vmem:[%s3792 + $0xd8] sm:$0xff]
        %v3830 = vld [vmem:[%s3792 + $0xe0] sm:$0xf]
        %v3831 = vld [vmem:[%s3792 + $0xe4] sm:$0xff]
        %v3832 = vld [vmem:[%s3792 + $0xec] sm:$0xf]
        %v3833 = vld [vmem:[%s3792 + $0xf0] sm:$0xff]
        %v3834 = vld [vmem:[%s3792 + $0xf8] sm:$0xf]
        %v3835 = vld [vmem:[%s3792 + $0xfc] sm:$0xff]
        %v3836 = vld [vmem:[%s3792 + $0x104] sm:$0xf]
        %v3837 = vld [vmem:[%s3792 + $0x108] sm:$0xff]
        %v3838 = vld [vmem:[%s3792 + $0x110] sm:$0xf]
        %v3839 = vld [vmem:[%s3792 + $0x114] sm:$0xff]
        %v3840 = vld [vmem:[%s3792 + $0x11c] sm:$0xf]
        %v3841 = vld [vmem:[%s3792 + $0x120] sm:$0xff]
        %v3842 = vld [vmem:[%s3792 + $0x128] sm:$0xf]
        %v3843 = vld [vmem:[%s3792 + $0x12c] sm:$0xff]
        %v3844 = vld [vmem:[%s3792 + $0x134] sm:$0xf]
        %v3845 = vld [vmem:[%s3792 + $0x138] sm:$0xff]
        %v3846 = vld [vmem:[%s3792 + $0x140] sm:$0xf]
        %v3847 = vld [vmem:[%s3792 + $0x144] sm:$0xff]
        %v3848 = vld [vmem:[%s3792 + $0x14c] sm:$0xf]
        %v3849 = vld [vmem:[%s3792 + $0x150] sm:$0xff]
        %v3850 = vld [vmem:[%s3792 + $0x158] sm:$0xf]
        %v3851 = vld [vmem:[%s3792 + $0x15c] sm:$0xff]
        %v3852 = vld [vmem:[%s3792 + $0x164] sm:$0xf]
        %v3853 = vld [vmem:[%s3792 + $0x168] sm:$0xff]
        %v3854 = vld [vmem:[%s3792 + $0x170] sm:$0xf]
        %v3855 = vld [vmem:[%s3792 + $0x174] sm:$0xff]
        %v3856 = vld [vmem:[%s3792 + $0x17c] sm:$0xf]
        %v3857 = vld [vmem:[%s3792 + $0x180] sm:$0xff]
        %v3858 = vld [vmem:[%s3792 + $0x188] sm:$0xf]
        %v3859 = vld [vmem:[%s3792 + $0x18c] sm:$0xff]
        %v3860 = vld [vmem:[%s3792 + $0x194] sm:$0xf]
        %v3861 = vld [vmem:[%s3792 + $0x198] sm:$0xff]
        %v3862 = vld [vmem:[%s3792 + $0x1a0] sm:$0xf]
        %v3863 = vld [vmem:[%s3792 + $0x1a4] sm:$0xff]
        %v3864 = vld [vmem:[%s3792 + $0x1ac] sm:$0xf]
        %v3865 = vld [vmem:[%s3792 + $0x1b0] sm:$0xff]
        %v3866 = vld [vmem:[%s3792 + $0x1b8] sm:$0xf]
        %v3867 = vld [vmem:[%s3792 + $0x1bc] sm:$0xff]
        %v3868 = vld [vmem:[%s3792 + $0x1c4] sm:$0xf]
        %v3869 = vld [vmem:[%s3792 + $0x1c8] sm:$0xff]
        %v3870 = vld [vmem:[%s3792 + $0x1d0] sm:$0xf]
        %v3871 = vld [vmem:[%s3792 + $0x1d4] sm:$0xff]
        %v3872 = vld [vmem:[%s3792 + $0x1dc] sm:$0xf]
        %v3873 = vld [vmem:[%s3792 + $0x1e0] sm:$0xff]
        %v3874 = vld [vmem:[%s3792 + $0x1e8] sm:$0xf]
        %v3875 = vld [vmem:[%s3792 + $0x1ec] sm:$0xff]
        %v3876 = vld [vmem:[%s3792 + $0x1f4] sm:$0xf]
        %v3877 = vld [vmem:[%s3792 + $0x1f8] sm:$0xff]
        %v3878 = vld [vmem:[%s3792 + $0x200] sm:$0xf]
        %v3879 = vld [vmem:[%s3792 + $0x204] sm:$0xff]
        %v3880 = vld [vmem:[%s3792 + $0x20c] sm:$0xf]
        %v3881 = vld [vmem:[%s3792 + $0x210] sm:$0xff]
        %v3882 = vld [vmem:[%s3792 + $0x218] sm:$0xf]
        %v3883 = vld [vmem:[%s3792 + $0x21c] sm:$0xff]
        %v3884 = vld [vmem:[%s3792 + $0x224] sm:$0xf]
        %v3885 = vld [vmem:[%s3792 + $0x228] sm:$0xff]
        %v3886 = vld [vmem:[%s3792 + $0x230] sm:$0xf]
        %v3887 = vld [vmem:[%s3792 + $0x234] sm:$0xff]
        %v3888 = vld [vmem:[%s3792 + $0x23c] sm:$0xf]
        %v3889 = vld [vmem:[%s3792 + $0x240] sm:$0xff]
        %v3890 = vld [vmem:[%s3792 + $0x248] sm:$0xf]
        %v3891 = vld [vmem:[%s3792 + $0x24c] sm:$0xff]
        %v3892 = vld [vmem:[%s3792 + $0x254] sm:$0xf]
        %v3893 = vld [vmem:[%s3792 + $0x258] sm:$0xff]
        %v3894 = vld [vmem:[%s3792 + $0x260] sm:$0xf]
        %v3895 = vld [vmem:[%s3792 + $0x264] sm:$0xff]
        %v3896 = vld [vmem:[%s3792 + $0x26c] sm:$0xf]
        %v3897 = vld [vmem:[%s3792 + $0x270] sm:$0xff]
        %v3898 = vld [vmem:[%s3792 + $0x278] sm:$0xf]
        %v3899 = vld [vmem:[%s3792 + $0x27c] sm:$0xff]
        %v3900 = vld [vmem:[%s3792 + $0x284] sm:$0xf]
        %v3901 = vld [vmem:[%s3792 + $0x288] sm:$0xff]
        %v3902 = vld [vmem:[%s3792 + $0x290] sm:$0xf]
        %v3903 = vld [vmem:[%s3792 + $0x294] sm:$0xff]
        %v3904 = vld [vmem:[%s3792 + $0x29c] sm:$0xf]
        %v3906 = vshrl.u32 %v3788, 16
        %v3908 = vshll.u32 %v3788, 16
        %v3910 = vrot.slane %v3908, 1
        %v3911 = vor.u32 %v3906, %v3910
        %v3913 = vshrl.u32 %v3789, 16
        %v3915 = vshll.u32 %v3789, 16
        %v3917 = vrot.slane %v3915, 1
        %v3918 = vor.u32 %v3913, %v3917
        %v3920 = vshrl.u32 %v3790, 16
        %v3922 = vshll.u32 %v3790, 16
        %v3924 = vrot.slane %v3922, 1
        %v3925 = vor.u32 %v3920, %v3924
        %v3927 = vshrl.u32 %v3791, 16
        %v3929 = vshll.u32 %v3791, 16
        %v3931 = vrot.slane %v3929, 1
        %v3932 = vor.u32 %v3927, %v3931
        %v4048 = vunpack.c.l.b16 %v3793
        %v4049 = vunpack.c.h.b16 %v3793
        %v4050 = vunpack.c.l.b16 %v3794
        %v4051 = vunpack.c.l.b16 %v3795
        %v4052 = vunpack.c.h.b16 %v3795
        %v4053 = vunpack.c.l.b16 %v3796
        %v4054 = vunpack.c.l.b16 %v3797
        %v4055 = vunpack.c.h.b16 %v3797
        %v4056 = vunpack.c.l.b16 %v3798
        %v4057 = vunpack.c.l.b16 %v3799
        %v4058 = vunpack.c.h.b16 %v3799
        %v4059 = vunpack.c.l.b16 %v3800
        %v4060 = vunpack.c.l.b16 %v3801
        %v4061 = vunpack.c.h.b16 %v3801
        %v4062 = vunpack.c.l.b16 %v3802
        %v4063 = vunpack.c.l.b16 %v3803
        %v4064 = vunpack.c.h.b16 %v3803
        %v4065 = vunpack.c.l.b16 %v3804
        %v4066 = vunpack.c.l.b16 %v3805
        %v4067 = vunpack.c.h.b16 %v3805
        %v4068 = vunpack.c.l.b16 %v3806
        %v4069 = vunpack.c.l.b16 %v3807
        %v4070 = vunpack.c.h.b16 %v3807
        %v4071 = vunpack.c.l.b16 %v3808
        %v4072 = vunpack.c.l.b16 %v3809
        %v4073 = vunpack.c.h.b16 %v3809
        %v4074 = vunpack.c.l.b16 %v3810
        %v4075 = vunpack.c.l.b16 %v3811
        %v4076 = vunpack.c.h.b16 %v3811
        %v4077 = vunpack.c.l.b16 %v3812
        %v4078 = vunpack.c.l.b16 %v3813
        %v4079 = vunpack.c.h.b16 %v3813
        %v4080 = vunpack.c.l.b16 %v3814
        %v4081 = vunpack.c.l.b16 %v3815
        %v4082 = vunpack.c.h.b16 %v3815
        %v4083 = vunpack.c.l.b16 %v3816
        %v4084 = vunpack.c.l.b16 %v3817
        %v4085 = vunpack.c.h.b16 %v3817
        %v4086 = vunpack.c.l.b16 %v3818
        %v4087 = vunpack.c.l.b16 %v3819
        %v4088 = vunpack.c.h.b16 %v3819
        %v4089 = vunpack.c.l.b16 %v3820
        %v4090 = vunpack.c.l.b16 %v3821
        %v4091 = vunpack.c.h.b16 %v3821
        %v4092 = vunpack.c.l.b16 %v3822
        %v4093 = vunpack.c.l.b16 %v3823
        %v4094 = vunpack.c.h.b16 %v3823
        %v4095 = vunpack.c.l.b16 %v3824
        %v4096 = vunpack.c.l.b16 %v3825
        %v4097 = vunpack.c.h.b16 %v3825
        %v4098 = vunpack.c.l.b16 %v3826
        %v4099 = vunpack.c.l.b16 %v3827
        %v4100 = vunpack.c.h.b16 %v3827
        %v4101 = vunpack.c.l.b16 %v3828
        %v4102 = vunpack.c.l.b16 %v3829
        %v4103 = vunpack.c.h.b16 %v3829
        %v4104 = vunpack.c.l.b16 %v3830
        %v4105 = vunpack.c.l.b16 %v3831
        %v4106 = vunpack.c.h.b16 %v3831
        %v4107 = vunpack.c.l.b16 %v3832
        %v4108 = vunpack.c.l.b16 %v3833
        %v4109 = vunpack.c.h.b16 %v3833
        %v4110 = vunpack.c.l.b16 %v3834
        %v4111 = vunpack.c.l.b16 %v3835
        %v4112 = vunpack.c.h.b16 %v3835
        %v4113 = vunpack.c.l.b16 %v3836
        %v4114 = vunpack.c.l.b16 %v3837
        %v4115 = vunpack.c.h.b16 %v3837
        %v4116 = vunpack.c.l.b16 %v3838
        %v4117 = vunpack.c.l.b16 %v3839
        %v4118 = vunpack.c.h.b16 %v3839
        %v4119 = vunpack.c.l.b16 %v3840
        %v4120 = vunpack.c.l.b16 %v3841
        %v4121 = vunpack.c.h.b16 %v3841
        %v4122 = vunpack.c.l.b16 %v3842
        %v4123 = vunpack.c.l.b16 %v3843
        %v4124 = vunpack.c.h.b16 %v3843
        %v4125 = vunpack.c.l.b16 %v3844
        %v4126 = vunpack.c.l.b16 %v3845
        %v4127 = vunpack.c.h.b16 %v3845
        %v4128 = vunpack.c.l.b16 %v3846
        %v4129 = vunpack.c.l.b16 %v3847
        %v4130 = vunpack.c.h.b16 %v3847
        %v4131 = vunpack.c.l.b16 %v3848
        %v4132 = vunpack.c.l.b16 %v3849
        %v4133 = vunpack.c.h.b16 %v3849
        %v4134 = vunpack.c.l.b16 %v3850
        %v4135 = vunpack.c.l.b16 %v3851
        %v4136 = vunpack.c.h.b16 %v3851
        %v4137 = vunpack.c.l.b16 %v3852
        %v4138 = vunpack.c.l.b16 %v3853
        %v4139 = vunpack.c.h.b16 %v3853
        %v4140 = vunpack.c.l.b16 %v3854
        %v4141 = vunpack.c.l.b16 %v3855
        %v4142 = vunpack.c.h.b16 %v3855
        %v4143 = vunpack.c.l.b16 %v3856
        %v4144 = vunpack.c.l.b16 %v3857
        %v4145 = vunpack.c.h.b16 %v3857
        %v4146 = vunpack.c.l.b16 %v3858
        %v4147 = vunpack.c.l.b16 %v3859
        %v4148 = vunpack.c.h.b16 %v3859
        %v4149 = vunpack.c.l.b16 %v3860
        %v4150 = vunpack.c.l.b16 %v3861
        %v4151 = vunpack.c.h.b16 %v3861
        %v4152 = vunpack.c.l.b16 %v3862
        %v4153 = vunpack.c.l.b16 %v3863
        %v4154 = vunpack.c.h.b16 %v3863
        %v4155 = vunpack.c.l.b16 %v3864
        %v4156 = vunpack.c.l.b16 %v3865
        %v4157 = vunpack.c.h.b16 %v3865
        %v4158 = vunpack.c.l.b16 %v3866
        %v4159 = vunpack.c.l.b16 %v3867
        %v4160 = vunpack.c.h.b16 %v3867
        %v4161 = vunpack.c.l.b16 %v3868
        %v4162 = vunpack.c.l.b16 %v3869
        %v4163 = vunpack.c.h.b16 %v3869
        %v4164 = vunpack.c.l.b16 %v3870
        %v4165 = vunpack.c.l.b16 %v3871
        %v4166 = vunpack.c.h.b16 %v3871
        %v4167 = vunpack.c.l.b16 %v3872
        %v4168 = vunpack.c.l.b16 %v3873
        %v4169 = vunpack.c.h.b16 %v3873
        %v4170 = vunpack.c.l.b16 %v3874
        %v4171 = vunpack.c.l.b16 %v3875
        %v4172 = vunpack.c.h.b16 %v3875
        %v4173 = vunpack.c.l.b16 %v3876
        %v4174 = vunpack.c.l.b16 %v3877
        %v4175 = vunpack.c.h.b16 %v3877
        %v4176 = vunpack.c.l.b16 %v3878
        %v4177 = vunpack.c.l.b16 %v3879
        %v4178 = vunpack.c.h.b16 %v3879
        %v4179 = vunpack.c.l.b16 %v3880
        %v4180 = vunpack.c.l.b16 %v3881
        %v4181 = vunpack.c.h.b16 %v3881
        %v4182 = vunpack.c.l.b16 %v3882
        %v4183 = vunpack.c.l.b16 %v3883
        %v4184 = vunpack.c.h.b16 %v3883
        %v4185 = vunpack.c.l.b16 %v3884
        %v4186 = vunpack.c.l.b16 %v3885
        %v4187 = vunpack.c.h.b16 %v3885
        %v4188 = vunpack.c.l.b16 %v3886
        %v4189 = vunpack.c.l.b16 %v3887
        %v4190 = vunpack.c.h.b16 %v3887
        %v4191 = vunpack.c.l.b16 %v3888
        %v4192 = vunpack.c.l.b16 %v3889
        %v4193 = vunpack.c.h.b16 %v3889
        %v4194 = vunpack.c.l.b16 %v3890
        %v4195 = vunpack.c.l.b16 %v3891
        %v4196 = vunpack.c.h.b16 %v3891
        %v4197 = vunpack.c.l.b16 %v3892
        %v4198 = vunpack.c.l.b16 %v3893
        %v4199 = vunpack.c.h.b16 %v3893
        %v4200 = vunpack.c.l.b16 %v3894
        %v4201 = vunpack.c.l.b16 %v3895
        %v4202 = vunpack.c.h.b16 %v3895
        %v4203 = vunpack.c.l.b16 %v3896
        %v4204 = vunpack.c.l.b16 %v3897
        %v4205 = vunpack.c.h.b16 %v3897
        %v4206 = vunpack.c.l.b16 %v3898
        %v4207 = vunpack.c.l.b16 %v3899
        %v4208 = vunpack.c.h.b16 %v3899
        %v4209 = vunpack.c.l.b16 %v3900
        %v4210 = vunpack.c.l.b16 %v3901
        %v4211 = vunpack.c.h.b16 %v3901
        %v4212 = vunpack.c.l.b16 %v3902
        %v4213 = vunpack.c.l.b16 %v3903
        %v4214 = vunpack.c.h.b16 %v3903
        %v4215 = vunpack.c.l.b16 %v3904
        %v4216 = vpack.c.b16 %v4051, %v4048
        %v4217 = vpack.c.b16 %v4052, %v4049
        %v4218 = vpack.c.b16 %v4053, %v4050
        %v4219 = vpack.c.b16 %v4057, %v4054
        %v4220 = vpack.c.b16 %v4058, %v4055
        %v4221 = vpack.c.b16 %v4059, %v4056
        %v4222 = vpack.c.b16 %v4063, %v4060
        %v4223 = vpack.c.b16 %v4064, %v4061
        %v4224 = vpack.c.b16 %v4065, %v4062
        %v4225 = vpack.c.b16 %v4069, %v4066
        %v4226 = vpack.c.b16 %v4070, %v4067
        %v4227 = vpack.c.b16 %v4071, %v4068
        %v4228 = vpack.c.b16 %v4075, %v4072
        %v4229 = vpack.c.b16 %v4076, %v4073
        %v4230 = vpack.c.b16 %v4077, %v4074
        %v4231 = vpack.c.b16 %v4081, %v4078
        %v4232 = vpack.c.b16 %v4082, %v4079
        %v4233 = vpack.c.b16 %v4083, %v4080
        %v4234 = vpack.c.b16 %v4087, %v4084
        %v4235 = vpack.c.b16 %v4088, %v4085
        %v4236 = vpack.c.b16 %v4089, %v4086
        %v4237 = vpack.c.b16 %v4093, %v4090
        %v4238 = vpack.c.b16 %v4094, %v4091
        %v4239 = vpack.c.b16 %v4095, %v4092
        %v4240 = vpack.c.b16 %v4099, %v4096
        %v4241 = vpack.c.b16 %v4100, %v4097
        %v4242 = vpack.c.b16 %v4101, %v4098
        %v4243 = vpack.c.b16 %v4105, %v4102
        %v4244 = vpack.c.b16 %v4106, %v4103
        %v4245 = vpack.c.b16 %v4107, %v4104
        %v4246 = vpack.c.b16 %v4111, %v4108
        %v4247 = vpack.c.b16 %v4112, %v4109
        %v4248 = vpack.c.b16 %v4113, %v4110
        %v4249 = vpack.c.b16 %v4117, %v4114
        %v4250 = vpack.c.b16 %v4118, %v4115
        %v4251 = vpack.c.b16 %v4119, %v4116
        %v4252 = vpack.c.b16 %v4123, %v4120
        %v4253 = vpack.c.b16 %v4124, %v4121
        %v4254 = vpack.c.b16 %v4125, %v4122
        %v4255 = vpack.c.b16 %v4129, %v4126
        %v4256 = vpack.c.b16 %v4130, %v4127
        %v4257 = vpack.c.b16 %v4131, %v4128
        %v4258 = vpack.c.b16 %v4135, %v4132
        %v4259 = vpack.c.b16 %v4136, %v4133
        %v4260 = vpack.c.b16 %v4137, %v4134
        %v4261 = vpack.c.b16 %v4141, %v4138
        %v4262 = vpack.c.b16 %v4142, %v4139
        %v4263 = vpack.c.b16 %v4143, %v4140
        %v4264 = vpack.c.b16 %v4147, %v4144
        %v4265 = vpack.c.b16 %v4148, %v4145
        %v4266 = vpack.c.b16 %v4149, %v4146
        %v4267 = vpack.c.b16 %v4153, %v4150
        %v4268 = vpack.c.b16 %v4154, %v4151
        %v4269 = vpack.c.b16 %v4155, %v4152
        %v4270 = vpack.c.b16 %v4159, %v4156
        %v4271 = vpack.c.b16 %v4160, %v4157
        %v4272 = vpack.c.b16 %v4161, %v4158
        %v4273 = vpack.c.b16 %v4165, %v4162
        %v4274 = vpack.c.b16 %v4166, %v4163
        %v4275 = vpack.c.b16 %v4167, %v4164
        %v4276 = vpack.c.b16 %v4171, %v4168
        %v4277 = vpack.c.b16 %v4172, %v4169
        %v4278 = vpack.c.b16 %v4173, %v4170
        %v4279 = vpack.c.b16 %v4177, %v4174
        %v4280 = vpack.c.b16 %v4178, %v4175
        %v4281 = vpack.c.b16 %v4179, %v4176
        %v4282 = vpack.c.b16 %v4183, %v4180
        %v4283 = vpack.c.b16 %v4184, %v4181
        %v4284 = vpack.c.b16 %v4185, %v4182
        %v4285 = vpack.c.b16 %v4189, %v4186
        %v4286 = vpack.c.b16 %v4190, %v4187
        %v4287 = vpack.c.b16 %v4191, %v4188
        %v4288 = vpack.c.b16 %v4195, %v4192
        %v4289 = vpack.c.b16 %v4196, %v4193
        %v4290 = vpack.c.b16 %v4197, %v4194
        %v4291 = vpack.c.b16 %v4201, %v4198
        %v4292 = vpack.c.b16 %v4202, %v4199
        %v4293 = vpack.c.b16 %v4203, %v4200
        %v4294 = vpack.c.b16 %v4207, %v4204
        %v4295 = vpack.c.b16 %v4208, %v4205
        %v4296 = vpack.c.b16 %v4209, %v4206
        %v4297 = vpack.c.b16 %v4213, %v4210
        %v4298 = vpack.c.b16 %v4214, %v4211
        %v4299 = vpack.c.b16 %v4215, %v4212
        %v4385 = vsel %vm2262, %v3932, 0
        %4387 = vmatprep.subr.bf16.mxu0 %v4217
        %4388 = vmatpush1.bf16.msra.mxu0 %v4216
        %4389 = vmatprep.subr.bf16.mxu0 %v4220
        %4390 = vmatpush1.bf16.msra.mxu0 %v4219
        %4391 = vmatprep.subr.bf16.mxu0 %v4223
        %4392 = vmatpush1.bf16.msra.mxu0 %v4222
        %4393 = vmatprep.subr.bf16.mxu0 %v4226
        %4394 = vmatpush1.bf16.msra.mxu0 %v4225
        %4395 = vmatprep.subr.bf16.mxu0 %v4229
        %4396 = vmatpush1.bf16.msra.mxu0 %v4228
        %4397 = vmatprep.subr.bf16.mxu0 %v4232
        %4398 = vmatpush1.bf16.msra.mxu0 %v4231
        %4399 = vmatprep.subr.bf16.mxu0 %v4235
        %4400 = vmatpush1.bf16.msra.mxu0 %v4234
        %4401 = vmatprep.subr.bf16.mxu0 %v4238
        %4402 = vmatpush1.bf16.msra.mxu0 %v4237
        %4403 = vmatprep.subr.bf16.mxu0 %v4241
        %4404 = vmatpush1.bf16.msra.mxu0 %v4240
        %4405 = vmatprep.subr.bf16.mxu0 %v4244
        %4406 = vmatpush1.bf16.msra.mxu0 %v4243
        %4407 = vmatprep.subr.bf16.mxu0 %v4247
        %4408 = vmatpush1.bf16.msra.mxu0 %v4246
        %4409 = vmatprep.subr.bf16.mxu0 %v4250
        %4410 = vmatpush1.bf16.msra.mxu0 %v4249
        %4411 = vmatprep.subr.bf16.mxu0 %v4253
        %4412 = vmatpush1.bf16.msra.mxu0 %v4252
        %4413 = vmatprep.subr.bf16.mxu0 %v4256
        %4414 = vmatpush1.bf16.msra.mxu0 %v4255
        %4415 = vmatprep.subr.bf16.mxu0 %v4259
        %4416 = vmatpush1.bf16.msra.mxu0 %v4258
        %4417 = vmatprep.subr.bf16.mxu0 %v4262
        %4418 = vmatpush1.bf16.msra.mxu0 %v4261
        %4419 = vmatprep.mubr.bf16.mxu0 %v3918
        %4420 = vmatmul.mubr.bf16.gmra.mrb[0].mxu0 %v3911
        %v4421 = vpop.f32.mrb[0].mxu0
        %v4422 = vadd.f32 0.0, %v4421
        %v4423 = vpop.f32.mrb[0].mxu0
        %v4424 = vadd.f32 0.0, %v4423
        %v4425 = vpop.f32.mrb[0].mxu0
        %v4426 = vadd.f32 0.0, %v4425
        %v4427 = vpop.f32.mrb[0].mxu0
        %v4428 = vadd.f32 0.0, %v4427
        %4429 = vdwg.mxu0
        %4430 = vmatprep.subr.bf16.mxu0 %v4265
        %4431 = vmatpush1.bf16.msra.mxu0 %v4264
        %4432 = vmatprep.subr.bf16.mxu0 %v4268
        %4433 = vmatpush1.bf16.msra.mxu0 %v4267
        %4434 = vmatprep.subr.bf16.mxu0 %v4271
        %4435 = vmatpush1.bf16.msra.mxu0 %v4270
        %4436 = vmatprep.subr.bf16.mxu0 %v4274
        %4437 = vmatpush1.bf16.msra.mxu0 %v4273
        %4438 = vmatprep.subr.bf16.mxu0 %v4277
        %4439 = vmatpush1.bf16.msra.mxu0 %v4276
        %4440 = vmatprep.subr.bf16.mxu0 %v4280
        %4441 = vmatpush1.bf16.msra.mxu0 %v4279
        %4442 = vmatprep.subr.bf16.mxu0 %v4283
        %4443 = vmatpush1.bf16.msra.mxu0 %v4282
        %4444 = vmatprep.subr.bf16.mxu0 %v4286
        %4445 = vmatpush1.bf16.msra.mxu0 %v4285
        %4446 = vmatprep.subr.bf16.mxu0 %v4289
        %4447 = vmatpush1.bf16.msra.mxu0 %v4288
        %4448 = vmatprep.subr.bf16.mxu0 %v4292
        %4449 = vmatpush1.bf16.msra.mxu0 %v4291
        %4450 = vmatprep.subr.bf16.mxu0 %v4295
        %4451 = vmatpush1.bf16.msra.mxu0 %v4294
        %4452 = vmatprep.subr.bf16.mxu0 %v4298
        %4453 = vmatpush1.bf16.msra.mxu0 %v4297
        %4454 = vmatprep.subr.bf16.mxu0 0
        %4455 = vmatpush1.bf16.msra.mxu0 0
        %4456 = vmatprep.subr.bf16.mxu0 0
        %4457 = vmatpush1.bf16.msra.mxu0 0
        %4458 = vmatprep.subr.bf16.mxu0 0
        %4459 = vmatpush1.bf16.msra.mxu0 0
        %4460 = vmatprep.subr.bf16.mxu0 0
        %4461 = vmatpush1.bf16.msra.mxu0 0
        %4462 = vmatprep.mubr.bf16.mxu0 %v4385
        %4463 = vmatmul.mubr.bf16.gmra.mrb[0].mxu0 %v3925
        %v4464 = vpop.f32.mrb[0].mxu0
        %v4465 = vadd.f32 %v4422, %v4464
        %v4466 = vpop.f32.mrb[0].mxu0
        %v4467 = vadd.f32 %v4424, %v4466
        %v4468 = vpop.f32.mrb[0].mxu0
        %v4469 = vadd.f32 %v4426, %v4468
        %v4470 = vpop.f32.mrb[0].mxu0
        %v4471 = vadd.f32 %v4428, %v4470
        %4472 = vdwg.mxu0
        %4473 = vmatprep.subr.bf16.mxu0 0
        %4474 = vmatpush1.bf16.msra.mxu0 %v4218
        %4475 = vmatprep.subr.bf16.mxu0 0
        %4476 = vmatpush1.bf16.msra.mxu0 %v4221
        %4477 = vmatprep.subr.bf16.mxu0 0
        %4478 = vmatpush1.bf16.msra.mxu0 %v4224
        %4479 = vmatprep.subr.bf16.mxu0 0
        %4480 = vmatpush1.bf16.msra.mxu0 %v4227
        %4481 = vmatprep.subr.bf16.mxu0 0
        %4482 = vmatpush1.bf16.msra.mxu0 %v4230
        %4483 = vmatprep.subr.bf16.mxu0 0
        %4484 = vmatpush1.bf16.msra.mxu0 %v4233
        %4485 = vmatprep.subr.bf16.mxu0 0
        %4486 = vmatpush1.bf16.msra.mxu0 %v4236
        %4487 = vmatprep.subr.bf16.mxu0 0
        %4488 = vmatpush1.bf16.msra.mxu0 %v4239
        %4489 = vmatprep.subr.bf16.mxu0 0
        %4490 = vmatpush1.bf16.msra.mxu0 %v4242
        %4491 = vmatprep.subr.bf16.mxu0 0
        %4492 = vmatpush1.bf16.msra.mxu0 %v4245
        %4493 = vmatprep.subr.bf16.mxu0 0
        %4494 = vmatpush1.bf16.msra.mxu0 %v4248
        %4495 = vmatprep.subr.bf16.mxu0 0
        %4496 = vmatpush1.bf16.msra.mxu0 %v4251
        %4497 = vmatprep.subr.bf16.mxu0 0
        %4498 = vmatpush1.bf16.msra.mxu0 %v4254
        %4499 = vmatprep.subr.bf16.mxu0 0
        %4500 = vmatpush1.bf16.msra.mxu0 %v4257
        %4501 = vmatprep.subr.bf16.mxu0 0
        %4502 = vmatpush1.bf16.msra.mxu0 %v4260
        %4503 = vmatprep.subr.bf16.mxu0 0
        %4504 = vmatpush1.bf16.msra.mxu0 %v4263
        %4505 = vmatprep.mubr.bf16.mxu0 %v3918
        %4506 = vmatmul.mubr.bf16.gmra.mrb[0].mxu0 %v3911
        %v4507 = vpop.f32.mrb[0].mxu0
        %v4508 = vadd.f32 0.0, %v4507
        %v4509 = vpop.f32.mrb[0].mxu0
        %v4510 = vpop.f32.mrb[0].mxu0
        %v4511 = vadd.f32 0.0, %v4510
        %v4512 = vpop.f32.mrb[0].mxu0
        %4513 = vdwg.mxu0
        %4514 = vmatprep.subr.bf16.mxu0 0
        %4515 = vmatpush1.bf16.msra.mxu0 %v4266
        %4516 = vmatprep.subr.bf16.mxu0 0
        %4517 = vmatpush1.bf16.msra.mxu0 %v4269
        %4518 = vmatprep.subr.bf16.mxu0 0
        %4519 = vmatpush1.bf16.msra.mxu0 %v4272
        %4520 = vmatprep.subr.bf16.mxu0 0
        %4521 = vmatpush1.bf16.msra.mxu0 %v4275
        %4522 = vmatprep.subr.bf16.mxu0 0
        %4523 = vmatpush1.bf16.msra.mxu0 %v4278
        %4524 = vmatprep.subr.bf16.mxu0 0
        %4525 = vmatpush1.bf16.msra.mxu0 %v4281
        %4526 = vmatprep.subr.bf16.mxu0 0
        %4527 = vmatpush1.bf16.msra.mxu0 %v4284
        %4528 = vmatprep.subr.bf16.mxu0 0
        %4529 = vmatpush1.bf16.msra.mxu0 %v4287
        %4530 = vmatprep.subr.bf16.mxu0 0
        %4531 = vmatpush1.bf16.msra.mxu0 %v4290
        %4532 = vmatprep.subr.bf16.mxu0 0
        %4533 = vmatpush1.bf16.msra.mxu0 %v4293
        %4534 = vmatprep.subr.bf16.mxu0 0
        %4535 = vmatpush1.bf16.msra.mxu0 %v4296
        %4536 = vmatprep.subr.bf16.mxu0 0
        %4537 = vmatpush1.bf16.msra.mxu0 %v4299
        %4538 = vmatprep.subr.bf16.mxu0 0
        %4539 = vmatpush1.bf16.msra.mxu0 0
        %4540 = vmatprep.subr.bf16.mxu0 0
        %4541 = vmatpush1.bf16.msra.mxu0 0
        %4542 = vmatprep.subr.bf16.mxu0 0
        %4543 = vmatpush1.bf16.msra.mxu0 0
        %4544 = vmatprep.subr.bf16.mxu0 0
        %4545 = vmatpush1.bf16.msra.mxu0 0
        %4546 = vmatprep.mubr.bf16.mxu0 %v4385
        %4547 = vmatmul.mubr.bf16.gmra.mrb[0].mxu0 %v3925
        %v4548 = vpop.f32.mrb[0].mxu0
        %v4549 = vadd.f32 %v4508, %v4548
        %v4550 = vpop.f32.mrb[0].mxu0
        %v4551 = vpop.f32.mrb[0].mxu0
        %v4552 = vadd.f32 %v4511, %v4551
        %v4553 = vpop.f32.mrb[0].mxu0
        %4554 = vdwg.mxu0
        %v4555 = vadd.f32 %v3690, %v4465
        %v4556 = vadd.f32 %v3692, %v4467
        %v4557 = vadd.f32 %v3774, %v4549
        %v4558 = vadd.f32 %v3694, %v4469
        %v4559 = vadd.f32 %v3696, %v4471
        %v4560 = vadd.f32 %v3777, %v4552
        %v4561 = vld [vmem:[#allocation3] sm:$0xfe]
        %v4562 = vld [vmem:[#allocation3 + $0x8] sm:$0xfe]
        %v4563 = vld [vmem:[#allocation3 + $0x10] sm:$0xfe]
        %v4564 = vld [vmem:[#allocation3 + $0x18] sm:$0xfe]
        %v4565 = vld [vmem:[#allocation3 + $0x20] sm:$0x1f]
        %v4566 = vld [vmem:[#allocation3 + $0x28] sm:$0x1f]
        %v4567 = vld [vmem:[#allocation3 + $0x30] sm:$0x1f]
        %v4568 = vld [vmem:[#allocation3 + $0x38] sm:$0x1f]
        %v4569 = vpack.c.bf16 %v4565, %v4561
        %v4570 = vpack.c.bf16 %v4566, %v4562
        %v4571 = vpack.c.bf16 %v4567, %v4563
        %v4572 = vpack.c.bf16 %v4568, %v4564
        %s4573 = scalar_lea.vmem [#allocation9], 2016
        %v4574 = vld [vmem:[%s4573] sm:$0xff]
        %v4575 = vld [vmem:[%s4573 + $0x8] sm:$0xf]
        %v4576 = vld [vmem:[%s4573 + $0xc] sm:$0xff]
        %v4577 = vld [vmem:[%s4573 + $0x14] sm:$0xf]
        %v4578 = vld [vmem:[%s4573 + $0x18] sm:$0xff]
        %v4579 = vld [vmem:[%s4573 + $0x20] sm:$0xf]
        %v4580 = vld [vmem:[%s4573 + $0x24] sm:$0xff]
        %v4581 = vld [vmem:[%s4573 + $0x2c] sm:$0xf]
        %v4582 = vld [vmem:[%s4573 + $0x30] sm:$0xff]
        %v4583 = vld [vmem:[%s4573 + $0x38] sm:$0xf]
        %v4584 = vld [vmem:[%s4573 + $0x3c] sm:$0xff]
        %v4585 = vld [vmem:[%s4573 + $0x44] sm:$0xf]
        %v4586 = vld [vmem:[%s4573 + $0x48] sm:$0xff]
        %v4587 = vld [vmem:[%s4573 + $0x50] sm:$0xf]
        %v4588 = vld [vmem:[%s4573 + $0x54] sm:$0xff]
        %v4589 = vld [vmem:[%s4573 + $0x5c] sm:$0xf]
        %v4590 = vld [vmem:[%s4573 + $0x60] sm:$0xff]
        %v4591 = vld [vmem:[%s4573 + $0x68] sm:$0xf]
        %v4592 = vld [vmem:[%s4573 + $0x6c] sm:$0xff]
        %v4593 = vld [vmem:[%s4573 + $0x74] sm:$0xf]
        %v4594 = vld [vmem:[%s4573 + $0x78] sm:$0xff]
        %v4595 = vld [vmem:[%s4573 + $0x80] sm:$0xf]
        %v4596 = vld [vmem:[%s4573 + $0x84] sm:$0xff]
        %v4597 = vld [vmem:[%s4573 + $0x8c] sm:$0xf]
        %v4598 = vld [vmem:[%s4573 + $0x90] sm:$0xff]
        %v4599 = vld [vmem:[%s4573 + $0x98] sm:$0xf]
        %v4600 = vld [vmem:[%s4573 + $0x9c] sm:$0xff]
        %v4601 = vld [vmem:[%s4573 + $0xa4] sm:$0xf]
        %v4602 = vld [vmem:[%s4573 + $0xa8] sm:$0xff]
        %v4603 = vld [vmem:[%s4573 + $0xb0] sm:$0xf]
        %v4604 = vld [vmem:[%s4573 + $0xb4] sm:$0xff]
        %v4605 = vld [vmem:[%s4573 + $0xbc] sm:$0xf]
        %v4606 = vld [vmem:[%s4573 + $0xc0] sm:$0xff]
        %v4607 = vld [vmem:[%s4573 + $0xc8] sm:$0xf]
        %v4608 = vld [vmem:[%s4573 + $0xcc] sm:$0xff]
        %v4609 = vld [vmem:[%s4573 + $0xd4] sm:$0xf]
        %v4610 = vld [vmem:[%s4573 + $0xd8] sm:$0xff]
        %v4611 = vld [vmem:[%s4573 + $0xe0] sm:$0xf]
        %v4612 = vld [vmem:[%s4573 + $0xe4] sm:$0xff]
        %v4613 = vld [vmem:[%s4573 + $0xec] sm:$0xf]
        %v4614 = vld [vmem:[%s4573 + $0xf0] sm:$0xff]
        %v4615 = vld [vmem:[%s4573 + $0xf8] sm:$0xf]
        %v4616 = vld [vmem:[%s4573 + $0xfc] sm:$0xff]
        %v4617 = vld [vmem:[%s4573 + $0x104] sm:$0xf]
        %v4618 = vld [vmem:[%s4573 + $0x108] sm:$0xff]
        %v4619 = vld [vmem:[%s4573 + $0x110] sm:$0xf]
        %v4620 = vld [vmem:[%s4573 + $0x114] sm:$0xff]
        %v4621 = vld [vmem:[%s4573 + $0x11c] sm:$0xf]
        %v4622 = vld [vmem:[%s4573 + $0x120] sm:$0xff]
        %v4623 = vld [vmem:[%s4573 + $0x128] sm:$0xf]
        %v4624 = vld [vmem:[%s4573 + $0x12c] sm:$0xff]
        %v4625 = vld [vmem:[%s4573 + $0x134] sm:$0xf]
        %v4626 = vld [vmem:[%s4573 + $0x138] sm:$0xff]
        %v4627 = vld [vmem:[%s4573 + $0x140] sm:$0xf]
        %v4628 = vld [vmem:[%s4573 + $0x144] sm:$0xff]
        %v4629 = vld [vmem:[%s4573 + $0x14c] sm:$0xf]
        %v4630 = vld [vmem:[%s4573 + $0x150] sm:$0xff]
        %v4631 = vld [vmem:[%s4573 + $0x158] sm:$0xf]
        %v4632 = vld [vmem:[%s4573 + $0x15c] sm:$0xff]
        %v4633 = vld [vmem:[%s4573 + $0x164] sm:$0xf]
        %v4634 = vld [vmem:[%s4573 + $0x168] sm:$0xff]
        %v4635 = vld [vmem:[%s4573 + $0x170] sm:$0xf]
        %v4636 = vld [vmem:[%s4573 + $0x174] sm:$0xff]
        %v4637 = vld [vmem:[%s4573 + $0x17c] sm:$0xf]
        %v4638 = vld [vmem:[%s4573 + $0x180] sm:$0xff]
        %v4639 = vld [vmem:[%s4573 + $0x188] sm:$0xf]
        %v4640 = vld [vmem:[%s4573 + $0x18c] sm:$0xff]
        %v4641 = vld [vmem:[%s4573 + $0x194] sm:$0xf]
        %v4642 = vld [vmem:[%s4573 + $0x198] sm:$0xff]
        %v4643 = vld [vmem:[%s4573 + $0x1a0] sm:$0xf]
        %v4644 = vld [vmem:[%s4573 + $0x1a4] sm:$0xff]
        %v4645 = vld [vmem:[%s4573 + $0x1ac] sm:$0xf]
        %v4646 = vld [vmem:[%s4573 + $0x1b0] sm:$0xff]
        %v4647 = vld [vmem:[%s4573 + $0x1b8] sm:$0xf]
        %v4648 = vld [vmem:[%s4573 + $0x1bc] sm:$0xff]
        %v4649 = vld [vmem:[%s4573 + $0x1c4] sm:$0xf]
        %v4650 = vld [vmem:[%s4573 + $0x1c8] sm:$0xff]
        %v4651 = vld [vmem:[%s4573 + $0x1d0] sm:$0xf]
        %v4652 = vld [vmem:[%s4573 + $0x1d4] sm:$0xff]
        %v4653 = vld [vmem:[%s4573 + $0x1dc] sm:$0xf]
        %v4654 = vld [vmem:[%s4573 + $0x1e0] sm:$0xff]
        %v4655 = vld [vmem:[%s4573 + $0x1e8] sm:$0xf]
        %v4656 = vld [vmem:[%s4573 + $0x1ec] sm:$0xff]
        %v4657 = vld [vmem:[%s4573 + $0x1f4] sm:$0xf]
        %v4658 = vld [vmem:[%s4573 + $0x1f8] sm:$0xff]
        %v4659 = vld [vmem:[%s4573 + $0x200] sm:$0xf]
        %v4660 = vld [vmem:[%s4573 + $0x204] sm:$0xff]
        %v4661 = vld [vmem:[%s4573 + $0x20c] sm:$0xf]
        %v4662 = vld [vmem:[%s4573 + $0x210] sm:$0xff]
        %v4663 = vld [vmem:[%s4573 + $0x218] sm:$0xf]
        %v4664 = vld [vmem:[%s4573 + $0x21c] sm:$0xff]
        %v4665 = vld [vmem:[%s4573 + $0x224] sm:$0xf]
        %v4666 = vld [vmem:[%s4573 + $0x228] sm:$0xff]
        %v4667 = vld [vmem:[%s4573 + $0x230] sm:$0xf]
        %v4668 = vld [vmem:[%s4573 + $0x234] sm:$0xff]
        %v4669 = vld [vmem:[%s4573 + $0x23c] sm:$0xf]
        %v4670 = vld [vmem:[%s4573 + $0x240] sm:$0xff]
        %v4671 = vld [vmem:[%s4573 + $0x248] sm:$0xf]
        %v4672 = vld [vmem:[%s4573 + $0x24c] sm:$0xff]
        %v4673 = vld [vmem:[%s4573 + $0x254] sm:$0xf]
        %v4674 = vld [vmem:[%s4573 + $0x258] sm:$0xff]
        %v4675 = vld [vmem:[%s4573 + $0x260] sm:$0xf]
        %v4676 = vld [vmem:[%s4573 + $0x264] sm:$0xff]
        %v4677 = vld [vmem:[%s4573 + $0x26c] sm:$0xf]
        %v4678 = vld [vmem:[%s4573 + $0x270] sm:$0xff]
        %v4679 = vld [vmem:[%s4573 + $0x278] sm:$0xf]
        %v4680 = vld [vmem:[%s4573 + $0x27c] sm:$0xff]
        %v4681 = vld [vmem:[%s4573 + $0x284] sm:$0xf]
        %v4682 = vld [vmem:[%s4573 + $0x288] sm:$0xff]
        %v4683 = vld [vmem:[%s4573 + $0x290] sm:$0xf]
        %v4684 = vld [vmem:[%s4573 + $0x294] sm:$0xff]
        %v4685 = vld [vmem:[%s4573 + $0x29c] sm:$0xf]
        %v4687 = vshrl.u32 %v4569, 16
        %v4689 = vshll.u32 %v4569, 16
        %v4691 = vrot.slane %v4689, 1
        %v4692 = vor.u32 %v4687, %v4691
        %v4694 = vshrl.u32 %v4570, 16
        %v4696 = vshll.u32 %v4570, 16
        %v4698 = vrot.slane %v4696, 1
        %v4699 = vor.u32 %v4694, %v4698
        %v4701 = vshrl.u32 %v4571, 16
        %v4703 = vshll.u32 %v4571, 16
        %v4705 = vrot.slane %v4703, 1
        %v4706 = vor.u32 %v4701, %v4705
        %v4708 = vshrl.u32 %v4572, 16
        %v4710 = vshll.u32 %v4572, 16
        %v4712 = vrot.slane %v4710, 1
        %v4713 = vor.u32 %v4708, %v4712
        %v4829 = vunpack.c.l.b16 %v4574
        %v4830 = vunpack.c.h.b16 %v4574
        %v4831 = vunpack.c.l.b16 %v4575
        %v4832 = vunpack.c.l.b16 %v4576
        %v4833 = vunpack.c.h.b16 %v4576
        %v4834 = vunpack.c.l.b16 %v4577
        %v4835 = vunpack.c.l.b16 %v4578
        %v4836 = vunpack.c.h.b16 %v4578
        %v4837 = vunpack.c.l.b16 %v4579
        %v4838 = vunpack.c.l.b16 %v4580
        %v4839 = vunpack.c.h.b16 %v4580
        %v4840 = vunpack.c.l.b16 %v4581
        %v4841 = vunpack.c.l.b16 %v4582
        %v4842 = vunpack.c.h.b16 %v4582
        %v4843 = vunpack.c.l.b16 %v4583
        %v4844 = vunpack.c.l.b16 %v4584
        %v4845 = vunpack.c.h.b16 %v4584
        %v4846 = vunpack.c.l.b16 %v4585
        %v4847 = vunpack.c.l.b16 %v4586
        %v4848 = vunpack.c.h.b16 %v4586
        %v4849 = vunpack.c.l.b16 %v4587
        %v4850 = vunpack.c.l.b16 %v4588
        %v4851 = vunpack.c.h.b16 %v4588
        %v4852 = vunpack.c.l.b16 %v4589
        %v4853 = vunpack.c.l.b16 %v4590
        %v4854 = vunpack.c.h.b16 %v4590
        %v4855 = vunpack.c.l.b16 %v4591
        %v4856 = vunpack.c.l.b16 %v4592
        %v4857 = vunpack.c.h.b16 %v4592
        %v4858 = vunpack.c.l.b16 %v4593
        %v4859 = vunpack.c.l.b16 %v4594
        %v4860 = vunpack.c.h.b16 %v4594
        %v4861 = vunpack.c.l.b16 %v4595
        %v4862 = vunpack.c.l.b16 %v4596
        %v4863 = vunpack.c.h.b16 %v4596
        %v4864 = vunpack.c.l.b16 %v4597
        %v4865 = vunpack.c.l.b16 %v4598
        %v4866 = vunpack.c.h.b16 %v4598
        %v4867 = vunpack.c.l.b16 %v4599
        %v4868 = vunpack.c.l.b16 %v4600
        %v4869 = vunpack.c.h.b16 %v4600
        %v4870 = vunpack.c.l.b16 %v4601
        %v4871 = vunpack.c.l.b16 %v4602
        %v4872 = vunpack.c.h.b16 %v4602
        %v4873 = vunpack.c.l.b16 %v4603
        %v4874 = vunpack.c.l.b16 %v4604
        %v4875 = vunpack.c.h.b16 %v4604
        %v4876 = vunpack.c.l.b16 %v4605
        %v4877 = vunpack.c.l.b16 %v4606
        %v4878 = vunpack.c.h.b16 %v4606
        %v4879 = vunpack.c.l.b16 %v4607
        %v4880 = vunpack.c.l.b16 %v4608
        %v4881 = vunpack.c.h.b16 %v4608
        %v4882 = vunpack.c.l.b16 %v4609
        %v4883 = vunpack.c.l.b16 %v4610
        %v4884 = vunpack.c.h.b16 %v4610
        %v4885 = vunpack.c.l.b16 %v4611
        %v4886 = vunpack.c.l.b16 %v4612
        %v4887 = vunpack.c.h.b16 %v4612
        %v4888 = vunpack.c.l.b16 %v4613
        %v4889 = vunpack.c.l.b16 %v4614
        %v4890 = vunpack.c.h.b16 %v4614
        %v4891 = vunpack.c.l.b16 %v4615
        %v4892 = vunpack.c.l.b16 %v4616
        %v4893 = vunpack.c.h.b16 %v4616
        %v4894 = vunpack.c.l.b16 %v4617
        %v4895 = vunpack.c.l.b16 %v4618
        %v4896 = vunpack.c.h.b16 %v4618
        %v4897 = vunpack.c.l.b16 %v4619
        %v4898 = vunpack.c.l.b16 %v4620
        %v4899 = vunpack.c.h.b16 %v4620
        %v4900 = vunpack.c.l.b16 %v4621
        %v4901 = vunpack.c.l.b16 %v4622
        %v4902 = vunpack.c.h.b16 %v4622
        %v4903 = vunpack.c.l.b16 %v4623
        %v4904 = vunpack.c.l.b16 %v4624
        %v4905 = vunpack.c.h.b16 %v4624
        %v4906 = vunpack.c.l.b16 %v4625
        %v4907 = vunpack.c.l.b16 %v4626
        %v4908 = vunpack.c.h.b16 %v4626
        %v4909 = vunpack.c.l.b16 %v4627
        %v4910 = vunpack.c.l.b16 %v4628
        %v4911 = vunpack.c.h.b16 %v4628
        %v4912 = vunpack.c.l.b16 %v4629
        %v4913 = vunpack.c.l.b16 %v4630
        %v4914 = vunpack.c.h.b16 %v4630
        %v4915 = vunpack.c.l.b16 %v4631
        %v4916 = vunpack.c.l.b16 %v4632
        %v4917 = vunpack.c.h.b16 %v4632
        %v4918 = vunpack.c.l.b16 %v4633
        %v4919 = vunpack.c.l.b16 %v4634
        %v4920 = vunpack.c.h.b16 %v4634
        %v4921 = vunpack.c.l.b16 %v4635
        %v4922 = vunpack.c.l.b16 %v4636
        %v4923 = vunpack.c.h.b16 %v4636
        %v4924 = vunpack.c.l.b16 %v4637
        %v4925 = vunpack.c.l.b16 %v4638
        %v4926 = vunpack.c.h.b16 %v4638
        %v4927 = vunpack.c.l.b16 %v4639
        %v4928 = vunpack.c.l.b16 %v4640
        %v4929 = vunpack.c.h.b16 %v4640
        %v4930 = vunpack.c.l.b16 %v4641
        %v4931 = vunpack.c.l.b16 %v4642
        %v4932 = vunpack.c.h.b16 %v4642
        %v4933 = vunpack.c.l.b16 %v4643
        %v4934 = vunpack.c.l.b16 %v4644
        %v4935 = vunpack.c.h.b16 %v4644
        %v4936 = vunpack.c.l.b16 %v4645
        %v4937 = vunpack.c.l.b16 %v4646
        %v4938 = vunpack.c.h.b16 %v4646
        %v4939 = vunpack.c.l.b16 %v4647
        %v4940 = vunpack.c.l.b16 %v4648
        %v4941 = vunpack.c.h.b16 %v4648
        %v4942 = vunpack.c.l.b16 %v4649
        %v4943 = vunpack.c.l.b16 %v4650
        %v4944 = vunpack.c.h.b16 %v4650
        %v4945 = vunpack.c.l.b16 %v4651
        %v4946 = vunpack.c.l.b16 %v4652
        %v4947 = vunpack.c.h.b16 %v4652
        %v4948 = vunpack.c.l.b16 %v4653
        %v4949 = vunpack.c.l.b16 %v4654
        %v4950 = vunpack.c.h.b16 %v4654
        %v4951 = vunpack.c.l.b16 %v4655
        %v4952 = vunpack.c.l.b16 %v4656
        %v4953 = vunpack.c.h.b16 %v4656
        %v4954 = vunpack.c.l.b16 %v4657
        %v4955 = vunpack.c.l.b16 %v4658
        %v4956 = vunpack.c.h.b16 %v4658
        %v4957 = vunpack.c.l.b16 %v4659
        %v4958 = vunpack.c.l.b16 %v4660
        %v4959 = vunpack.c.h.b16 %v4660
        %v4960 = vunpack.c.l.b16 %v4661
        %v4961 = vunpack.c.l.b16 %v4662
        %v4962 = vunpack.c.h.b16 %v4662
        %v4963 = vunpack.c.l.b16 %v4663
        %v4964 = vunpack.c.l.b16 %v4664
        %v4965 = vunpack.c.h.b16 %v4664
        %v4966 = vunpack.c.l.b16 %v4665
        %v4967 = vunpack.c.l.b16 %v4666
        %v4968 = vunpack.c.h.b16 %v4666
        %v4969 = vunpack.c.l.b16 %v4667
        %v4970 = vunpack.c.l.b16 %v4668
        %v4971 = vunpack.c.h.b16 %v4668
        %v4972 = vunpack.c.l.b16 %v4669
        %v4973 = vunpack.c.l.b16 %v4670
        %v4974 = vunpack.c.h.b16 %v4670
        %v4975 = vunpack.c.l.b16 %v4671
        %v4976 = vunpack.c.l.b16 %v4672
        %v4977 = vunpack.c.h.b16 %v4672
        %v4978 = vunpack.c.l.b16 %v4673
        %v4979 = vunpack.c.l.b16 %v4674
        %v4980 = vunpack.c.h.b16 %v4674
        %v4981 = vunpack.c.l.b16 %v4675
        %v4982 = vunpack.c.l.b16 %v4676
        %v4983 = vunpack.c.h.b16 %v4676
        %v4984 = vunpack.c.l.b16 %v4677
        %v4985 = vunpack.c.l.b16 %v4678
        %v4986 = vunpack.c.h.b16 %v4678
        %v4987 = vunpack.c.l.b16 %v4679
        %v4988 = vunpack.c.l.b16 %v4680
        %v4989 = vunpack.c.h.b16 %v4680
        %v4990 = vunpack.c.l.b16 %v4681
        %v4991 = vunpack.c.l.b16 %v4682
        %v4992 = vunpack.c.h.b16 %v4682
        %v4993 = vunpack.c.l.b16 %v4683
        %v4994 = vunpack.c.l.b16 %v4684
        %v4995 = vunpack.c.h.b16 %v4684
        %v4996 = vunpack.c.l.b16 %v4685
        %v4997 = vpack.c.b16 %v4832, %v4829
        %v4998 = vpack.c.b16 %v4833, %v4830
        %v4999 = vpack.c.b16 %v4834, %v4831
        %v5000 = vpack.c.b16 %v4838, %v4835
        %v5001 = vpack.c.b16 %v4839, %v4836
        %v5002 = vpack.c.b16 %v4840, %v4837
        %v5003 = vpack.c.b16 %v4844, %v4841
        %v5004 = vpack.c.b16 %v4845, %v4842
        %v5005 = vpack.c.b16 %v4846, %v4843
        %v5006 = vpack.c.b16 %v4850, %v4847
        %v5007 = vpack.c.b16 %v4851, %v4848
        %v5008 = vpack.c.b16 %v4852, %v4849
        %v5009 = vpack.c.b16 %v4856, %v4853
        %v5010 = vpack.c.b16 %v4857, %v4854
        %v5011 = vpack.c.b16 %v4858, %v4855
        %v5012 = vpack.c.b16 %v4862, %v4859
        %v5013 = vpack.c.b16 %v4863, %v4860
        %v5014 = vpack.c.b16 %v4864, %v4861
        %v5015 = vpack.c.b16 %v4868, %v4865
        %v5016 = vpack.c.b16 %v4869, %v4866
        %v5017 = vpack.c.b16 %v4870, %v4867
        %v5018 = vpack.c.b16 %v4874, %v4871
        %v5019 = vpack.c.b16 %v4875, %v4872
        %v5020 = vpack.c.b16 %v4876, %v4873
        %v5021 = vpack.c.b16 %v4880, %v4877
        %v5022 = vpack.c.b16 %v4881, %v4878
        %v5023 = vpack.c.b16 %v4882, %v4879
        %v5024 = vpack.c.b16 %v4886, %v4883
        %v5025 = vpack.c.b16 %v4887, %v4884
        %v5026 = vpack.c.b16 %v4888, %v4885
        %v5027 = vpack.c.b16 %v4892, %v4889
        %v5028 = vpack.c.b16 %v4893, %v4890
        %v5029 = vpack.c.b16 %v4894, %v4891
        %v5030 = vpack.c.b16 %v4898, %v4895
        %v5031 = vpack.c.b16 %v4899, %v4896
        %v5032 = vpack.c.b16 %v4900, %v4897
        %v5033 = vpack.c.b16 %v4904, %v4901
        %v5034 = vpack.c.b16 %v4905, %v4902
        %v5035 = vpack.c.b16 %v4906, %v4903
        %v5036 = vpack.c.b16 %v4910, %v4907
        %v5037 = vpack.c.b16 %v4911, %v4908
        %v5038 = vpack.c.b16 %v4912, %v4909
        %v5039 = vpack.c.b16 %v4916, %v4913
        %v5040 = vpack.c.b16 %v4917, %v4914
        %v5041 = vpack.c.b16 %v4918, %v4915
        %v5042 = vpack.c.b16 %v4922, %v4919
        %v5043 = vpack.c.b16 %v4923, %v4920
        %v5044 = vpack.c.b16 %v4924, %v4921
        %v5045 = vpack.c.b16 %v4928, %v4925
        %v5046 = vpack.c.b16 %v4929, %v4926
        %v5047 = vpack.c.b16 %v4930, %v4927
        %v5048 = vpack.c.b16 %v4934, %v4931
        %v5049 = vpack.c.b16 %v4935, %v4932
        %v5050 = vpack.c.b16 %v4936, %v4933
        %v5051 = vpack.c.b16 %v4940, %v4937
        %v5052 = vpack.c.b16 %v4941, %v4938
        %v5053 = vpack.c.b16 %v4942, %v4939
        %v5054 = vpack.c.b16 %v4946, %v4943
        %v5055 = vpack.c.b16 %v4947, %v4944
        %v5056 = vpack.c.b16 %v4948, %v4945
        %v5057 = vpack.c.b16 %v4952, %v4949
        %v5058 = vpack.c.b16 %v4953, %v4950
        %v5059 = vpack.c.b16 %v4954, %v4951
        %v5060 = vpack.c.b16 %v4958, %v4955
        %v5061 = vpack.c.b16 %v4959, %v4956
        %v5062 = vpack.c.b16 %v4960, %v4957
        %v5063 = vpack.c.b16 %v4964, %v4961
        %v5064 = vpack.c.b16 %v4965, %v4962
        %v5065 = vpack.c.b16 %v4966, %v4963
        %v5066 = vpack.c.b16 %v4970, %v4967
        %v5067 = vpack.c.b16 %v4971, %v4968
        %v5068 = vpack.c.b16 %v4972, %v4969
        %v5069 = vpack.c.b16 %v4976, %v4973
        %v5070 = vpack.c.b16 %v4977, %v4974
        %v5071 = vpack.c.b16 %v4978, %v4975
        %v5072 = vpack.c.b16 %v4982, %v4979
        %v5073 = vpack.c.b16 %v4983, %v4980
        %v5074 = vpack.c.b16 %v4984, %v4981
        %v5075 = vpack.c.b16 %v4988, %v4985
        %v5076 = vpack.c.b16 %v4989, %v4986
        %v5077 = vpack.c.b16 %v4990, %v4987
        %v5078 = vpack.c.b16 %v4994, %v4991
        %v5079 = vpack.c.b16 %v4995, %v4992
        %v5080 = vpack.c.b16 %v4996, %v4993
        %v5166 = vsel %vm2262, %v4713, 0
        %5168 = vmatprep.subr.bf16.mxu0 %v4998
        %5169 = vmatpush1.bf16.msra.mxu0 %v4997
        %5170 = vmatprep.subr.bf16.mxu0 %v5001
        %5171 = vmatpush1.bf16.msra.mxu0 %v5000
        %5172 = vmatprep.subr.bf16.mxu0 %v5004
        %5173 = vmatpush1.bf16.msra.mxu0 %v5003
        %5174 = vmatprep.subr.bf16.mxu0 %v5007
        %5175 = vmatpush1.bf16.msra.mxu0 %v5006
        %5176 = vmatprep.subr.bf16.mxu0 %v5010
        %5177 = vmatpush1.bf16.msra.mxu0 %v5009
        %5178 = vmatprep.subr.bf16.mxu0 %v5013
        %5179 = vmatpush1.bf16.msra.mxu0 %v5012
        %5180 = vmatprep.subr.bf16.mxu0 %v5016
        %5181 = vmatpush1.bf16.msra.mxu0 %v5015
        %5182 = vmatprep.subr.bf16.mxu0 %v5019
        %5183 = vmatpush1.bf16.msra.mxu0 %v5018
        %5184 = vmatprep.subr.bf16.mxu0 %v5022
        %5185 = vmatpush1.bf16.msra.mxu0 %v5021
        %5186 = vmatprep.subr.bf16.mxu0 %v5025
        %5187 = vmatpush1.bf16.msra.mxu0 %v5024
        %5188 = vmatprep.subr.bf16.mxu0 %v5028
        %5189 = vmatpush1.bf16.msra.mxu0 %v5027
        %5190 = vmatprep.subr.bf16.mxu0 %v5031
        %5191 = vmatpush1.bf16.msra.mxu0 %v5030
        %5192 = vmatprep.subr.bf16.mxu0 %v5034
        %5193 = vmatpush1.bf16.msra.mxu0 %v5033
        %5194 = vmatprep.subr.bf16.mxu0 %v5037
        %5195 = vmatpush1.bf16.msra.mxu0 %v5036
        %5196 = vmatprep.subr.bf16.mxu0 %v5040
        %5197 = vmatpush1.bf16.msra.mxu0 %v5039
        %5198 = vmatprep.subr.bf16.mxu0 %v5043
        %5199 = vmatpush1.bf16.msra.mxu0 %v5042
        %5200 = vmatprep.mubr.bf16.mxu0 %v4699
        %5201 = vmatmul.mubr.bf16.gmra.mrb[0].mxu0 %v4692
        %v5202 = vpop.f32.mrb[0].mxu0
        %v5203 = vadd.f32 0.0, %v5202
        %v5204 = vpop.f32.mrb[0].mxu0
        %v5205 = vadd.f32 0.0, %v5204
        %v5206 = vpop.f32.mrb[0].mxu0
        %v5207 = vadd.f32 0.0, %v5206
        %v5208 = vpop.f32.mrb[0].mxu0
        %v5209 = vadd.f32 0.0, %v5208
        %5210 = vdwg.mxu0
        %5211 = vmatprep.subr.bf16.mxu0 %v5046
        %5212 = vmatpush1.bf16.msra.mxu0 %v5045
        %5213 = vmatprep.subr.bf16.mxu0 %v5049
        %5214 = vmatpush1.bf16.msra.mxu0 %v5048
        %5215 = vmatprep.subr.bf16.mxu0 %v5052
        %5216 = vmatpush1.bf16.msra.mxu0 %v5051
        %5217 = vmatprep.subr.bf16.mxu0 %v5055
        %5218 = vmatpush1.bf16.msra.mxu0 %v5054
        %5219 = vmatprep.subr.bf16.mxu0 %v5058
        %5220 = vmatpush1.bf16.msra.mxu0 %v5057
        %5221 = vmatprep.subr.bf16.mxu0 %v5061
        %5222 = vmatpush1.bf16.msra.mxu0 %v5060
        %5223 = vmatprep.subr.bf16.mxu0 %v5064
        %5224 = vmatpush1.bf16.msra.mxu0 %v5063
        %5225 = vmatprep.subr.bf16.mxu0 %v5067
        %5226 = vmatpush1.bf16.msra.mxu0 %v5066
        %5227 = vmatprep.subr.bf16.mxu0 %v5070
        %5228 = vmatpush1.bf16.msra.mxu0 %v5069
        %5229 = vmatprep.subr.bf16.mxu0 %v5073
        %5230 = vmatpush1.bf16.msra.mxu0 %v5072
        %5231 = vmatprep.subr.bf16.mxu0 %v5076
        %5232 = vmatpush1.bf16.msra.mxu0 %v5075
        %5233 = vmatprep.subr.bf16.mxu0 %v5079
        %5234 = vmatpush1.bf16.msra.mxu0 %v5078
        %5235 = vmatprep.subr.bf16.mxu0 0
        %5236 = vmatpush1.bf16.msra.mxu0 0
        %5237 = vmatprep.subr.bf16.mxu0 0
        %5238 = vmatpush1.bf16.msra.mxu0 0
        %5239 = vmatprep.subr.bf16.mxu0 0
        %5240 = vmatpush1.bf16.msra.mxu0 0
        %5241 = vmatprep.subr.bf16.mxu0 0
        %5242 = vmatpush1.bf16.msra.mxu0 0
        %5243 = vmatprep.mubr.bf16.mxu0 %v5166
        %5244 = vmatmul.mubr.bf16.gmra.mrb[0].mxu0 %v4706
        %v5245 = vpop.f32.mrb[0].mxu0
        %v5246 = vadd.f32 %v5203, %v5245
        %v5247 = vpop.f32.mrb[0].mxu0
        %v5248 = vadd.f32 %v5205, %v5247
        %v5249 = vpop.f32.mrb[0].mxu0
        %v5250 = vadd.f32 %v5207, %v5249
        %v5251 = vpop.f32.mrb[0].mxu0
        %v5252 = vadd.f32 %v5209, %v5251
        %5253 = vdwg.mxu0
        %5254 = vmatprep.subr.bf16.mxu0 0
        %5255 = vmatpush1.bf16.msra.mxu0 %v4999
        %5256 = vmatprep.subr.bf16.mxu0 0
        %5257 = vmatpush1.bf16.msra.mxu0 %v5002
        %5258 = vmatprep.subr.bf16.mxu0 0
        %5259 = vmatpush1.bf16.msra.mxu0 %v5005
        %5260 = vmatprep.subr.bf16.mxu0 0
        %5261 = vmatpush1.bf16.msra.mxu0 %v5008
        %5262 = vmatprep.subr.bf16.mxu0 0
        %5263 = vmatpush1.bf16.msra.mxu0 %v5011
        %5264 = vmatprep.subr.bf16.mxu0 0
        %5265 = vmatpush1.bf16.msra.mxu0 %v5014
        %5266 = vmatprep.subr.bf16.mxu0 0
        %5267 = vmatpush1.bf16.msra.mxu0 %v5017
        %5268 = vmatprep.subr.bf16.mxu0 0
        %5269 = vmatpush1.bf16.msra.mxu0 %v5020
        %5270 = vmatprep.subr.bf16.mxu0 0
        %5271 = vmatpush1.bf16.msra.mxu0 %v5023
        %5272 = vmatprep.subr.bf16.mxu0 0
        %5273 = vmatpush1.bf16.msra.mxu0 %v5026
        %5274 = vmatprep.subr.bf16.mxu0 0
        %5275 = vmatpush1.bf16.msra.mxu0 %v5029
        %5276 = vmatprep.subr.bf16.mxu0 0
        %5277 = vmatpush1.bf16.msra.mxu0 %v5032
        %5278 = vmatprep.subr.bf16.mxu0 0
        %5279 = vmatpush1.bf16.msra.mxu0 %v5035
        %5280 = vmatprep.subr.bf16.mxu0 0
        %5281 = vmatpush1.bf16.msra.mxu0 %v5038
        %5282 = vmatprep.subr.bf16.mxu0 0
        %5283 = vmatpush1.bf16.msra.mxu0 %v5041
        %5284 = vmatprep.subr.bf16.mxu0 0
        %5285 = vmatpush1.bf16.msra.mxu0 %v5044
        %5286 = vmatprep.mubr.bf16.mxu0 %v4699
        %5287 = vmatmul.mubr.bf16.gmra.mrb[0].mxu0 %v4692
        %v5288 = vpop.f32.mrb[0].mxu0
        %v5289 = vadd.f32 0.0, %v5288
        %v5290 = vpop.f32.mrb[0].mxu0
        %v5291 = vpop.f32.mrb[0].mxu0
        %v5292 = vadd.f32 0.0, %v5291
        %v5293 = vpop.f32.mrb[0].mxu0
        %5294 = vdwg.mxu0
        %5295 = vmatprep.subr.bf16.mxu0 0
        %5296 = vmatpush1.bf16.msra.mxu0 %v5047
        %5297 = vmatprep.subr.bf16.mxu0 0
        %5298 = vmatpush1.bf16.msra.mxu0 %v5050
        %5299 = vmatprep.subr.bf16.mxu0 0
        %5300 = vmatpush1.bf16.msra.mxu0 %v5053
        %5301 = vmatprep.subr.bf16.mxu0 0
        %5302 = vmatpush1.bf16.msra.mxu0 %v5056
        %5303 = vmatprep.subr.bf16.mxu0 0
        %5304 = vmatpush1.bf16.msra.mxu0 %v5059
        %5305 = vmatprep.subr.bf16.mxu0 0
        %5306 = vmatpush1.bf16.msra.mxu0 %v5062
        %5307 = vmatprep.subr.bf16.mxu0 0
        %5308 = vmatpush1.bf16.msra.mxu0 %v5065
        %5309 = vmatprep.subr.bf16.mxu0 0
        %5310 = vmatpush1.bf16.msra.mxu0 %v5068
        %5311 = vmatprep.subr.bf16.mxu0 0
        %5312 = vmatpush1.bf16.msra.mxu0 %v5071
        %5313 = vmatprep.subr.bf16.mxu0 0
        %5314 = vmatpush1.bf16.msra.mxu0 %v5074
        %5315 = vmatprep.subr.bf16.mxu0 0
        %5316 = vmatpush1.bf16.msra.mxu0 %v5077
        %5317 = vmatprep.subr.bf16.mxu0 0
        %5318 = vmatpush1.bf16.msra.mxu0 %v5080
        %5319 = vmatprep.subr.bf16.mxu0 0
        %5320 = vmatpush1.bf16.msra.mxu0 0
        %5321 = vmatprep.subr.bf16.mxu0 0
        %5322 = vmatpush1.bf16.msra.mxu0 0
        %5323 = vmatprep.subr.bf16.mxu0 0
        %5324 = vmatpush1.bf16.msra.mxu0 0
        %5325 = vmatprep.subr.bf16.mxu0 0
        %5326 = vmatpush1.bf16.msra.mxu0 0
        %5327 = vmatprep.mubr.bf16.mxu0 %v5166
        %5328 = vmatmul.mubr.bf16.gmra.mrb[0].mxu0 %v4706
        %v5329 = vpop.f32.mrb[0].mxu0
        %v5330 = vadd.f32 %v5289, %v5329
        %v5331 = vpop.f32.mrb[0].mxu0
        %v5332 = vpop.f32.mrb[0].mxu0
        %v5333 = vadd.f32 %v5292, %v5332
        %v5334 = vpop.f32.mrb[0].mxu0
        %5335 = vdwg.mxu0
        %v5336 = vadd.f32 %v4555, %v5246
        %v5337 = vadd.f32 %v4556, %v5248
        %v5338 = vadd.f32 %v4557, %v5330
        %v5339 = vadd.f32 %v4558, %v5250
        %v5340 = vadd.f32 %v4559, %v5252
        %v5341 = vadd.f32 %v4560, %v5333
        %v5342 = vld [vmem:[#allocation2] sm:$0xfc]
        %v5343 = vld [vmem:[#allocation2 + $0x8] sm:$0xfc]
        %v5344 = vld [vmem:[#allocation2 + $0x10] sm:$0xfc]
        %v5345 = vld [vmem:[#allocation2 + $0x18] sm:$0xfc]
        %v5346 = vld [vmem:[#allocation2 + $0x20] sm:$0x3f]
        %v5347 = vld [vmem:[#allocation2 + $0x28] sm:$0x3f]
        %v5348 = vld [vmem:[#allocation2 + $0x30] sm:$0x3f]
        %v5349 = vld [vmem:[#allocation2 + $0x38] sm:$0x3f]
        %v5350 = vpack.c.bf16 %v5346, %v5342
        %v5351 = vpack.c.bf16 %v5347, %v5343
        %v5352 = vpack.c.bf16 %v5348, %v5344
        %v5353 = vpack.c.bf16 %v5349, %v5345
        %s5354 = scalar_lea.vmem [#allocation9], 2688
        %v5355 = vld [vmem:[%s5354] sm:$0xff]
        %v5356 = vld [vmem:[%s5354 + $0x8] sm:$0xf]
        %v5357 = vld [vmem:[%s5354 + $0xc] sm:$0xff]
        %v5358 = vld [vmem:[%s5354 + $0x14] sm:$0xf]
        %v5359 = vld [vmem:[%s5354 + $0x18] sm:$0xff]
        %v5360 = vld [vmem:[%s5354 + $0x20] sm:$0xf]
        %v5361 = vld [vmem:[%s5354 + $0x24] sm:$0xff]
        %v5362 = vld [vmem:[%s5354 + $0x2c] sm:$0xf]
        %v5363 = vld [vmem:[%s5354 + $0x30] sm:$0xff]
        %v5364 = vld [vmem:[%s5354 + $0x38] sm:$0xf]
        %v5365 = vld [vmem:[%s5354 + $0x3c] sm:$0xff]
        %v5366 = vld [vmem:[%s5354 + $0x44] sm:$0xf]
        %v5367 = vld [vmem:[%s5354 + $0x48] sm:$0xff]
        %v5368 = vld [vmem:[%s5354 + $0x50] sm:$0xf]
        %v5369 = vld [vmem:[%s5354 + $0x54] sm:$0xff]
        %v5370 = vld [vmem:[%s5354 + $0x5c] sm:$0xf]
        %v5371 = vld [vmem:[%s5354 + $0x60] sm:$0xff]
        %v5372 = vld [vmem:[%s5354 + $0x68] sm:$0xf]
        %v5373 = vld [vmem:[%s5354 + $0x6c] sm:$0xff]
        %v5374 = vld [vmem:[%s5354 + $0x74] sm:$0xf]
        %v5375 = vld [vmem:[%s5354 + $0x78] sm:$0xff]
        %v5376 = vld [vmem:[%s5354 + $0x80] sm:$0xf]
        %v5377 = vld [vmem:[%s5354 + $0x84] sm:$0xff]
        %v5378 = vld [vmem:[%s5354 + $0x8c] sm:$0xf]
        %v5379 = vld [vmem:[%s5354 + $0x90] sm:$0xff]
        %v5380 = vld [vmem:[%s5354 + $0x98] sm:$0xf]
        %v5381 = vld [vmem:[%s5354 + $0x9c] sm:$0xff]
        %v5382 = vld [vmem:[%s5354 + $0xa4] sm:$0xf]
        %v5383 = vld [vmem:[%s5354 + $0xa8] sm:$0xff]
        %v5384 = vld [vmem:[%s5354 + $0xb0] sm:$0xf]
        %v5385 = vld [vmem:[%s5354 + $0xb4] sm:$0xff]
        %v5386 = vld [vmem:[%s5354 + $0xbc] sm:$0xf]
        %v5387 = vld [vmem:[%s5354 + $0xc0] sm:$0xff]
        %v5388 = vld [vmem:[%s5354 + $0xc8] sm:$0xf]
        %v5389 = vld [vmem:[%s5354 + $0xcc] sm:$0xff]
        %v5390 = vld [vmem:[%s5354 + $0xd4] sm:$0xf]
        %v5391 = vld [vmem:[%s5354 + $0xd8] sm:$0xff]
        %v5392 = vld [vmem:[%s5354 + $0xe0] sm:$0xf]
        %v5393 = vld [vmem:[%s5354 + $0xe4] sm:$0xff]
        %v5394 = vld [vmem:[%s5354 + $0xec] sm:$0xf]
        %v5395 = vld [vmem:[%s5354 + $0xf0] sm:$0xff]
        %v5396 = vld [vmem:[%s5354 + $0xf8] sm:$0xf]
        %v5397 = vld [vmem:[%s5354 + $0xfc] sm:$0xff]
        %v5398 = vld [vmem:[%s5354 + $0x104] sm:$0xf]
        %v5399 = vld [vmem:[%s5354 + $0x108] sm:$0xff]
        %v5400 = vld [vmem:[%s5354 + $0x110] sm:$0xf]
        %v5401 = vld [vmem:[%s5354 + $0x114] sm:$0xff]
        %v5402 = vld [vmem:[%s5354 + $0x11c] sm:$0xf]
        %v5403 = vld [vmem:[%s5354 + $0x120] sm:$0xff]
        %v5404 = vld [vmem:[%s5354 + $0x128] sm:$0xf]
        %v5405 = vld [vmem:[%s5354 + $0x12c] sm:$0xff]
        %v5406 = vld [vmem:[%s5354 + $0x134] sm:$0xf]
        %v5407 = vld [vmem:[%s5354 + $0x138] sm:$0xff]
        %v5408 = vld [vmem:[%s5354 + $0x140] sm:$0xf]
        %v5409 = vld [vmem:[%s5354 + $0x144] sm:$0xff]
        %v5410 = vld [vmem:[%s5354 + $0x14c] sm:$0xf]
        %v5411 = vld [vmem:[%s5354 + $0x150] sm:$0xff]
        %v5412 = vld [vmem:[%s5354 + $0x158] sm:$0xf]
        %v5413 = vld [vmem:[%s5354 + $0x15c] sm:$0xff]
        %v5414 = vld [vmem:[%s5354 + $0x164] sm:$0xf]
        %v5415 = vld [vmem:[%s5354 + $0x168] sm:$0xff]
        %v5416 = vld [vmem:[%s5354 + $0x170] sm:$0xf]
        %v5417 = vld [vmem:[%s5354 + $0x174] sm:$0xff]
        %v5418 = vld [vmem:[%s5354 + $0x17c] sm:$0xf]
        %v5419 = vld [vmem:[%s5354 + $0x180] sm:$0xff]
        %v5420 = vld [vmem:[%s5354 + $0x188] sm:$0xf]
        %v5421 = vld [vmem:[%s5354 + $0x18c] sm:$0xff]
        %v5422 = vld [vmem:[%s5354 + $0x194] sm:$0xf]
        %v5423 = vld [vmem:[%s5354 + $0x198] sm:$0xff]
        %v5424 = vld [vmem:[%s5354 + $0x1a0] sm:$0xf]
        %v5425 = vld [vmem:[%s5354 + $0x1a4] sm:$0xff]
        %v5426 = vld [vmem:[%s5354 + $0x1ac] sm:$0xf]
        %v5427 = vld [vmem:[%s5354 + $0x1b0] sm:$0xff]
        %v5428 = vld [vmem:[%s5354 + $0x1b8] sm:$0xf]
        %v5429 = vld [vmem:[%s5354 + $0x1bc] sm:$0xff]
        %v5430 = vld [vmem:[%s5354 + $0x1c4] sm:$0xf]
        %v5431 = vld [vmem:[%s5354 + $0x1c8] sm:$0xff]
        %v5432 = vld [vmem:[%s5354 + $0x1d0] sm:$0xf]
        %v5433 = vld [vmem:[%s5354 + $0x1d4] sm:$0xff]
        %v5434 = vld [vmem:[%s5354 + $0x1dc] sm:$0xf]
        %v5435 = vld [vmem:[%s5354 + $0x1e0] sm:$0xff]
        %v5436 = vld [vmem:[%s5354 + $0x1e8] sm:$0xf]
        %v5437 = vld [vmem:[%s5354 + $0x1ec] sm:$0xff]
        %v5438 = vld [vmem:[%s5354 + $0x1f4] sm:$0xf]
        %v5439 = vld [vmem:[%s5354 + $0x1f8] sm:$0xff]
        %v5440 = vld [vmem:[%s5354 + $0x200] sm:$0xf]
        %v5441 = vld [vmem:[%s5354 + $0x204] sm:$0xff]
        %v5442 = vld [vmem:[%s5354 + $0x20c] sm:$0xf]
        %v5443 = vld [vmem:[%s5354 + $0x210] sm:$0xff]
        %v5444 = vld [vmem:[%s5354 + $0x218] sm:$0xf]
        %v5445 = vld [vmem:[%s5354 + $0x21c] sm:$0xff]
        %v5446 = vld [vmem:[%s5354 + $0x224] sm:$0xf]
        %v5447 = vld [vmem:[%s5354 + $0x228] sm:$0xff]
        %v5448 = vld [vmem:[%s5354 + $0x230] sm:$0xf]
        %v5449 = vld [vmem:[%s5354 + $0x234] sm:$0xff]
        %v5450 = vld [vmem:[%s5354 + $0x23c] sm:$0xf]
        %v5451 = vld [vmem:[%s5354 + $0x240] sm:$0xff]
        %v5452 = vld [vmem:[%s5354 + $0x248] sm:$0xf]
        %v5453 = vld [vmem:[%s5354 + $0x24c] sm:$0xff]
        %v5454 = vld [vmem:[%s5354 + $0x254] sm:$0xf]
        %v5455 = vld [vmem:[%s5354 + $0x258] sm:$0xff]
        %v5456 = vld [vmem:[%s5354 + $0x260] sm:$0xf]
        %v5457 = vld [vmem:[%s5354 + $0x264] sm:$0xff]
        %v5458 = vld [vmem:[%s5354 + $0x26c] sm:$0xf]
        %v5459 = vld [vmem:[%s5354 + $0x270] sm:$0xff]
        %v5460 = vld [vmem:[%s5354 + $0x278] sm:$0xf]
        %v5461 = vld [vmem:[%s5354 + $0x27c] sm:$0xff]
        %v5462 = vld [vmem:[%s5354 + $0x284] sm:$0xf]
        %v5463 = vld [vmem:[%s5354 + $0x288] sm:$0xff]
        %v5464 = vld [vmem:[%s5354 + $0x290] sm:$0xf]
        %v5465 = vld [vmem:[%s5354 + $0x294] sm:$0xff]
        %v5466 = vld [vmem:[%s5354 + $0x29c] sm:$0xf]
        %v5471 = vrot.slane %v5350, 1
        %v5472 = vrot.slane %v5351, 1
        %v5473 = vrot.slane %v5352, 1
        %v5474 = vrot.slane %v5353, 1
        %v5590 = vunpack.c.l.b16 %v5355
        %v5591 = vunpack.c.h.b16 %v5355
        %v5592 = vunpack.c.l.b16 %v5356
        %v5593 = vunpack.c.l.b16 %v5357
        %v5594 = vunpack.c.h.b16 %v5357
        %v5595 = vunpack.c.l.b16 %v5358
        %v5596 = vunpack.c.l.b16 %v5359
        %v5597 = vunpack.c.h.b16 %v5359
        %v5598 = vunpack.c.l.b16 %v5360
        %v5599 = vunpack.c.l.b16 %v5361
        %v5600 = vunpack.c.h.b16 %v5361
        %v5601 = vunpack.c.l.b16 %v5362
        %v5602 = vunpack.c.l.b16 %v5363
        %v5603 = vunpack.c.h.b16 %v5363
        %v5604 = vunpack.c.l.b16 %v5364
        %v5605 = vunpack.c.l.b16 %v5365
        %v5606 = vunpack.c.h.b16 %v5365
        %v5607 = vunpack.c.l.b16 %v5366
        %v5608 = vunpack.c.l.b16 %v5367
        %v5609 = vunpack.c.h.b16 %v5367
        %v5610 = vunpack.c.l.b16 %v5368
        %v5611 = vunpack.c.l.b16 %v5369
        %v5612 = vunpack.c.h.b16 %v5369
        %v5613 = vunpack.c.l.b16 %v5370
        %v5614 = vunpack.c.l.b16 %v5371
        %v5615 = vunpack.c.h.b16 %v5371
        %v5616 = vunpack.c.l.b16 %v5372
        %v5617 = vunpack.c.l.b16 %v5373
        %v5618 = vunpack.c.h.b16 %v5373
        %v5619 = vunpack.c.l.b16 %v5374
        %v5620 = vunpack.c.l.b16 %v5375
        %v5621 = vunpack.c.h.b16 %v5375
        %v5622 = vunpack.c.l.b16 %v5376
        %v5623 = vunpack.c.l.b16 %v5377
        %v5624 = vunpack.c.h.b16 %v5377
        %v5625 = vunpack.c.l.b16 %v5378
        %v5626 = vunpack.c.l.b16 %v5379
        %v5627 = vunpack.c.h.b16 %v5379
        %v5628 = vunpack.c.l.b16 %v5380
        %v5629 = vunpack.c.l.b16 %v5381
        %v5630 = vunpack.c.h.b16 %v5381
        %v5631 = vunpack.c.l.b16 %v5382
        %v5632 = vunpack.c.l.b16 %v5383
        %v5633 = vunpack.c.h.b16 %v5383
        %v5634 = vunpack.c.l.b16 %v5384
        %v5635 = vunpack.c.l.b16 %v5385
        %v5636 = vunpack.c.h.b16 %v5385
        %v5637 = vunpack.c.l.b16 %v5386
        %v5638 = vunpack.c.l.b16 %v5387
        %v5639 = vunpack.c.h.b16 %v5387
        %v5640 = vunpack.c.l.b16 %v5388
        %v5641 = vunpack.c.l.b16 %v5389
        %v5642 = vunpack.c.h.b16 %v5389
        %v5643 = vunpack.c.l.b16 %v5390
        %v5644 = vunpack.c.l.b16 %v5391
        %v5645 = vunpack.c.h.b16 %v5391
        %v5646 = vunpack.c.l.b16 %v5392
        %v5647 = vunpack.c.l.b16 %v5393
        %v5648 = vunpack.c.h.b16 %v5393
        %v5649 = vunpack.c.l.b16 %v5394
        %v5650 = vunpack.c.l.b16 %v5395
        %v5651 = vunpack.c.h.b16 %v5395
        %v5652 = vunpack.c.l.b16 %v5396
        %v5653 = vunpack.c.l.b16 %v5397
        %v5654 = vunpack.c.h.b16 %v5397
        %v5655 = vunpack.c.l.b16 %v5398
        %v5656 = vunpack.c.l.b16 %v5399
        %v5657 = vunpack.c.h.b16 %v5399
        %v5658 = vunpack.c.l.b16 %v5400
        %v5659 = vunpack.c.l.b16 %v5401
        %v5660 = vunpack.c.h.b16 %v5401
        %v5661 = vunpack.c.l.b16 %v5402
        %v5662 = vunpack.c.l.b16 %v5403
        %v5663 = vunpack.c.h.b16 %v5403
        %v5664 = vunpack.c.l.b16 %v5404
        %v5665 = vunpack.c.l.b16 %v5405
        %v5666 = vunpack.c.h.b16 %v5405
        %v5667 = vunpack.c.l.b16 %v5406
        %v5668 = vunpack.c.l.b16 %v5407
        %v5669 = vunpack.c.h.b16 %v5407
        %v5670 = vunpack.c.l.b16 %v5408
        %v5671 = vunpack.c.l.b16 %v5409
        %v5672 = vunpack.c.h.b16 %v5409
        %v5673 = vunpack.c.l.b16 %v5410
        %v5674 = vunpack.c.l.b16 %v5411
        %v5675 = vunpack.c.h.b16 %v5411
        %v5676 = vunpack.c.l.b16 %v5412
        %v5677 = vunpack.c.l.b16 %v5413
        %v5678 = vunpack.c.h.b16 %v5413
        %v5679 = vunpack.c.l.b16 %v5414
        %v5680 = vunpack.c.l.b16 %v5415
        %v5681 = vunpack.c.h.b16 %v5415
        %v5682 = vunpack.c.l.b16 %v5416
        %v5683 = vunpack.c.l.b16 %v5417
        %v5684 = vunpack.c.h.b16 %v5417
        %v5685 = vunpack.c.l.b16 %v5418
        %v5686 = vunpack.c.l.b16 %v5419
        %v5687 = vunpack.c.h.b16 %v5419
        %v5688 = vunpack.c.l.b16 %v5420
        %v5689 = vunpack.c.l.b16 %v5421
        %v5690 = vunpack.c.h.b16 %v5421
        %v5691 = vunpack.c.l.b16 %v5422
        %v5692 = vunpack.c.l.b16 %v5423
        %v5693 = vunpack.c.h.b16 %v5423
        %v5694 = vunpack.c.l.b16 %v5424
        %v5695 = vunpack.c.l.b16 %v5425
        %v5696 = vunpack.c.h.b16 %v5425
        %v5697 = vunpack.c.l.b16 %v5426
        %v5698 = vunpack.c.l.b16 %v5427
        %v5699 = vunpack.c.h.b16 %v5427
        %v5700 = vunpack.c.l.b16 %v5428
        %v5701 = vunpack.c.l.b16 %v5429
        %v5702 = vunpack.c.h.b16 %v5429
        %v5703 = vunpack.c.l.b16 %v5430
        %v5704 = vunpack.c.l.b16 %v5431
        %v5705 = vunpack.c.h.b16 %v5431
        %v5706 = vunpack.c.l.b16 %v5432
        %v5707 = vunpack.c.l.b16 %v5433
        %v5708 = vunpack.c.h.b16 %v5433
        %v5709 = vunpack.c.l.b16 %v5434
        %v5710 = vunpack.c.l.b16 %v5435
        %v5711 = vunpack.c.h.b16 %v5435
        %v5712 = vunpack.c.l.b16 %v5436
        %v5713 = vunpack.c.l.b16 %v5437
        %v5714 = vunpack.c.h.b16 %v5437
        %v5715 = vunpack.c.l.b16 %v5438
        %v5716 = vunpack.c.l.b16 %v5439
        %v5717 = vunpack.c.h.b16 %v5439
        %v5718 = vunpack.c.l.b16 %v5440
        %v5719 = vunpack.c.l.b16 %v5441
        %v5720 = vunpack.c.h.b16 %v5441
        %v5721 = vunpack.c.l.b16 %v5442
        %v5722 = vunpack.c.l.b16 %v5443
        %v5723 = vunpack.c.h.b16 %v5443
        %v5724 = vunpack.c.l.b16 %v5444
        %v5725 = vunpack.c.l.b16 %v5445
        %v5726 = vunpack.c.h.b16 %v5445
        %v5727 = vunpack.c.l.b16 %v5446
        %v5728 = vunpack.c.l.b16 %v5447
        %v5729 = vunpack.c.h.b16 %v5447
        %v5730 = vunpack.c.l.b16 %v5448
        %v5731 = vunpack.c.l.b16 %v5449
        %v5732 = vunpack.c.h.b16 %v5449
        %v5733 = vunpack.c.l.b16 %v5450
        %v5734 = vunpack.c.l.b16 %v5451
        %v5735 = vunpack.c.h.b16 %v5451
        %v5736 = vunpack.c.l.b16 %v5452
        %v5737 = vunpack.c.l.b16 %v5453
        %v5738 = vunpack.c.h.b16 %v5453
        %v5739 = vunpack.c.l.b16 %v5454
        %v5740 = vunpack.c.l.b16 %v5455
        %v5741 = vunpack.c.h.b16 %v5455
        %v5742 = vunpack.c.l.b16 %v5456
        %v5743 = vunpack.c.l.b16 %v5457
        %v5744 = vunpack.c.h.b16 %v5457
        %v5745 = vunpack.c.l.b16 %v5458
        %v5746 = vunpack.c.l.b16 %v5459
        %v5747 = vunpack.c.h.b16 %v5459
        %v5748 = vunpack.c.l.b16 %v5460
        %v5749 = vunpack.c.l.b16 %v5461
        %v5750 = vunpack.c.h.b16 %v5461
        %v5751 = vunpack.c.l.b16 %v5462
        %v5752 = vunpack.c.l.b16 %v5463
        %v5753 = vunpack.c.h.b16 %v5463
        %v5754 = vunpack.c.l.b16 %v5464
        %v5755 = vunpack.c.l.b16 %v5465
        %v5756 = vunpack.c.h.b16 %v5465
        %v5757 = vunpack.c.l.b16 %v5466
        %v5758 = vpack.c.b16 %v5593, %v5590
        %v5759 = vpack.c.b16 %v5594, %v5591
        %v5760 = vpack.c.b16 %v5595, %v5592
        %v5761 = vpack.c.b16 %v5599, %v5596
        %v5762 = vpack.c.b16 %v5600, %v5597
        %v5763 = vpack.c.b16 %v5601, %v5598
        %v5764 = vpack.c.b16 %v5605, %v5602
        %v5765 = vpack.c.b16 %v5606, %v5603
        %v5766 = vpack.c.b16 %v5607, %v5604
        %v5767 = vpack.c.b16 %v5611, %v5608
        %v5768 = vpack.c.b16 %v5612, %v5609
        %v5769 = vpack.c.b16 %v5613, %v5610
        %v5770 = vpack.c.b16 %v5617, %v5614
        %v5771 = vpack.c.b16 %v5618, %v5615
        %v5772 = vpack.c.b16 %v5619, %v5616
        %v5773 = vpack.c.b16 %v5623, %v5620
        %v5774 = vpack.c.b16 %v5624, %v5621
        %v5775 = vpack.c.b16 %v5625, %v5622
        %v5776 = vpack.c.b16 %v5629, %v5626
        %v5777 = vpack.c.b16 %v5630, %v5627
        %v5778 = vpack.c.b16 %v5631, %v5628
        %v5779 = vpack.c.b16 %v5635, %v5632
        %v5780 = vpack.c.b16 %v5636, %v5633
        %v5781 = vpack.c.b16 %v5637, %v5634
        %v5782 = vpack.c.b16 %v5641, %v5638
        %v5783 = vpack.c.b16 %v5642, %v5639
        %v5784 = vpack.c.b16 %v5643, %v5640
        %v5785 = vpack.c.b16 %v5647, %v5644
        %v5786 = vpack.c.b16 %v5648, %v5645
        %v5787 = vpack.c.b16 %v5649, %v5646
        %v5788 = vpack.c.b16 %v5653, %v5650
        %v5789 = vpack.c.b16 %v5654, %v5651
        %v5790 = vpack.c.b16 %v5655, %v5652
        %v5791 = vpack.c.b16 %v5659, %v5656
        %v5792 = vpack.c.b16 %v5660, %v5657
        %v5793 = vpack.c.b16 %v5661, %v5658
        %v5794 = vpack.c.b16 %v5665, %v5662
        %v5795 = vpack.c.b16 %v5666, %v5663
        %v5796 = vpack.c.b16 %v5667, %v5664
        %v5797 = vpack.c.b16 %v5671, %v5668
        %v5798 = vpack.c.b16 %v5672, %v5669
        %v5799 = vpack.c.b16 %v5673, %v5670
        %v5800 = vpack.c.b16 %v5677, %v5674
        %v5801 = vpack.c.b16 %v5678, %v5675
        %v5802 = vpack.c.b16 %v5679, %v5676
        %v5803 = vpack.c.b16 %v5683, %v5680
        %v5804 = vpack.c.b16 %v5684, %v5681
        %v5805 = vpack.c.b16 %v5685, %v5682
        %v5806 = vpack.c.b16 %v5689, %v5686
        %v5807 = vpack.c.b16 %v5690, %v5687
        %v5808 = vpack.c.b16 %v5691, %v5688
        %v5809 = vpack.c.b16 %v5695, %v5692
        %v5810 = vpack.c.b16 %v5696, %v5693
        %v5811 = vpack.c.b16 %v5697, %v5694
        %v5812 = vpack.c.b16 %v5701, %v5698
        %v5813 = vpack.c.b16 %v5702, %v5699
        %v5814 = vpack.c.b16 %v5703, %v5700
        %v5815 = vpack.c.b16 %v5707, %v5704
        %v5816 = vpack.c.b16 %v5708, %v5705
        %v5817 = vpack.c.b16 %v5709, %v5706
        %v5818 = vpack.c.b16 %v5713, %v5710
        %v5819 = vpack.c.b16 %v5714, %v5711
        %v5820 = vpack.c.b16 %v5715, %v5712
        %v5821 = vpack.c.b16 %v5719, %v5716
        %v5822 = vpack.c.b16 %v5720, %v5717
        %v5823 = vpack.c.b16 %v5721, %v5718
        %v5824 = vpack.c.b16 %v5725, %v5722
        %v5825 = vpack.c.b16 %v5726, %v5723
        %v5826 = vpack.c.b16 %v5727, %v5724
        %v5827 = vpack.c.b16 %v5731, %v5728
        %v5828 = vpack.c.b16 %v5732, %v5729
        %v5829 = vpack.c.b16 %v5733, %v5730
        %v5830 = vpack.c.b16 %v5737, %v5734
        %v5831 = vpack.c.b16 %v5738, %v5735
        %v5832 = vpack.c.b16 %v5739, %v5736
        %v5833 = vpack.c.b16 %v5743, %v5740
        %v5834 = vpack.c.b16 %v5744, %v5741
        %v5835 = vpack.c.b16 %v5745, %v5742
        %v5836 = vpack.c.b16 %v5749, %v5746
        %v5837 = vpack.c.b16 %v5750, %v5747
        %v5838 = vpack.c.b16 %v5751, %v5748
        %v5839 = vpack.c.b16 %v5755, %v5752
        %v5840 = vpack.c.b16 %v5756, %v5753
        %v5841 = vpack.c.b16 %v5757, %v5754
        %v5927 = vsel %vm2262, %v5474, 0
        %5929 = vmatprep.subr.bf16.mxu0 %v5759
        %5930 = vmatpush1.bf16.msra.mxu0 %v5758
        %5931 = vmatprep.subr.bf16.mxu0 %v5762
        %5932 = vmatpush1.bf16.msra.mxu0 %v5761
        %5933 = vmatprep.subr.bf16.mxu0 %v5765
        %5934 = vmatpush1.bf16.msra.mxu0 %v5764
        %5935 = vmatprep.subr.bf16.mxu0 %v5768
        %5936 = vmatpush1.bf16.msra.mxu0 %v5767
        %5937 = vmatprep.subr.bf16.mxu0 %v5771
        %5938 = vmatpush1.bf16.msra.mxu0 %v5770
        %5939 = vmatprep.subr.bf16.mxu0 %v5774
        %5940 = vmatpush1.bf16.msra.mxu0 %v5773
        %5941 = vmatprep.subr.bf16.mxu0 %v5777
        %5942 = vmatpush1.bf16.msra.mxu0 %v5776
        %5943 = vmatprep.subr.bf16.mxu0 %v5780
        %5944 = vmatpush1.bf16.msra.mxu0 %v5779
        %5945 = vmatprep.subr.bf16.mxu0 %v5783
        %5946 = vmatpush1.bf16.msra.mxu0 %v5782
        %5947 = vmatprep.subr.bf16.mxu0 %v5786
        %5948 = vmatpush1.bf16.msra.mxu0 %v5785
        %5949 = vmatprep.subr.bf16.mxu0 %v5789
        %5950 = vmatpush1.bf16.msra.mxu0 %v5788
        %5951 = vmatprep.subr.bf16.mxu0 %v5792
        %5952 = vmatpush1.bf16.msra.mxu0 %v5791
        %5953 = vmatprep.subr.bf16.mxu0 %v5795
        %5954 = vmatpush1.bf16.msra.mxu0 %v5794
        %5955 = vmatprep.subr.bf16.mxu0 %v5798
        %5956 = vmatpush1.bf16.msra.mxu0 %v5797
        %5957 = vmatprep.subr.bf16.mxu0 %v5801
        %5958 = vmatpush1.bf16.msra.mxu0 %v5800
        %5959 = vmatprep.subr.bf16.mxu0 %v5804
        %5960 = vmatpush1.bf16.msra.mxu0 %v5803
        %5961 = vmatprep.mubr.bf16.mxu0 %v5472
        %5962 = vmatmul.mubr.bf16.gmra.mrb[0].mxu0 %v5471
        %v5963 = vpop.f32.mrb[0].mxu0
        %v5964 = vadd.f32 0.0, %v5963
        %v5965 = vpop.f32.mrb[0].mxu0
        %v5966 = vadd.f32 0.0, %v5965
        %v5967 = vpop.f32.mrb[0].mxu0
        %v5968 = vadd.f32 0.0, %v5967
        %v5969 = vpop.f32.mrb[0].mxu0
        %v5970 = vadd.f32 0.0, %v5969
        %5971 = vdwg.mxu0
        %5972 = vmatprep.subr.bf16.mxu0 %v5807
        %5973 = vmatpush1.bf16.msra.mxu0 %v5806
        %5974 = vmatprep.subr.bf16.mxu0 %v5810
        %5975 = vmatpush1.bf16.msra.mxu0 %v5809
        %5976 = vmatprep.subr.bf16.mxu0 %v5813
        %5977 = vmatpush1.bf16.msra.mxu0 %v5812
        %5978 = vmatprep.subr.bf16.mxu0 %v5816
        %5979 = vmatpush1.bf16.msra.mxu0 %v5815
        %5980 = vmatprep.subr.bf16.mxu0 %v5819
        %5981 = vmatpush1.bf16.msra.mxu0 %v5818
        %5982 = vmatprep.subr.bf16.mxu0 %v5822
        %5983 = vmatpush1.bf16.msra.mxu0 %v5821
        %5984 = vmatprep.subr.bf16.mxu0 %v5825
        %5985 = vmatpush1.bf16.msra.mxu0 %v5824
        %5986 = vmatprep.subr.bf16.mxu0 %v5828
        %5987 = vmatpush1.bf16.msra.mxu0 %v5827
        %5988 = vmatprep.subr.bf16.mxu0 %v5831
        %5989 = vmatpush1.bf16.msra.mxu0 %v5830
        %5990 = vmatprep.subr.bf16.mxu0 %v5834
        %5991 = vmatpush1.bf16.msra.mxu0 %v5833
        %5992 = vmatprep.subr.bf16.mxu0 %v5837
        %5993 = vmatpush1.bf16.msra.mxu0 %v5836
        %5994 = vmatprep.subr.bf16.mxu0 %v5840
        %5995 = vmatpush1.bf16.msra.mxu0 %v5839
        %5996 = vmatprep.subr.bf16.mxu0 0
        %5997 = vmatpush1.bf16.msra.mxu0 0
        %5998 = vmatprep.subr.bf16.mxu0 0
        %5999 = vmatpush1.bf16.msra.mxu0 0
        %6000 = vmatprep.subr.bf16.mxu0 0
        %6001 = vmatpush1.bf16.msra.mxu0 0
        %6002 = vmatprep.subr.bf16.mxu0 0
        %6003 = vmatpush1.bf16.msra.mxu0 0
        %6004 = vmatprep.mubr.bf16.mxu0 %v5927
        %6005 = vmatmul.mubr.bf16.gmra.mrb[0].mxu0 %v5473
        %v6006 = vpop.f32.mrb[0].mxu0
        %v6007 = vadd.f32 %v5964, %v6006
        %v6008 = vpop.f32.mrb[0].mxu0
        %v6009 = vadd.f32 %v5966, %v6008
        %v6010 = vpop.f32.mrb[0].mxu0
        %v6011 = vadd.f32 %v5968, %v6010
        %v6012 = vpop.f32.mrb[0].mxu0
        %v6013 = vadd.f32 %v5970, %v6012
        %6014 = vdwg.mxu0
        %6015 = vmatprep.subr.bf16.mxu0 0
        %6016 = vmatpush1.bf16.msra.mxu0 %v5760
        %6017 = vmatprep.subr.bf16.mxu0 0
        %6018 = vmatpush1.bf16.msra.mxu0 %v5763
        %6019 = vmatprep.subr.bf16.mxu0 0
        %6020 = vmatpush1.bf16.msra.mxu0 %v5766
        %6021 = vmatprep.subr.bf16.mxu0 0
        %6022 = vmatpush1.bf16.msra.mxu0 %v5769
        %6023 = vmatprep.subr.bf16.mxu0 0
        %6024 = vmatpush1.bf16.msra.mxu0 %v5772
        %6025 = vmatprep.subr.bf16.mxu0 0
        %6026 = vmatpush1.bf16.msra.mxu0 %v5775
        %6027 = vmatprep.subr.bf16.mxu0 0
        %6028 = vmatpush1.bf16.msra.mxu0 %v5778
        %6029 = vmatprep.subr.bf16.mxu0 0
        %6030 = vmatpush1.bf16.msra.mxu0 %v5781
        %6031 = vmatprep.subr.bf16.mxu0 0
        %6032 = vmatpush1.bf16.msra.mxu0 %v5784
        %6033 = vmatprep.subr.bf16.mxu0 0
        %6034 = vmatpush1.bf16.msra.mxu0 %v5787
        %6035 = vmatprep.subr.bf16.mxu0 0
        %6036 = vmatpush1.bf16.msra.mxu0 %v5790
        %6037 = vmatprep.subr.bf16.mxu0 0
        %6038 = vmatpush1.bf16.msra.mxu0 %v5793
        %6039 = vmatprep.subr.bf16.mxu0 0
        %6040 = vmatpush1.bf16.msra.mxu0 %v5796
        %6041 = vmatprep.subr.bf16.mxu0 0
        %6042 = vmatpush1.bf16.msra.mxu0 %v5799
        %6043 = vmatprep.subr.bf16.mxu0 0
        %6044 = vmatpush1.bf16.msra.mxu0 %v5802
        %6045 = vmatprep.subr.bf16.mxu0 0
        %6046 = vmatpush1.bf16.msra.mxu0 %v5805
        %6047 = vmatprep.mubr.bf16.mxu0 %v5472
        %6048 = vmatmul.mubr.bf16.gmra.mrb[0].mxu0 %v5471
        %v6049 = vpop.f32.mrb[0].mxu0
        %v6050 = vadd.f32 0.0, %v6049
        %v6051 = vpop.f32.mrb[0].mxu0
        %v6052 = vpop.f32.mrb[0].mxu0
        %v6053 = vadd.f32 0.0, %v6052
        %v6054 = vpop.f32.mrb[0].mxu0
        %6055 = vdwg.mxu0
        %6056 = vmatprep.subr.bf16.mxu0 0
        %6057 = vmatpush1.bf16.msra.mxu0 %v5808
        %6058 = vmatprep.subr.bf16.mxu0 0
        %6059 = vmatpush1.bf16.msra.mxu0 %v5811
        %6060 = vmatprep.subr.bf16.mxu0 0
        %6061 = vmatpush1.bf16.msra.mxu0 %v5814
        %6062 = vmatprep.subr.bf16.mxu0 0
        %6063 = vmatpush1.bf16.msra.mxu0 %v5817
        %6064 = vmatprep.subr.bf16.mxu0 0
        %6065 = vmatpush1.bf16.msra.mxu0 %v5820
        %6066 = vmatprep.subr.bf16.mxu0 0
        %6067 = vmatpush1.bf16.msra.mxu0 %v5823
        %6068 = vmatprep.subr.bf16.mxu0 0
        %6069 = vmatpush1.bf16.msra.mxu0 %v5826
        %6070 = vmatprep.subr.bf16.mxu0 0
        %6071 = vmatpush1.bf16.msra.mxu0 %v5829
        %6072 = vmatprep.subr.bf16.mxu0 0
        %6073 = vmatpush1.bf16.msra.mxu0 %v5832
        %6074 = vmatprep.subr.bf16.mxu0 0
        %6075 = vmatpush1.bf16.msra.mxu0 %v5835
        %6076 = vmatprep.subr.bf16.mxu0 0
        %6077 = vmatpush1.bf16.msra.mxu0 %v5838
        %6078 = vmatprep.subr.bf16.mxu0 0
        %6079 = vmatpush1.bf16.msra.mxu0 %v5841
        %6080 = vmatprep.subr.bf16.mxu0 0
        %6081 = vmatpush1.bf16.msra.mxu0 0
        %6082 = vmatprep.subr.bf16.mxu0 0
        %6083 = vmatpush1.bf16.msra.mxu0 0
        %6084 = vmatprep.subr.bf16.mxu0 0
        %6085 = vmatpush1.bf16.msra.mxu0 0
        %6086 = vmatprep.subr.bf16.mxu0 0
        %6087 = vmatpush1.bf16.msra.mxu0 0
        %6088 = vmatprep.mubr.bf16.mxu0 %v5927
        %6089 = vmatmul.mubr.bf16.gmra.mrb[0].mxu0 %v5473
        %v6090 = vpop.f32.mrb[0].mxu0
        %v6091 = vadd.f32 %v6050, %v6090
        %v6092 = vpop.f32.mrb[0].mxu0
        %v6093 = vpop.f32.mrb[0].mxu0
        %v6094 = vadd.f32 %v6053, %v6093
        %v6095 = vpop.f32.mrb[0].mxu0
        %6096 = vdwg.mxu0
        %v6097 = vadd.f32 %v5336, %v6007
        %v6098 = vadd.f32 %v5337, %v6009
        %v6099 = vadd.f32 %v5338, %v6091
        %v6100 = vadd.f32 %v5339, %v6011
        %v6101 = vadd.f32 %v5340, %v6013
        %v6102 = vadd.f32 %v5341, %v6094
        %v6103 = vld [vmem:[#allocation3] sm:$0xfc]
        %v6104 = vld [vmem:[#allocation3 + $0x8] sm:$0xfc]
        %v6105 = vld [vmem:[#allocation3 + $0x10] sm:$0xfc]
        %v6106 = vld [vmem:[#allocation3 + $0x18] sm:$0xfc]
        %v6107 = vld [vmem:[#allocation3 + $0x20] sm:$0x3f]
        %v6108 = vld [vmem:[#allocation3 + $0x28] sm:$0x3f]
        %v6109 = vld [vmem:[#allocation3 + $0x30] sm:$0x3f]
        %v6110 = vld [vmem:[#allocation3 + $0x38] sm:$0x3f]
        %v6111 = vpack.c.bf16 %v6107, %v6103
        %v6112 = vpack.c.bf16 %v6108, %v6104
        %v6113 = vpack.c.bf16 %v6109, %v6105
        %v6114 = vpack.c.bf16 %v6110, %v6106
        %s6115 = scalar_lea.vmem [#allocation9], 3360
        %v6116 = vld [vmem:[%s6115] sm:$0xff]
        %v6117 = vld [vmem:[%s6115 + $0x8] sm:$0xf]
        %v6118 = vld [vmem:[%s6115 + $0xc] sm:$0xff]
        %v6119 = vld [vmem:[%s6115 + $0x14] sm:$0xf]
        %v6120 = vld [vmem:[%s6115 + $0x18] sm:$0xff]
        %v6121 = vld [vmem:[%s6115 + $0x20] sm:$0xf]
        %v6122 = vld [vmem:[%s6115 + $0x24] sm:$0xff]
        %v6123 = vld [vmem:[%s6115 + $0x2c] sm:$0xf]
        %v6124 = vld [vmem:[%s6115 + $0x30] sm:$0xff]
        %v6125 = vld [vmem:[%s6115 + $0x38] sm:$0xf]
        %v6126 = vld [vmem:[%s6115 + $0x3c] sm:$0xff]
        %v6127 = vld [vmem:[%s6115 + $0x44] sm:$0xf]
        %v6128 = vld [vmem:[%s6115 + $0x48] sm:$0xff]
        %v6129 = vld [vmem:[%s6115 + $0x50] sm:$0xf]
        %v6130 = vld [vmem:[%s6115 + $0x54] sm:$0xff]
        %v6131 = vld [vmem:[%s6115 + $0x5c] sm:$0xf]
        %v6132 = vld [vmem:[%s6115 + $0x60] sm:$0xff]
        %v6133 = vld [vmem:[%s6115 + $0x68] sm:$0xf]
        %v6134 = vld [vmem:[%s6115 + $0x6c] sm:$0xff]
        %v6135 = vld [vmem:[%s6115 + $0x74] sm:$0xf]
        %v6136 = vld [vmem:[%s6115 + $0x78] sm:$0xff]
        %v6137 = vld [vmem:[%s6115 + $0x80] sm:$0xf]
        %v6138 = vld [vmem:[%s6115 + $0x84] sm:$0xff]
        %v6139 = vld [vmem:[%s6115 + $0x8c] sm:$0xf]
        %v6140 = vld [vmem:[%s6115 + $0x90] sm:$0xff]
        %v6141 = vld [vmem:[%s6115 + $0x98] sm:$0xf]
        %v6142 = vld [vmem:[%s6115 + $0x9c] sm:$0xff]
        %v6143 = vld [vmem:[%s6115 + $0xa4] sm:$0xf]
        %v6144 = vld [vmem:[%s6115 + $0xa8] sm:$0xff]
        %v6145 = vld [vmem:[%s6115 + $0xb0] sm:$0xf]
        %v6146 = vld [vmem:[%s6115 + $0xb4] sm:$0xff]
        %v6147 = vld [vmem:[%s6115 + $0xbc] sm:$0xf]
        %v6148 = vld [vmem:[%s6115 + $0xc0] sm:$0xff]
        %v6149 = vld [vmem:[%s6115 + $0xc8] sm:$0xf]
        %v6150 = vld [vmem:[%s6115 + $0xcc] sm:$0xff]
        %v6151 = vld [vmem:[%s6115 + $0xd4] sm:$0xf]
        %v6152 = vld [vmem:[%s6115 + $0xd8] sm:$0xff]
        %v6153 = vld [vmem:[%s6115 + $0xe0] sm:$0xf]
        %v6154 = vld [vmem:[%s6115 + $0xe4] sm:$0xff]
        %v6155 = vld [vmem:[%s6115 + $0xec] sm:$0xf]
        %v6156 = vld [vmem:[%s6115 + $0xf0] sm:$0xff]
        %v6157 = vld [vmem:[%s6115 + $0xf8] sm:$0xf]
        %v6158 = vld [vmem:[%s6115 + $0xfc] sm:$0xff]
        %v6159 = vld [vmem:[%s6115 + $0x104] sm:$0xf]
        %v6160 = vld [vmem:[%s6115 + $0x108] sm:$0xff]
        %v6161 = vld [vmem:[%s6115 + $0x110] sm:$0xf]
        %v6162 = vld [vmem:[%s6115 + $0x114] sm:$0xff]
        %v6163 = vld [vmem:[%s6115 + $0x11c] sm:$0xf]
        %v6164 = vld [vmem:[%s6115 + $0x120] sm:$0xff]
        %v6165 = vld [vmem:[%s6115 + $0x128] sm:$0xf]
        %v6166 = vld [vmem:[%s6115 + $0x12c] sm:$0xff]
        %v6167 = vld [vmem:[%s6115 + $0x134] sm:$0xf]
        %v6168 = vld [vmem:[%s6115 + $0x138] sm:$0xff]
        %v6169 = vld [vmem:[%s6115 + $0x140] sm:$0xf]
        %v6170 = vld [vmem:[%s6115 + $0x144] sm:$0xff]
        %v6171 = vld [vmem:[%s6115 + $0x14c] sm:$0xf]
        %v6172 = vld [vmem:[%s6115 + $0x150] sm:$0xff]
        %v6173 = vld [vmem:[%s6115 + $0x158] sm:$0xf]
        %v6174 = vld [vmem:[%s6115 + $0x15c] sm:$0xff]
        %v6175 = vld [vmem:[%s6115 + $0x164] sm:$0xf]
        %v6176 = vld [vmem:[%s6115 + $0x168] sm:$0xff]
        %v6177 = vld [vmem:[%s6115 + $0x170] sm:$0xf]
        %v6178 = vld [vmem:[%s6115 + $0x174] sm:$0xff]
        %v6179 = vld [vmem:[%s6115 + $0x17c] sm:$0xf]
        %v6180 = vld [vmem:[%s6115 + $0x180] sm:$0xff]
        %v6181 = vld [vmem:[%s6115 + $0x188] sm:$0xf]
        %v6182 = vld [vmem:[%s6115 + $0x18c] sm:$0xff]
        %v6183 = vld [vmem:[%s6115 + $0x194] sm:$0xf]
        %v6184 = vld [vmem:[%s6115 + $0x198] sm:$0xff]
        %v6185 = vld [vmem:[%s6115 + $0x1a0] sm:$0xf]
        %v6186 = vld [vmem:[%s6115 + $0x1a4] sm:$0xff]
        %v6187 = vld [vmem:[%s6115 + $0x1ac] sm:$0xf]
        %v6188 = vld [vmem:[%s6115 + $0x1b0] sm:$0xff]
        %v6189 = vld [vmem:[%s6115 + $0x1b8] sm:$0xf]
        %v6190 = vld [vmem:[%s6115 + $0x1bc] sm:$0xff]
        %v6191 = vld [vmem:[%s6115 + $0x1c4] sm:$0xf]
        %v6192 = vld [vmem:[%s6115 + $0x1c8] sm:$0xff]
        %v6193 = vld [vmem:[%s6115 + $0x1d0] sm:$0xf]
        %v6194 = vld [vmem:[%s6115 + $0x1d4] sm:$0xff]
        %v6195 = vld [vmem:[%s6115 + $0x1dc] sm:$0xf]
        %v6196 = vld [vmem:[%s6115 + $0x1e0] sm:$0xff]
        %v6197 = vld [vmem:[%s6115 + $0x1e8] sm:$0xf]
        %v6198 = vld [vmem:[%s6115 + $0x1ec] sm:$0xff]
        %v6199 = vld [vmem:[%s6115 + $0x1f4] sm:$0xf]
        %v6200 = vld [vmem:[%s6115 + $0x1f8] sm:$0xff]
        %v6201 = vld [vmem:[%s6115 + $0x200] sm:$0xf]
        %v6202 = vld [vmem:[%s6115 + $0x204] sm:$0xff]
        %v6203 = vld [vmem:[%s6115 + $0x20c] sm:$0xf]
        %v6204 = vld [vmem:[%s6115 + $0x210] sm:$0xff]
        %v6205 = vld [vmem:[%s6115 + $0x218] sm:$0xf]
        %v6206 = vld [vmem:[%s6115 + $0x21c] sm:$0xff]
        %v6207 = vld [vmem:[%s6115 + $0x224] sm:$0xf]
        %v6208 = vld [vmem:[%s6115 + $0x228] sm:$0xff]
        %v6209 = vld [vmem:[%s6115 + $0x230] sm:$0xf]
        %v6210 = vld [vmem:[%s6115 + $0x234] sm:$0xff]
        %v6211 = vld [vmem:[%s6115 + $0x23c] sm:$0xf]
        %v6212 = vld [vmem:[%s6115 + $0x240] sm:$0xff]
        %v6213 = vld [vmem:[%s6115 + $0x248] sm:$0xf]
        %v6214 = vld [vmem:[%s6115 + $0x24c] sm:$0xff]
        %v6215 = vld [vmem:[%s6115 + $0x254] sm:$0xf]
        %v6216 = vld [vmem:[%s6115 + $0x258] sm:$0xff]
        %v6217 = vld [vmem:[%s6115 + $0x260] sm:$0xf]
        %v6218 = vld [vmem:[%s6115 + $0x264] sm:$0xff]
        %v6219 = vld [vmem:[%s6115 + $0x26c] sm:$0xf]
        %v6220 = vld [vmem:[%s6115 + $0x270] sm:$0xff]
        %v6221 = vld [vmem:[%s6115 + $0x278] sm:$0xf]
        %v6222 = vld [vmem:[%s6115 + $0x27c] sm:$0xff]
        %v6223 = vld [vmem:[%s6115 + $0x284] sm:$0xf]
        %v6224 = vld [vmem:[%s6115 + $0x288] sm:$0xff]
        %v6225 = vld [vmem:[%s6115 + $0x290] sm:$0xf]
        %v6226 = vld [vmem:[%s6115 + $0x294] sm:$0xff]
        %v6227 = vld [vmem:[%s6115 + $0x29c] sm:$0xf]
        %v6232 = vrot.slane %v6111, 1
        %v6233 = vrot.slane %v6112, 1
        %v6234 = vrot.slane %v6113, 1
        %v6235 = vrot.slane %v6114, 1
        %v6351 = vunpack.c.l.b16 %v6116
        %v6352 = vunpack.c.h.b16 %v6116
        %v6353 = vunpack.c.l.b16 %v6117
        %v6354 = vunpack.c.l.b16 %v6118
        %v6355 = vunpack.c.h.b16 %v6118
        %v6356 = vunpack.c.l.b16 %v6119
        %v6357 = vunpack.c.l.b16 %v6120
        %v6358 = vunpack.c.h.b16 %v6120
        %v6359 = vunpack.c.l.b16 %v6121
        %v6360 = vunpack.c.l.b16 %v6122
        %v6361 = vunpack.c.h.b16 %v6122
        %v6362 = vunpack.c.l.b16 %v6123
        %v6363 = vunpack.c.l.b16 %v6124
        %v6364 = vunpack.c.h.b16 %v6124
        %v6365 = vunpack.c.l.b16 %v6125
        %v6366 = vunpack.c.l.b16 %v6126
        %v6367 = vunpack.c.h.b16 %v6126
        %v6368 = vunpack.c.l.b16 %v6127
        %v6369 = vunpack.c.l.b16 %v6128
        %v6370 = vunpack.c.h.b16 %v6128
        %v6371 = vunpack.c.l.b16 %v6129
        %v6372 = vunpack.c.l.b16 %v6130
        %v6373 = vunpack.c.h.b16 %v6130
        %v6374 = vunpack.c.l.b16 %v6131
        %v6375 = vunpack.c.l.b16 %v6132
        %v6376 = vunpack.c.h.b16 %v6132
        %v6377 = vunpack.c.l.b16 %v6133
        %v6378 = vunpack.c.l.b16 %v6134
        %v6379 = vunpack.c.h.b16 %v6134
        %v6380 = vunpack.c.l.b16 %v6135
        %v6381 = vunpack.c.l.b16 %v6136
        %v6382 = vunpack.c.h.b16 %v6136
        %v6383 = vunpack.c.l.b16 %v6137
        %v6384 = vunpack.c.l.b16 %v6138
        %v6385 = vunpack.c.h.b16 %v6138
        %v6386 = vunpack.c.l.b16 %v6139
        %v6387 = vunpack.c.l.b16 %v6140
        %v6388 = vunpack.c.h.b16 %v6140
        %v6389 = vunpack.c.l.b16 %v6141
        %v6390 = vunpack.c.l.b16 %v6142
        %v6391 = vunpack.c.h.b16 %v6142
        %v6392 = vunpack.c.l.b16 %v6143
        %v6393 = vunpack.c.l.b16 %v6144
        %v6394 = vunpack.c.h.b16 %v6144
        %v6395 = vunpack.c.l.b16 %v6145
        %v6396 = vunpack.c.l.b16 %v6146
        %v6397 = vunpack.c.h.b16 %v6146
        %v6398 = vunpack.c.l.b16 %v6147
        %v6399 = vunpack.c.l.b16 %v6148
        %v6400 = vunpack.c.h.b16 %v6148
        %v6401 = vunpack.c.l.b16 %v6149
        %v6402 = vunpack.c.l.b16 %v6150
        %v6403 = vunpack.c.h.b16 %v6150
        %v6404 = vunpack.c.l.b16 %v6151
        %v6405 = vunpack.c.l.b16 %v6152
        %v6406 = vunpack.c.h.b16 %v6152
        %v6407 = vunpack.c.l.b16 %v6153
        %v6408 = vunpack.c.l.b16 %v6154
        %v6409 = vunpack.c.h.b16 %v6154
        %v6410 = vunpack.c.l.b16 %v6155
        %v6411 = vunpack.c.l.b16 %v6156
        %v6412 = vunpack.c.h.b16 %v6156
        %v6413 = vunpack.c.l.b16 %v6157
        %v6414 = vunpack.c.l.b16 %v6158
        %v6415 = vunpack.c.h.b16 %v6158
        %v6416 = vunpack.c.l.b16 %v6159
        %v6417 = vunpack.c.l.b16 %v6160
        %v6418 = vunpack.c.h.b16 %v6160
        %v6419 = vunpack.c.l.b16 %v6161
        %v6420 = vunpack.c.l.b16 %v6162
        %v6421 = vunpack.c.h.b16 %v6162
        %v6422 = vunpack.c.l.b16 %v6163
        %v6423 = vunpack.c.l.b16 %v6164
        %v6424 = vunpack.c.h.b16 %v6164
        %v6425 = vunpack.c.l.b16 %v6165
        %v6426 = vunpack.c.l.b16 %v6166
        %v6427 = vunpack.c.h.b16 %v6166
        %v6428 = vunpack.c.l.b16 %v6167
        %v6429 = vunpack.c.l.b16 %v6168
        %v6430 = vunpack.c.h.b16 %v6168
        %v6431 = vunpack.c.l.b16 %v6169
        %v6432 = vunpack.c.l.b16 %v6170
        %v6433 = vunpack.c.h.b16 %v6170
        %v6434 = vunpack.c.l.b16 %v6171
        %v6435 = vunpack.c.l.b16 %v6172
        %v6436 = vunpack.c.h.b16 %v6172
        %v6437 = vunpack.c.l.b16 %v6173
        %v6438 = vunpack.c.l.b16 %v6174
        %v6439 = vunpack.c.h.b16 %v6174
        %v6440 = vunpack.c.l.b16 %v6175
        %v6441 = vunpack.c.l.b16 %v6176
        %v6442 = vunpack.c.h.b16 %v6176
        %v6443 = vunpack.c.l.b16 %v6177
        %v6444 = vunpack.c.l.b16 %v6178
        %v6445 = vunpack.c.h.b16 %v6178
        %v6446 = vunpack.c.l.b16 %v6179
        %v6447 = vunpack.c.l.b16 %v6180
        %v6448 = vunpack.c.h.b16 %v6180
        %v6449 = vunpack.c.l.b16 %v6181
        %v6450 = vunpack.c.l.b16 %v6182
        %v6451 = vunpack.c.h.b16 %v6182
        %v6452 = vunpack.c.l.b16 %v6183
        %v6453 = vunpack.c.l.b16 %v6184
        %v6454 = vunpack.c.h.b16 %v6184
        %v6455 = vunpack.c.l.b16 %v6185
        %v6456 = vunpack.c.l.b16 %v6186
        %v6457 = vunpack.c.h.b16 %v6186
        %v6458 = vunpack.c.l.b16 %v6187
        %v6459 = vunpack.c.l.b16 %v6188
        %v6460 = vunpack.c.h.b16 %v6188
        %v6461 = vunpack.c.l.b16 %v6189
        %v6462 = vunpack.c.l.b16 %v6190
        %v6463 = vunpack.c.h.b16 %v6190
        %v6464 = vunpack.c.l.b16 %v6191
        %v6465 = vunpack.c.l.b16 %v6192
        %v6466 = vunpack.c.h.b16 %v6192
        %v6467 = vunpack.c.l.b16 %v6193
        %v6468 = vunpack.c.l.b16 %v6194
        %v6469 = vunpack.c.h.b16 %v6194
        %v6470 = vunpack.c.l.b16 %v6195
        %v6471 = vunpack.c.l.b16 %v6196
        %v6472 = vunpack.c.h.b16 %v6196
        %v6473 = vunpack.c.l.b16 %v6197
        %v6474 = vunpack.c.l.b16 %v6198
        %v6475 = vunpack.c.h.b16 %v6198
        %v6476 = vunpack.c.l.b16 %v6199
        %v6477 = vunpack.c.l.b16 %v6200
        %v6478 = vunpack.c.h.b16 %v6200
        %v6479 = vunpack.c.l.b16 %v6201
        %v6480 = vunpack.c.l.b16 %v6202
        %v6481 = vunpack.c.h.b16 %v6202
        %v6482 = vunpack.c.l.b16 %v6203
        %v6483 = vunpack.c.l.b16 %v6204
        %v6484 = vunpack.c.h.b16 %v6204
        %v6485 = vunpack.c.l.b16 %v6205
        %v6486 = vunpack.c.l.b16 %v6206
        %v6487 = vunpack.c.h.b16 %v6206
        %v6488 = vunpack.c.l.b16 %v6207
        %v6489 = vunpack.c.l.b16 %v6208
        %v6490 = vunpack.c.h.b16 %v6208
        %v6491 = vunpack.c.l.b16 %v6209
        %v6492 = vunpack.c.l.b16 %v6210
        %v6493 = vunpack.c.h.b16 %v6210
        %v6494 = vunpack.c.l.b16 %v6211
        %v6495 = vunpack.c.l.b16 %v6212
        %v6496 = vunpack.c.h.b16 %v6212
        %v6497 = vunpack.c.l.b16 %v6213
        %v6498 = vunpack.c.l.b16 %v6214
        %v6499 = vunpack.c.h.b16 %v6214
        %v6500 = vunpack.c.l.b16 %v6215
        %v6501 = vunpack.c.l.b16 %v6216
        %v6502 = vunpack.c.h.b16 %v6216
        %v6503 = vunpack.c.l.b16 %v6217
        %v6504 = vunpack.c.l.b16 %v6218
        %v6505 = vunpack.c.h.b16 %v6218
        %v6506 = vunpack.c.l.b16 %v6219
        %v6507 = vunpack.c.l.b16 %v6220
        %v6508 = vunpack.c.h.b16 %v6220
        %v6509 = vunpack.c.l.b16 %v6221
        %v6510 = vunpack.c.l.b16 %v6222
        %v6511 = vunpack.c.h.b16 %v6222
        %v6512 = vunpack.c.l.b16 %v6223
        %v6513 = vunpack.c.l.b16 %v6224
        %v6514 = vunpack.c.h.b16 %v6224
        %v6515 = vunpack.c.l.b16 %v6225
        %v6516 = vunpack.c.l.b16 %v6226
        %v6517 = vunpack.c.h.b16 %v6226
        %v6518 = vunpack.c.l.b16 %v6227
        %v6519 = vpack.c.b16 %v6354, %v6351
        %v6520 = vpack.c.b16 %v6355, %v6352
        %v6521 = vpack.c.b16 %v6356, %v6353
        %v6522 = vpack.c.b16 %v6360, %v6357
        %v6523 = vpack.c.b16 %v6361, %v6358
        %v6524 = vpack.c.b16 %v6362, %v6359
        %v6525 = vpack.c.b16 %v6366, %v6363
        %v6526 = vpack.c.b16 %v6367, %v6364
        %v6527 = vpack.c.b16 %v6368, %v6365
        %v6528 = vpack.c.b16 %v6372, %v6369
        %v6529 = vpack.c.b16 %v6373, %v6370
        %v6530 = vpack.c.b16 %v6374, %v6371
        %v6531 = vpack.c.b16 %v6378, %v6375
        %v6532 = vpack.c.b16 %v6379, %v6376
        %v6533 = vpack.c.b16 %v6380, %v6377
        %v6534 = vpack.c.b16 %v6384, %v6381
        %v6535 = vpack.c.b16 %v6385, %v6382
        %v6536 = vpack.c.b16 %v6386, %v6383
        %v6537 = vpack.c.b16 %v6390, %v6387
        %v6538 = vpack.c.b16 %v6391, %v6388
        %v6539 = vpack.c.b16 %v6392, %v6389
        %v6540 = vpack.c.b16 %v6396, %v6393
        %v6541 = vpack.c.b16 %v6397, %v6394
        %v6542 = vpack.c.b16 %v6398, %v6395
        %v6543 = vpack.c.b16 %v6402, %v6399
        %v6544 = vpack.c.b16 %v6403, %v6400
        %v6545 = vpack.c.b16 %v6404, %v6401
        %v6546 = vpack.c.b16 %v6408, %v6405
        %v6547 = vpack.c.b16 %v6409, %v6406
        %v6548 = vpack.c.b16 %v6410, %v6407
        %v6549 = vpack.c.b16 %v6414, %v6411
        %v6550 = vpack.c.b16 %v6415, %v6412
        %v6551 = vpack.c.b16 %v6416, %v6413
        %v6552 = vpack.c.b16 %v6420, %v6417
        %v6553 = vpack.c.b16 %v6421, %v6418
        %v6554 = vpack.c.b16 %v6422, %v6419
        %v6555 = vpack.c.b16 %v6426, %v6423
        %v6556 = vpack.c.b16 %v6427, %v6424
        %v6557 = vpack.c.b16 %v6428, %v6425
        %v6558 = vpack.c.b16 %v6432, %v6429
        %v6559 = vpack.c.b16 %v6433, %v6430
        %v6560 = vpack.c.b16 %v6434, %v6431
        %v6561 = vpack.c.b16 %v6438, %v6435
        %v6562 = vpack.c.b16 %v6439, %v6436
        %v6563 = vpack.c.b16 %v6440, %v6437
        %v6564 = vpack.c.b16 %v6444, %v6441
        %v6565 = vpack.c.b16 %v6445, %v6442
        %v6566 = vpack.c.b16 %v6446, %v6443
        %v6567 = vpack.c.b16 %v6450, %v6447
        %v6568 = vpack.c.b16 %v6451, %v6448
        %v6569 = vpack.c.b16 %v6452, %v6449
        %v6570 = vpack.c.b16 %v6456, %v6453
        %v6571 = vpack.c.b16 %v6457, %v6454
        %v6572 = vpack.c.b16 %v6458, %v6455
        %v6573 = vpack.c.b16 %v6462, %v6459
        %v6574 = vpack.c.b16 %v6463, %v6460
        %v6575 = vpack.c.b16 %v6464, %v6461
        %v6576 = vpack.c.b16 %v6468, %v6465
        %v6577 = vpack.c.b16 %v6469, %v6466
        %v6578 = vpack.c.b16 %v6470, %v6467
        %v6579 = vpack.c.b16 %v6474, %v6471
        %v6580 = vpack.c.b16 %v6475, %v6472
        %v6581 = vpack.c.b16 %v6476, %v6473
        %v6582 = vpack.c.b16 %v6480, %v6477
        %v6583 = vpack.c.b16 %v6481, %v6478
        %v6584 = vpack.c.b16 %v6482, %v6479
        %v6585 = vpack.c.b16 %v6486, %v6483
        %v6586 = vpack.c.b16 %v6487, %v6484
        %v6587 = vpack.c.b16 %v6488, %v6485
        %v6588 = vpack.c.b16 %v6492, %v6489
        %v6589 = vpack.c.b16 %v6493, %v6490
        %v6590 = vpack.c.b16 %v6494, %v6491
        %v6591 = vpack.c.b16 %v6498, %v6495
        %v6592 = vpack.c.b16 %v6499, %v6496
        %v6593 = vpack.c.b16 %v6500, %v6497
        %v6594 = vpack.c.b16 %v6504, %v6501
        %v6595 = vpack.c.b16 %v6505, %v6502
        %v6596 = vpack.c.b16 %v6506, %v6503
        %v6597 = vpack.c.b16 %v6510, %v6507
        %v6598 = vpack.c.b16 %v6511, %v6508
        %v6599 = vpack.c.b16 %v6512, %v6509
        %v6600 = vpack.c.b16 %v6516, %v6513
        %v6601 = vpack.c.b16 %v6517, %v6514
        %v6602 = vpack.c.b16 %v6518, %v6515
        %v6688 = vsel %vm2262, %v6235, 0
        %6690 = vmatprep.subr.bf16.mxu0 %v6520
        %6691 = vmatpush1.bf16.msra.mxu0 %v6519
        %6692 = vmatprep.subr.bf16.mxu0 %v6523
        %6693 = vmatpush1.bf16.msra.mxu0 %v6522
        %6694 = vmatprep.subr.bf16.mxu0 %v6526
        %6695 = vmatpush1.bf16.msra.mxu0 %v6525
        %6696 = vmatprep.subr.bf16.mxu0 %v6529
        %6697 = vmatpush1.bf16.msra.mxu0 %v6528
        %6698 = vmatprep.subr.bf16.mxu0 %v6532
        %6699 = vmatpush1.bf16.msra.mxu0 %v6531
        %6700 = vmatprep.subr.bf16.mxu0 %v6535
        %6701 = vmatpush1.bf16.msra.mxu0 %v6534
        %6702 = vmatprep.subr.bf16.mxu0 %v6538
        %6703 = vmatpush1.bf16.msra.mxu0 %v6537
        %6704 = vmatprep.subr.bf16.mxu0 %v6541
        %6705 = vmatpush1.bf16.msra.mxu0 %v6540
        %6706 = vmatprep.subr.bf16.mxu0 %v6544
        %6707 = vmatpush1.bf16.msra.mxu0 %v6543
        %6708 = vmatprep.subr.bf16.mxu0 %v6547
        %6709 = vmatpush1.bf16.msra.mxu0 %v6546
        %6710 = vmatprep.subr.bf16.mxu0 %v6550
        %6711 = vmatpush1.bf16.msra.mxu0 %v6549
        %6712 = vmatprep.subr.bf16.mxu0 %v6553
        %6713 = vmatpush1.bf16.msra.mxu0 %v6552
        %6714 = vmatprep.subr.bf16.mxu0 %v6556
        %6715 = vmatpush1.bf16.msra.mxu0 %v6555
        %6716 = vmatprep.subr.bf16.mxu0 %v6559
        %6717 = vmatpush1.bf16.msra.mxu0 %v6558
        %6718 = vmatprep.subr.bf16.mxu0 %v6562
        %6719 = vmatpush1.bf16.msra.mxu0 %v6561
        %6720 = vmatprep.subr.bf16.mxu0 %v6565
        %6721 = vmatpush1.bf16.msra.mxu0 %v6564
        %6722 = vmatprep.mubr.bf16.mxu0 %v6233
        %6723 = vmatmul.mubr.bf16.gmra.mrb[0].mxu0 %v6232
        %v6724 = vpop.f32.mrb[0].mxu0
        %v6725 = vadd.f32 0.0, %v6724
        %v6726 = vpop.f32.mrb[0].mxu0
        %v6727 = vadd.f32 0.0, %v6726
        %v6728 = vpop.f32.mrb[0].mxu0
        %v6729 = vadd.f32 0.0, %v6728
        %v6730 = vpop.f32.mrb[0].mxu0
        %v6731 = vadd.f32 0.0, %v6730
        %6732 = vdwg.mxu0
        %6733 = vmatprep.subr.bf16.mxu0 %v6568
        %6734 = vmatpush1.bf16.msra.mxu0 %v6567
        %6735 = vmatprep.subr.bf16.mxu0 %v6571
        %6736 = vmatpush1.bf16.msra.mxu0 %v6570
        %6737 = vmatprep.subr.bf16.mxu0 %v6574
        %6738 = vmatpush1.bf16.msra.mxu0 %v6573
        %6739 = vmatprep.subr.bf16.mxu0 %v6577
        %6740 = vmatpush1.bf16.msra.mxu0 %v6576
        %6741 = vmatprep.subr.bf16.mxu0 %v6580
        %6742 = vmatpush1.bf16.msra.mxu0 %v6579
        %6743 = vmatprep.subr.bf16.mxu0 %v6583
        %6744 = vmatpush1.bf16.msra.mxu0 %v6582
        %6745 = vmatprep.subr.bf16.mxu0 %v6586
        %6746 = vmatpush1.bf16.msra.mxu0 %v6585
        %6747 = vmatprep.subr.bf16.mxu0 %v6589
        %6748 = vmatpush1.bf16.msra.mxu0 %v6588
        %6749 = vmatprep.subr.bf16.mxu0 %v6592
        %6750 = vmatpush1.bf16.msra.mxu0 %v6591
        %6751 = vmatprep.subr.bf16.mxu0 %v6595
        %6752 = vmatpush1.bf16.msra.mxu0 %v6594
        %6753 = vmatprep.subr.bf16.mxu0 %v6598
        %6754 = vmatpush1.bf16.msra.mxu0 %v6597
        %6755 = vmatprep.subr.bf16.mxu0 %v6601
        %6756 = vmatpush1.bf16.msra.mxu0 %v6600
        %6757 = vmatprep.subr.bf16.mxu0 0
        %6758 = vmatpush1.bf16.msra.mxu0 0
        %6759 = vmatprep.subr.bf16.mxu0 0
        %6760 = vmatpush1.bf16.msra.mxu0 0
        %6761 = vmatprep.subr.bf16.mxu0 0
        %6762 = vmatpush1.bf16.msra.mxu0 0
        %6763 = vmatprep.subr.bf16.mxu0 0
        %6764 = vmatpush1.bf16.msra.mxu0 0
        %6765 = vmatprep.mubr.bf16.mxu0 %v6688
        %6766 = vmatmul.mubr.bf16.gmra.mrb[0].mxu0 %v6234
        %v6767 = vpop.f32.mrb[0].mxu0
        %v6768 = vadd.f32 %v6725, %v6767
        %v6769 = vpop.f32.mrb[0].mxu0
        %v6770 = vadd.f32 %v6727, %v6769
        %v6771 = vpop.f32.mrb[0].mxu0
        %v6772 = vadd.f32 %v6729, %v6771
        %v6773 = vpop.f32.mrb[0].mxu0
        %v6774 = vadd.f32 %v6731, %v6773
        %6775 = vdwg.mxu0
        %6776 = vmatprep.subr.bf16.mxu0 0
        %6777 = vmatpush1.bf16.msra.mxu0 %v6521
        %6778 = vmatprep.subr.bf16.mxu0 0
        %6779 = vmatpush1.bf16.msra.mxu0 %v6524
        %6780 = vmatprep.subr.bf16.mxu0 0
        %6781 = vmatpush1.bf16.msra.mxu0 %v6527
        %6782 = vmatprep.subr.bf16.mxu0 0
        %6783 = vmatpush1.bf16.msra.mxu0 %v6530
        %6784 = vmatprep.subr.bf16.mxu0 0
        %6785 = vmatpush1.bf16.msra.mxu0 %v6533
        %6786 = vmatprep.subr.bf16.mxu0 0
        %6787 = vmatpush1.bf16.msra.mxu0 %v6536
        %6788 = vmatprep.subr.bf16.mxu0 0
        %6789 = vmatpush1.bf16.msra.mxu0 %v6539
        %6790 = vmatprep.subr.bf16.mxu0 0
        %6791 = vmatpush1.bf16.msra.mxu0 %v6542
        %6792 = vmatprep.subr.bf16.mxu0 0
        %6793 = vmatpush1.bf16.msra.mxu0 %v6545
        %6794 = vmatprep.subr.bf16.mxu0 0
        %6795 = vmatpush1.bf16.msra.mxu0 %v6548
        %6796 = vmatprep.subr.bf16.mxu0 0
        %6797 = vmatpush1.bf16.msra.mxu0 %v6551
        %6798 = vmatprep.subr.bf16.mxu0 0
        %6799 = vmatpush1.bf16.msra.mxu0 %v6554
        %6800 = vmatprep.subr.bf16.mxu0 0
        %6801 = vmatpush1.bf16.msra.mxu0 %v6557
        %6802 = vmatprep.subr.bf16.mxu0 0
        %6803 = vmatpush1.bf16.msra.mxu0 %v6560
        %6804 = vmatprep.subr.bf16.mxu0 0
        %6805 = vmatpush1.bf16.msra.mxu0 %v6563
        %6806 = vmatprep.subr.bf16.mxu0 0
        %6807 = vmatpush1.bf16.msra.mxu0 %v6566
        %6808 = vmatprep.mubr.bf16.mxu0 %v6233
        %6809 = vmatmul.mubr.bf16.gmra.mrb[0].mxu0 %v6232
        %v6810 = vpop.f32.mrb[0].mxu0
        %v6811 = vadd.f32 0.0, %v6810
        %v6812 = vpop.f32.mrb[0].mxu0
        %v6813 = vpop.f32.mrb[0].mxu0
        %v6814 = vadd.f32 0.0, %v6813
        %v6815 = vpop.f32.mrb[0].mxu0
        %6816 = vdwg.mxu0
        %6817 = vmatprep.subr.bf16.mxu0 0
        %6818 = vmatpush1.bf16.msra.mxu0 %v6569
        %6819 = vmatprep.subr.bf16.mxu0 0
        %6820 = vmatpush1.bf16.msra.mxu0 %v6572
        %6821 = vmatprep.subr.bf16.mxu0 0
        %6822 = vmatpush1.bf16.msra.mxu0 %v6575
        %6823 = vmatprep.subr.bf16.mxu0 0
        %6824 = vmatpush1.bf16.msra.mxu0 %v6578
        %6825 = vmatprep.subr.bf16.mxu0 0
        %6826 = vmatpush1.bf16.msra.mxu0 %v6581
        %6827 = vmatprep.subr.bf16.mxu0 0
        %6828 = vmatpush1.bf16.msra.mxu0 %v6584
        %6829 = vmatprep.subr.bf16.mxu0 0
        %6830 = vmatpush1.bf16.msra.mxu0 %v6587
        %6831 = vmatprep.subr.bf16.mxu0 0
        %6832 = vmatpush1.bf16.msra.mxu0 %v6590
        %6833 = vmatprep.subr.bf16.mxu0 0
        %6834 = vmatpush1.bf16.msra.mxu0 %v6593
        %6835 = vmatprep.subr.bf16.mxu0 0
        %6836 = vmatpush1.bf16.msra.mxu0 %v6596
        %6837 = vmatprep.subr.bf16.mxu0 0
        %6838 = vmatpush1.bf16.msra.mxu0 %v6599
        %6839 = vmatprep.subr.bf16.mxu0 0
        %6840 = vmatpush1.bf16.msra.mxu0 %v6602
        %6841 = vmatprep.subr.bf16.mxu0 0
        %6842 = vmatpush1.bf16.msra.mxu0 0
        %6843 = vmatprep.subr.bf16.mxu0 0
        %6844 = vmatpush1.bf16.msra.mxu0 0
        %6845 = vmatprep.subr.bf16.mxu0 0
        %6846 = vmatpush1.bf16.msra.mxu0 0
        %6847 = vmatprep.subr.bf16.mxu0 0
        %6848 = vmatpush1.bf16.msra.mxu0 0
        %6849 = vmatprep.mubr.bf16.mxu0 %v6688
        %6850 = vmatmul.mubr.bf16.gmra.mrb[0].mxu0 %v6234
        %v6851 = vpop.f32.mrb[0].mxu0
        %v6852 = vadd.f32 %v6811, %v6851
        %v6853 = vpop.f32.mrb[0].mxu0
        %v6854 = vpop.f32.mrb[0].mxu0
        %v6855 = vadd.f32 %v6814, %v6854
        %v6856 = vpop.f32.mrb[0].mxu0
        %6857 = vdwg.mxu0
        %v6858 = vadd.f32 %v6097, %v6768
        %v6859 = vadd.f32 %v6098, %v6770
        %v6860 = vadd.f32 %v6099, %v6852
        %v6861 = vadd.f32 %v6100, %v6772
        %v6862 = vadd.f32 %v6101, %v6774
        %v6863 = vadd.f32 %v6102, %v6855
        %v6864 = vld [vmem:[#allocation12] sm:$0x7]
        %v6866 = vlaneseq
        %v6867 = vshrl.u32 %v6866, 7
        %v6868 = vsub.s32 0, %v6867
        %v6869 = vrot.slane %v6864, %v6868
        %v6870 = vlaneseq
        %v6871 = vshrl.u32 %v6870, 7
        %v6872 = vsub.s32 1, %v6871
        %v6873 = vrot.slane %v6864, %v6872
        %v6874 = vlaneseq
        %v6875 = vshrl.u32 %v6874, 7
        %v6876 = vsub.s32 2, %v6875
        %v6877 = vrot.slane %v6864, %v6876
        %v6881 = vadd.f32 %v6858, %v6869
        %v6882 = vadd.f32 %v6859, %v6873
        %v6883 = vadd.f32 %v6860, %v6877
        %v6884 = vadd.f32 %v6861, %v6869
        %v6885 = vadd.f32 %v6862, %v6873
        %v6886 = vadd.f32 %v6863, %v6877
        %v6887 = vmax.f32 %v6881, 0.0
        %v6888 = vmax.f32 %v6882, 0.0
        %v6889 = vmax.f32 %v6883, 0.0
        %v6890 = vmax.f32 %v6884, 0.0
        %v6891 = vmax.f32 %v6885, 0.0
        %v6892 = vmax.f32 %v6886, 0.0
        %6893 = vst [vmem:[#allocation4] sm:$0xff] %v6887
        %6894 = vst [vmem:[#allocation4 + $0x8] sm:$0xff] %v6888
        %6895 = vst [vmem:[#allocation4 + $0x10] sm:$0xff] %v6889
        %6896 = vst [vmem:[#allocation4 + $0x18] sm:$0xf] %v6890
        %6897 = vst [vmem:[#allocation4 + $0x20] sm:$0xf] %v6891
        %6898 = vst [vmem:[#allocation4 + $0x28] sm:$0xf] %v6892
        %v6899 = vld [vmem:[#allocation4] sm:$0xff]
        %v6900 = vld [vmem:[#allocation4 + $0x8] sm:$0xff]
        %v6901 = vld [vmem:[#allocation4 + $0x10] sm:$0xff]
        %v6902 = vld [vmem:[#allocation4 + $0x18] sm:$0x3]
        %v6903 = vld [vmem:[#allocation4 + $0x20] sm:$0x3]
        %v6904 = vld [vmem:[#allocation4 + $0x28] sm:$0x3]
        %v6905 = vpack.c.bf16 %v6902, %v6899
        %v6906 = vpack.c.bf16 %v6903, %v6900
        %v6907 = vpack.c.bf16 %v6904, %v6901
        %v6908 = vld [vmem:[%s4] sm:$0xf]
        %v6909 = vld [vmem:[%s4 + $0x4] sm:$0xf]
        %v6910 = vld [vmem:[%s4 + $0x8] sm:$0xf]
        %v6911 = vld [vmem:[%s4 + $0xc] sm:$0xf]
        %v6912 = vld [vmem:[%s4 + $0x10] sm:$0xf]
        %v6913 = vld [vmem:[%s4 + $0x14] sm:$0xf]
        %v6914 = vld [vmem:[%s4 + $0x18] sm:$0xf]
        %v6915 = vld [vmem:[%s4 + $0x1c] sm:$0xf]
        %v6916 = vld [vmem:[%s4 + $0x20] sm:$0xf]
        %v6917 = vld [vmem:[%s4 + $0x24] sm:$0xf]
        %v6918 = vld [vmem:[%s4 + $0x28] sm:$0xf]
        %v6919 = vld [vmem:[%s4 + $0x2c] sm:$0xf]
        %v6920 = vld [vmem:[%s4 + $0x30] sm:$0xf]
        %v6921 = vld [vmem:[%s4 + $0x34] sm:$0xf]
        %v6922 = vld [vmem:[%s4 + $0x38] sm:$0xf]
        %v6923 = vld [vmem:[%s4 + $0x3c] sm:$0xf]
        %v6924 = vld [vmem:[%s4 + $0x40] sm:$0xf]
        %v6925 = vld [vmem:[%s4 + $0x44] sm:$0xf]
        %v6926 = vld [vmem:[%s4 + $0x48] sm:$0xf]
        %v6927 = vld [vmem:[%s4 + $0x4c] sm:$0xf]
        %v6928 = vld [vmem:[%s4 + $0x50] sm:$0xf]
        %v6929 = vld [vmem:[%s4 + $0x54] sm:$0xf]
        %v6930 = vld [vmem:[%s4 + $0x58] sm:$0xf]
        %v6931 = vld [vmem:[%s4 + $0x5c] sm:$0xf]
        %v6932 = vld [vmem:[%s4 + $0x60] sm:$0xf]
        %v6933 = vld [vmem:[%s4 + $0x64] sm:$0xf]
        %v6934 = vld [vmem:[%s4 + $0x68] sm:$0xf]
        %v6935 = vld [vmem:[%s4 + $0x6c] sm:$0xf]
        %v6936 = vld [vmem:[%s4 + $0x70] sm:$0xf]
        %v6937 = vld [vmem:[%s4 + $0x74] sm:$0xf]
        %v6938 = vld [vmem:[%s4 + $0x78] sm:$0xf]
        %v6939 = vld [vmem:[%s4 + $0x7c] sm:$0xf]
        %v6940 = vld [vmem:[%s4 + $0x80] sm:$0xf]
        %v6941 = vld [vmem:[%s4 + $0x84] sm:$0xf]
        %v6942 = vld [vmem:[%s4 + $0x88] sm:$0xf]
        %v6943 = vld [vmem:[%s4 + $0x8c] sm:$0xf]
        %v6944 = vld [vmem:[%s4 + $0x90] sm:$0xf]
        %v6945 = vld [vmem:[%s4 + $0x94] sm:$0xf]
        %v6946 = vld [vmem:[%s4 + $0x98] sm:$0xf]
        %v6947 = vld [vmem:[%s4 + $0x9c] sm:$0xf]
        %v6948 = vld [vmem:[%s4 + $0xa0] sm:$0xf]
        %v6949 = vld [vmem:[%s4 + $0xa4] sm:$0xf]
        %v6950 = vld [vmem:[%s4 + $0xa8] sm:$0xf]
        %v6951 = vld [vmem:[%s4 + $0xac] sm:$0xf]
        %v6952 = vld [vmem:[%s4 + $0xb0] sm:$0xf]
        %v6953 = vld [vmem:[%s4 + $0xb4] sm:$0xf]
        %v6954 = vld [vmem:[%s4 + $0xb8] sm:$0xf]
        %v6955 = vld [vmem:[%s4 + $0xbc] sm:$0xf]
        %v6956 = vld [vmem:[#allocation4] sm:$0xfe]
        %v6957 = vld [vmem:[#allocation4 + $0x8] sm:$0xfe]
        %v6958 = vld [vmem:[#allocation4 + $0x10] sm:$0xfe]
        %v6959 = vld [vmem:[#allocation4 + $0x18] sm:$0x7]
        %v6960 = vld [vmem:[#allocation4 + $0x20] sm:$0x7]
        %v6961 = vld [vmem:[#allocation4 + $0x28] sm:$0x7]
        %v6962 = vpack.c.bf16 %v6959, %v6956
        %v6963 = vpack.c.bf16 %v6960, %v6957
        %v6964 = vpack.c.bf16 %v6961, %v6958
        %s6965 = scalar_lea.vmem %s4, 192
        %v6966 = vld [vmem:[%s6965] sm:$0xf]
        %v6967 = vld [vmem:[%s6965 + $0x4] sm:$0xf]
        %v6968 = vld [vmem:[%s6965 + $0x8] sm:$0xf]
        %v6969 = vld [vmem:[%s6965 + $0xc] sm:$0xf]
        %v6970 = vld [vmem:[%s6965 + $0x10] sm:$0xf]
        %v6971 = vld [vmem:[%s6965 + $0x14] sm:$0xf]
        %v6972 = vld [vmem:[%s6965 + $0x18] sm:$0xf]
        %v6973 = vld [vmem:[%s6965 + $0x1c] sm:$0xf]
        %v6974 = vld [vmem:[%s6965 + $0x20] sm:$0xf]
        %v6975 = vld [vmem:[%s6965 + $0x24] sm:$0xf]
        %v6976 = vld [vmem:[%s6965 + $0x28] sm:$0xf]
        %v6977 = vld [vmem:[%s6965 + $0x2c] sm:$0xf]
        %v6978 = vld [vmem:[%s6965 + $0x30] sm:$0xf]
        %v6979 = vld [vmem:[%s6965 + $0x34] sm:$0xf]
        %v6980 = vld [vmem:[%s6965 + $0x38] sm:$0xf]
        %v6981 = vld [vmem:[%s6965 + $0x3c] sm:$0xf]
        %v6982 = vld [vmem:[%s6965 + $0x40] sm:$0xf]
        %v6983 = vld [vmem:[%s6965 + $0x44] sm:$0xf]
        %v6984 = vld [vmem:[%s6965 + $0x48] sm:$0xf]
        %v6985 = vld [vmem:[%s6965 + $0x4c] sm:$0xf]
        %v6986 = vld [vmem:[%s6965 + $0x50] sm:$0xf]
        %v6987 = vld [vmem:[%s6965 + $0x54] sm:$0xf]
        %v6988 = vld [vmem:[%s6965 + $0x58] sm:$0xf]
        %v6989 = vld [vmem:[%s6965 + $0x5c] sm:$0xf]
        %v6990 = vld [vmem:[%s6965 + $0x60] sm:$0xf]
        %v6991 = vld [vmem:[%s6965 + $0x64] sm:$0xf]
        %v6992 = vld [vmem:[%s6965 + $0x68] sm:$0xf]
        %v6993 = vld [vmem:[%s6965 + $0x6c] sm:$0xf]
        %v6994 = vld [vmem:[%s6965 + $0x70] sm:$0xf]
        %v6995 = vld [vmem:[%s6965 + $0x74] sm:$0xf]
        %v6996 = vld [vmem:[%s6965 + $0x78] sm:$0xf]
        %v6997 = vld [vmem:[%s6965 + $0x7c] sm:$0xf]
        %v6998 = vld [vmem:[%s6965 + $0x80] sm:$0xf]
        %v6999 = vld [vmem:[%s6965 + $0x84] sm:$0xf]
        %v7000 = vld [vmem:[%s6965 + $0x88] sm:$0xf]
        %v7001 = vld [vmem:[%s6965 + $0x8c] sm:$0xf]
        %v7002 = vld [vmem:[%s6965 + $0x90] sm:$0xf]
        %v7003 = vld [vmem:[%s6965 + $0x94] sm:$0xf]
        %v7004 = vld [vmem:[%s6965 + $0x98] sm:$0xf]
        %v7005 = vld [vmem:[%s6965 + $0x9c] sm:$0xf]
        %v7006 = vld [vmem:[%s6965 + $0xa0] sm:$0xf]
        %v7007 = vld [vmem:[%s6965 + $0xa4] sm:$0xf]
        %v7008 = vld [vmem:[%s6965 + $0xa8] sm:$0xf]
        %v7009 = vld [vmem:[%s6965 + $0xac] sm:$0xf]
        %v7010 = vld [vmem:[%s6965 + $0xb0] sm:$0xf]
        %v7011 = vld [vmem:[%s6965 + $0xb4] sm:$0xf]
        %v7012 = vld [vmem:[%s6965 + $0xb8] sm:$0xf]
        %v7013 = vld [vmem:[%s6965 + $0xbc] sm:$0xf]
        %v7015 = vshrl.u32 %v6962, 16
        %v7017 = vshll.u32 %v6962, 16
        %v7019 = vrot.slane %v7017, 1
        %v7020 = vor.u32 %v7015, %v7019
        %v7022 = vshrl.u32 %v6963, 16
        %v7024 = vshll.u32 %v6963, 16
        %v7026 = vrot.slane %v7024, 1
        %v7027 = vor.u32 %v7022, %v7026
        %v7029 = vshrl.u32 %v6964, 16
        %v7031 = vshll.u32 %v6964, 16
        %v7033 = vrot.slane %v7031, 1
        %v7034 = vor.u32 %v7029, %v7033
        %v7086 = vunpack.c.l.b16 %v6966
        %v7087 = vunpack.c.l.b16 %v6967
        %v7088 = vunpack.c.l.b16 %v6968
        %v7089 = vunpack.c.l.b16 %v6969
        %v7090 = vunpack.c.l.b16 %v6970
        %v7091 = vunpack.c.l.b16 %v6971
        %v7092 = vunpack.c.l.b16 %v6972
        %v7093 = vunpack.c.l.b16 %v6973
        %v7094 = vunpack.c.l.b16 %v6974
        %v7095 = vunpack.c.l.b16 %v6975
        %v7096 = vunpack.c.l.b16 %v6976
        %v7097 = vunpack.c.l.b16 %v6977
        %v7098 = vunpack.c.l.b16 %v6978
        %v7099 = vunpack.c.l.b16 %v6979
        %v7100 = vunpack.c.l.b16 %v6980
        %v7101 = vunpack.c.l.b16 %v6981
        %v7102 = vunpack.c.l.b16 %v6982
        %v7103 = vunpack.c.l.b16 %v6983
        %v7104 = vunpack.c.l.b16 %v6984
        %v7105 = vunpack.c.l.b16 %v6985
        %v7106 = vunpack.c.l.b16 %v6986
        %v7107 = vunpack.c.l.b16 %v6987
        %v7108 = vunpack.c.l.b16 %v6988
        %v7109 = vunpack.c.l.b16 %v6989
        %v7110 = vunpack.c.l.b16 %v6990
        %v7111 = vunpack.c.l.b16 %v6991
        %v7112 = vunpack.c.l.b16 %v6992
        %v7113 = vunpack.c.l.b16 %v6993
        %v7114 = vunpack.c.l.b16 %v6994
        %v7115 = vunpack.c.l.b16 %v6995
        %v7116 = vunpack.c.l.b16 %v6996
        %v7117 = vunpack.c.l.b16 %v6997
        %v7118 = vunpack.c.l.b16 %v6998
        %v7119 = vunpack.c.l.b16 %v6999
        %v7120 = vunpack.c.l.b16 %v7000
        %v7121 = vunpack.c.l.b16 %v7001
        %v7122 = vunpack.c.l.b16 %v7002
        %v7123 = vunpack.c.l.b16 %v7003
        %v7124 = vunpack.c.l.b16 %v7004
        %v7125 = vunpack.c.l.b16 %v7005
        %v7126 = vunpack.c.l.b16 %v7006
        %v7127 = vunpack.c.l.b16 %v7007
        %v7128 = vunpack.c.l.b16 %v7008
        %v7129 = vunpack.c.l.b16 %v7009
        %v7130 = vunpack.c.l.b16 %v7010
        %v7131 = vunpack.c.l.b16 %v7011
        %v7132 = vunpack.c.l.b16 %v7012
        %v7133 = vunpack.c.l.b16 %v7013
        %v7134 = vpack.c.b16 %v7087, %v7086
        %v7135 = vpack.c.b16 %v7089, %v7088
        %v7136 = vpack.c.b16 %v7091, %v7090
        %v7137 = vpack.c.b16 %v7093, %v7092
        %v7138 = vpack.c.b16 %v7095, %v7094
        %v7139 = vpack.c.b16 %v7097, %v7096
        %v7140 = vpack.c.b16 %v7099, %v7098
        %v7141 = vpack.c.b16 %v7101, %v7100
        %v7142 = vpack.c.b16 %v7103, %v7102
        %v7143 = vpack.c.b16 %v7105, %v7104
        %v7144 = vpack.c.b16 %v7107, %v7106
        %v7145 = vpack.c.b16 %v7109, %v7108
        %v7146 = vpack.c.b16 %v7111, %v7110
        %v7147 = vpack.c.b16 %v7113, %v7112
        %v7148 = vpack.c.b16 %v7115, %v7114
        %v7149 = vpack.c.b16 %v7117, %v7116
        %v7150 = vpack.c.b16 %v7119, %v7118
        %v7151 = vpack.c.b16 %v7121, %v7120
        %v7152 = vpack.c.b16 %v7123, %v7122
        %v7153 = vpack.c.b16 %v7125, %v7124
        %v7154 = vpack.c.b16 %v7127, %v7126
        %v7155 = vpack.c.b16 %v7129, %v7128
        %v7156 = vpack.c.b16 %v7131, %v7130
        %v7157 = vpack.c.b16 %v7133, %v7132
        %7182 = vmatprep.subr.bf16.mxu0 0
        %7183 = vmatpush1.bf16.msra.mxu0 %v7134
        %7184 = vmatprep.subr.bf16.mxu0 0
        %7185 = vmatpush1.bf16.msra.mxu0 %v7135
        %7186 = vmatprep.subr.bf16.mxu0 0
        %7187 = vmatpush1.bf16.msra.mxu0 %v7136
        %7188 = vmatprep.subr.bf16.mxu0 0
        %7189 = vmatpush1.bf16.msra.mxu0 %v7137
        %7190 = vmatprep.subr.bf16.mxu0 0
        %7191 = vmatpush1.bf16.msra.mxu0 %v7138
        %7192 = vmatprep.subr.bf16.mxu0 0
        %7193 = vmatpush1.bf16.msra.mxu0 %v7139
        %7194 = vmatprep.subr.bf16.mxu0 0
        %7195 = vmatpush1.bf16.msra.mxu0 %v7140
        %7196 = vmatprep.subr.bf16.mxu0 0
        %7197 = vmatpush1.bf16.msra.mxu0 %v7141
        %7198 = vmatprep.subr.bf16.mxu0 0
        %7199 = vmatpush1.bf16.msra.mxu0 %v7142
        %7200 = vmatprep.subr.bf16.mxu0 0
        %7201 = vmatpush1.bf16.msra.mxu0 %v7143
        %7202 = vmatprep.subr.bf16.mxu0 0
        %7203 = vmatpush1.bf16.msra.mxu0 %v7144
        %7204 = vmatprep.subr.bf16.mxu0 0
        %7205 = vmatpush1.bf16.msra.mxu0 %v7145
        %7206 = vmatprep.subr.bf16.mxu0 0
        %7207 = vmatpush1.bf16.msra.mxu0 %v7146
        %7208 = vmatprep.subr.bf16.mxu0 0
        %7209 = vmatpush1.bf16.msra.mxu0 %v7147
        %7210 = vmatprep.subr.bf16.mxu0 0
        %7211 = vmatpush1.bf16.msra.mxu0 %v7148
        %7212 = vmatprep.subr.bf16.mxu0 0
        %7213 = vmatpush1.bf16.msra.mxu0 %v7149
        %7214 = vmatprep.mubr.bf16.mxu0 %v7027
        %7215 = vmatmul.mubr.bf16.gmra.mrb[0].mxu0 %v7020
        %v7216 = vpop.f32.mrb[0].mxu0
        %v7217 = vadd.f32 0.0, %v7216
        %v7218 = vpop.f32.mrb[0].mxu0
        %v7219 = vpop.f32.mrb[0].mxu0
        %v7220 = vadd.f32 0.0, %v7219
        %v7221 = vpop.f32.mrb[0].mxu0
        %7222 = vdwg.mxu0
        %7223 = vmatprep.subr.bf16.mxu0 0
        %7224 = vmatpush1.bf16.msra.mxu0 %v7150
        %7225 = vmatprep.subr.bf16.mxu0 0
        %7226 = vmatpush1.bf16.msra.mxu0 %v7151
        %7227 = vmatprep.subr.bf16.mxu0 0
        %7228 = vmatpush1.bf16.msra.mxu0 %v7152
        %7229 = vmatprep.subr.bf16.mxu0 0
        %7230 = vmatpush1.bf16.msra.mxu0 %v7153
        %7231 = vmatprep.subr.bf16.mxu0 0
        %7232 = vmatpush1.bf16.msra.mxu0 %v7154
        %7233 = vmatprep.subr.bf16.mxu0 0
        %7234 = vmatpush1.bf16.msra.mxu0 %v7155
        %7235 = vmatprep.subr.bf16.mxu0 0
        %7236 = vmatpush1.bf16.msra.mxu0 %v7156
        %7237 = vmatprep.subr.bf16.mxu0 0
        %7238 = vmatpush1.bf16.msra.mxu0 %v7157
        %7239 = vmatprep.subr.bf16.mxu0 0
        %7240 = vmatpush1.bf16.msra.mxu0 0
        %7241 = vmatprep.subr.bf16.mxu0 0
        %7242 = vmatpush1.bf16.msra.mxu0 0
        %7243 = vmatprep.subr.bf16.mxu0 0
        %7244 = vmatpush1.bf16.msra.mxu0 0
        %7245 = vmatprep.subr.bf16.mxu0 0
        %7246 = vmatpush1.bf16.msra.mxu0 0
        %7247 = vmatprep.subr.bf16.mxu0 0
        %7248 = vmatpush1.bf16.msra.mxu0 0
        %7249 = vmatprep.subr.bf16.mxu0 0
        %7250 = vmatpush1.bf16.msra.mxu0 0
        %7251 = vmatprep.subr.bf16.mxu0 0
        %7252 = vmatpush1.bf16.msra.mxu0 0
        %7253 = vmatprep.subr.bf16.mxu0 0
        %7254 = vmatpush1.bf16.msra.mxu0 0
        %7255 = vmatprep.mubr.bf16.mxu0 0
        %7256 = vmatmul.mubr.bf16.gmra.mrb[0].mxu0 %v7034
        %v7257 = vpop.f32.mrb[0].mxu0
        %v7258 = vadd.f32 %v7217, %v7257
        %v7259 = vpop.f32.mrb[0].mxu0
        %v7260 = vpop.f32.mrb[0].mxu0
        %v7261 = vadd.f32 %v7220, %v7260
        %v7262 = vpop.f32.mrb[0].mxu0
        %7263 = vdwg.mxu0
        %v7312 = vunpack.c.l.b16 %v6908
        %v7313 = vunpack.c.l.b16 %v6909
        %v7314 = vunpack.c.l.b16 %v6910
        %v7315 = vunpack.c.l.b16 %v6911
        %v7316 = vunpack.c.l.b16 %v6912
        %v7317 = vunpack.c.l.b16 %v6913
        %v7318 = vunpack.c.l.b16 %v6914
        %v7319 = vunpack.c.l.b16 %v6915
        %v7320 = vunpack.c.l.b16 %v6916
        %v7321 = vunpack.c.l.b16 %v6917
        %v7322 = vunpack.c.l.b16 %v6918
        %v7323 = vunpack.c.l.b16 %v6919
        %v7324 = vunpack.c.l.b16 %v6920
        %v7325 = vunpack.c.l.b16 %v6921
        %v7326 = vunpack.c.l.b16 %v6922
        %v7327 = vunpack.c.l.b16 %v6923
        %v7328 = vunpack.c.l.b16 %v6924
        %v7329 = vunpack.c.l.b16 %v6925
        %v7330 = vunpack.c.l.b16 %v6926
        %v7331 = vunpack.c.l.b16 %v6927
        %v7332 = vunpack.c.l.b16 %v6928
        %v7333 = vunpack.c.l.b16 %v6929
        %v7334 = vunpack.c.l.b16 %v6930
        %v7335 = vunpack.c.l.b16 %v6931
        %v7336 = vunpack.c.l.b16 %v6932
        %v7337 = vunpack.c.l.b16 %v6933
        %v7338 = vunpack.c.l.b16 %v6934
        %v7339 = vunpack.c.l.b16 %v6935
        %v7340 = vunpack.c.l.b16 %v6936
        %v7341 = vunpack.c.l.b16 %v6937
        %v7342 = vunpack.c.l.b16 %v6938
        %v7343 = vunpack.c.l.b16 %v6939
        %v7344 = vunpack.c.l.b16 %v6940
        %v7345 = vunpack.c.l.b16 %v6941
        %v7346 = vunpack.c.l.b16 %v6942
        %v7347 = vunpack.c.l.b16 %v6943
        %v7348 = vunpack.c.l.b16 %v6944
        %v7349 = vunpack.c.l.b16 %v6945
        %v7350 = vunpack.c.l.b16 %v6946
        %v7351 = vunpack.c.l.b16 %v6947
        %v7352 = vunpack.c.l.b16 %v6948
        %v7353 = vunpack.c.l.b16 %v6949
        %v7354 = vunpack.c.l.b16 %v6950
        %v7355 = vunpack.c.l.b16 %v6951
        %v7356 = vunpack.c.l.b16 %v6952
        %v7357 = vunpack.c.l.b16 %v6953
        %v7358 = vunpack.c.l.b16 %v6954
        %v7359 = vunpack.c.l.b16 %v6955
        %v7360 = vpack.c.b16 %v7313, %v7312
        %v7361 = vpack.c.b16 %v7315, %v7314
        %v7362 = vpack.c.b16 %v7317, %v7316
        %v7363 = vpack.c.b16 %v7319, %v7318
        %v7364 = vpack.c.b16 %v7321, %v7320
        %v7365 = vpack.c.b16 %v7323, %v7322
        %v7366 = vpack.c.b16 %v7325, %v7324
        %v7367 = vpack.c.b16 %v7327, %v7326
        %v7368 = vpack.c.b16 %v7329, %v7328
        %v7369 = vpack.c.b16 %v7331, %v7330
        %v7370 = vpack.c.b16 %v7333, %v7332
        %v7371 = vpack.c.b16 %v7335, %v7334
        %v7372 = vpack.c.b16 %v7337, %v7336
        %v7373 = vpack.c.b16 %v7339, %v7338
        %v7374 = vpack.c.b16 %v7341, %v7340
        %v7375 = vpack.c.b16 %v7343, %v7342
        %v7376 = vpack.c.b16 %v7345, %v7344
        %v7377 = vpack.c.b16 %v7347, %v7346
        %v7378 = vpack.c.b16 %v7349, %v7348
        %v7379 = vpack.c.b16 %v7351, %v7350
        %v7380 = vpack.c.b16 %v7353, %v7352
        %v7381 = vpack.c.b16 %v7355, %v7354
        %v7382 = vpack.c.b16 %v7357, %v7356
        %v7383 = vpack.c.b16 %v7359, %v7358
        %7408 = vmatprep.subr.bf16.mxu0 0
        %7409 = vmatpush1.bf16.msra.mxu0 %v7360
        %7410 = vmatprep.subr.bf16.mxu0 0
        %7411 = vmatpush1.bf16.msra.mxu0 %v7361
        %7412 = vmatprep.subr.bf16.mxu0 0
        %7413 = vmatpush1.bf16.msra.mxu0 %v7362
        %7414 = vmatprep.subr.bf16.mxu0 0
        %7415 = vmatpush1.bf16.msra.mxu0 %v7363
        %7416 = vmatprep.subr.bf16.mxu0 0
        %7417 = vmatpush1.bf16.msra.mxu0 %v7364
        %7418 = vmatprep.subr.bf16.mxu0 0
        %7419 = vmatpush1.bf16.msra.mxu0 %v7365
        %7420 = vmatprep.subr.bf16.mxu0 0
        %7421 = vmatpush1.bf16.msra.mxu0 %v7366
        %7422 = vmatprep.subr.bf16.mxu0 0
        %7423 = vmatpush1.bf16.msra.mxu0 %v7367
        %7424 = vmatprep.subr.bf16.mxu0 0
        %7425 = vmatpush1.bf16.msra.mxu0 %v7368
        %7426 = vmatprep.subr.bf16.mxu0 0
        %7427 = vmatpush1.bf16.msra.mxu0 %v7369
        %7428 = vmatprep.subr.bf16.mxu0 0
        %7429 = vmatpush1.bf16.msra.mxu0 %v7370
        %7430 = vmatprep.subr.bf16.mxu0 0
        %7431 = vmatpush1.bf16.msra.mxu0 %v7371
        %7432 = vmatprep.subr.bf16.mxu0 0
        %7433 = vmatpush1.bf16.msra.mxu0 %v7372
        %7434 = vmatprep.subr.bf16.mxu0 0
        %7435 = vmatpush1.bf16.msra.mxu0 %v7373
        %7436 = vmatprep.subr.bf16.mxu0 0
        %7437 = vmatpush1.bf16.msra.mxu0 %v7374
        %7438 = vmatprep.subr.bf16.mxu0 0
        %7439 = vmatpush1.bf16.msra.mxu0 %v7375
        %7440 = vmatprep.mubr.bf16.mxu0 %v6906
        %7441 = vmatmul.mubr.bf16.gmra.mrb[0].mxu0 %v6905
        %v7442 = vpop.f32.mrb[0].mxu0
        %v7443 = vadd.f32 %v7258, %v7442
        %v7444 = vpop.f32.mrb[0].mxu0
        %v7445 = vpop.f32.mrb[0].mxu0
        %v7446 = vadd.f32 %v7261, %v7445
        %v7447 = vpop.f32.mrb[0].mxu0
        %7448 = vdwg.mxu0
        %7449 = vmatprep.subr.bf16.mxu0 0
        %7450 = vmatpush1.bf16.msra.mxu0 %v7376
        %7451 = vmatprep.subr.bf16.mxu0 0
        %7452 = vmatpush1.bf16.msra.mxu0 %v7377
        %7453 = vmatprep.subr.bf16.mxu0 0
        %7454 = vmatpush1.bf16.msra.mxu0 %v7378
        %7455 = vmatprep.subr.bf16.mxu0 0
        %7456 = vmatpush1.bf16.msra.mxu0 %v7379
        %7457 = vmatprep.subr.bf16.mxu0 0
        %7458 = vmatpush1.bf16.msra.mxu0 %v7380
        %7459 = vmatprep.subr.bf16.mxu0 0
        %7460 = vmatpush1.bf16.msra.mxu0 %v7381
        %7461 = vmatprep.subr.bf16.mxu0 0
        %7462 = vmatpush1.bf16.msra.mxu0 %v7382
        %7463 = vmatprep.subr.bf16.mxu0 0
        %7464 = vmatpush1.bf16.msra.mxu0 %v7383
        %7465 = vmatprep.subr.bf16.mxu0 0
        %7466 = vmatpush1.bf16.msra.mxu0 0
        %7467 = vmatprep.subr.bf16.mxu0 0
        %7468 = vmatpush1.bf16.msra.mxu0 0
        %7469 = vmatprep.subr.bf16.mxu0 0
        %7470 = vmatpush1.bf16.msra.mxu0 0
        %7471 = vmatprep.subr.bf16.mxu0 0
        %7472 = vmatpush1.bf16.msra.mxu0 0
        %7473 = vmatprep.subr.bf16.mxu0 0
        %7474 = vmatpush1.bf16.msra.mxu0 0
        %7475 = vmatprep.subr.bf16.mxu0 0
        %7476 = vmatpush1.bf16.msra.mxu0 0
        %7477 = vmatprep.subr.bf16.mxu0 0
        %7478 = vmatpush1.bf16.msra.mxu0 0
        %7479 = vmatprep.subr.bf16.mxu0 0
        %7480 = vmatpush1.bf16.msra.mxu0 0
        %7481 = vmatprep.mubr.bf16.mxu0 0
        %7482 = vmatmul.mubr.bf16.gmra.mrb[0].mxu0 %v6907
        %v7483 = vpop.f32.mrb[0].mxu0
        %v7484 = vadd.f32 %v7443, %v7483
        %v7485 = vpop.f32.mrb[0].mxu0
        %v7486 = vpop.f32.mrb[0].mxu0
        %v7487 = vadd.f32 %v7446, %v7486
        %v7488 = vpop.f32.mrb[0].mxu0
        %7489 = vdwg.mxu0
        %v7490 = vld [vmem:[#allocation4] sm:$0xfc]
        %v7491 = vld [vmem:[#allocation4 + $0x8] sm:$0xfc]
        %v7492 = vld [vmem:[#allocation4 + $0x10] sm:$0xfc]
        %v7493 = vld [vmem:[#allocation4 + $0x18] sm:$0xf]
        %v7494 = vld [vmem:[#allocation4 + $0x20] sm:$0xf]
        %v7495 = vld [vmem:[#allocation4 + $0x28] sm:$0xf]
        %v7496 = vpack.c.bf16 %v7493, %v7490
        %v7497 = vpack.c.bf16 %v7494, %v7491
        %v7498 = vpack.c.bf16 %v7495, %v7492
        %s7499 = scalar_lea.vmem %s4, 384
        %v7500 = vld [vmem:[%s7499] sm:$0xf]
        %v7501 = vld [vmem:[%s7499 + $0x4] sm:$0xf]
        %v7502 = vld [vmem:[%s7499 + $0x8] sm:$0xf]
        %v7503 = vld [vmem:[%s7499 + $0xc] sm:$0xf]
        %v7504 = vld [vmem:[%s7499 + $0x10] sm:$0xf]
        %v7505 = vld [vmem:[%s7499 + $0x14] sm:$0xf]
        %v7506 = vld [vmem:[%s7499 + $0x18] sm:$0xf]
        %v7507 = vld [vmem:[%s7499 + $0x1c] sm:$0xf]
        %v7508 = vld [vmem:[%s7499 + $0x20] sm:$0xf]
        %v7509 = vld [vmem:[%s7499 + $0x24] sm:$0xf]
        %v7510 = vld [vmem:[%s7499 + $0x28] sm:$0xf]
        %v7511 = vld [vmem:[%s7499 + $0x2c] sm:$0xf]
        %v7512 = vld [vmem:[%s7499 + $0x30] sm:$0xf]
        %v7513 = vld [vmem:[%s7499 + $0x34] sm:$0xf]
        %v7514 = vld [vmem:[%s7499 + $0x38] sm:$0xf]
        %v7515 = vld [vmem:[%s7499 + $0x3c] sm:$0xf]
        %v7516 = vld [vmem:[%s7499 + $0x40] sm:$0xf]
        %v7517 = vld [vmem:[%s7499 + $0x44] sm:$0xf]
        %v7518 = vld [vmem:[%s7499 + $0x48] sm:$0xf]
        %v7519 = vld [vmem:[%s7499 + $0x4c] sm:$0xf]
        %v7520 = vld [vmem:[%s7499 + $0x50] sm:$0xf]
        %v7521 = vld [vmem:[%s7499 + $0x54] sm:$0xf]
        %v7522 = vld [vmem:[%s7499 + $0x58] sm:$0xf]
        %v7523 = vld [vmem:[%s7499 + $0x5c] sm:$0xf]
        %v7524 = vld [vmem:[%s7499 + $0x60] sm:$0xf]
        %v7525 = vld [vmem:[%s7499 + $0x64] sm:$0xf]
        %v7526 = vld [vmem:[%s7499 + $0x68] sm:$0xf]
        %v7527 = vld [vmem:[%s7499 + $0x6c] sm:$0xf]
        %v7528 = vld [vmem:[%s7499 + $0x70] sm:$0xf]
        %v7529 = vld [vmem:[%s7499 + $0x74] sm:$0xf]
        %v7530 = vld [vmem:[%s7499 + $0x78] sm:$0xf]
        %v7531 = vld [vmem:[%s7499 + $0x7c] sm:$0xf]
        %v7532 = vld [vmem:[%s7499 + $0x80] sm:$0xf]
        %v7533 = vld [vmem:[%s7499 + $0x84] sm:$0xf]
        %v7534 = vld [vmem:[%s7499 + $0x88] sm:$0xf]
        %v7535 = vld [vmem:[%s7499 + $0x8c] sm:$0xf]
        %v7536 = vld [vmem:[%s7499 + $0x90] sm:$0xf]
        %v7537 = vld [vmem:[%s7499 + $0x94] sm:$0xf]
        %v7538 = vld [vmem:[%s7499 + $0x98] sm:$0xf]
        %v7539 = vld [vmem:[%s7499 + $0x9c] sm:$0xf]
        %v7540 = vld [vmem:[%s7499 + $0xa0] sm:$0xf]
        %v7541 = vld [vmem:[%s7499 + $0xa4] sm:$0xf]
        %v7542 = vld [vmem:[%s7499 + $0xa8] sm:$0xf]
        %v7543 = vld [vmem:[%s7499 + $0xac] sm:$0xf]
        %v7544 = vld [vmem:[%s7499 + $0xb0] sm:$0xf]
        %v7545 = vld [vmem:[%s7499 + $0xb4] sm:$0xf]
        %v7546 = vld [vmem:[%s7499 + $0xb8] sm:$0xf]
        %v7547 = vld [vmem:[%s7499 + $0xbc] sm:$0xf]
        %v7551 = vrot.slane %v7496, 1
        %v7552 = vrot.slane %v7497, 1
        %v7553 = vrot.slane %v7498, 1
        %v7605 = vunpack.c.l.b16 %v7500
        %v7606 = vunpack.c.l.b16 %v7501
        %v7607 = vunpack.c.l.b16 %v7502
        %v7608 = vunpack.c.l.b16 %v7503
        %v7609 = vunpack.c.l.b16 %v7504
        %v7610 = vunpack.c.l.b16 %v7505
        %v7611 = vunpack.c.l.b16 %v7506
        %v7612 = vunpack.c.l.b16 %v7507
        %v7613 = vunpack.c.l.b16 %v7508
        %v7614 = vunpack.c.l.b16 %v7509
        %v7615 = vunpack.c.l.b16 %v7510
        %v7616 = vunpack.c.l.b16 %v7511
        %v7617 = vunpack.c.l.b16 %v7512
        %v7618 = vunpack.c.l.b16 %v7513
        %v7619 = vunpack.c.l.b16 %v7514
        %v7620 = vunpack.c.l.b16 %v7515
        %v7621 = vunpack.c.l.b16 %v7516
        %v7622 = vunpack.c.l.b16 %v7517
        %v7623 = vunpack.c.l.b16 %v7518
        %v7624 = vunpack.c.l.b16 %v7519
        %v7625 = vunpack.c.l.b16 %v7520
        %v7626 = vunpack.c.l.b16 %v7521
        %v7627 = vunpack.c.l.b16 %v7522
        %v7628 = vunpack.c.l.b16 %v7523
        %v7629 = vunpack.c.l.b16 %v7524
        %v7630 = vunpack.c.l.b16 %v7525
        %v7631 = vunpack.c.l.b16 %v7526
        %v7632 = vunpack.c.l.b16 %v7527
        %v7633 = vunpack.c.l.b16 %v7528
        %v7634 = vunpack.c.l.b16 %v7529
        %v7635 = vunpack.c.l.b16 %v7530
        %v7636 = vunpack.c.l.b16 %v7531
        %v7637 = vunpack.c.l.b16 %v7532
        %v7638 = vunpack.c.l.b16 %v7533
        %v7639 = vunpack.c.l.b16 %v7534
        %v7640 = vunpack.c.l.b16 %v7535
        %v7641 = vunpack.c.l.b16 %v7536
        %v7642 = vunpack.c.l.b16 %v7537
        %v7643 = vunpack.c.l.b16 %v7538
        %v7644 = vunpack.c.l.b16 %v7539
        %v7645 = vunpack.c.l.b16 %v7540
        %v7646 = vunpack.c.l.b16 %v7541
        %v7647 = vunpack.c.l.b16 %v7542
        %v7648 = vunpack.c.l.b16 %v7543
        %v7649 = vunpack.c.l.b16 %v7544
        %v7650 = vunpack.c.l.b16 %v7545
        %v7651 = vunpack.c.l.b16 %v7546
        %v7652 = vunpack.c.l.b16 %v7547
        %v7653 = vpack.c.b16 %v7606, %v7605
        %v7654 = vpack.c.b16 %v7608, %v7607
        %v7655 = vpack.c.b16 %v7610, %v7609
        %v7656 = vpack.c.b16 %v7612, %v7611
        %v7657 = vpack.c.b16 %v7614, %v7613
        %v7658 = vpack.c.b16 %v7616, %v7615
        %v7659 = vpack.c.b16 %v7618, %v7617
        %v7660 = vpack.c.b16 %v7620, %v7619
        %v7661 = vpack.c.b16 %v7622, %v7621
        %v7662 = vpack.c.b16 %v7624, %v7623
        %v7663 = vpack.c.b16 %v7626, %v7625
        %v7664 = vpack.c.b16 %v7628, %v7627
        %v7665 = vpack.c.b16 %v7630, %v7629
        %v7666 = vpack.c.b16 %v7632, %v7631
        %v7667 = vpack.c.b16 %v7634, %v7633
        %v7668 = vpack.c.b16 %v7636, %v7635
        %v7669 = vpack.c.b16 %v7638, %v7637
        %v7670 = vpack.c.b16 %v7640, %v7639
        %v7671 = vpack.c.b16 %v7642, %v7641
        %v7672 = vpack.c.b16 %v7644, %v7643
        %v7673 = vpack.c.b16 %v7646, %v7645
        %v7674 = vpack.c.b16 %v7648, %v7647
        %v7675 = vpack.c.b16 %v7650, %v7649
        %v7676 = vpack.c.b16 %v7652, %v7651
        %7701 = vmatprep.subr.bf16.mxu0 0
        %7702 = vmatpush1.bf16.msra.mxu0 %v7653
        %7703 = vmatprep.subr.bf16.mxu0 0
        %7704 = vmatpush1.bf16.msra.mxu0 %v7654
        %7705 = vmatprep.subr.bf16.mxu0 0
        %7706 = vmatpush1.bf16.msra.mxu0 %v7655
        %7707 = vmatprep.subr.bf16.mxu0 0
        %7708 = vmatpush1.bf16.msra.mxu0 %v7656
        %7709 = vmatprep.subr.bf16.mxu0 0
        %7710 = vmatpush1.bf16.msra.mxu0 %v7657
        %7711 = vmatprep.subr.bf16.mxu0 0
        %7712 = vmatpush1.bf16.msra.mxu0 %v7658
        %7713 = vmatprep.subr.bf16.mxu0 0
        %7714 = vmatpush1.bf16.msra.mxu0 %v7659
        %7715 = vmatprep.subr.bf16.mxu0 0
        %7716 = vmatpush1.bf16.msra.mxu0 %v7660
        %7717 = vmatprep.subr.bf16.mxu0 0
        %7718 = vmatpush1.bf16.msra.mxu0 %v7661
        %7719 = vmatprep.subr.bf16.mxu0 0
        %7720 = vmatpush1.bf16.msra.mxu0 %v7662
        %7721 = vmatprep.subr.bf16.mxu0 0
        %7722 = vmatpush1.bf16.msra.mxu0 %v7663
        %7723 = vmatprep.subr.bf16.mxu0 0
        %7724 = vmatpush1.bf16.msra.mxu0 %v7664
        %7725 = vmatprep.subr.bf16.mxu0 0
        %7726 = vmatpush1.bf16.msra.mxu0 %v7665
        %7727 = vmatprep.subr.bf16.mxu0 0
        %7728 = vmatpush1.bf16.msra.mxu0 %v7666
        %7729 = vmatprep.subr.bf16.mxu0 0
        %7730 = vmatpush1.bf16.msra.mxu0 %v7667
        %7731 = vmatprep.subr.bf16.mxu0 0
        %7732 = vmatpush1.bf16.msra.mxu0 %v7668
        %7733 = vmatprep.mubr.bf16.mxu0 %v7552
        %7734 = vmatmul.mubr.bf16.gmra.mrb[0].mxu0 %v7551
        %v7735 = vpop.f32.mrb[0].mxu0
        %v7736 = vadd.f32 0.0, %v7735
        %v7737 = vpop.f32.mrb[0].mxu0
        %v7738 = vpop.f32.mrb[0].mxu0
        %v7739 = vadd.f32 0.0, %v7738
        %v7740 = vpop.f32.mrb[0].mxu0
        %7741 = vdwg.mxu0
        %7742 = vmatprep.subr.bf16.mxu0 0
        %7743 = vmatpush1.bf16.msra.mxu0 %v7669
        %7744 = vmatprep.subr.bf16.mxu0 0
        %7745 = vmatpush1.bf16.msra.mxu0 %v7670
        %7746 = vmatprep.subr.bf16.mxu0 0
        %7747 = vmatpush1.bf16.msra.mxu0 %v7671
        %7748 = vmatprep.subr.bf16.mxu0 0
        %7749 = vmatpush1.bf16.msra.mxu0 %v7672
        %7750 = vmatprep.subr.bf16.mxu0 0
        %7751 = vmatpush1.bf16.msra.mxu0 %v7673
        %7752 = vmatprep.subr.bf16.mxu0 0
        %7753 = vmatpush1.bf16.msra.mxu0 %v7674
        %7754 = vmatprep.subr.bf16.mxu0 0
        %7755 = vmatpush1.bf16.msra.mxu0 %v7675
        %7756 = vmatprep.subr.bf16.mxu0 0
        %7757 = vmatpush1.bf16.msra.mxu0 %v7676
        %7758 = vmatprep.subr.bf16.mxu0 0
        %7759 = vmatpush1.bf16.msra.mxu0 0
        %7760 = vmatprep.subr.bf16.mxu0 0
        %7761 = vmatpush1.bf16.msra.mxu0 0
        %7762 = vmatprep.subr.bf16.mxu0 0
        %7763 = vmatpush1.bf16.msra.mxu0 0
        %7764 = vmatprep.subr.bf16.mxu0 0
        %7765 = vmatpush1.bf16.msra.mxu0 0
        %7766 = vmatprep.subr.bf16.mxu0 0
        %7767 = vmatpush1.bf16.msra.mxu0 0
        %7768 = vmatprep.subr.bf16.mxu0 0
        %7769 = vmatpush1.bf16.msra.mxu0 0
        %7770 = vmatprep.subr.bf16.mxu0 0
        %7771 = vmatpush1.bf16.msra.mxu0 0
        %7772 = vmatprep.subr.bf16.mxu0 0
        %7773 = vmatpush1.bf16.msra.mxu0 0
        %7774 = vmatprep.mubr.bf16.mxu0 0
        %7775 = vmatmul.mubr.bf16.gmra.mrb[0].mxu0 %v7553
        %v7776 = vpop.f32.mrb[0].mxu0
        %v7777 = vadd.f32 %v7736, %v7776
        %v7778 = vpop.f32.mrb[0].mxu0
        %v7779 = vpop.f32.mrb[0].mxu0
        %v7780 = vadd.f32 %v7739, %v7779
        %v7781 = vpop.f32.mrb[0].mxu0
        %7782 = vdwg.mxu0
        %v7783 = vadd.f32 %v7484, %v7777
        %v7784 = vadd.f32 %v7487, %v7780
        %v7785 = vld [vmem:[#allocation14] sm:$0x1]
        %v7787 = vlaneseq
        %v7788 = vshrl.u32 %v7787, 7
        %v7789 = vsub.s32 0, %v7788
        %v7790 = vrot.slane %v7785, %v7789
        %v7792 = vadd.f32 %v7783, %v7790
        %v7793 = vadd.f32 %v7784, %v7790
        %v7794 = vmax.f32 %v7792, 0.0
        %v7795 = vmax.f32 %v7793, 0.0
        %vm7796 = vcmask 654336
        %7797 = vst.msk [vmem:[#allocation5] sm:$0xff] %vm7796, %v7794
        %vm7798 = vcmask 648192
        %7799 = vst.msk [vmem:[#allocation5 + $0x8] sm:$0x3] %vm7798, %v7795
        %v7800 = vld [vmem:[#allocation5] sm:$0x1]
        %v7801 = vpack.c.bf16 %v7800, %v7800
        %v7802 = vld [vmem:[%s5] sm:$0xf]
        %v7803 = vld [vmem:[%s5 + $0x4] sm:$0xf]
        %v7804 = vld [vmem:[%s5 + $0x8] sm:$0xf]
        %v7805 = vld [vmem:[%s5 + $0xc] sm:$0xf]
        %v7806 = vld [vmem:[%s5 + $0x10] sm:$0xf]
        %v7807 = vld [vmem:[%s5 + $0x14] sm:$0xf]
        %v7808 = vld [vmem:[%s5 + $0x18] sm:$0xf]
        %v7809 = vld [vmem:[%s5 + $0x1c] sm:$0xf]
        %v7810 = vld [vmem:[%s5 + $0x20] sm:$0xf]
        %v7811 = vld [vmem:[%s5 + $0x24] sm:$0xf]
        %v7812 = vld [vmem:[#allocation5 + $0x1] sm:$0x1]
        %v7813 = vpack.c.bf16 %v7812, %v7812
        %s7814 = scalar_lea.vmem %s5, 40
        %v7815 = vld [vmem:[%s7814] sm:$0xf]
        %v7816 = vld [vmem:[%s7814 + $0x4] sm:$0xf]
        %v7817 = vld [vmem:[%s7814 + $0x8] sm:$0xf]
        %v7818 = vld [vmem:[%s7814 + $0xc] sm:$0xf]
        %v7819 = vld [vmem:[%s7814 + $0x10] sm:$0xf]
        %v7820 = vld [vmem:[%s7814 + $0x14] sm:$0xf]
        %v7821 = vld [vmem:[%s7814 + $0x18] sm:$0xf]
        %v7822 = vld [vmem:[%s7814 + $0x1c] sm:$0xf]
        %v7823 = vld [vmem:[%s7814 + $0x20] sm:$0xf]
        %v7824 = vld [vmem:[%s7814 + $0x24] sm:$0xf]
        %v7835 = vunpack.c.l.b16 %v7815
        %v7836 = vunpack.c.l.b16 %v7816
        %v7837 = vunpack.c.l.b16 %v7817
        %v7838 = vunpack.c.l.b16 %v7818
        %v7839 = vunpack.c.l.b16 %v7819
        %v7840 = vunpack.c.l.b16 %v7820
        %v7841 = vunpack.c.l.b16 %v7821
        %v7842 = vunpack.c.l.b16 %v7822
        %v7843 = vunpack.c.l.b16 %v7823
        %v7844 = vunpack.c.l.b16 %v7824
        %v7845 = vpack.c.b16 %v7836, %v7835
        %v7846 = vpack.c.b16 %v7838, %v7837
        %v7847 = vpack.c.b16 %v7840, %v7839
        %v7848 = vpack.c.b16 %v7842, %v7841
        %v7849 = vpack.c.b16 %v7844, %v7843
        %v7856 = vsel %vm7796, %v7813, 0
        %7858 = vmatprep.subr.bf16.mxu0 0
        %7859 = vmatpush1.bf16.msra.mxu0 %v7845
        %7860 = vmatprep.subr.bf16.mxu0 0
        %7861 = vmatpush1.bf16.msra.mxu0 %v7846
        %7862 = vmatprep.subr.bf16.mxu0 0
        %7863 = vmatpush1.bf16.msra.mxu0 %v7847
        %7864 = vmatprep.subr.bf16.mxu0 0
        %7865 = vmatpush1.bf16.msra.mxu0 %v7848
        %7866 = vmatprep.subr.bf16.mxu0 0
        %7867 = vmatpush1.bf16.msra.mxu0 %v7849
        %7868 = vmatprep.subr.bf16.mxu0 0
        %7869 = vmatpush1.bf16.msra.mxu0 0
        %7870 = vmatprep.subr.bf16.mxu0 0
        %7871 = vmatpush1.bf16.msra.mxu0 0
        %7872 = vmatprep.subr.bf16.mxu0 0
        %7873 = vmatpush1.bf16.msra.mxu0 0
        %7874 = vmatprep.subr.bf16.mxu0 0
        %7875 = vmatpush1.bf16.msra.mxu0 0
        %7876 = vmatprep.subr.bf16.mxu0 0
        %7877 = vmatpush1.bf16.msra.mxu0 0
        %7878 = vmatprep.subr.bf16.mxu0 0
        %7879 = vmatpush1.bf16.msra.mxu0 0
        %7880 = vmatprep.subr.bf16.mxu0 0
        %7881 = vmatpush1.bf16.msra.mxu0 0
        %7882 = vmatprep.subr.bf16.mxu0 0
        %7883 = vmatpush1.bf16.msra.mxu0 0
        %7884 = vmatprep.subr.bf16.mxu0 0
        %7885 = vmatpush1.bf16.msra.mxu0 0
        %7886 = vmatprep.subr.bf16.mxu0 0
        %7887 = vmatpush1.bf16.msra.mxu0 0
        %7888 = vmatprep.subr.bf16.mxu0 0
        %7889 = vmatpush1.bf16.msra.mxu0 0
        %7890 = vmatprep.mubr.bf16.mxu0 0
        %7891 = vmatmul.mubr.bf16.gmra.mrb[0].mxu0 %v7856
        %v7892 = vpop.f32.mrb[0].mxu0
        %v7893 = vadd.f32 0.0, %v7892
        %v7894 = vpop.f32.mrb[0].mxu0
        %v7895 = vpop.f32.mrb[0].mxu0
        %v7896 = vpop.f32.mrb[0].mxu0
        %7897 = vdwg.mxu0
        %v7908 = vunpack.c.l.b16 %v7802
        %v7909 = vunpack.c.l.b16 %v7803
        %v7910 = vunpack.c.l.b16 %v7804
        %v7911 = vunpack.c.l.b16 %v7805
        %v7912 = vunpack.c.l.b16 %v7806
        %v7913 = vunpack.c.l.b16 %v7807
        %v7914 = vunpack.c.l.b16 %v7808
        %v7915 = vunpack.c.l.b16 %v7809
        %v7916 = vunpack.c.l.b16 %v7810
        %v7917 = vunpack.c.l.b16 %v7811
        %v7918 = vpack.c.b16 %v7909, %v7908
        %v7919 = vpack.c.b16 %v7911, %v7910
        %v7920 = vpack.c.b16 %v7913, %v7912
        %v7921 = vpack.c.b16 %v7915, %v7914
        %v7922 = vpack.c.b16 %v7917, %v7916
        %v7929 = vsel %vm7796, %v7801, 0
        %7931 = vmatprep.subr.bf16.mxu0 0
        %7932 = vmatpush1.bf16.msra.mxu0 %v7918
        %7933 = vmatprep.subr.bf16.mxu0 0
        %7934 = vmatpush1.bf16.msra.mxu0 %v7919
        %7935 = vmatprep.subr.bf16.mxu0 0
        %7936 = vmatpush1.bf16.msra.mxu0 %v7920
        %7937 = vmatprep.subr.bf16.mxu0 0
        %7938 = vmatpush1.bf16.msra.mxu0 %v7921
        %7939 = vmatprep.subr.bf16.mxu0 0
        %7940 = vmatpush1.bf16.msra.mxu0 %v7922
        %7941 = vmatprep.subr.bf16.mxu0 0
        %7942 = vmatpush1.bf16.msra.mxu0 0
        %7943 = vmatprep.subr.bf16.mxu0 0
        %7944 = vmatpush1.bf16.msra.mxu0 0
        %7945 = vmatprep.subr.bf16.mxu0 0
        %7946 = vmatpush1.bf16.msra.mxu0 0
        %7947 = vmatprep.subr.bf16.mxu0 0
        %7948 = vmatpush1.bf16.msra.mxu0 0
        %7949 = vmatprep.subr.bf16.mxu0 0
        %7950 = vmatpush1.bf16.msra.mxu0 0
        %7951 = vmatprep.subr.bf16.mxu0 0
        %7952 = vmatpush1.bf16.msra.mxu0 0
        %7953 = vmatprep.subr.bf16.mxu0 0
        %7954 = vmatpush1.bf16.msra.mxu0 0
        %7955 = vmatprep.subr.bf16.mxu0 0
        %7956 = vmatpush1.bf16.msra.mxu0 0
        %7957 = vmatprep.subr.bf16.mxu0 0
        %7958 = vmatpush1.bf16.msra.mxu0 0
        %7959 = vmatprep.subr.bf16.mxu0 0
        %7960 = vmatpush1.bf16.msra.mxu0 0
        %7961 = vmatprep.subr.bf16.mxu0 0
        %7962 = vmatpush1.bf16.msra.mxu0 0
        %7963 = vmatprep.mubr.bf16.mxu0 0
        %7964 = vmatmul.mubr.bf16.gmra.mrb[0].mxu0 %v7929
        %v7965 = vpop.f32.mrb[0].mxu0
        %v7966 = vadd.f32 %v7893, %v7965
        %v7967 = vpop.f32.mrb[0].mxu0
        %v7968 = vpop.f32.mrb[0].mxu0
        %v7969 = vpop.f32.mrb[0].mxu0
        %7970 = vdwg.mxu0
        %v7971 = vld [vmem:[#allocation5 + $0x2] sm:$0x1]
        %v7972 = vpack.c.bf16 %v7971, %v7971
        %s7973 = scalar_lea.vmem %s5, 80
        %v7974 = vld [vmem:[%s7973] sm:$0xf]
        %v7975 = vld [vmem:[%s7973 + $0x4] sm:$0xf]
        %v7976 = vld [vmem:[%s7973 + $0x8] sm:$0xf]
        %v7977 = vld [vmem:[%s7973 + $0xc] sm:$0xf]
        %v7978 = vld [vmem:[%s7973 + $0x10] sm:$0xf]
        %v7979 = vld [vmem:[%s7973 + $0x14] sm:$0xf]
        %v7980 = vld [vmem:[%s7973 + $0x18] sm:$0xf]
        %v7981 = vld [vmem:[%s7973 + $0x1c] sm:$0xf]
        %v7982 = vld [vmem:[%s7973 + $0x20] sm:$0xf]
        %v7983 = vld [vmem:[%s7973 + $0x24] sm:$0xf]
        %v7994 = vunpack.c.l.b16 %v7974
        %v7995 = vunpack.c.l.b16 %v7975
        %v7996 = vunpack.c.l.b16 %v7976
        %v7997 = vunpack.c.l.b16 %v7977
        %v7998 = vunpack.c.l.b16 %v7978
        %v7999 = vunpack.c.l.b16 %v7979
        %v8000 = vunpack.c.l.b16 %v7980
        %v8001 = vunpack.c.l.b16 %v7981
        %v8002 = vunpack.c.l.b16 %v7982
        %v8003 = vunpack.c.l.b16 %v7983
        %v8004 = vpack.c.b16 %v7995, %v7994
        %v8005 = vpack.c.b16 %v7997, %v7996
        %v8006 = vpack.c.b16 %v7999, %v7998
        %v8007 = vpack.c.b16 %v8001, %v8000
        %v8008 = vpack.c.b16 %v8003, %v8002
        %v8015 = vsel %vm7796, %v7972, 0
        %8017 = vmatprep.subr.bf16.mxu0 0
        %8018 = vmatpush1.bf16.msra.mxu0 %v8004
        %8019 = vmatprep.subr.bf16.mxu0 0
        %8020 = vmatpush1.bf16.msra.mxu0 %v8005
        %8021 = vmatprep.subr.bf16.mxu0 0
        %8022 = vmatpush1.bf16.msra.mxu0 %v8006
        %8023 = vmatprep.subr.bf16.mxu0 0
        %8024 = vmatpush1.bf16.msra.mxu0 %v8007
        %8025 = vmatprep.subr.bf16.mxu0 0
        %8026 = vmatpush1.bf16.msra.mxu0 %v8008
        %8027 = vmatprep.subr.bf16.mxu0 0
        %8028 = vmatpush1.bf16.msra.mxu0 0
        %8029 = vmatprep.subr.bf16.mxu0 0
        %8030 = vmatpush1.bf16.msra.mxu0 0
        %8031 = vmatprep.subr.bf16.mxu0 0
        %8032 = vmatpush1.bf16.msra.mxu0 0
        %8033 = vmatprep.subr.bf16.mxu0 0
        %8034 = vmatpush1.bf16.msra.mxu0 0
        %8035 = vmatprep.subr.bf16.mxu0 0
        %8036 = vmatpush1.bf16.msra.mxu0 0
        %8037 = vmatprep.subr.bf16.mxu0 0
        %8038 = vmatpush1.bf16.msra.mxu0 0
        %8039 = vmatprep.subr.bf16.mxu0 0
        %8040 = vmatpush1.bf16.msra.mxu0 0
        %8041 = vmatprep.subr.bf16.mxu0 0
        %8042 = vmatpush1.bf16.msra.mxu0 0
        %8043 = vmatprep.subr.bf16.mxu0 0
        %8044 = vmatpush1.bf16.msra.mxu0 0
        %8045 = vmatprep.subr.bf16.mxu0 0
        %8046 = vmatpush1.bf16.msra.mxu0 0
        %8047 = vmatprep.subr.bf16.mxu0 0
        %8048 = vmatpush1.bf16.msra.mxu0 0
        %8049 = vmatprep.mubr.bf16.mxu0 0
        %8050 = vmatmul.mubr.bf16.gmra.mrb[0].mxu0 %v8015
        %v8051 = vpop.f32.mrb[0].mxu0
        %v8052 = vadd.f32 0.0, %v8051
        %v8053 = vpop.f32.mrb[0].mxu0
        %v8054 = vpop.f32.mrb[0].mxu0
        %v8055 = vpop.f32.mrb[0].mxu0
        %8056 = vdwg.mxu0
        %v8057 = vadd.f32 %v7966, %v8052
        %v8058 = vld [vmem:[#allocation5 + $0x3] sm:$0x1]
        %v8059 = vpack.c.bf16 %v8058, %v8058
        %s8060 = scalar_lea.vmem %s5, 120
        %v8061 = vld [vmem:[%s8060] sm:$0xf]
        %v8062 = vld [vmem:[%s8060 + $0x4] sm:$0xf]
        %v8063 = vld [vmem:[%s8060 + $0x8] sm:$0xf]
        %v8064 = vld [vmem:[%s8060 + $0xc] sm:$0xf]
        %v8065 = vld [vmem:[%s8060 + $0x10] sm:$0xf]
        %v8066 = vld [vmem:[%s8060 + $0x14] sm:$0xf]
        %v8067 = vld [vmem:[%s8060 + $0x18] sm:$0xf]
        %v8068 = vld [vmem:[%s8060 + $0x1c] sm:$0xf]
        %v8069 = vld [vmem:[%s8060 + $0x20] sm:$0xf]
        %v8070 = vld [vmem:[%s8060 + $0x24] sm:$0xf]
        %v8081 = vunpack.c.l.b16 %v8061
        %v8082 = vunpack.c.l.b16 %v8062
        %v8083 = vunpack.c.l.b16 %v8063
        %v8084 = vunpack.c.l.b16 %v8064
        %v8085 = vunpack.c.l.b16 %v8065
        %v8086 = vunpack.c.l.b16 %v8066
        %v8087 = vunpack.c.l.b16 %v8067
        %v8088 = vunpack.c.l.b16 %v8068
        %v8089 = vunpack.c.l.b16 %v8069
        %v8090 = vunpack.c.l.b16 %v8070
        %v8091 = vpack.c.b16 %v8082, %v8081
        %v8092 = vpack.c.b16 %v8084, %v8083
        %v8093 = vpack.c.b16 %v8086, %v8085
        %v8094 = vpack.c.b16 %v8088, %v8087
        %v8095 = vpack.c.b16 %v8090, %v8089
        %v8102 = vsel %vm7796, %v8059, 0
        %8104 = vmatprep.subr.bf16.mxu0 0
        %8105 = vmatpush1.bf16.msra.mxu0 %v8091
        %8106 = vmatprep.subr.bf16.mxu0 0
        %8107 = vmatpush1.bf16.msra.mxu0 %v8092
        %8108 = vmatprep.subr.bf16.mxu0 0
        %8109 = vmatpush1.bf16.msra.mxu0 %v8093
        %8110 = vmatprep.subr.bf16.mxu0 0
        %8111 = vmatpush1.bf16.msra.mxu0 %v8094
        %8112 = vmatprep.subr.bf16.mxu0 0
        %8113 = vmatpush1.bf16.msra.mxu0 %v8095
        %8114 = vmatprep.subr.bf16.mxu0 0
        %8115 = vmatpush1.bf16.msra.mxu0 0
        %8116 = vmatprep.subr.bf16.mxu0 0
        %8117 = vmatpush1.bf16.msra.mxu0 0
        %8118 = vmatprep.subr.bf16.mxu0 0
        %8119 = vmatpush1.bf16.msra.mxu0 0
        %8120 = vmatprep.subr.bf16.mxu0 0
        %8121 = vmatpush1.bf16.msra.mxu0 0
        %8122 = vmatprep.subr.bf16.mxu0 0
        %8123 = vmatpush1.bf16.msra.mxu0 0
        %8124 = vmatprep.subr.bf16.mxu0 0
        %8125 = vmatpush1.bf16.msra.mxu0 0
        %8126 = vmatprep.subr.bf16.mxu0 0
        %8127 = vmatpush1.bf16.msra.mxu0 0
        %8128 = vmatprep.subr.bf16.mxu0 0
        %8129 = vmatpush1.bf16.msra.mxu0 0
        %8130 = vmatprep.subr.bf16.mxu0 0
        %8131 = vmatpush1.bf16.msra.mxu0 0
        %8132 = vmatprep.subr.bf16.mxu0 0
        %8133 = vmatpush1.bf16.msra.mxu0 0
        %8134 = vmatprep.subr.bf16.mxu0 0
        %8135 = vmatpush1.bf16.msra.mxu0 0
        %8136 = vmatprep.mubr.bf16.mxu0 0
        %8137 = vmatmul.mubr.bf16.gmra.mrb[0].mxu0 %v8102
        %v8138 = vpop.f32.mrb[0].mxu0
        %v8139 = vadd.f32 0.0, %v8138
        %v8140 = vpop.f32.mrb[0].mxu0
        %v8141 = vpop.f32.mrb[0].mxu0
        %v8142 = vpop.f32.mrb[0].mxu0
        %8143 = vdwg.mxu0
        %v8144 = vadd.f32 %v8057, %v8139
        %v8145 = vld [vmem:[#allocation5 + $0x4] sm:$0x1]
        %v8146 = vpack.c.bf16 %v8145, %v8145
        %s8147 = scalar_lea.vmem %s5, 160
        %v8148 = vld [vmem:[%s8147] sm:$0xf]
        %v8149 = vld [vmem:[%s8147 + $0x4] sm:$0xf]
        %v8150 = vld [vmem:[%s8147 + $0x8] sm:$0xf]
        %v8151 = vld [vmem:[%s8147 + $0xc] sm:$0xf]
        %v8152 = vld [vmem:[%s8147 + $0x10] sm:$0xf]
        %v8153 = vld [vmem:[%s8147 + $0x14] sm:$0xf]
        %v8154 = vld [vmem:[%s8147 + $0x18] sm:$0xf]
        %v8155 = vld [vmem:[%s8147 + $0x1c] sm:$0xf]
        %v8156 = vld [vmem:[%s8147 + $0x20] sm:$0xf]
        %v8157 = vld [vmem:[%s8147 + $0x24] sm:$0xf]
        %v8168 = vunpack.c.l.b16 %v8148
        %v8169 = vunpack.c.l.b16 %v8149
        %v8170 = vunpack.c.l.b16 %v8150
        %v8171 = vunpack.c.l.b16 %v8151
        %v8172 = vunpack.c.l.b16 %v8152
        %v8173 = vunpack.c.l.b16 %v8153
        %v8174 = vunpack.c.l.b16 %v8154
        %v8175 = vunpack.c.l.b16 %v8155
        %v8176 = vunpack.c.l.b16 %v8156
        %v8177 = vunpack.c.l.b16 %v8157
        %v8178 = vpack.c.b16 %v8169, %v8168
        %v8179 = vpack.c.b16 %v8171, %v8170
        %v8180 = vpack.c.b16 %v8173, %v8172
        %v8181 = vpack.c.b16 %v8175, %v8174
        %v8182 = vpack.c.b16 %v8177, %v8176
        %v8189 = vsel %vm7796, %v8146, 0
        %8191 = vmatprep.subr.bf16.mxu0 0
        %8192 = vmatpush1.bf16.msra.mxu0 %v8178
        %8193 = vmatprep.subr.bf16.mxu0 0
        %8194 = vmatpush1.bf16.msra.mxu0 %v8179
        %8195 = vmatprep.subr.bf16.mxu0 0
        %8196 = vmatpush1.bf16.msra.mxu0 %v8180
        %8197 = vmatprep.subr.bf16.mxu0 0
        %8198 = vmatpush1.bf16.msra.mxu0 %v8181
        %8199 = vmatprep.subr.bf16.mxu0 0
        %8200 = vmatpush1.bf16.msra.mxu0 %v8182
        %8201 = vmatprep.subr.bf16.mxu0 0
        %8202 = vmatpush1.bf16.msra.mxu0 0
        %8203 = vmatprep.subr.bf16.mxu0 0
        %8204 = vmatpush1.bf16.msra.mxu0 0
        %8205 = vmatprep.subr.bf16.mxu0 0
        %8206 = vmatpush1.bf16.msra.mxu0 0
        %8207 = vmatprep.subr.bf16.mxu0 0
        %8208 = vmatpush1.bf16.msra.mxu0 0
        %8209 = vmatprep.subr.bf16.mxu0 0
        %8210 = vmatpush1.bf16.msra.mxu0 0
        %8211 = vmatprep.subr.bf16.mxu0 0
        %8212 = vmatpush1.bf16.msra.mxu0 0
        %8213 = vmatprep.subr.bf16.mxu0 0
        %8214 = vmatpush1.bf16.msra.mxu0 0
        %8215 = vmatprep.subr.bf16.mxu0 0
        %8216 = vmatpush1.bf16.msra.mxu0 0
        %8217 = vmatprep.subr.bf16.mxu0 0
        %8218 = vmatpush1.bf16.msra.mxu0 0
        %8219 = vmatprep.subr.bf16.mxu0 0
        %8220 = vmatpush1.bf16.msra.mxu0 0
        %8221 = vmatprep.subr.bf16.mxu0 0
        %8222 = vmatpush1.bf16.msra.mxu0 0
        %8223 = vmatprep.mubr.bf16.mxu0 0
        %8224 = vmatmul.mubr.bf16.gmra.mrb[0].mxu0 %v8189
        %v8225 = vpop.f32.mrb[0].mxu0
        %v8226 = vadd.f32 0.0, %v8225
        %v8227 = vpop.f32.mrb[0].mxu0
        %v8228 = vpop.f32.mrb[0].mxu0
        %v8229 = vpop.f32.mrb[0].mxu0
        %8230 = vdwg.mxu0
        %v8231 = vadd.f32 %v8144, %v8226
        %v8232 = vld [vmem:[#allocation5 + $0x5] sm:$0x1]
        %v8233 = vpack.c.bf16 %v8232, %v8232
        %s8234 = scalar_lea.vmem %s5, 200
        %v8235 = vld [vmem:[%s8234] sm:$0xf]
        %v8236 = vld [vmem:[%s8234 + $0x4] sm:$0xf]
        %v8237 = vld [vmem:[%s8234 + $0x8] sm:$0xf]
        %v8238 = vld [vmem:[%s8234 + $0xc] sm:$0xf]
        %v8239 = vld [vmem:[%s8234 + $0x10] sm:$0xf]
        %v8240 = vld [vmem:[%s8234 + $0x14] sm:$0xf]
        %v8241 = vld [vmem:[%s8234 + $0x18] sm:$0xf]
        %v8242 = vld [vmem:[%s8234 + $0x1c] sm:$0xf]
        %v8243 = vld [vmem:[%s8234 + $0x20] sm:$0xf]
        %v8244 = vld [vmem:[%s8234 + $0x24] sm:$0xf]
        %v8255 = vunpack.c.l.b16 %v8235
        %v8256 = vunpack.c.l.b16 %v8236
        %v8257 = vunpack.c.l.b16 %v8237
        %v8258 = vunpack.c.l.b16 %v8238
        %v8259 = vunpack.c.l.b16 %v8239
        %v8260 = vunpack.c.l.b16 %v8240
        %v8261 = vunpack.c.l.b16 %v8241
        %v8262 = vunpack.c.l.b16 %v8242
        %v8263 = vunpack.c.l.b16 %v8243
        %v8264 = vunpack.c.l.b16 %v8244
        %v8265 = vpack.c.b16 %v8256, %v8255
        %v8266 = vpack.c.b16 %v8258, %v8257
        %v8267 = vpack.c.b16 %v8260, %v8259
        %v8268 = vpack.c.b16 %v8262, %v8261
        %v8269 = vpack.c.b16 %v8264, %v8263
        %v8276 = vsel %vm7796, %v8233, 0
        %8278 = vmatprep.subr.bf16.mxu0 0
        %8279 = vmatpush1.bf16.msra.mxu0 %v8265
        %8280 = vmatprep.subr.bf16.mxu0 0
        %8281 = vmatpush1.bf16.msra.mxu0 %v8266
        %8282 = vmatprep.subr.bf16.mxu0 0
        %8283 = vmatpush1.bf16.msra.mxu0 %v8267
        %8284 = vmatprep.subr.bf16.mxu0 0
        %8285 = vmatpush1.bf16.msra.mxu0 %v8268
        %8286 = vmatprep.subr.bf16.mxu0 0
        %8287 = vmatpush1.bf16.msra.mxu0 %v8269
        %8288 = vmatprep.subr.bf16.mxu0 0
        %8289 = vmatpush1.bf16.msra.mxu0 0
        %8290 = vmatprep.subr.bf16.mxu0 0
        %8291 = vmatpush1.bf16.msra.mxu0 0
        %8292 = vmatprep.subr.bf16.mxu0 0
        %8293 = vmatpush1.bf16.msra.mxu0 0
        %8294 = vmatprep.subr.bf16.mxu0 0
        %8295 = vmatpush1.bf16.msra.mxu0 0
        %8296 = vmatprep.subr.bf16.mxu0 0
        %8297 = vmatpush1.bf16.msra.mxu0 0
        %8298 = vmatprep.subr.bf16.mxu0 0
        %8299 = vmatpush1.bf16.msra.mxu0 0
        %8300 = vmatprep.subr.bf16.mxu0 0
        %8301 = vmatpush1.bf16.msra.mxu0 0
        %8302 = vmatprep.subr.bf16.mxu0 0
        %8303 = vmatpush1.bf16.msra.mxu0 0
        %8304 = vmatprep.subr.bf16.mxu0 0
        %8305 = vmatpush1.bf16.msra.mxu0 0
        %8306 = vmatprep.subr.bf16.mxu0 0
        %8307 = vmatpush1.bf16.msra.mxu0 0
        %8308 = vmatprep.subr.bf16.mxu0 0
        %8309 = vmatpush1.bf16.msra.mxu0 0
        %8310 = vmatprep.mubr.bf16.mxu0 0
        %8311 = vmatmul.mubr.bf16.gmra.mrb[0].mxu0 %v8276
        %v8312 = vpop.f32.mrb[0].mxu0
        %v8313 = vadd.f32 0.0, %v8312
        %v8314 = vpop.f32.mrb[0].mxu0
        %v8315 = vpop.f32.mrb[0].mxu0
        %v8316 = vpop.f32.mrb[0].mxu0
        %8317 = vdwg.mxu0
        %v8318 = vadd.f32 %v8231, %v8313
        %v8319 = vld [vmem:[#allocation5 + $0x6] sm:$0x1]
        %v8320 = vpack.c.bf16 %v8319, %v8319
        %s8321 = scalar_lea.vmem %s5, 240
        %v8322 = vld [vmem:[%s8321] sm:$0xf]
        %v8323 = vld [vmem:[%s8321 + $0x4] sm:$0xf]
        %v8324 = vld [vmem:[%s8321 + $0x8] sm:$0xf]
        %v8325 = vld [vmem:[%s8321 + $0xc] sm:$0xf]
        %v8326 = vld [vmem:[%s8321 + $0x10] sm:$0xf]
        %v8327 = vld [vmem:[%s8321 + $0x14] sm:$0xf]
        %v8328 = vld [vmem:[%s8321 + $0x18] sm:$0xf]
        %v8329 = vld [vmem:[%s8321 + $0x1c] sm:$0xf]
        %v8330 = vld [vmem:[%s8321 + $0x20] sm:$0xf]
        %v8331 = vld [vmem:[%s8321 + $0x24] sm:$0xf]
        %v8342 = vunpack.c.l.b16 %v8322
        %v8343 = vunpack.c.l.b16 %v8323
        %v8344 = vunpack.c.l.b16 %v8324
        %v8345 = vunpack.c.l.b16 %v8325
        %v8346 = vunpack.c.l.b16 %v8326
        %v8347 = vunpack.c.l.b16 %v8327
        %v8348 = vunpack.c.l.b16 %v8328
        %v8349 = vunpack.c.l.b16 %v8329
        %v8350 = vunpack.c.l.b16 %v8330
        %v8351 = vunpack.c.l.b16 %v8331
        %v8352 = vpack.c.b16 %v8343, %v8342
        %v8353 = vpack.c.b16 %v8345, %v8344
        %v8354 = vpack.c.b16 %v8347, %v8346
        %v8355 = vpack.c.b16 %v8349, %v8348
        %v8356 = vpack.c.b16 %v8351, %v8350
        %v8363 = vsel %vm7796, %v8320, 0
        %8365 = vmatprep.subr.bf16.mxu0 0
        %8366 = vmatpush1.bf16.msra.mxu0 %v8352
        %8367 = vmatprep.subr.bf16.mxu0 0
        %8368 = vmatpush1.bf16.msra.mxu0 %v8353
        %8369 = vmatprep.subr.bf16.mxu0 0
        %8370 = vmatpush1.bf16.msra.mxu0 %v8354
        %8371 = vmatprep.subr.bf16.mxu0 0
        %8372 = vmatpush1.bf16.msra.mxu0 %v8355
        %8373 = vmatprep.subr.bf16.mxu0 0
        %8374 = vmatpush1.bf16.msra.mxu0 %v8356
        %8375 = vmatprep.subr.bf16.mxu0 0
        %8376 = vmatpush1.bf16.msra.mxu0 0
        %8377 = vmatprep.subr.bf16.mxu0 0
        %8378 = vmatpush1.bf16.msra.mxu0 0
        %8379 = vmatprep.subr.bf16.mxu0 0
        %8380 = vmatpush1.bf16.msra.mxu0 0
        %8381 = vmatprep.subr.bf16.mxu0 0
        %8382 = vmatpush1.bf16.msra.mxu0 0
        %8383 = vmatprep.subr.bf16.mxu0 0
        %8384 = vmatpush1.bf16.msra.mxu0 0
        %8385 = vmatprep.subr.bf16.mxu0 0
        %8386 = vmatpush1.bf16.msra.mxu0 0
        %8387 = vmatprep.subr.bf16.mxu0 0
        %8388 = vmatpush1.bf16.msra.mxu0 0
        %8389 = vmatprep.subr.bf16.mxu0 0
        %8390 = vmatpush1.bf16.msra.mxu0 0
        %8391 = vmatprep.subr.bf16.mxu0 0
        %8392 = vmatpush1.bf16.msra.mxu0 0
        %8393 = vmatprep.subr.bf16.mxu0 0
        %8394 = vmatpush1.bf16.msra.mxu0 0
        %8395 = vmatprep.subr.bf16.mxu0 0
        %8396 = vmatpush1.bf16.msra.mxu0 0
        %8397 = vmatprep.mubr.bf16.mxu0 0
        %8398 = vmatmul.mubr.bf16.gmra.mrb[0].mxu0 %v8363
        %v8399 = vpop.f32.mrb[0].mxu0
        %v8400 = vadd.f32 0.0, %v8399
        %v8401 = vpop.f32.mrb[0].mxu0
        %v8402 = vpop.f32.mrb[0].mxu0
        %v8403 = vpop.f32.mrb[0].mxu0
        %8404 = vdwg.mxu0
        %v8405 = vadd.f32 %v8318, %v8400
        %v8406 = vld [vmem:[#allocation5 + $0x7] sm:$0x1]
        %v8407 = vpack.c.bf16 %v8406, %v8406
        %s8408 = scalar_lea.vmem %s5, 280
        %v8409 = vld [vmem:[%s8408] sm:$0xf]
        %v8410 = vld [vmem:[%s8408 + $0x4] sm:$0xf]
        %v8411 = vld [vmem:[%s8408 + $0x8] sm:$0xf]
        %v8412 = vld [vmem:[%s8408 + $0xc] sm:$0xf]
        %v8413 = vld [vmem:[%s8408 + $0x10] sm:$0xf]
        %v8414 = vld [vmem:[%s8408 + $0x14] sm:$0xf]
        %v8415 = vld [vmem:[%s8408 + $0x18] sm:$0xf]
        %v8416 = vld [vmem:[%s8408 + $0x1c] sm:$0xf]
        %v8417 = vld [vmem:[%s8408 + $0x20] sm:$0xf]
        %v8418 = vld [vmem:[%s8408 + $0x24] sm:$0xf]
        %v8429 = vunpack.c.l.b16 %v8409
        %v8430 = vunpack.c.l.b16 %v8410
        %v8431 = vunpack.c.l.b16 %v8411
        %v8432 = vunpack.c.l.b16 %v8412
        %v8433 = vunpack.c.l.b16 %v8413
        %v8434 = vunpack.c.l.b16 %v8414
        %v8435 = vunpack.c.l.b16 %v8415
        %v8436 = vunpack.c.l.b16 %v8416
        %v8437 = vunpack.c.l.b16 %v8417
        %v8438 = vunpack.c.l.b16 %v8418
        %v8439 = vpack.c.b16 %v8430, %v8429
        %v8440 = vpack.c.b16 %v8432, %v8431
        %v8441 = vpack.c.b16 %v8434, %v8433
        %v8442 = vpack.c.b16 %v8436, %v8435
        %v8443 = vpack.c.b16 %v8438, %v8437
        %v8450 = vsel %vm7796, %v8407, 0
        %8452 = vmatprep.subr.bf16.mxu0 0
        %8453 = vmatpush1.bf16.msra.mxu0 %v8439
        %8454 = vmatprep.subr.bf16.mxu0 0
        %8455 = vmatpush1.bf16.msra.mxu0 %v8440
        %8456 = vmatprep.subr.bf16.mxu0 0
        %8457 = vmatpush1.bf16.msra.mxu0 %v8441
        %8458 = vmatprep.subr.bf16.mxu0 0
        %8459 = vmatpush1.bf16.msra.mxu0 %v8442
        %8460 = vmatprep.subr.bf16.mxu0 0
        %8461 = vmatpush1.bf16.msra.mxu0 %v8443
        %8462 = vmatprep.subr.bf16.mxu0 0
        %8463 = vmatpush1.bf16.msra.mxu0 0
        %8464 = vmatprep.subr.bf16.mxu0 0
        %8465 = vmatpush1.bf16.msra.mxu0 0
        %8466 = vmatprep.subr.bf16.mxu0 0
        %8467 = vmatpush1.bf16.msra.mxu0 0
        %8468 = vmatprep.subr.bf16.mxu0 0
        %8469 = vmatpush1.bf16.msra.mxu0 0
        %8470 = vmatprep.subr.bf16.mxu0 0
        %8471 = vmatpush1.bf16.msra.mxu0 0
        %8472 = vmatprep.subr.bf16.mxu0 0
        %8473 = vmatpush1.bf16.msra.mxu0 0
        %8474 = vmatprep.subr.bf16.mxu0 0
        %8475 = vmatpush1.bf16.msra.mxu0 0
        %8476 = vmatprep.subr.bf16.mxu0 0
        %8477 = vmatpush1.bf16.msra.mxu0 0
        %8478 = vmatprep.subr.bf16.mxu0 0
        %8479 = vmatpush1.bf16.msra.mxu0 0
        %8480 = vmatprep.subr.bf16.mxu0 0
        %8481 = vmatpush1.bf16.msra.mxu0 0
        %8482 = vmatprep.subr.bf16.mxu0 0
        %8483 = vmatpush1.bf16.msra.mxu0 0
        %8484 = vmatprep.mubr.bf16.mxu0 0
        %8485 = vmatmul.mubr.bf16.gmra.mrb[0].mxu0 %v8450
        %v8486 = vpop.f32.mrb[0].mxu0
        %v8487 = vadd.f32 0.0, %v8486
        %v8488 = vpop.f32.mrb[0].mxu0
        %v8489 = vpop.f32.mrb[0].mxu0
        %v8490 = vpop.f32.mrb[0].mxu0
        %8491 = vdwg.mxu0
        %v8492 = vadd.f32 %v8405, %v8487
        %v8493 = vld [vmem:[#allocation5 + $0x8] sm:$0x1]
        %v8494 = vpack.c.bf16 %v8493, %v8493
        %s8495 = scalar_lea.vmem %s5, 320
        %v8496 = vld [vmem:[%s8495] sm:$0xf]
        %v8497 = vld [vmem:[%s8495 + $0x4] sm:$0xf]
        %v8498 = vld [vmem:[%s8495 + $0x8] sm:$0xf]
        %v8499 = vld [vmem:[%s8495 + $0xc] sm:$0xf]
        %v8500 = vld [vmem:[%s8495 + $0x10] sm:$0xf]
        %v8501 = vld [vmem:[%s8495 + $0x14] sm:$0xf]
        %v8502 = vld [vmem:[%s8495 + $0x18] sm:$0xf]
        %v8503 = vld [vmem:[%s8495 + $0x1c] sm:$0xf]
        %v8504 = vld [vmem:[%s8495 + $0x20] sm:$0xf]
        %v8505 = vld [vmem:[%s8495 + $0x24] sm:$0xf]
        %v8516 = vunpack.c.l.b16 %v8496
        %v8517 = vunpack.c.l.b16 %v8497
        %v8518 = vunpack.c.l.b16 %v8498
        %v8519 = vunpack.c.l.b16 %v8499
        %v8520 = vunpack.c.l.b16 %v8500
        %v8521 = vunpack.c.l.b16 %v8501
        %v8522 = vunpack.c.l.b16 %v8502
        %v8523 = vunpack.c.l.b16 %v8503
        %v8524 = vunpack.c.l.b16 %v8504
        %v8525 = vunpack.c.l.b16 %v8505
        %v8526 = vpack.c.b16 %v8517, %v8516
        %v8527 = vpack.c.b16 %v8519, %v8518
        %v8528 = vpack.c.b16 %v8521, %v8520
        %v8529 = vpack.c.b16 %v8523, %v8522
        %v8530 = vpack.c.b16 %v8525, %v8524
        %v8537 = vsel %vm7796, %v8494, 0
        %8539 = vmatprep.subr.bf16.mxu0 0
        %8540 = vmatpush1.bf16.msra.mxu0 %v8526
        %8541 = vmatprep.subr.bf16.mxu0 0
        %8542 = vmatpush1.bf16.msra.mxu0 %v8527
        %8543 = vmatprep.subr.bf16.mxu0 0
        %8544 = vmatpush1.bf16.msra.mxu0 %v8528
        %8545 = vmatprep.subr.bf16.mxu0 0
        %8546 = vmatpush1.bf16.msra.mxu0 %v8529
        %8547 = vmatprep.subr.bf16.mxu0 0
        %8548 = vmatpush1.bf16.msra.mxu0 %v8530
        %8549 = vmatprep.subr.bf16.mxu0 0
        %8550 = vmatpush1.bf16.msra.mxu0 0
        %8551 = vmatprep.subr.bf16.mxu0 0
        %8552 = vmatpush1.bf16.msra.mxu0 0
        %8553 = vmatprep.subr.bf16.mxu0 0
        %8554 = vmatpush1.bf16.msra.mxu0 0
        %8555 = vmatprep.subr.bf16.mxu0 0
        %8556 = vmatpush1.bf16.msra.mxu0 0
        %8557 = vmatprep.subr.bf16.mxu0 0
        %8558 = vmatpush1.bf16.msra.mxu0 0
        %8559 = vmatprep.subr.bf16.mxu0 0
        %8560 = vmatpush1.bf16.msra.mxu0 0
        %8561 = vmatprep.subr.bf16.mxu0 0
        %8562 = vmatpush1.bf16.msra.mxu0 0
        %8563 = vmatprep.subr.bf16.mxu0 0
        %8564 = vmatpush1.bf16.msra.mxu0 0
        %8565 = vmatprep.subr.bf16.mxu0 0
        %8566 = vmatpush1.bf16.msra.mxu0 0
        %8567 = vmatprep.subr.bf16.mxu0 0
        %8568 = vmatpush1.bf16.msra.mxu0 0
        %8569 = vmatprep.subr.bf16.mxu0 0
        %8570 = vmatpush1.bf16.msra.mxu0 0
        %8571 = vmatprep.mubr.bf16.mxu0 0
        %8572 = vmatmul.mubr.bf16.gmra.mrb[0].mxu0 %v8537
        %v8573 = vpop.f32.mrb[0].mxu0
        %v8574 = vadd.f32 0.0, %v8573
        %v8575 = vpop.f32.mrb[0].mxu0
        %v8576 = vpop.f32.mrb[0].mxu0
        %v8577 = vpop.f32.mrb[0].mxu0
        %8578 = vdwg.mxu0
        %v8579 = vadd.f32 %v8492, %v8574
        %v8580 = vld [vmem:[#allocation5 + $0x9] sm:$0x1]
        %v8581 = vpack.c.bf16 %v8580, %v8580
        %s8582 = scalar_lea.vmem %s5, 360
        %v8583 = vld [vmem:[%s8582] sm:$0xf]
        %v8584 = vld [vmem:[%s8582 + $0x4] sm:$0xf]
        %v8585 = vld [vmem:[%s8582 + $0x8] sm:$0xf]
        %v8586 = vld [vmem:[%s8582 + $0xc] sm:$0xf]
        %v8587 = vld [vmem:[%s8582 + $0x10] sm:$0xf]
        %v8588 = vld [vmem:[%s8582 + $0x14] sm:$0xf]
        %v8589 = vld [vmem:[%s8582 + $0x18] sm:$0xf]
        %v8590 = vld [vmem:[%s8582 + $0x1c] sm:$0xf]
        %v8591 = vld [vmem:[%s8582 + $0x20] sm:$0xf]
        %v8592 = vld [vmem:[%s8582 + $0x24] sm:$0xf]
        %v8603 = vunpack.c.l.b16 %v8583
        %v8604 = vunpack.c.l.b16 %v8584
        %v8605 = vunpack.c.l.b16 %v8585
        %v8606 = vunpack.c.l.b16 %v8586
        %v8607 = vunpack.c.l.b16 %v8587
        %v8608 = vunpack.c.l.b16 %v8588
        %v8609 = vunpack.c.l.b16 %v8589
        %v8610 = vunpack.c.l.b16 %v8590
        %v8611 = vunpack.c.l.b16 %v8591
        %v8612 = vunpack.c.l.b16 %v8592
        %v8613 = vpack.c.b16 %v8604, %v8603
        %v8614 = vpack.c.b16 %v8606, %v8605
        %v8615 = vpack.c.b16 %v8608, %v8607
        %v8616 = vpack.c.b16 %v8610, %v8609
        %v8617 = vpack.c.b16 %v8612, %v8611
        %v8624 = vsel %vm7796, %v8581, 0
        %8626 = vmatprep.subr.bf16.mxu0 0
        %8627 = vmatpush1.bf16.msra.mxu0 %v8613
        %8628 = vmatprep.subr.bf16.mxu0 0
        %8629 = vmatpush1.bf16.msra.mxu0 %v8614
        %8630 = vmatprep.subr.bf16.mxu0 0
        %8631 = vmatpush1.bf16.msra.mxu0 %v8615
        %8632 = vmatprep.subr.bf16.mxu0 0
        %8633 = vmatpush1.bf16.msra.mxu0 %v8616
        %8634 = vmatprep.subr.bf16.mxu0 0
        %8635 = vmatpush1.bf16.msra.mxu0 %v8617
        %8636 = vmatprep.subr.bf16.mxu0 0
        %8637 = vmatpush1.bf16.msra.mxu0 0
        %8638 = vmatprep.subr.bf16.mxu0 0
        %8639 = vmatpush1.bf16.msra.mxu0 0
        %8640 = vmatprep.subr.bf16.mxu0 0
        %8641 = vmatpush1.bf16.msra.mxu0 0
        %8642 = vmatprep.subr.bf16.mxu0 0
        %8643 = vmatpush1.bf16.msra.mxu0 0
        %8644 = vmatprep.subr.bf16.mxu0 0
        %8645 = vmatpush1.bf16.msra.mxu0 0
        %8646 = vmatprep.subr.bf16.mxu0 0
        %8647 = vmatpush1.bf16.msra.mxu0 0
        %8648 = vmatprep.subr.bf16.mxu0 0
        %8649 = vmatpush1.bf16.msra.mxu0 0
        %8650 = vmatprep.subr.bf16.mxu0 0
        %8651 = vmatpush1.bf16.msra.mxu0 0
        %8652 = vmatprep.subr.bf16.mxu0 0
        %8653 = vmatpush1.bf16.msra.mxu0 0
        %8654 = vmatprep.subr.bf16.mxu0 0
        %8655 = vmatpush1.bf16.msra.mxu0 0
        %8656 = vmatprep.subr.bf16.mxu0 0
        %8657 = vmatpush1.bf16.msra.mxu0 0
        %8658 = vmatprep.mubr.bf16.mxu0 0
        %8659 = vmatmul.mubr.bf16.gmra.mrb[0].mxu0 %v8624
        %v8660 = vpop.f32.mrb[0].mxu0
        %v8661 = vadd.f32 0.0, %v8660
        %v8662 = vpop.f32.mrb[0].mxu0
        %v8663 = vpop.f32.mrb[0].mxu0
        %v8664 = vpop.f32.mrb[0].mxu0
        %8665 = vdwg.mxu0
        %v8666 = vadd.f32 %v8579, %v8661
        %v8667 = vld [vmem:[#allocation15] sm:$0x1]
        %v8668 = vadd.f32 %v8666, %v8667
        %v8669 = vmax.f32 %v8668, 0.0
        %v8670 = vpack.c.bf16 %v8669, %v8669
        %v8671 = vld [vmem:[%s6] sm:$0xf]
        %v8672 = vld [vmem:[%s6 + $0x4] sm:$0xf]
        %v8673 = vld [vmem:[%s6 + $0x8] sm:$0xf]
        %v8674 = vld [vmem:[%s6 + $0xc] sm:$0x7]
        %v8675 = vld [vmem:[#allocation17] sm:$0x1]
        %v8680 = vunpack.c.l.b16 %v8671
        %v8681 = vunpack.c.l.b16 %v8672
        %v8682 = vunpack.c.l.b16 %v8673
        %v8683 = vunpack.c.l.b16 %v8674
        %v8684 = vpack.c.b16 %v8681, %v8680
        %v8685 = vpack.c.b16 %v8683, %v8682
        %vm8687 = vcmask 244736
        %v8689 = vsel %vm8687, %v8670, 0
        %vm8691 = vcmask 1046528
        %v8693 = vsel %vm8691, %v8685, 0
        %8695 = vmatprep.subr.bf16.mxu0 0
        %8696 = vmatpush1.bf16.msra.mxu0 %v8684
        %8697 = vmatprep.subr.bf16.mxu0 0
        %8698 = vmatpush1.bf16.msra.mxu0 %v8693
        %8699 = vmatprep.subr.bf16.mxu0 0
        %8700 = vmatpush1.bf16.msra.mxu0 0
        %8701 = vmatprep.subr.bf16.mxu0 0
        %8702 = vmatpush1.bf16.msra.mxu0 0
        %8703 = vmatprep.subr.bf16.mxu0 0
        %8704 = vmatpush1.bf16.msra.mxu0 0
        %8705 = vmatprep.subr.bf16.mxu0 0
        %8706 = vmatpush1.bf16.msra.mxu0 0
        %8707 = vmatprep.subr.bf16.mxu0 0
        %8708 = vmatpush1.bf16.msra.mxu0 0
        %8709 = vmatprep.subr.bf16.mxu0 0
        %8710 = vmatpush1.bf16.msra.mxu0 0
        %8711 = vmatprep.subr.bf16.mxu0 0
        %8712 = vmatpush1.bf16.msra.mxu0 0
        %8713 = vmatprep.subr.bf16.mxu0 0
        %8714 = vmatpush1.bf16.msra.mxu0 0
        %8715 = vmatprep.subr.bf16.mxu0 0
        %8716 = vmatpush1.bf16.msra.mxu0 0
        %8717 = vmatprep.subr.bf16.mxu0 0
        %8718 = vmatpush1.bf16.msra.mxu0 0
        %8719 = vmatprep.subr.bf16.mxu0 0
        %8720 = vmatpush1.bf16.msra.mxu0 0
        %8721 = vmatprep.subr.bf16.mxu0 0
        %8722 = vmatpush1.bf16.msra.mxu0 0
        %8723 = vmatprep.subr.bf16.mxu0 0
        %8724 = vmatpush1.bf16.msra.mxu0 0
        %8725 = vmatprep.subr.bf16.mxu0 0
        %8726 = vmatpush1.bf16.msra.mxu0 0
        %8727 = vmatprep.mubr.bf16.mxu0 0
        %8728 = vmatmul.mubr.bf16.gmra.mrb[0].mxu0 %v8689
        %v8729 = vpop.f32.mrb[0].mxu0
        %v8730 = vadd.f32 %v8675, %v8729
        %v8731 = vpop.f32.mrb[0].mxu0
        %v8732 = vpop.f32.mrb[0].mxu0
        %v8733 = vpop.f32.mrb[0].mxu0
        %8734 = vdwg.mxu0
        %vm8735 = vcmask 73728
        %8736 = vst.msk [vmem:[%s512] sm:$0x1] %vm8735, %v8730
        %s8737 = sand.u32 %s300, 1
        %s8738 = scalar_lea.sflag [#allocation8], %s8737
        %s8739 = sand.u32 %s300, 1
        %s8740 = scalar_lea.vmem [#allocation18], %s8739
        // Predicated region
        $region97: #{forward.1} parent=67 // pred_check
          %p8741 = pneg %p310
        $region98: #{forward.1} parent=67 // pred_check_branch
          %8743 = sbr.rel (%p8741) target = $region100
        $region99: #{forward.1} parent=67 // pred_region
          %s8745 = ssub.s32 16, 16
          %8746 = vsyncadd %s8738, %s8745
          %s8747 = smul.addr %s30, 16
          %s8748 = scalar_lea.hbm %s12, %s8747
          %s8750 = sshll.u32 %s8740, 4
          %s8751 = int_to_ptr.vmem [resolvable:$true] %s8750
          %8753 = dma.vmem_to_hbm [thread:$0]  %s8751, 16, %s8748, %s8738
        $region100: #{forward.1} parent=67 // pred_fallthru
          _
      $region68: #{forward.1} parent=5 // pred_fallthru
        _
      %p8754 = scmp.le.s32.totalorder 2, %s25
      // Predicated region
      $region101: #{forward.1} parent=5 // pred_check
        %p8755 = pneg %p8754
      $region102: #{forward.1} parent=5 // pred_check_branch
        %8757 = sbr.rel (%p8755) target = $region104
      $region103: #{forward.1} parent=5 // pred_region
        %s8758 = ssub.s32 %s25, 2
        // Predicated region
        $region105: #{forward.1} parent=103 // pred_check
          %p8759 = pneg %p316
        $region106: #{forward.1} parent=103 // pred_check_branch
          %8761 = sbr.rel (%p8759) target = $region108
        $region107: #{forward.1} parent=103 // pred_region
          %s8762 = sand.u32 %s301, 1
          %s8763 = scalar_lea.sflag [#allocation8], %s8762
          %s8764 = sand.u32 %s301, 1
          %s8765 = scalar_lea.vmem [#allocation18], %s8764
          %8766 = dma.done %s8763, 16
        $region108: #{forward.1} parent=103 // pred_fallthru
          _
      $region104: #{forward.1} parent=5 // pred_fallthru
        _
    $region6: #{forward.1} parent=1 // loop_footer
      %s29 = sadd.s32 1, %s25
    $region7: #{forward.1} parent=1 // loop_footer_branch
      %24 = sbr.rel target = $region3
    $region8: #{forward.1} parent=1 // loop_exit
      _
    %8767 = vsyncpa [#allocation7], 1
    %s8768 = scalar_lea.sflag [#allocation7], 1
    %8769 = vsyncpa %s8768, 1
    %8770 = vsyncpa [#allocation10], 1
    %8771 = vsyncpa [#allocation13], 1
    %8772 = vsyncpa [#allocation16], 1
    %8773 = vsyncpa [#allocation8], 1
    %s8774 = scalar_lea.sflag [#allocation8], 1
    %8775 = vsyncpa %s8774, 1

</llo_original>
